<compile_context>
chip_gen: v5e
topology: v5e:2x2
jax: 0.10.0
libtpu: 0.0.40
codegen_flags: <defaults>
</compile_context>

<pallas_src>
import numpy as np
import jax
import jax.numpy as jnp
from jax import lax
from jax.experimental import pallas as pl
from jax.experimental.pallas import tpu as pltpu

D_CONST = 256.0      # self.d = 2 ** 8
H = 8                # spatial size after the stride-2 wavelet conv (input 16x16)
W = 8
P = H * W            # 64 spatial positions per sample


def _build_tap_incidence():
    """T[t, p_in, p_out]: multiplicity with which input position p_in feeds
    output position p_out at 3x3 tap t = ky*3+kx under ReflectionPad2d(1)."""
    def refl(i):
        if i < 0:
            return -i
        if i > H - 1:
            return 2 * (H - 1) - i
        return i

    T = np.zeros((9, P, P), np.float32)
    for ky in range(3):
        for kx in range(3):
            t = ky * 3 + kx
            for y in range(H):
                for x in range(W):
                    yy = refl(y + ky - 1)
                    xx = refl(x + kx - 1)
                    T[t, yy * W + xx, y * W + x] += 1.0
    return T


_T_TAPS = _build_tap_incidence()          # (9, 64, 64), static


# --------------------------------- kernel ------------------------------------

def variant_c_kernel(scal_ref, xs_ref, wwav_ref, w0_ref, b0_ref,
                     w1_ref, b1_ref, w2_ref, b2_ref, w3_ref, out_ref):
    """One batch tile (BT samples) per grid step.

    scal_ref : SMEM (3,)          [b_wav, b3, d*alpha]
    xs_ref   : (BT, 256)          space-to-depth input, pos-major / 2x2-tap-minor
    wwav_ref : (256, 64)          block-diag wavelet matrix (mask and 1/d folded)
    w*_ref   : (64*cin, 64*cout)  dense conv-as-matrix (refl-pad + taps folded)
    b*_ref   : (1, 64*cout)
    out_ref  : (BT, 64)
    """
    f32 = jnp.float32
    bwav = scal_ref[0]
    b3 = scal_ref[1]
    scale = scal_ref[2]

    # conv_wavelet(x / d)
    x0 = jnp.dot(xs_ref[...], wwav_ref[...], preferred_element_type=f32) + bwav

    # residual 3x3 conv stack (reflection padding folded into the matrices)
    x1 = jnp.dot(x0, w0_ref[...], preferred_element_type=f32) + b0_ref[...]
    x2 = jnp.tanh(x1)
    x3 = jnp.dot(x2, w1_ref[...], preferred_element_type=f32) + b1_ref[...]
    x4 = jnp.tanh(x3)
    x5 = jnp.dot(x4, w2_ref[...], preferred_element_type=f32) + b2_ref[...]
    x6 = x5 + x3
    y = jnp.dot(x6, w3_ref[...], preferred_element_type=f32) + b3

    out_ref[...] = (y + x0) * scale


# ----------------------------- JAX glue / wrapper -----------------------------

def _to_tap_matrix(w):
    # (Cout, Cin, 3, 3) torch layout -> (9, Cin, Cout), tap t = ky*3+kx
    co, ci = w.shape[0], w.shape[1]
    return jnp.transpose(w, (2, 3, 1, 0)).reshape(9, ci, co).astype(jnp.float32)


def _conv_as_matrix(w):
    # Dense (64*cin, 64*cout) matrix implementing ReflectionPad2d(1) + 3x3 conv.
    co, ci = w.shape[0], w.shape[1]
    taps = _to_tap_matrix(w)                                     # (9, ci, co)
    big = jnp.einsum("tpq,tcd->pcqd", jnp.asarray(_T_TAPS), taps)
    return big.reshape(P * ci, P * co)


def _bias_row(b):
    # per-channel bias -> (1, 64*cout) row, pos-major / channel-minor
    return jnp.tile(b.astype(jnp.float32), P).reshape(1, P * b.shape[0])


def _flatten_input(x):
    # (B, 1, 16, 16) NCHW -> (B, 256) with column index p*4 + (ky*2 + kx)
    b = x.shape[0]
    xr = x[:, 0].reshape(b, H, 2, W, 2)          # (b, y, ky, x, kx)
    xr = jnp.transpose(xr, (0, 1, 3, 2, 4))      # (b, y, x, ky, kx)
    return xr.reshape(b, 4 * P).astype(jnp.float32)


def _pick_batch_tile(b):
    # Prefer >=2 grid steps with an 8-divisible tile (megacore / layout), cap 128.
    for bt in (128, 64, 32, 16, 8):
        if b % bt == 0 and b // bt >= 2:
            return bt
    for bt in (128, 64, 32, 16, 8):
        if b % bt == 0:
            return bt
    return b                                     # tiny / odd batch: one tile


@jax.jit
def variant_c_forward(x, params):
    b = x.shape[0]
    bt = _pick_batch_tile(b)
    xs = _flatten_input(x)                                        # (B, 256)

    # wavelet conv as a block-diagonal matrix; mask and 1/d folded in (exact).
    wwav = (params["w_wav"] * params["mask"]).reshape(4, 1).astype(jnp.float32)
    wwav_big = jnp.kron(jnp.eye(P, dtype=jnp.float32), wwav / D_CONST)  # (256, 64)

    w0 = _conv_as_matrix(params["w0"]); b0 = _bias_row(params["b0"])
    w1 = _conv_as_matrix(params["w1"]); b1 = _bias_row(params["b1"])
    w2 = _conv_as_matrix(params["w2"]); b2 = _bias_row(params["b2"])
    w3 = _conv_as_matrix(params["w3"])

    scalars = jnp.concatenate([
        params["b_wav"].reshape(1),
        params["b3"].reshape(1),
        (D_CONST * params["alpha"]).reshape(1),
    ]).astype(jnp.float32)

    out = pl.pallas_call(
        variant_c_kernel,
        grid=(b // bt,),
        in_specs=[
            pl.BlockSpec(memory_space=pltpu.MemorySpace.SMEM),        # scalars
            pl.BlockSpec((bt, 4 * P), lambda i: (i, 0)),              # xs
            pl.BlockSpec((4 * P, P), lambda i: (0, 0)),               # wwav_big
            pl.BlockSpec((P, 16 * P), lambda i: (0, 0)),              # w0
            pl.BlockSpec((1, 16 * P), lambda i: (0, 0)),              # b0
            pl.BlockSpec((16 * P, 16 * P), lambda i: (0, 0)),         # w1
            pl.BlockSpec((1, 16 * P), lambda i: (0, 0)),              # b1
            pl.BlockSpec((16 * P, 16 * P), lambda i: (0, 0)),         # w2
            pl.BlockSpec((1, 16 * P), lambda i: (0, 0)),              # b2
            pl.BlockSpec((16 * P, P), lambda i: (0, 0)),              # w3
        ],
        out_specs=pl.BlockSpec((bt, P), lambda i: (i, 0)),
        out_shape=jax.ShapeDtypeStruct((b, P), jnp.float32),
        compiler_params=pltpu.CompilerParams(
            dimension_semantics=("parallel",)),
    )(scalars, xs, wwav_big, w0, b0, w1, b1, w2, b2, w3)

    return out.reshape(b, 1, H, W)   # back to NCHW


# ----------------------------- pure-JAX reference -----------------------------

def reference_forward(x, params):
    dn = ("NCHW", "OIHW", "NCHW")
    w_wav = params["w_wav"] * params["mask"]
    x0 = lax.conv_general_dilated(x / D_CONST, w_wav, (2, 2), "VALID",
                                  dimension_numbers=dn) + params["b_wav"].reshape(1, 1, 1, 1)

    def refpad(t):
        return jnp.pad(t, ((0, 0), (0, 0), (1, 1), (1, 1)), mode="reflect")

    def conv(t, w, bias):
        y = lax.conv_general_dilated(refpad(t), w, (1, 1), "VALID", dimension_numbers=dn)
        return y + bias.reshape(1, -1, 1, 1)

    x1 = conv(x0, params["w0"], params["b0"])
    x2 = jnp.tanh(x1)
    x3 = conv(x2, params["w1"], params["b1"])
    x4 = jnp.tanh(x3)
    x5 = conv(x4, params["w2"], params["b2"])
    x6 = x5 + x3
    out = conv(x6, params["w3"], params["b3"]) + x0
    return out * D_CONST * params["alpha"].reshape(1, 1, 1, 1)


if __name__ == "__main__":
    key = jax.random.PRNGKey(0)
    ks = jax.random.split(key, 11)

    def uinit(k, shape, fan_in):
        bound = 1.0 / float(np.sqrt(fan_in))
        return jax.random.uniform(k, shape, jnp.float32, -bound, bound)

    params = {
        # wavelet-style filter mask (shape (1,1,2,2) -> kernel_size=2, stride=2)
        "mask": jnp.array([[1.0, 1.0], [1.0, 0.0]], jnp.float32).reshape(1, 1, 2, 2),
        "w_wav": uinit(ks[0], (1, 1, 2, 2), 4),
        "b_wav": uinit(ks[1], (1,), 4),
        "w0": uinit(ks[2], (16, 1, 3, 3), 1 * 9),
        "b0": uinit(ks[3], (16,), 1 * 9),
        "w1": uinit(ks[4], (16, 16, 3, 3), 16 * 9),
        "b1": uinit(ks[5], (16,), 16 * 9),
        "w2": uinit(ks[6], (16, 16, 3, 3), 16 * 9),
        "b2": uinit(ks[7], (16,), 16 * 9),
        "w3": uinit(ks[8], (1, 16, 3, 3), 16 * 9),
        "b3": uinit(ks[9], (1,), 16 * 9),
        "alpha": jnp.array([0.1], jnp.float32),
    }

    # 8-bit-image-like input (the module divides by 2**8): NCHW (B, 1, 16, 16)
    x = jax.random.uniform(ks[10], (2, 1, 16, 16), jnp.float32, 0.0, 256.0)

    out = jax.block_until_ready(variant_c_forward(x, params))
    ref = reference_forward(x, params)
    np.testing.assert_allclose(np.asarray(out), np.asarray(ref), rtol=1e-3, atol=1e-2)
    print("KERNEL_OK")
</pallas_src>

<mosaic_0001>
module attributes {stable_mosaic.version = 11 : i64} {
  func.func @variant_c_kernel(%arg0: i32, %arg1: memref<3xf32, #tpu.memory_space<smem>>, %arg2: memref<2x256xf32, #tpu.memory_space<vmem>>, %arg3: memref<256x64xf32, #tpu.memory_space<vmem>>, %arg4: memref<64x1024xf32, #tpu.memory_space<vmem>>, %arg5: memref<1x1024xf32, #tpu.memory_space<vmem>>, %arg6: memref<1024x1024xf32, #tpu.memory_space<vmem>>, %arg7: memref<1x1024xf32, #tpu.memory_space<vmem>>, %arg8: memref<1024x1024xf32, #tpu.memory_space<vmem>>, %arg9: memref<1x1024xf32, #tpu.memory_space<vmem>>, %arg10: memref<1024x64xf32, #tpu.memory_space<vmem>>, %arg11: memref<2x64xf32, #tpu.memory_space<vmem>>) attributes {dimension_semantics = [#tpu.dimension_semantics<parallel>], iteration_bounds = array<i64: 1>, scalar_prefetch = 0 : i64, scratch_operands = 0 : i64, tpu.core_type = #tpu.core_type<tc>, window_params = [{transform_indices = @transform_0, window_bounds = array<i64: 3>}, {transform_indices = @transform_1, window_bounds = array<i64: 2, 256>}, {pipeline_mode = #tpu.pipeline_mode<synchronous>, transform_indices = @transform_2, window_bounds = array<i64: 256, 64>}, {pipeline_mode = #tpu.pipeline_mode<synchronous>, transform_indices = @transform_3, window_bounds = array<i64: 64, 1024>}, {pipeline_mode = #tpu.pipeline_mode<synchronous>, transform_indices = @transform_4, window_bounds = array<i64: 1, 1024>}, {pipeline_mode = #tpu.pipeline_mode<synchronous>, transform_indices = @transform_5, window_bounds = array<i64: 1024, 1024>}, {pipeline_mode = #tpu.pipeline_mode<synchronous>, transform_indices = @transform_6, window_bounds = array<i64: 1, 1024>}, {pipeline_mode = #tpu.pipeline_mode<synchronous>, transform_indices = @transform_7, window_bounds = array<i64: 1024, 1024>}, {pipeline_mode = #tpu.pipeline_mode<synchronous>, transform_indices = @transform_8, window_bounds = array<i64: 1, 1024>}, {pipeline_mode = #tpu.pipeline_mode<synchronous>, transform_indices = @transform_9, window_bounds = array<i64: 1024, 64>}, {transform_indices = @transform_10, window_bounds = array<i64: 2, 64>}]} {
    %c0 = arith.constant 0 : index
    %0 = memref.load %arg1[%c0] : memref<3xf32, #tpu.memory_space<smem>>
    %c1 = arith.constant 1 : index
    %1 = memref.load %arg1[%c1] : memref<3xf32, #tpu.memory_space<smem>>
    %c2 = arith.constant 2 : index
    %2 = memref.load %arg1[%c2] : memref<3xf32, #tpu.memory_space<smem>>
    %c0_0 = arith.constant 0 : index
    %c0_1 = arith.constant 0 : index
    %3 = vector.load %arg2[%c0_0, %c0_1] : memref<2x256xf32, #tpu.memory_space<vmem>>, vector<2x256xf32>
    %c0_2 = arith.constant 0 : index
    %c0_3 = arith.constant 0 : index
    %4 = vector.load %arg3[%c0_2, %c0_3] : memref<256x64xf32, #tpu.memory_space<vmem>>, vector<256x64xf32>
    %cst = arith.constant dense<0.000000e+00> : vector<2x64xf32>
    %5 = tpu.matmul %3, %4, %cst {dimension_numbers = #tpu.dot_dimension_numbers<[1], [0], [0], [1], [0, 0, 1, 1], [], []>} : vector<2x256xf32>, vector<256x64xf32>, vector<2x64xf32> -> vector<2x64xf32>
    %6 = vector.broadcast %0 : f32 to vector<2x64xf32>
    %7 = arith.addf %5, %6 : vector<2x64xf32>
    %c0_4 = arith.constant 0 : index
    %c0_5 = arith.constant 0 : index
    %8 = vector.load %arg4[%c0_4, %c0_5] : memref<64x1024xf32, #tpu.memory_space<vmem>>, vector<64x1024xf32>
    %cst_6 = arith.constant dense<0.000000e+00> : vector<2x1024xf32>
    %9 = tpu.matmul %7, %8, %cst_6 {dimension_numbers = #tpu.dot_dimension_numbers<[1], [0], [0], [1], [0, 0, 1, 1], [], []>} : vector<2x64xf32>, vector<64x1024xf32>, vector<2x1024xf32> -> vector<2x1024xf32>
    %c0_7 = arith.constant 0 : index
    %c0_8 = arith.constant 0 : index
    %10 = vector.load %arg5[%c0_7, %c0_8] : memref<1x1024xf32, #tpu.memory_space<vmem>>, vector<1x1024xf32>
    %11 = vector.broadcast %10 : vector<1x1024xf32> to vector<2x1024xf32>
    %12 = arith.addf %9, %11 : vector<2x1024xf32>
    %13 = math.tanh %12 : vector<2x1024xf32>
    %c0_9 = arith.constant 0 : index
    %c0_10 = arith.constant 0 : index
    %14 = vector.load %arg6[%c0_9, %c0_10] : memref<1024x1024xf32, #tpu.memory_space<vmem>>, vector<1024x1024xf32>
    %cst_11 = arith.constant dense<0.000000e+00> : vector<2x1024xf32>
    %15 = tpu.matmul %13, %14, %cst_11 {dimension_numbers = #tpu.dot_dimension_numbers<[1], [0], [0], [1], [0, 0, 1, 1], [], []>} : vector<2x1024xf32>, vector<1024x1024xf32>, vector<2x1024xf32> -> vector<2x1024xf32>
    %c0_12 = arith.constant 0 : index
    %c0_13 = arith.constant 0 : index
    %16 = vector.load %arg7[%c0_12, %c0_13] : memref<1x1024xf32, #tpu.memory_space<vmem>>, vector<1x1024xf32>
    %17 = vector.broadcast %16 : vector<1x1024xf32> to vector<2x1024xf32>
    %18 = arith.addf %15, %17 : vector<2x1024xf32>
    %19 = math.tanh %18 : vector<2x1024xf32>
    %c0_14 = arith.constant 0 : index
    %c0_15 = arith.constant 0 : index
    %20 = vector.load %arg8[%c0_14, %c0_15] : memref<1024x1024xf32, #tpu.memory_space<vmem>>, vector<1024x1024xf32>
    %cst_16 = arith.constant dense<0.000000e+00> : vector<2x1024xf32>
    %21 = tpu.matmul %19, %20, %cst_16 {dimension_numbers = #tpu.dot_dimension_numbers<[1], [0], [0], [1], [0, 0, 1, 1], [], []>} : vector<2x1024xf32>, vector<1024x1024xf32>, vector<2x1024xf32> -> vector<2x1024xf32>
    %c0_17 = arith.constant 0 : index
    %c0_18 = arith.constant 0 : index
    %22 = vector.load %arg9[%c0_17, %c0_18] : memref<1x1024xf32, #tpu.memory_space<vmem>>, vector<1x1024xf32>
    %23 = vector.broadcast %22 : vector<1x1024xf32> to vector<2x1024xf32>
    %24 = arith.addf %21, %23 : vector<2x1024xf32>
    %25 = arith.addf %24, %18 : vector<2x1024xf32>
    %c0_19 = arith.constant 0 : index
    %c0_20 = arith.constant 0 : index
    %26 = vector.load %arg10[%c0_19, %c0_20] : memref<1024x64xf32, #tpu.memory_space<vmem>>, vector<1024x64xf32>
    %cst_21 = arith.constant dense<0.000000e+00> : vector<2x64xf32>
    %27 = tpu.matmul %25, %26, %cst_21 {dimension_numbers = #tpu.dot_dimension_numbers<[1], [0], [0], [1], [0, 0, 1, 1], [], []>} : vector<2x1024xf32>, vector<1024x64xf32>, vector<2x64xf32> -> vector<2x64xf32>
    %28 = vector.broadcast %1 : f32 to vector<2x64xf32>
    %29 = arith.addf %27, %28 : vector<2x64xf32>
    %30 = arith.addf %29, %7 : vector<2x64xf32>
    %31 = vector.broadcast %2 : f32 to vector<2x64xf32>
    %32 = arith.mulf %30, %31 : vector<2x64xf32>
    %c0_22 = arith.constant 0 : index
    %c0_23 = arith.constant 0 : index
    %33 = vector.load %arg11[%c0_22, %c0_23] : memref<2x64xf32, #tpu.memory_space<vmem>>, vector<2x64xf32>
    tpu.vector_store %arg11[%c0_22, %c0_23], %32 {strides = array<i32>} : memref<2x64xf32, #tpu.memory_space<vmem>>, vector<2x64xf32>,
    return
  }
  func.func @transform_0(%arg0: i32) -> i32 {
    %c0_i32 = arith.constant 0 : i32
    %c0_i32_0 = arith.constant 0 : i32
    return %c0_i32 : i32
  }
  func.func @transform_1(%arg0: i32) -> (i32, i32) {
    %c0_i32 = arith.constant 0 : i32
    %c0_i32_0 = arith.constant 0 : i32
    return %arg0, %c0_i32 : i32, i32
  }
  func.func @transform_2(%arg0: i32) -> (i32, i32) {
    %c0_i32 = arith.constant 0 : i32
    %c0_i32_0 = arith.constant 0 : i32
    %c0_i32_1 = arith.constant 0 : i32
    return %c0_i32, %c0_i32_0 : i32, i32
  }
  func.func @transform_3(%arg0: i32) -> (i32, i32) {
    %c0_i32 = arith.constant 0 : i32
    %c0_i32_0 = arith.constant 0 : i32
    %c0_i32_1 = arith.constant 0 : i32
    return %c0_i32, %c0_i32_0 : i32, i32
  }
  func.func @transform_4(%arg0: i32) -> (i32, i32) {
    %c0_i32 = arith.constant 0 : i32
    %c0_i32_0 = arith.constant 0 : i32
    %c0_i32_1 = arith.constant 0 : i32
    return %c0_i32, %c0_i32_0 : i32, i32
  }
  func.func @transform_5(%arg0: i32) -> (i32, i32) {
    %c0_i32 = arith.constant 0 : i32
    %c0_i32_0 = arith.constant 0 : i32
    %c0_i32_1 = arith.constant 0 : i32
    return %c0_i32, %c0_i32_0 : i32, i32
  }
  func.func @transform_6(%arg0: i32) -> (i32, i32) {
    %c0_i32 = arith.constant 0 : i32
    %c0_i32_0 = arith.constant 0 : i32
    %c0_i32_1 = arith.constant 0 : i32
    return %c0_i32, %c0_i32_0 : i32, i32
  }
  func.func @transform_7(%arg0: i32) -> (i32, i32) {
    %c0_i32 = arith.constant 0 : i32
    %c0_i32_0 = arith.constant 0 : i32
    %c0_i32_1 = arith.constant 0 : i32
    return %c0_i32, %c0_i32_0 : i32, i32
  }
  func.func @transform_8(%arg0: i32) -> (i32, i32) {
    %c0_i32 = arith.constant 0 : i32
    %c0_i32_0 = arith.constant 0 : i32
    %c0_i32_1 = arith.constant 0 : i32
    return %c0_i32, %c0_i32_0 : i32, i32
  }
  func.func @transform_9(%arg0: i32) -> (i32, i32) {
    %c0_i32 = arith.constant 0 : i32
    %c0_i32_0 = arith.constant 0 : i32
    %c0_i32_1 = arith.constant 0 : i32
    return %c0_i32, %c0_i32_0 : i32, i32
  }
  func.func @transform_10(%arg0: i32) -> (i32, i32) {
    %c0_i32 = arith.constant 0 : i32
    %c0_i32_0 = arith.constant 0 : i32
    return %arg0, %c0_i32 : i32, i32
  }
}

</mosaic_0001>

<llo_original>
// kernel: squeeze.1
$region0: #{squeeze.1}
  %s0 = inlined_call_operand.vmem [shape: f32[2,1,16,16], index: 0, kind: input, shape index: {}]
  %s1 = inlined_call_operand.vmem [shape: f32[2,8,2,8,2], index: 1, kind: output, shape index: {}]
  %v2 = vld [vmem:[%s0] sm:$0xff]
  %vm3 = vcmask 15360
  %4 = vst.msk [vmem:[%s1] ss:$8 sm:$0xf] %vm3, %v2
  %5 = vst.msk [vmem:[%s1] ss:$8 sm:$0xf0] %vm3, %v2
  %s6 = scalar_lea.vmem %s0, 8
  %v7 = vld [vmem:[%s6] sm:$0xff]
  %vm8 = vcmask 15360
  %s9 = scalar_lea.vmem %s1, 64
  %10 = vst.msk [vmem:[%s9] ss:$8 sm:$0xf] %vm8, %v7
  %s11 = scalar_lea.vmem %s1, 64
  %12 = vst.msk [vmem:[%s11] ss:$8 sm:$0xf0] %vm8, %v7
  %s13 = scalar_lea.vmem %s0, 16
  %v14 = vld [vmem:[%s13] sm:$0xff]
  %vm15 = vcmask 15360
  %s16 = scalar_lea.vmem %s1, 128
  %17 = vst.msk [vmem:[%s16] ss:$8 sm:$0xf] %vm15, %v14
  %s18 = scalar_lea.vmem %s1, 128
  %19 = vst.msk [vmem:[%s18] ss:$8 sm:$0xf0] %vm15, %v14
  %s20 = scalar_lea.vmem %s0, 24
  %v21 = vld [vmem:[%s20] sm:$0xff]
  %vm22 = vcmask 15360
  %s23 = scalar_lea.vmem %s1, 192
  %24 = vst.msk [vmem:[%s23] ss:$8 sm:$0xf] %vm22, %v21
  %s25 = scalar_lea.vmem %s1, 192
  %26 = vst.msk [vmem:[%s25] ss:$8 sm:$0xf0] %vm22, %v21
  %v27 = vld [vmem:[%s0] sm:$0xff]
  %28 = vrot.lane.b32.xlu0 %v27, 126
  %v29 = vpop.permute.xlu0 %28
  %vm30 = vcmask 15360
  %s31 = scalar_lea.vmem %s1, 1
  %32 = vst.msk [vmem:[%s31] ss:$8 sm:$0xf] %vm30, %v29
  %s33 = scalar_lea.vmem %s1, 1
  %34 = vst.msk [vmem:[%s33] ss:$8 sm:$0xf0] %vm30, %v29
  %s35 = scalar_lea.vmem %s0, 8
  %v36 = vld [vmem:[%s35] sm:$0xff]
  %37 = vrot.lane.b32.xlu0 %v36, 126
  %v38 = vpop.permute.xlu0 %37
  %vm39 = vcmask 15360
  %s40 = scalar_lea.vmem %s1, 65
  %41 = vst.msk [vmem:[%s40] ss:$8 sm:$0xf] %vm39, %v38
  %s42 = scalar_lea.vmem %s1, 65
  %43 = vst.msk [vmem:[%s42] ss:$8 sm:$0xf0] %vm39, %v38
  %s44 = scalar_lea.vmem %s0, 16
  %v45 = vld [vmem:[%s44] sm:$0xff]
  %46 = vrot.lane.b32.xlu0 %v45, 126
  %v47 = vpop.permute.xlu0 %46
  %vm48 = vcmask 15360
  %s49 = scalar_lea.vmem %s1, 129
  %50 = vst.msk [vmem:[%s49] ss:$8 sm:$0xf] %vm48, %v47
  %s51 = scalar_lea.vmem %s1, 129
  %52 = vst.msk [vmem:[%s51] ss:$8 sm:$0xf0] %vm48, %v47
  %s53 = scalar_lea.vmem %s0, 24
  %v54 = vld [vmem:[%s53] sm:$0xff]
  %55 = vrot.lane.b32.xlu0 %v54, 126
  %v56 = vpop.permute.xlu0 %55
  %vm57 = vcmask 15360
  %s58 = scalar_lea.vmem %s1, 193
  %59 = vst.msk [vmem:[%s58] ss:$8 sm:$0xf] %vm57, %v56
  %s60 = scalar_lea.vmem %s1, 193
  %61 = vst.msk [vmem:[%s60] ss:$8 sm:$0xf0] %vm57, %v56
  %v62 = vld [vmem:[%s0] sm:$0xff]
  %63 = vrot.lane.b32.xlu0 %v62, 124
  %v64 = vpop.permute.xlu0 %63
  %vm65 = vcmask 15360
  %s66 = scalar_lea.vmem %s1, 2
  %67 = vst.msk [vmem:[%s66] ss:$8 sm:$0xf] %vm65, %v64
  %s68 = scalar_lea.vmem %s1, 2
  %69 = vst.msk [vmem:[%s68] ss:$8 sm:$0xf0] %vm65, %v64
  %s70 = scalar_lea.vmem %s0, 8
  %v71 = vld [vmem:[%s70] sm:$0xff]
  %72 = vrot.lane.b32.xlu0 %v71, 124
  %v73 = vpop.permute.xlu0 %72
  %vm74 = vcmask 15360
  %s75 = scalar_lea.vmem %s1, 66
  %76 = vst.msk [vmem:[%s75] ss:$8 sm:$0xf] %vm74, %v73
  %s77 = scalar_lea.vmem %s1, 66
  %78 = vst.msk [vmem:[%s77] ss:$8 sm:$0xf0] %vm74, %v73
  %s79 = scalar_lea.vmem %s0, 16
  %v80 = vld [vmem:[%s79] sm:$0xff]
  %81 = vrot.lane.b32.xlu0 %v80, 124
  %v82 = vpop.permute.xlu0 %81
  %vm83 = vcmask 15360
  %s84 = scalar_lea.vmem %s1, 130
  %85 = vst.msk [vmem:[%s84] ss:$8 sm:$0xf] %vm83, %v82
  %s86 = scalar_lea.vmem %s1, 130
  %87 = vst.msk [vmem:[%s86] ss:$8 sm:$0xf0] %vm83, %v82
  %s88 = scalar_lea.vmem %s0, 24
  %v89 = vld [vmem:[%s88] sm:$0xff]
  %90 = vrot.lane.b32.xlu0 %v89, 124
  %v91 = vpop.permute.xlu0 %90
  %vm92 = vcmask 15360
  %s93 = scalar_lea.vmem %s1, 194
  %94 = vst.msk [vmem:[%s93] ss:$8 sm:$0xf] %vm92, %v91
  %s95 = scalar_lea.vmem %s1, 194
  %96 = vst.msk [vmem:[%s95] ss:$8 sm:$0xf0] %vm92, %v91
  %v97 = vld [vmem:[%s0] sm:$0xff]
  %98 = vrot.lane.b32.xlu0 %v97, 122
  %v99 = vpop.permute.xlu0 %98
  %vm100 = vcmask 15360
  %s101 = scalar_lea.vmem %s1, 3
  %102 = vst.msk [vmem:[%s101] ss:$8 sm:$0xf] %vm100, %v99
  %s103 = scalar_lea.vmem %s1, 3
  %104 = vst.msk [vmem:[%s103] ss:$8 sm:$0xf0] %vm100, %v99
  %s105 = scalar_lea.vmem %s0, 8
  %v106 = vld [vmem:[%s105] sm:$0xff]
  %107 = vrot.lane.b32.xlu0 %v106, 122
  %v108 = vpop.permute.xlu0 %107
  %vm109 = vcmask 15360
  %s110 = scalar_lea.vmem %s1, 67
  %111 = vst.msk [vmem:[%s110] ss:$8 sm:$0xf] %vm109, %v108
  %s112 = scalar_lea.vmem %s1, 67
  %113 = vst.msk [vmem:[%s112] ss:$8 sm:$0xf0] %vm109, %v108
  %s114 = scalar_lea.vmem %s0, 16
  %v115 = vld [vmem:[%s114] sm:$0xff]
  %116 = vrot.lane.b32.xlu0 %v115, 122
  %v117 = vpop.permute.xlu0 %116
  %vm118 = vcmask 15360
  %s119 = scalar_lea.vmem %s1, 131
  %120 = vst.msk [vmem:[%s119] ss:$8 sm:$0xf] %vm118, %v117
  %s121 = scalar_lea.vmem %s1, 131
  %122 = vst.msk [vmem:[%s121] ss:$8 sm:$0xf0] %vm118, %v117
  %s123 = scalar_lea.vmem %s0, 24
  %v124 = vld [vmem:[%s123] sm:$0xff]
  %125 = vrot.lane.b32.xlu0 %v124, 122
  %v126 = vpop.permute.xlu0 %125
  %vm127 = vcmask 15360
  %s128 = scalar_lea.vmem %s1, 195
  %129 = vst.msk [vmem:[%s128] ss:$8 sm:$0xf] %vm127, %v126
  %s130 = scalar_lea.vmem %s1, 195
  %131 = vst.msk [vmem:[%s130] ss:$8 sm:$0xf0] %vm127, %v126
  %v132 = vld [vmem:[%s0] sm:$0xff]
  %133 = vrot.lane.b32.xlu0 %v132, 120
  %v134 = vpop.permute.xlu0 %133
  %vm135 = vcmask 15360
  %s136 = scalar_lea.vmem %s1, 4
  %137 = vst.msk [vmem:[%s136] ss:$8 sm:$0xf] %vm135, %v134
  %s138 = scalar_lea.vmem %s1, 4
  %139 = vst.msk [vmem:[%s138] ss:$8 sm:$0xf0] %vm135, %v134
  %s140 = scalar_lea.vmem %s0, 8
  %v141 = vld [vmem:[%s140] sm:$0xff]
  %142 = vrot.lane.b32.xlu0 %v141, 120
  %v143 = vpop.permute.xlu0 %142
  %vm144 = vcmask 15360
  %s145 = scalar_lea.vmem %s1, 68
  %146 = vst.msk [vmem:[%s145] ss:$8 sm:$0xf] %vm144, %v143
  %s147 = scalar_lea.vmem %s1, 68
  %148 = vst.msk [vmem:[%s147] ss:$8 sm:$0xf0] %vm144, %v143
  %s149 = scalar_lea.vmem %s0, 16
  %v150 = vld [vmem:[%s149] sm:$0xff]
  %151 = vrot.lane.b32.xlu0 %v150, 120
  %v152 = vpop.permute.xlu0 %151
  %vm153 = vcmask 15360
  %s154 = scalar_lea.vmem %s1, 132
  %155 = vst.msk [vmem:[%s154] ss:$8 sm:$0xf] %vm153, %v152
  %s156 = scalar_lea.vmem %s1, 132
  %157 = vst.msk [vmem:[%s156] ss:$8 sm:$0xf0] %vm153, %v152
  %s158 = scalar_lea.vmem %s0, 24
  %v159 = vld [vmem:[%s158] sm:$0xff]
  %160 = vrot.lane.b32.xlu0 %v159, 120
  %v161 = vpop.permute.xlu0 %160
  %vm162 = vcmask 15360
  %s163 = scalar_lea.vmem %s1, 196
  %164 = vst.msk [vmem:[%s163] ss:$8 sm:$0xf] %vm162, %v161
  %s165 = scalar_lea.vmem %s1, 196
  %166 = vst.msk [vmem:[%s165] ss:$8 sm:$0xf0] %vm162, %v161
  %v167 = vld [vmem:[%s0] sm:$0xff]
  %168 = vrot.lane.b32.xlu0 %v167, 118
  %v169 = vpop.permute.xlu0 %168
  %vm170 = vcmask 15360
  %s171 = scalar_lea.vmem %s1, 5
  %172 = vst.msk [vmem:[%s171] ss:$8 sm:$0xf] %vm170, %v169
  %s173 = scalar_lea.vmem %s1, 5
  %174 = vst.msk [vmem:[%s173] ss:$8 sm:$0xf0] %vm170, %v169
  %s175 = scalar_lea.vmem %s0, 8
  %v176 = vld [vmem:[%s175] sm:$0xff]
  %177 = vrot.lane.b32.xlu0 %v176, 118
  %v178 = vpop.permute.xlu0 %177
  %vm179 = vcmask 15360
  %s180 = scalar_lea.vmem %s1, 69
  %181 = vst.msk [vmem:[%s180] ss:$8 sm:$0xf] %vm179, %v178
  %s182 = scalar_lea.vmem %s1, 69
  %183 = vst.msk [vmem:[%s182] ss:$8 sm:$0xf0] %vm179, %v178
  %s184 = scalar_lea.vmem %s0, 16
  %v185 = vld [vmem:[%s184] sm:$0xff]
  %186 = vrot.lane.b32.xlu0 %v185, 118
  %v187 = vpop.permute.xlu0 %186
  %vm188 = vcmask 15360
  %s189 = scalar_lea.vmem %s1, 133
  %190 = vst.msk [vmem:[%s189] ss:$8 sm:$0xf] %vm188, %v187
  %s191 = scalar_lea.vmem %s1, 133
  %192 = vst.msk [vmem:[%s191] ss:$8 sm:$0xf0] %vm188, %v187
  %s193 = scalar_lea.vmem %s0, 24
  %v194 = vld [vmem:[%s193] sm:$0xff]
  %195 = vrot.lane.b32.xlu0 %v194, 118
  %v196 = vpop.permute.xlu0 %195
  %vm197 = vcmask 15360
  %s198 = scalar_lea.vmem %s1, 197
  %199 = vst.msk [vmem:[%s198] ss:$8 sm:$0xf] %vm197, %v196
  %s200 = scalar_lea.vmem %s1, 197
  %201 = vst.msk [vmem:[%s200] ss:$8 sm:$0xf0] %vm197, %v196
  %v202 = vld [vmem:[%s0] sm:$0xff]
  %203 = vrot.lane.b32.xlu0 %v202, 116
  %v204 = vpop.permute.xlu0 %203
  %vm205 = vcmask 15360
  %s206 = scalar_lea.vmem %s1, 6
  %207 = vst.msk [vmem:[%s206] ss:$8 sm:$0xf] %vm205, %v204
  %s208 = scalar_lea.vmem %s1, 6
  %209 = vst.msk [vmem:[%s208] ss:$8 sm:$0xf0] %vm205, %v204
  %s210 = scalar_lea.vmem %s0, 8
  %v211 = vld [vmem:[%s210] sm:$0xff]
  %212 = vrot.lane.b32.xlu0 %v211, 116
  %v213 = vpop.permute.xlu0 %212
  %vm214 = vcmask 15360
  %s215 = scalar_lea.vmem %s1, 70
  %216 = vst.msk [vmem:[%s215] ss:$8 sm:$0xf] %vm214, %v213
  %s217 = scalar_lea.vmem %s1, 70
  %218 = vst.msk [vmem:[%s217] ss:$8 sm:$0xf0] %vm214, %v213
  %s219 = scalar_lea.vmem %s0, 16
  %v220 = vld [vmem:[%s219] sm:$0xff]
  %221 = vrot.lane.b32.xlu0 %v220, 116
  %v222 = vpop.permute.xlu0 %221
  %vm223 = vcmask 15360
  %s224 = scalar_lea.vmem %s1, 134
  %225 = vst.msk [vmem:[%s224] ss:$8 sm:$0xf] %vm223, %v222
  %s226 = scalar_lea.vmem %s1, 134
  %227 = vst.msk [vmem:[%s226] ss:$8 sm:$0xf0] %vm223, %v222
  %s228 = scalar_lea.vmem %s0, 24
  %v229 = vld [vmem:[%s228] sm:$0xff]
  %230 = vrot.lane.b32.xlu0 %v229, 116
  %v231 = vpop.permute.xlu0 %230
  %vm232 = vcmask 15360
  %s233 = scalar_lea.vmem %s1, 198
  %234 = vst.msk [vmem:[%s233] ss:$8 sm:$0xf] %vm232, %v231
  %s235 = scalar_lea.vmem %s1, 198
  %236 = vst.msk [vmem:[%s235] ss:$8 sm:$0xf0] %vm232, %v231
  %v237 = vld [vmem:[%s0] sm:$0xff]
  %238 = vrot.lane.b32.xlu0 %v237, 114
  %v239 = vpop.permute.xlu0 %238
  %vm240 = vcmask 15360
  %s241 = scalar_lea.vmem %s1, 7
  %242 = vst.msk [vmem:[%s241] ss:$8 sm:$0xf] %vm240, %v239
  %s243 = scalar_lea.vmem %s1, 7
  %244 = vst.msk [vmem:[%s243] ss:$8 sm:$0xf0] %vm240, %v239
  %s245 = scalar_lea.vmem %s0, 8
  %v246 = vld [vmem:[%s245] sm:$0xff]
  %247 = vrot.lane.b32.xlu0 %v246, 114
  %v248 = vpop.permute.xlu0 %247
  %vm249 = vcmask 15360
  %s250 = scalar_lea.vmem %s1, 71
  %251 = vst.msk [vmem:[%s250] ss:$8 sm:$0xf] %vm249, %v248
  %s252 = scalar_lea.vmem %s1, 71
  %253 = vst.msk [vmem:[%s252] ss:$8 sm:$0xf0] %vm249, %v248
  %s254 = scalar_lea.vmem %s0, 16
  %v255 = vld [vmem:[%s254] sm:$0xff]
  %256 = vrot.lane.b32.xlu0 %v255, 114
  %v257 = vpop.permute.xlu0 %256
  %vm258 = vcmask 15360
  %s259 = scalar_lea.vmem %s1, 135
  %260 = vst.msk [vmem:[%s259] ss:$8 sm:$0xf] %vm258, %v257
  %s261 = scalar_lea.vmem %s1, 135
  %262 = vst.msk [vmem:[%s261] ss:$8 sm:$0xf0] %vm258, %v257
  %s263 = scalar_lea.vmem %s0, 24
  %v264 = vld [vmem:[%s263] sm:$0xff]
  %265 = vrot.lane.b32.xlu0 %v264, 114
  %v266 = vpop.permute.xlu0 %265
  %vm267 = vcmask 15360
  %s268 = scalar_lea.vmem %s1, 199
  %269 = vst.msk [vmem:[%s268] ss:$8 sm:$0xf] %vm267, %v266
  %s270 = scalar_lea.vmem %s1, 199
  %271 = vst.msk [vmem:[%s270] ss:$8 sm:$0xf0] %vm267, %v266

// kernel: tile.18
$region0: #{tile.18}
  #allocation0 [shape = 's32[1]{0}', space=sflag, size = 0x4, scoped, tag = 'scoped memory for tile.18']
  %s0 = inlined_call_operand.vmem [shape: f32[16], index: 0, kind: input, shape index: {}]
  %s1 = inlined_call_operand.vmem [shape: f32[64,16], index: 1, kind: output, shape index: {}]
  // Predicated region
  $region2: #{tile.18} parent=0 // pred_check
    _
  $region3: #{tile.18} parent=0 // pred_check_branch
    %3 = sbr.rel (0) target = $region5
  $region4: #{tile.18} parent=0 // pred_region
    _
  $region5: #{tile.18} parent=0 // pred_fallthru
    _
  %v4 = vld [vmem:[%s0] ss:$0 sm:$0xff]
  %5 = vst [vmem:[%s1] sm:$0xff] %v4
  %s6 = scalar_lea.vmem %s1, 8
  %7 = vst [vmem:[%s6] sm:$0xff] %v4
  %s8 = scalar_lea.vmem %s1, 16
  %9 = vst [vmem:[%s8] sm:$0xff] %v4
  %s10 = scalar_lea.vmem %s1, 24
  %11 = vst [vmem:[%s10] sm:$0xff] %v4
  %s12 = scalar_lea.vmem %s1, 32
  %13 = vst [vmem:[%s12] sm:$0xff] %v4
  %s14 = scalar_lea.vmem %s1, 40
  %15 = vst [vmem:[%s14] sm:$0xff] %v4
  %s16 = scalar_lea.vmem %s1, 48
  %17 = vst [vmem:[%s16] sm:$0xff] %v4
  %s18 = scalar_lea.vmem %s1, 56
  %19 = vst [vmem:[%s18] sm:$0xff] %v4

// kernel: tile.19
$region0: #{tile.19}
  %s0 = inlined_call_operand.vmem [shape: f32[64,16], index: 0, kind: input, shape index: {}]
  %s1 = inlined_call_operand.vmem [shape: f32[1,1024], index: 1, kind: output, shape index: {}]
  $region1: #{tile.19} parent=0
    #allocation0 [shape = 'u8[32768]{0}', space=vmem, size = 0x8000, scoped, tag = 'scoped mem for output reshape']
    %v2 = vld [vmem:[%s0] ss:$8 sm:$0xf]
    %v3 = vld [vmem:[%s0] ss:$8 sm:$0xf0]
    %vm4 = vcmask 1047556
    %v5 = vsel %vm4, %v3, %v2
    %vm6 = vcmask 130048
    %7 = vst.msk [vmem:[#allocation0] ss:$8 sm:$0xf] %vm6, %v5
    %8 = vst.msk [vmem:[#allocation0] ss:$8 sm:$0xf0] %vm6, %v5
    %s9 = scalar_lea.vmem %s0, 7
    %v10 = vld [vmem:[%s9] ss:$8 sm:$0xf]
    %s11 = scalar_lea.vmem %s0, 7
    %v12 = vld [vmem:[%s11] ss:$8 sm:$0xf0]
    %vm13 = vcmask 1047556
    %v14 = vsel %vm13, %v12, %v10
    %15 = vrot.lane.b32.xlu0 %v14, 112
    %v16 = vpop.permute.xlu0 %15
    %vm17 = vcmask 1048448
    %18 = vst.msk [vmem:[#allocation0] ss:$8 sm:$0xf] %vm17, %v16
    %19 = vst.msk [vmem:[#allocation0] ss:$8 sm:$0xf0] %vm17, %v16
    %s20 = scalar_lea.vmem %s0, 6
    %v21 = vld [vmem:[%s20] ss:$8 sm:$0xf]
    %s22 = scalar_lea.vmem %s0, 6
    %v23 = vld [vmem:[%s22] ss:$8 sm:$0xf0]
    %vm24 = vcmask 1047556
    %v25 = vsel %vm24, %v23, %v21
    %26 = vrot.lane.b32.xlu0 %v25, 96
    %v27 = vpop.permute.xlu0 %26
    %vm28 = vcmask 917248
    %29 = vst.msk [vmem:[#allocation0] ss:$8 sm:$0xf] %vm28, %v27
    %30 = vst.msk [vmem:[#allocation0] ss:$8 sm:$0xf0] %vm28, %v27
    %s31 = scalar_lea.vmem %s0, 5
    %v32 = vld [vmem:[%s31] ss:$8 sm:$0xf]
    %s33 = scalar_lea.vmem %s0, 5
    %v34 = vld [vmem:[%s33] ss:$8 sm:$0xf0]
    %vm35 = vcmask 1047556
    %v36 = vsel %vm35, %v34, %v32
    %37 = vrot.lane.b32.xlu0 %v36, 80
    %v38 = vpop.permute.xlu0 %37
    %vm39 = vcmask 786048
    %40 = vst.msk [vmem:[#allocation0] ss:$8 sm:$0xf] %vm39, %v38
    %41 = vst.msk [vmem:[#allocation0] ss:$8 sm:$0xf0] %vm39, %v38
    %s42 = scalar_lea.vmem %s0, 4
    %v43 = vld [vmem:[%s42] ss:$8 sm:$0xf]
    %s44 = scalar_lea.vmem %s0, 4
    %v45 = vld [vmem:[%s44] ss:$8 sm:$0xf0]
    %vm46 = vcmask 1047556
    %v47 = vsel %vm46, %v45, %v43
    %48 = vrot.lane.b32.xlu0 %v47, 64
    %v49 = vpop.permute.xlu0 %48
    %vm50 = vcmask 654848
    %51 = vst.msk [vmem:[#allocation0] ss:$8 sm:$0xf] %vm50, %v49
    %52 = vst.msk [vmem:[#allocation0] ss:$8 sm:$0xf0] %vm50, %v49
    %s53 = scalar_lea.vmem %s0, 3
    %v54 = vld [vmem:[%s53] ss:$8 sm:$0xf]
    %s55 = scalar_lea.vmem %s0, 3
    %v56 = vld [vmem:[%s55] ss:$8 sm:$0xf0]
    %vm57 = vcmask 1047556
    %v58 = vsel %vm57, %v56, %v54
    %59 = vrot.lane.b32.xlu0 %v58, 48
    %v60 = vpop.permute.xlu0 %59
    %vm61 = vcmask 523648
    %62 = vst.msk [vmem:[#allocation0] ss:$8 sm:$0xf] %vm61, %v60
    %63 = vst.msk [vmem:[#allocation0] ss:$8 sm:$0xf0] %vm61, %v60
    %s64 = scalar_lea.vmem %s0, 2
    %v65 = vld [vmem:[%s64] ss:$8 sm:$0xf]
    %s66 = scalar_lea.vmem %s0, 2
    %v67 = vld [vmem:[%s66] ss:$8 sm:$0xf0]
    %vm68 = vcmask 1047556
    %v69 = vsel %vm68, %v67, %v65
    %70 = vrot.lane.b32.xlu0 %v69, 32
    %v71 = vpop.permute.xlu0 %70
    %vm72 = vcmask 392448
    %73 = vst.msk [vmem:[#allocation0] ss:$8 sm:$0xf] %vm72, %v71
    %74 = vst.msk [vmem:[#allocation0] ss:$8 sm:$0xf0] %vm72, %v71
    %s75 = scalar_lea.vmem %s0, 1
    %v76 = vld [vmem:[%s75] ss:$8 sm:$0xf]
    %s77 = scalar_lea.vmem %s0, 1
    %v78 = vld [vmem:[%s77] ss:$8 sm:$0xf0]
    %vm79 = vcmask 1047556
    %v80 = vsel %vm79, %v78, %v76
    %81 = vrot.lane.b32.xlu0 %v80, 16
    %v82 = vpop.permute.xlu0 %81
    %vm83 = vcmask 261248
    %84 = vst.msk [vmem:[#allocation0] ss:$8 sm:$0xf] %vm83, %v82
    %85 = vst.msk [vmem:[#allocation0] ss:$8 sm:$0xf0] %vm83, %v82
    %s87 = ssub.s32 2, 1
    %v88 = vld [vmem:[#allocation0] sm:%s87]
    %s90 = ssub.s32 2, 1
    %91 = vst [vmem:[%s1] sm:%s90] %v88
    %s92 = scalar_lea.vmem [#allocation0], 8
    %v93 = vld [vmem:[%s92] sm:%s87]
    %s95 = ssub.s32 2, 1
    %s96 = scalar_lea.vmem %s1, 1
    %97 = vst [vmem:[%s96] sm:%s95] %v93
    %s98 = scalar_lea.vmem [#allocation0], 16
    %v99 = vld [vmem:[%s98] sm:%s87]
    %s101 = ssub.s32 2, 1
    %s102 = scalar_lea.vmem %s1, 2
    %103 = vst [vmem:[%s102] sm:%s101] %v99
    %s104 = scalar_lea.vmem [#allocation0], 24
    %v105 = vld [vmem:[%s104] sm:%s87]
    %s107 = ssub.s32 2, 1
    %s108 = scalar_lea.vmem %s1, 3
    %109 = vst [vmem:[%s108] sm:%s107] %v105
    %s110 = scalar_lea.vmem [#allocation0], 32
    %v111 = vld [vmem:[%s110] sm:%s87]
    %s113 = ssub.s32 2, 1
    %s114 = scalar_lea.vmem %s1, 4
    %115 = vst [vmem:[%s114] sm:%s113] %v111
    %s116 = scalar_lea.vmem [#allocation0], 40
    %v117 = vld [vmem:[%s116] sm:%s87]
    %s119 = ssub.s32 2, 1
    %s120 = scalar_lea.vmem %s1, 5
    %121 = vst [vmem:[%s120] sm:%s119] %v117
    %s122 = scalar_lea.vmem [#allocation0], 48
    %v123 = vld [vmem:[%s122] sm:%s87]
    %s125 = ssub.s32 2, 1
    %s126 = scalar_lea.vmem %s1, 6
    %127 = vst [vmem:[%s126] sm:%s125] %v123
    %s128 = scalar_lea.vmem [#allocation0], 56
    %v129 = vld [vmem:[%s128] sm:%s87]
    %s131 = ssub.s32 2, 1
    %s132 = scalar_lea.vmem %s1, 7
    %133 = vst [vmem:[%s132] sm:%s131] %v129

// kernel: variant_c_forward.1
$region0: #{variant_c_forward.1}
  #allocation0 [shape = 'u32[]', space=smem, size = 0x4, offset = 0x4, fixed_abs, tag = 'smem constant byte address 0x4 - core index']
  #allocation1 [shape = 'u32[72,128]{1,0:T(1,128)}', space=vmem, size = 0x9000, scoped, tag = 'internal scratch']
  %s0 = inlined_call_operand.vmem [shape: f32[3], index: 0, kind: input, shape index: {}]
  %s1 = inlined_call_operand.vmem [shape: f32[2,256], index: 1, kind: input, shape index: {}]
  %s2 = inlined_call_operand.vmem [shape: f32[256,64], index: 2, kind: input, shape index: {}]
  %s3 = inlined_call_operand.vmem [shape: f32[64,1024], index: 3, kind: input, shape index: {}]
  %s4 = inlined_call_operand.vmem [shape: f32[1,1024], index: 4, kind: input, shape index: {}]
  %s5 = inlined_call_operand.vmem [shape: f32[1024,1024], index: 5, kind: input, shape index: {}]
  %s6 = inlined_call_operand.vmem [shape: f32[1,1024], index: 6, kind: input, shape index: {}]
  %s7 = inlined_call_operand.vmem [shape: f32[1024,1024], index: 7, kind: input, shape index: {}]
  %s8 = inlined_call_operand.vmem [shape: f32[1,1024], index: 8, kind: input, shape index: {}]
  %s9 = inlined_call_operand.vmem [shape: f32[1024,64], index: 9, kind: input, shape index: {}]
  %s10 = inlined_call_operand.vmem [shape: f32[2,64], index: 10, kind: output, shape index: {}]
  %s11 = sld [smem:[#allocation0]]
  $region54: #{variant_c_forward.1} parent=0
    _
  %s13 = ssub.s32 1, %s11
  %s14 = scalar_select 0, %s13, %s11
  $region1: #{variant_c_forward.1} parent=0
    #allocation2 [shape = 'u8[512]{0}', space=smem, size = 0x200, scoped, tag = 'input window, operand 0, single buffered']
    #allocation3 [shape = 's32[1]{0}', space=sflag, size = 0x4, scoped, tag = 'scoped memory for variant_c_forward.1']
    %15 = vsyncpa [#allocation3], 0
    // Predicated region
    $region2: #{variant_c_forward.1} parent=1 // pred_check
      _
    $region3: #{variant_c_forward.1} parent=1 // pred_check_branch
      %17 = sbr.rel (0) target = $region5
    $region4: #{variant_c_forward.1} parent=1 // pred_region
      %19 = vsyncadd [#allocation3], 0
      %s21 = sshll.u32 %s0, 4
      %s22 = int_to_ptr.vmem [resolvable:$true] %s21
      %24 = dma.vmem_to_smem %s22, 16, [#allocation2], [#allocation3]
    $region5: #{variant_c_forward.1} parent=1 // pred_fallthru
      _
    // Predicated region
    $region6: #{variant_c_forward.1} parent=1 // pred_check
      _
    $region7: #{variant_c_forward.1} parent=1 // pred_check_branch
      %26 = sbr.rel (0) target = $region9
    $region8: #{variant_c_forward.1} parent=1 // pred_region
      _
    $region9: #{variant_c_forward.1} parent=1 // pred_fallthru
      _
    // Predicated region
    $region10: #{variant_c_forward.1} parent=1 // pred_check
      _
    $region11: #{variant_c_forward.1} parent=1 // pred_check_branch
      %28 = sbr.rel (0) target = $region13
    $region12: #{variant_c_forward.1} parent=1 // pred_region
      _
    $region13: #{variant_c_forward.1} parent=1 // pred_fallthru
      _
    // Predicated region
    $region14: #{variant_c_forward.1} parent=1 // pred_check
      _
    $region15: #{variant_c_forward.1} parent=1 // pred_check_branch
      %30 = sbr.rel (0) target = $region17
    $region16: #{variant_c_forward.1} parent=1 // pred_region
      _
    $region17: #{variant_c_forward.1} parent=1 // pred_fallthru
      _
    // Predicated region
    $region18: #{variant_c_forward.1} parent=1 // pred_check
      _
    $region19: #{variant_c_forward.1} parent=1 // pred_check_branch
      %32 = sbr.rel (0) target = $region21
    $region20: #{variant_c_forward.1} parent=1 // pred_region
      _
    $region21: #{variant_c_forward.1} parent=1 // pred_fallthru
      _
    // Predicated region
    $region22: #{variant_c_forward.1} parent=1 // pred_check
      _
    $region23: #{variant_c_forward.1} parent=1 // pred_check_branch
      %34 = sbr.rel (0) target = $region25
    $region24: #{variant_c_forward.1} parent=1 // pred_region
      _
    $region25: #{variant_c_forward.1} parent=1 // pred_fallthru
      _
    // Predicated region
    $region26: #{variant_c_forward.1} parent=1 // pred_check
      _
    $region27: #{variant_c_forward.1} parent=1 // pred_check_branch
      %36 = sbr.rel (0) target = $region29
    $region28: #{variant_c_forward.1} parent=1 // pred_region
      _
    $region29: #{variant_c_forward.1} parent=1 // pred_fallthru
      _
    // Predicated region
    $region30: #{variant_c_forward.1} parent=1 // pred_check
      _
    $region31: #{variant_c_forward.1} parent=1 // pred_check_branch
      %38 = sbr.rel (0) target = $region33
    $region32: #{variant_c_forward.1} parent=1 // pred_region
      _
    $region33: #{variant_c_forward.1} parent=1 // pred_fallthru
      _
    // Predicated region
    $region34: #{variant_c_forward.1} parent=1 // pred_check
      _
    $region35: #{variant_c_forward.1} parent=1 // pred_check_branch
      %40 = sbr.rel (0) target = $region37
    $region36: #{variant_c_forward.1} parent=1 // pred_region
      _
    $region37: #{variant_c_forward.1} parent=1 // pred_fallthru
      _
    // Predicated region
    $region38: #{variant_c_forward.1} parent=1 // pred_check
      _
    $region39: #{variant_c_forward.1} parent=1 // pred_check_branch
      %42 = sbr.rel (0) target = $region41
    $region40: #{variant_c_forward.1} parent=1 // pred_region
      _
    $region41: #{variant_c_forward.1} parent=1 // pred_fallthru
      _
    // Predicated region
    $region42: #{variant_c_forward.1} parent=1 // pred_check
      _
    $region43: #{variant_c_forward.1} parent=1 // pred_check_branch
      %44 = sbr.rel (0) target = $region45
    $region44: #{variant_c_forward.1} parent=1 // pred_region
      %46 = dma.done [#allocation3], 16
    $region45: #{variant_c_forward.1} parent=1 // pred_fallthru
      _
    %47 = sfence
    %s48 = sld [smem:[#allocation2]]
    %s49 = sld [smem:[#allocation2 + $0x1]]
    %s50 = sld [smem:[#allocation2 + $0x2]]
    %v51 = vld [vmem:[%s1] sm:$0xf]
    %v52 = vld [vmem:[%s2] sm:$0xff]
    %v53 = vld [vmem:[%s2 + $0x8] sm:$0xff]
    %v54 = vld [vmem:[%s2 + $0x10] sm:$0xff]
    %v55 = vld [vmem:[%s2 + $0x18] sm:$0xff]
    %v56 = vld [vmem:[%s2 + $0x20] sm:$0xff]
    %v57 = vld [vmem:[%s2 + $0x28] sm:$0xff]
    %v58 = vld [vmem:[%s2 + $0x30] sm:$0xff]
    %v59 = vld [vmem:[%s2 + $0x38] sm:$0xff]
    %v60 = vld [vmem:[%s2 + $0x40] sm:$0xff]
    %v61 = vld [vmem:[%s2 + $0x48] sm:$0xff]
    %v62 = vld [vmem:[%s2 + $0x50] sm:$0xff]
    %v63 = vld [vmem:[%s2 + $0x58] sm:$0xff]
    %v64 = vld [vmem:[%s2 + $0x60] sm:$0xff]
    %v65 = vld [vmem:[%s2 + $0x68] sm:$0xff]
    %v66 = vld [vmem:[%s2 + $0x70] sm:$0xff]
    %v67 = vld [vmem:[%s2 + $0x78] sm:$0xff]
    %v68 = vld [vmem:[%s2 + $0x80] sm:$0xff]
    %v69 = vld [vmem:[%s2 + $0x88] sm:$0xff]
    %v70 = vld [vmem:[%s2 + $0x90] sm:$0xff]
    %v71 = vld [vmem:[%s2 + $0x98] sm:$0xff]
    %v72 = vld [vmem:[%s2 + $0xa0] sm:$0xff]
    %v73 = vld [vmem:[%s2 + $0xa8] sm:$0xff]
    %v74 = vld [vmem:[%s2 + $0xb0] sm:$0xff]
    %v75 = vld [vmem:[%s2 + $0xb8] sm:$0xff]
    %v76 = vld [vmem:[%s2 + $0xc0] sm:$0xff]
    %v77 = vld [vmem:[%s2 + $0xc8] sm:$0xff]
    %v78 = vld [vmem:[%s2 + $0xd0] sm:$0xff]
    %v79 = vld [vmem:[%s2 + $0xd8] sm:$0xff]
    %v80 = vld [vmem:[%s2 + $0xe0] sm:$0xff]
    %v81 = vld [vmem:[%s2 + $0xe8] sm:$0xff]
    %v82 = vld [vmem:[%s2 + $0xf0] sm:$0xff]
    %v83 = vld [vmem:[%s2 + $0xf8] sm:$0xff]
    %v84 = vstv %s48
    %86 = vst [vmem:[#allocation1] ss:$4 sm:$0xff] %v51
    %v87 = vld.sshfl [vmem:[#allocation1] sm:$0xff pattern:$0x73625140]
    %v88 = vld.sshfl [vmem:[#allocation1 + $0x8] sm:$0xff pattern:$0x73625140]
    %91 = vmatpush.msra.mxu0 %v67
    %92 = vmatpush.msra.mxu0 %v66
    %93 = vmatpush.msra.mxu0 %v65
    %94 = vmatpush.msra.mxu0 %v64
    %95 = vmatpush.msra.mxu0 %v63
    %96 = vmatpush.msra.mxu0 %v62
    %97 = vmatpush.msra.mxu0 %v61
    %98 = vmatpush.msra.mxu0 %v60
    %99 = vmatpush.msra.mxu0 %v59
    %100 = vmatpush.msra.mxu0 %v58
    %101 = vmatpush.msra.mxu0 %v57
    %102 = vmatpush.msra.mxu0 %v56
    %103 = vmatpush.msra.mxu0 %v55
    %104 = vmatpush.msra.mxu0 %v54
    %105 = vmatpush.msra.mxu0 %v53
    %106 = vmatpush.msra.mxu0 %v52
    %107 = vmatmul.f32.gmra.mxu0 %v87
    %v108 = vpop.f32.mrf.mxu0
    %v109 = vadd.f32 %v84, %v108
    %110 = vdwg.mxu0
    %111 = vmatpush.msra.mxu0 %v83
    %112 = vmatpush.msra.mxu0 %v82
    %113 = vmatpush.msra.mxu0 %v81
    %114 = vmatpush.msra.mxu0 %v80
    %115 = vmatpush.msra.mxu0 %v79
    %116 = vmatpush.msra.mxu0 %v78
    %117 = vmatpush.msra.mxu0 %v77
    %118 = vmatpush.msra.mxu0 %v76
    %119 = vmatpush.msra.mxu0 %v75
    %120 = vmatpush.msra.mxu0 %v74
    %121 = vmatpush.msra.mxu0 %v73
    %122 = vmatpush.msra.mxu0 %v72
    %123 = vmatpush.msra.mxu0 %v71
    %124 = vmatpush.msra.mxu0 %v70
    %125 = vmatpush.msra.mxu0 %v69
    %126 = vmatpush.msra.mxu0 %v68
    %127 = vmatmul.f32.gmra.mxu0 %v88
    %v128 = vpop.f32.mrf.mxu0
    %v129 = vadd.f32 %v109, %v128
    %130 = vdwg.mxu0
    %v131 = vld [vmem:[%s3] sm:$0xff]
    %v132 = vld [vmem:[%s3 + $0x8] sm:$0xff]
    %v133 = vld [vmem:[%s3 + $0x10] sm:$0xff]
    %v134 = vld [vmem:[%s3 + $0x18] sm:$0xff]
    %v135 = vld [vmem:[%s3 + $0x20] sm:$0xff]
    %v136 = vld [vmem:[%s3 + $0x28] sm:$0xff]
    %v137 = vld [vmem:[%s3 + $0x30] sm:$0xff]
    %v138 = vld [vmem:[%s3 + $0x38] sm:$0xff]
    %v139 = vld [vmem:[%s3 + $0x40] sm:$0xff]
    %v140 = vld [vmem:[%s3 + $0x48] sm:$0xff]
    %v141 = vld [vmem:[%s3 + $0x50] sm:$0xff]
    %v142 = vld [vmem:[%s3 + $0x58] sm:$0xff]
    %v143 = vld [vmem:[%s3 + $0x60] sm:$0xff]
    %v144 = vld [vmem:[%s3 + $0x68] sm:$0xff]
    %v145 = vld [vmem:[%s3 + $0x70] sm:$0xff]
    %v146 = vld [vmem:[%s3 + $0x78] sm:$0xff]
    %v147 = vld [vmem:[%s3 + $0x80] sm:$0xff]
    %v148 = vld [vmem:[%s3 + $0x88] sm:$0xff]
    %v149 = vld [vmem:[%s3 + $0x90] sm:$0xff]
    %v150 = vld [vmem:[%s3 + $0x98] sm:$0xff]
    %v151 = vld [vmem:[%s3 + $0xa0] sm:$0xff]
    %v152 = vld [vmem:[%s3 + $0xa8] sm:$0xff]
    %v153 = vld [vmem:[%s3 + $0xb0] sm:$0xff]
    %v154 = vld [vmem:[%s3 + $0xb8] sm:$0xff]
    %v155 = vld [vmem:[%s3 + $0xc0] sm:$0xff]
    %v156 = vld [vmem:[%s3 + $0xc8] sm:$0xff]
    %v157 = vld [vmem:[%s3 + $0xd0] sm:$0xff]
    %v158 = vld [vmem:[%s3 + $0xd8] sm:$0xff]
    %v159 = vld [vmem:[%s3 + $0xe0] sm:$0xff]
    %v160 = vld [vmem:[%s3 + $0xe8] sm:$0xff]
    %v161 = vld [vmem:[%s3 + $0xf0] sm:$0xff]
    %v162 = vld [vmem:[%s3 + $0xf8] sm:$0xff]
    %v163 = vld [vmem:[%s3 + $0x100] sm:$0xff]
    %v164 = vld [vmem:[%s3 + $0x108] sm:$0xff]
    %v165 = vld [vmem:[%s3 + $0x110] sm:$0xff]
    %v166 = vld [vmem:[%s3 + $0x118] sm:$0xff]
    %v167 = vld [vmem:[%s3 + $0x120] sm:$0xff]
    %v168 = vld [vmem:[%s3 + $0x128] sm:$0xff]
    %v169 = vld [vmem:[%s3 + $0x130] sm:$0xff]
    %v170 = vld [vmem:[%s3 + $0x138] sm:$0xff]
    %v171 = vld [vmem:[%s3 + $0x140] sm:$0xff]
    %v172 = vld [vmem:[%s3 + $0x148] sm:$0xff]
    %v173 = vld [vmem:[%s3 + $0x150] sm:$0xff]
    %v174 = vld [vmem:[%s3 + $0x158] sm:$0xff]
    %v175 = vld [vmem:[%s3 + $0x160] sm:$0xff]
    %v176 = vld [vmem:[%s3 + $0x168] sm:$0xff]
    %v177 = vld [vmem:[%s3 + $0x170] sm:$0xff]
    %v178 = vld [vmem:[%s3 + $0x178] sm:$0xff]
    %v179 = vld [vmem:[%s3 + $0x180] sm:$0xff]
    %v180 = vld [vmem:[%s3 + $0x188] sm:$0xff]
    %v181 = vld [vmem:[%s3 + $0x190] sm:$0xff]
    %v182 = vld [vmem:[%s3 + $0x198] sm:$0xff]
    %v183 = vld [vmem:[%s3 + $0x1a0] sm:$0xff]
    %v184 = vld [vmem:[%s3 + $0x1a8] sm:$0xff]
    %v185 = vld [vmem:[%s3 + $0x1b0] sm:$0xff]
    %v186 = vld [vmem:[%s3 + $0x1b8] sm:$0xff]
    %v187 = vld [vmem:[%s3 + $0x1c0] sm:$0xff]
    %v188 = vld [vmem:[%s3 + $0x1c8] sm:$0xff]
    %v189 = vld [vmem:[%s3 + $0x1d0] sm:$0xff]
    %v190 = vld [vmem:[%s3 + $0x1d8] sm:$0xff]
    %v191 = vld [vmem:[%s3 + $0x1e0] sm:$0xff]
    %v192 = vld [vmem:[%s3 + $0x1e8] sm:$0xff]
    %v193 = vld [vmem:[%s3 + $0x1f0] sm:$0xff]
    %v194 = vld [vmem:[%s3 + $0x1f8] sm:$0xff]
    %v195 = vld [vmem:[%s4] sm:$0xff]
    %v197 = vperm.slane %v195, 0
    %v198 = vperm.slane %v195, 1
    %v199 = vperm.slane %v195, 2
    %v200 = vperm.slane %v195, 3
    %v201 = vperm.slane %v195, 4
    %v202 = vperm.slane %v195, 5
    %v203 = vperm.slane %v195, 6
    %v204 = vperm.slane %v195, 7
    %vm213 = vcmask 523264
    %v215 = vsel %vm213, %v129, 0
    %217 = vmatpush.msra.mxu0 0.0
    %218 = vmatpush.msra.mxu0 0.0
    %219 = vmatpush.msra.mxu0 0.0
    %220 = vmatpush.msra.mxu0 0.0
    %221 = vmatpush.msra.mxu0 0.0
    %222 = vmatpush.msra.mxu0 0.0
    %223 = vmatpush.msra.mxu0 0.0
    %224 = vmatpush.msra.mxu0 0.0
    %225 = vmatpush.msra.mxu0 %v187
    %226 = vmatpush.msra.mxu0 %v179
    %227 = vmatpush.msra.mxu0 %v171
    %228 = vmatpush.msra.mxu0 %v163
    %229 = vmatpush.msra.mxu0 %v155
    %230 = vmatpush.msra.mxu0 %v147
    %231 = vmatpush.msra.mxu0 %v139
    %232 = vmatpush.msra.mxu0 %v131
    %233 = vmatmul.f32.gmra.mxu0 %v215
    %v234 = vpop.f32.mrf.mxu0
    %v235 = vadd.f32 %v197, %v234
    %236 = vdwg.mxu0
    %237 = vmatpush.msra.mxu0 0.0
    %238 = vmatpush.msra.mxu0 0.0
    %239 = vmatpush.msra.mxu0 0.0
    %240 = vmatpush.msra.mxu0 0.0
    %241 = vmatpush.msra.mxu0 0.0
    %242 = vmatpush.msra.mxu0 0.0
    %243 = vmatpush.msra.mxu0 0.0
    %244 = vmatpush.msra.mxu0 0.0
    %245 = vmatpush.msra.mxu0 %v188
    %246 = vmatpush.msra.mxu0 %v180
    %247 = vmatpush.msra.mxu0 %v172
    %248 = vmatpush.msra.mxu0 %v164
    %249 = vmatpush.msra.mxu0 %v156
    %250 = vmatpush.msra.mxu0 %v148
    %251 = vmatpush.msra.mxu0 %v140
    %252 = vmatpush.msra.mxu0 %v132
    %253 = vmatmul.f32.gmra.mxu0 %v215
    %v254 = vpop.f32.mrf.mxu0
    %v255 = vadd.f32 %v198, %v254
    %256 = vdwg.mxu0
    %257 = vmatpush.msra.mxu0 0.0
    %258 = vmatpush.msra.mxu0 0.0
    %259 = vmatpush.msra.mxu0 0.0
    %260 = vmatpush.msra.mxu0 0.0
    %261 = vmatpush.msra.mxu0 0.0
    %262 = vmatpush.msra.mxu0 0.0
    %263 = vmatpush.msra.mxu0 0.0
    %264 = vmatpush.msra.mxu0 0.0
    %265 = vmatpush.msra.mxu0 %v189
    %266 = vmatpush.msra.mxu0 %v181
    %267 = vmatpush.msra.mxu0 %v173
    %268 = vmatpush.msra.mxu0 %v165
    %269 = vmatpush.msra.mxu0 %v157
    %270 = vmatpush.msra.mxu0 %v149
    %271 = vmatpush.msra.mxu0 %v141
    %272 = vmatpush.msra.mxu0 %v133
    %273 = vmatmul.f32.gmra.mxu0 %v215
    %v274 = vpop.f32.mrf.mxu0
    %v275 = vadd.f32 %v199, %v274
    %276 = vdwg.mxu0
    %277 = vmatpush.msra.mxu0 0.0
    %278 = vmatpush.msra.mxu0 0.0
    %279 = vmatpush.msra.mxu0 0.0
    %280 = vmatpush.msra.mxu0 0.0
    %281 = vmatpush.msra.mxu0 0.0
    %282 = vmatpush.msra.mxu0 0.0
    %283 = vmatpush.msra.mxu0 0.0
    %284 = vmatpush.msra.mxu0 0.0
    %285 = vmatpush.msra.mxu0 %v190
    %286 = vmatpush.msra.mxu0 %v182
    %287 = vmatpush.msra.mxu0 %v174
    %288 = vmatpush.msra.mxu0 %v166
    %289 = vmatpush.msra.mxu0 %v158
    %290 = vmatpush.msra.mxu0 %v150
    %291 = vmatpush.msra.mxu0 %v142
    %292 = vmatpush.msra.mxu0 %v134
    %293 = vmatmul.f32.gmra.mxu0 %v215
    %v294 = vpop.f32.mrf.mxu0
    %v295 = vadd.f32 %v200, %v294
    %296 = vdwg.mxu0
    %297 = vmatpush.msra.mxu0 0.0
    %298 = vmatpush.msra.mxu0 0.0
    %299 = vmatpush.msra.mxu0 0.0
    %300 = vmatpush.msra.mxu0 0.0
    %301 = vmatpush.msra.mxu0 0.0
    %302 = vmatpush.msra.mxu0 0.0
    %303 = vmatpush.msra.mxu0 0.0
    %304 = vmatpush.msra.mxu0 0.0
    %305 = vmatpush.msra.mxu0 %v191
    %306 = vmatpush.msra.mxu0 %v183
    %307 = vmatpush.msra.mxu0 %v175
    %308 = vmatpush.msra.mxu0 %v167
    %309 = vmatpush.msra.mxu0 %v159
    %310 = vmatpush.msra.mxu0 %v151
    %311 = vmatpush.msra.mxu0 %v143
    %312 = vmatpush.msra.mxu0 %v135
    %313 = vmatmul.f32.gmra.mxu0 %v215
    %v314 = vpop.f32.mrf.mxu0
    %v315 = vadd.f32 %v201, %v314
    %316 = vdwg.mxu0
    %317 = vmatpush.msra.mxu0 0.0
    %318 = vmatpush.msra.mxu0 0.0
    %319 = vmatpush.msra.mxu0 0.0
    %320 = vmatpush.msra.mxu0 0.0
    %321 = vmatpush.msra.mxu0 0.0
    %322 = vmatpush.msra.mxu0 0.0
    %323 = vmatpush.msra.mxu0 0.0
    %324 = vmatpush.msra.mxu0 0.0
    %325 = vmatpush.msra.mxu0 %v192
    %326 = vmatpush.msra.mxu0 %v184
    %327 = vmatpush.msra.mxu0 %v176
    %328 = vmatpush.msra.mxu0 %v168
    %329 = vmatpush.msra.mxu0 %v160
    %330 = vmatpush.msra.mxu0 %v152
    %331 = vmatpush.msra.mxu0 %v144
    %332 = vmatpush.msra.mxu0 %v136
    %333 = vmatmul.f32.gmra.mxu0 %v215
    %v334 = vpop.f32.mrf.mxu0
    %v335 = vadd.f32 %v202, %v334
    %336 = vdwg.mxu0
    %337 = vmatpush.msra.mxu0 0.0
    %338 = vmatpush.msra.mxu0 0.0
    %339 = vmatpush.msra.mxu0 0.0
    %340 = vmatpush.msra.mxu0 0.0
    %341 = vmatpush.msra.mxu0 0.0
    %342 = vmatpush.msra.mxu0 0.0
    %343 = vmatpush.msra.mxu0 0.0
    %344 = vmatpush.msra.mxu0 0.0
    %345 = vmatpush.msra.mxu0 %v193
    %346 = vmatpush.msra.mxu0 %v185
    %347 = vmatpush.msra.mxu0 %v177
    %348 = vmatpush.msra.mxu0 %v169
    %349 = vmatpush.msra.mxu0 %v161
    %350 = vmatpush.msra.mxu0 %v153
    %351 = vmatpush.msra.mxu0 %v145
    %352 = vmatpush.msra.mxu0 %v137
    %353 = vmatmul.f32.gmra.mxu0 %v215
    %v354 = vpop.f32.mrf.mxu0
    %v355 = vadd.f32 %v203, %v354
    %356 = vdwg.mxu0
    %357 = vmatpush.msra.mxu0 0.0
    %358 = vmatpush.msra.mxu0 0.0
    %359 = vmatpush.msra.mxu0 0.0
    %360 = vmatpush.msra.mxu0 0.0
    %361 = vmatpush.msra.mxu0 0.0
    %362 = vmatpush.msra.mxu0 0.0
    %363 = vmatpush.msra.mxu0 0.0
    %364 = vmatpush.msra.mxu0 0.0
    %365 = vmatpush.msra.mxu0 %v194
    %366 = vmatpush.msra.mxu0 %v186
    %367 = vmatpush.msra.mxu0 %v178
    %368 = vmatpush.msra.mxu0 %v170
    %369 = vmatpush.msra.mxu0 %v162
    %370 = vmatpush.msra.mxu0 %v154
    %371 = vmatpush.msra.mxu0 %v146
    %372 = vmatpush.msra.mxu0 %v138
    %373 = vmatmul.f32.gmra.mxu0 %v215
    %v374 = vpop.f32.mrf.mxu0
    %v375 = vadd.f32 %v204, %v374
    %376 = vdwg.mxu0
    %v377 = vtanh.pop %v235
    %v378 = vtanh.pop %v255
    %v379 = vtanh.pop %v275
    %v380 = vtanh.pop %v295
    %v381 = vtanh.pop %v315
    %v382 = vtanh.pop %v335
    %v383 = vtanh.pop %v355
    %v384 = vtanh.pop %v375
    %v385 = vld [vmem:[%s5] sm:$0xff]
    %v386 = vld [vmem:[%s5 + $0x8] sm:$0xff]
    %v387 = vld [vmem:[%s5 + $0x10] sm:$0xff]
    %v388 = vld [vmem:[%s5 + $0x18] sm:$0xff]
    %v389 = vld [vmem:[%s5 + $0x20] sm:$0xff]
    %v390 = vld [vmem:[%s5 + $0x28] sm:$0xff]
    %v391 = vld [vmem:[%s5 + $0x30] sm:$0xff]
    %v392 = vld [vmem:[%s5 + $0x38] sm:$0xff]
    %v393 = vld [vmem:[%s5 + $0x40] sm:$0xff]
    %v394 = vld [vmem:[%s5 + $0x48] sm:$0xff]
    %v395 = vld [vmem:[%s5 + $0x50] sm:$0xff]
    %v396 = vld [vmem:[%s5 + $0x58] sm:$0xff]
    %v397 = vld [vmem:[%s5 + $0x60] sm:$0xff]
    %v398 = vld [vmem:[%s5 + $0x68] sm:$0xff]
    %v399 = vld [vmem:[%s5 + $0x70] sm:$0xff]
    %v400 = vld [vmem:[%s5 + $0x78] sm:$0xff]
    %v401 = vld [vmem:[%s5 + $0x80] sm:$0xff]
    %v402 = vld [vmem:[%s5 + $0x88] sm:$0xff]
    %v403 = vld [vmem:[%s5 + $0x90] sm:$0xff]
    %v404 = vld [vmem:[%s5 + $0x98] sm:$0xff]
    %v405 = vld [vmem:[%s5 + $0xa0] sm:$0xff]
    %v406 = vld [vmem:[%s5 + $0xa8] sm:$0xff]
    %v407 = vld [vmem:[%s5 + $0xb0] sm:$0xff]
    %v408 = vld [vmem:[%s5 + $0xb8] sm:$0xff]
    %v409 = vld [vmem:[%s5 + $0xc0] sm:$0xff]
    %v410 = vld [vmem:[%s5 + $0xc8] sm:$0xff]
    %v411 = vld [vmem:[%s5 + $0xd0] sm:$0xff]
    %v412 = vld [vmem:[%s5 + $0xd8] sm:$0xff]
    %v413 = vld [vmem:[%s5 + $0xe0] sm:$0xff]
    %v414 = vld [vmem:[%s5 + $0xe8] sm:$0xff]
    %v415 = vld [vmem:[%s5 + $0xf0] sm:$0xff]
    %v416 = vld [vmem:[%s5 + $0xf8] sm:$0xff]
    %v417 = vld [vmem:[%s5 + $0x100] sm:$0xff]
    %v418 = vld [vmem:[%s5 + $0x108] sm:$0xff]
    %v419 = vld [vmem:[%s5 + $0x110] sm:$0xff]
    %v420 = vld [vmem:[%s5 + $0x118] sm:$0xff]
    %v421 = vld [vmem:[%s5 + $0x120] sm:$0xff]
    %v422 = vld [vmem:[%s5 + $0x128] sm:$0xff]
    %v423 = vld [vmem:[%s5 + $0x130] sm:$0xff]
    %v424 = vld [vmem:[%s5 + $0x138] sm:$0xff]
    %v425 = vld [vmem:[%s5 + $0x140] sm:$0xff]
    %v426 = vld [vmem:[%s5 + $0x148] sm:$0xff]
    %v427 = vld [vmem:[%s5 + $0x150] sm:$0xff]
    %v428 = vld [vmem:[%s5 + $0x158] sm:$0xff]
    %v429 = vld [vmem:[%s5 + $0x160] sm:$0xff]
    %v430 = vld [vmem:[%s5 + $0x168] sm:$0xff]
    %v431 = vld [vmem:[%s5 + $0x170] sm:$0xff]
    %v432 = vld [vmem:[%s5 + $0x178] sm:$0xff]
    %v433 = vld [vmem:[%s5 + $0x180] sm:$0xff]
    %v434 = vld [vmem:[%s5 + $0x188] sm:$0xff]
    %v435 = vld [vmem:[%s5 + $0x190] sm:$0xff]
    %v436 = vld [vmem:[%s5 + $0x198] sm:$0xff]
    %v437 = vld [vmem:[%s5 + $0x1a0] sm:$0xff]
    %v438 = vld [vmem:[%s5 + $0x1a8] sm:$0xff]
    %v439 = vld [vmem:[%s5 + $0x1b0] sm:$0xff]
    %v440 = vld [vmem:[%s5 + $0x1b8] sm:$0xff]
    %v441 = vld [vmem:[%s5 + $0x1c0] sm:$0xff]
    %v442 = vld [vmem:[%s5 + $0x1c8] sm:$0xff]
    %v443 = vld [vmem:[%s5 + $0x1d0] sm:$0xff]
    %v444 = vld [vmem:[%s5 + $0x1d8] sm:$0xff]
    %v445 = vld [vmem:[%s5 + $0x1e0] sm:$0xff]
    %v446 = vld [vmem:[%s5 + $0x1e8] sm:$0xff]
    %v447 = vld [vmem:[%s5 + $0x1f0] sm:$0xff]
    %v448 = vld [vmem:[%s5 + $0x1f8] sm:$0xff]
    %v449 = vld [vmem:[%s5 + $0x200] sm:$0xff]
    %v450 = vld [vmem:[%s5 + $0x208] sm:$0xff]
    %v451 = vld [vmem:[%s5 + $0x210] sm:$0xff]
    %v452 = vld [vmem:[%s5 + $0x218] sm:$0xff]
    %v453 = vld [vmem:[%s5 + $0x220] sm:$0xff]
    %v454 = vld [vmem:[%s5 + $0x228] sm:$0xff]
    %v455 = vld [vmem:[%s5 + $0x230] sm:$0xff]
    %v456 = vld [vmem:[%s5 + $0x238] sm:$0xff]
    %v457 = vld [vmem:[%s5 + $0x240] sm:$0xff]
    %v458 = vld [vmem:[%s5 + $0x248] sm:$0xff]
    %v459 = vld [vmem:[%s5 + $0x250] sm:$0xff]
    %v460 = vld [vmem:[%s5 + $0x258] sm:$0xff]
    %v461 = vld [vmem:[%s5 + $0x260] sm:$0xff]
    %v462 = vld [vmem:[%s5 + $0x268] sm:$0xff]
    %v463 = vld [vmem:[%s5 + $0x270] sm:$0xff]
    %v464 = vld [vmem:[%s5 + $0x278] sm:$0xff]
    %v465 = vld [vmem:[%s5 + $0x280] sm:$0xff]
    %v466 = vld [vmem:[%s5 + $0x288] sm:$0xff]
    %v467 = vld [vmem:[%s5 + $0x290] sm:$0xff]
    %v468 = vld [vmem:[%s5 + $0x298] sm:$0xff]
    %v469 = vld [vmem:[%s5 + $0x2a0] sm:$0xff]
    %v470 = vld [vmem:[%s5 + $0x2a8] sm:$0xff]
    %v471 = vld [vmem:[%s5 + $0x2b0] sm:$0xff]
    %v472 = vld [vmem:[%s5 + $0x2b8] sm:$0xff]
    %v473 = vld [vmem:[%s5 + $0x2c0] sm:$0xff]
    %v474 = vld [vmem:[%s5 + $0x2c8] sm:$0xff]
    %v475 = vld [vmem:[%s5 + $0x2d0] sm:$0xff]
    %v476 = vld [vmem:[%s5 + $0x2d8] sm:$0xff]
    %v477 = vld [vmem:[%s5 + $0x2e0] sm:$0xff]
    %v478 = vld [vmem:[%s5 + $0x2e8] sm:$0xff]
    %v479 = vld [vmem:[%s5 + $0x2f0] sm:$0xff]
    %v480 = vld [vmem:[%s5 + $0x2f8] sm:$0xff]
    %v481 = vld [vmem:[%s5 + $0x300] sm:$0xff]
    %v482 = vld [vmem:[%s5 + $0x308] sm:$0xff]
    %v483 = vld [vmem:[%s5 + $0x310] sm:$0xff]
    %v484 = vld [vmem:[%s5 + $0x318] sm:$0xff]
    %v485 = vld [vmem:[%s5 + $0x320] sm:$0xff]
    %v486 = vld [vmem:[%s5 + $0x328] sm:$0xff]
    %v487 = vld [vmem:[%s5 + $0x330] sm:$0xff]
    %v488 = vld [vmem:[%s5 + $0x338] sm:$0xff]
    %v489 = vld [vmem:[%s5 + $0x340] sm:$0xff]
    %v490 = vld [vmem:[%s5 + $0x348] sm:$0xff]
    %v491 = vld [vmem:[%s5 + $0x350] sm:$0xff]
    %v492 = vld [vmem:[%s5 + $0x358] sm:$0xff]
    %v493 = vld [vmem:[%s5 + $0x360] sm:$0xff]
    %v494 = vld [vmem:[%s5 + $0x368] sm:$0xff]
    %v495 = vld [vmem:[%s5 + $0x370] sm:$0xff]
    %v496 = vld [vmem:[%s5 + $0x378] sm:$0xff]
    %v497 = vld [vmem:[%s5 + $0x380] sm:$0xff]
    %v498 = vld [vmem:[%s5 + $0x388] sm:$0xff]
    %v499 = vld [vmem:[%s5 + $0x390] sm:$0xff]
    %v500 = vld [vmem:[%s5 + $0x398] sm:$0xff]
    %v501 = vld [vmem:[%s5 + $0x3a0] sm:$0xff]
    %v502 = vld [vmem:[%s5 + $0x3a8] sm:$0xff]
    %v503 = vld [vmem:[%s5 + $0x3b0] sm:$0xff]
    %v504 = vld [vmem:[%s5 + $0x3b8] sm:$0xff]
    %v505 = vld [vmem:[%s5 + $0x3c0] sm:$0xff]
    %v506 = vld [vmem:[%s5 + $0x3c8] sm:$0xff]
    %v507 = vld [vmem:[%s5 + $0x3d0] sm:$0xff]
    %v508 = vld [vmem:[%s5 + $0x3d8] sm:$0xff]
    %v509 = vld [vmem:[%s5 + $0x3e0] sm:$0xff]
    %v510 = vld [vmem:[%s5 + $0x3e8] sm:$0xff]
    %v511 = vld [vmem:[%s5 + $0x3f0] sm:$0xff]
    %v512 = vld [vmem:[%s5 + $0x3f8] sm:$0xff]
    %v513 = vld [vmem:[%s5 + $0x400] sm:$0xff]
    %v514 = vld [vmem:[%s5 + $0x408] sm:$0xff]
    %v515 = vld [vmem:[%s5 + $0x410] sm:$0xff]
    %v516 = vld [vmem:[%s5 + $0x418] sm:$0xff]
    %v517 = vld [vmem:[%s5 + $0x420] sm:$0xff]
    %v518 = vld [vmem:[%s5 + $0x428] sm:$0xff]
    %v519 = vld [vmem:[%s5 + $0x430] sm:$0xff]
    %v520 = vld [vmem:[%s5 + $0x438] sm:$0xff]
    %v521 = vld [vmem:[%s5 + $0x440] sm:$0xff]
    %v522 = vld [vmem:[%s5 + $0x448] sm:$0xff]
    %v523 = vld [vmem:[%s5 + $0x450] sm:$0xff]
    %v524 = vld [vmem:[%s5 + $0x458] sm:$0xff]
    %v525 = vld [vmem:[%s5 + $0x460] sm:$0xff]
    %v526 = vld [vmem:[%s5 + $0x468] sm:$0xff]
    %v527 = vld [vmem:[%s5 + $0x470] sm:$0xff]
    %v528 = vld [vmem:[%s5 + $0x478] sm:$0xff]
    %v529 = vld [vmem:[%s5 + $0x480] sm:$0xff]
    %v530 = vld [vmem:[%s5 + $0x488] sm:$0xff]
    %v531 = vld [vmem:[%s5 + $0x490] sm:$0xff]
    %v532 = vld [vmem:[%s5 + $0x498] sm:$0xff]
    %v533 = vld [vmem:[%s5 + $0x4a0] sm:$0xff]
    %v534 = vld [vmem:[%s5 + $0x4a8] sm:$0xff]
    %v535 = vld [vmem:[%s5 + $0x4b0] sm:$0xff]
    %v536 = vld [vmem:[%s5 + $0x4b8] sm:$0xff]
    %v537 = vld [vmem:[%s5 + $0x4c0] sm:$0xff]
    %v538 = vld [vmem:[%s5 + $0x4c8] sm:$0xff]
    %v539 = vld [vmem:[%s5 + $0x4d0] sm:$0xff]
    %v540 = vld [vmem:[%s5 + $0x4d8] sm:$0xff]
    %v541 = vld [vmem:[%s5 + $0x4e0] sm:$0xff]
    %v542 = vld [vmem:[%s5 + $0x4e8] sm:$0xff]
    %v543 = vld [vmem:[%s5 + $0x4f0] sm:$0xff]
    %v544 = vld [vmem:[%s5 + $0x4f8] sm:$0xff]
    %v545 = vld [vmem:[%s5 + $0x500] sm:$0xff]
    %v546 = vld [vmem:[%s5 + $0x508] sm:$0xff]
    %v547 = vld [vmem:[%s5 + $0x510] sm:$0xff]
    %v548 = vld [vmem:[%s5 + $0x518] sm:$0xff]
    %v549 = vld [vmem:[%s5 + $0x520] sm:$0xff]
    %v550 = vld [vmem:[%s5 + $0x528] sm:$0xff]
    %v551 = vld [vmem:[%s5 + $0x530] sm:$0xff]
    %v552 = vld [vmem:[%s5 + $0x538] sm:$0xff]
    %v553 = vld [vmem:[%s5 + $0x540] sm:$0xff]
    %v554 = vld [vmem:[%s5 + $0x548] sm:$0xff]
    %v555 = vld [vmem:[%s5 + $0x550] sm:$0xff]
    %v556 = vld [vmem:[%s5 + $0x558] sm:$0xff]
    %v557 = vld [vmem:[%s5 + $0x560] sm:$0xff]
    %v558 = vld [vmem:[%s5 + $0x568] sm:$0xff]
    %v559 = vld [vmem:[%s5 + $0x570] sm:$0xff]
    %v560 = vld [vmem:[%s5 + $0x578] sm:$0xff]
    %v561 = vld [vmem:[%s5 + $0x580] sm:$0xff]
    %v562 = vld [vmem:[%s5 + $0x588] sm:$0xff]
    %v563 = vld [vmem:[%s5 + $0x590] sm:$0xff]
    %v564 = vld [vmem:[%s5 + $0x598] sm:$0xff]
    %v565 = vld [vmem:[%s5 + $0x5a0] sm:$0xff]
    %v566 = vld [vmem:[%s5 + $0x5a8] sm:$0xff]
    %v567 = vld [vmem:[%s5 + $0x5b0] sm:$0xff]
    %v568 = vld [vmem:[%s5 + $0x5b8] sm:$0xff]
    %v569 = vld [vmem:[%s5 + $0x5c0] sm:$0xff]
    %v570 = vld [vmem:[%s5 + $0x5c8] sm:$0xff]
    %v571 = vld [vmem:[%s5 + $0x5d0] sm:$0xff]
    %v572 = vld [vmem:[%s5 + $0x5d8] sm:$0xff]
    %v573 = vld [vmem:[%s5 + $0x5e0] sm:$0xff]
    %v574 = vld [vmem:[%s5 + $0x5e8] sm:$0xff]
    %v575 = vld [vmem:[%s5 + $0x5f0] sm:$0xff]
    %v576 = vld [vmem:[%s5 + $0x5f8] sm:$0xff]
    %v577 = vld [vmem:[%s5 + $0x600] sm:$0xff]
    %v578 = vld [vmem:[%s5 + $0x608] sm:$0xff]
    %v579 = vld [vmem:[%s5 + $0x610] sm:$0xff]
    %v580 = vld [vmem:[%s5 + $0x618] sm:$0xff]
    %v581 = vld [vmem:[%s5 + $0x620] sm:$0xff]
    %v582 = vld [vmem:[%s5 + $0x628] sm:$0xff]
    %v583 = vld [vmem:[%s5 + $0x630] sm:$0xff]
    %v584 = vld [vmem:[%s5 + $0x638] sm:$0xff]
    %v585 = vld [vmem:[%s5 + $0x640] sm:$0xff]
    %v586 = vld [vmem:[%s5 + $0x648] sm:$0xff]
    %v587 = vld [vmem:[%s5 + $0x650] sm:$0xff]
    %v588 = vld [vmem:[%s5 + $0x658] sm:$0xff]
    %v589 = vld [vmem:[%s5 + $0x660] sm:$0xff]
    %v590 = vld [vmem:[%s5 + $0x668] sm:$0xff]
    %v591 = vld [vmem:[%s5 + $0x670] sm:$0xff]
    %v592 = vld [vmem:[%s5 + $0x678] sm:$0xff]
    %v593 = vld [vmem:[%s5 + $0x680] sm:$0xff]
    %v594 = vld [vmem:[%s5 + $0x688] sm:$0xff]
    %v595 = vld [vmem:[%s5 + $0x690] sm:$0xff]
    %v596 = vld [vmem:[%s5 + $0x698] sm:$0xff]
    %v597 = vld [vmem:[%s5 + $0x6a0] sm:$0xff]
    %v598 = vld [vmem:[%s5 + $0x6a8] sm:$0xff]
    %v599 = vld [vmem:[%s5 + $0x6b0] sm:$0xff]
    %v600 = vld [vmem:[%s5 + $0x6b8] sm:$0xff]
    %v601 = vld [vmem:[%s5 + $0x6c0] sm:$0xff]
    %v602 = vld [vmem:[%s5 + $0x6c8] sm:$0xff]
    %v603 = vld [vmem:[%s5 + $0x6d0] sm:$0xff]
    %v604 = vld [vmem:[%s5 + $0x6d8] sm:$0xff]
    %v605 = vld [vmem:[%s5 + $0x6e0] sm:$0xff]
    %v606 = vld [vmem:[%s5 + $0x6e8] sm:$0xff]
    %v607 = vld [vmem:[%s5 + $0x6f0] sm:$0xff]
    %v608 = vld [vmem:[%s5 + $0x6f8] sm:$0xff]
    %v609 = vld [vmem:[%s5 + $0x700] sm:$0xff]
    %v610 = vld [vmem:[%s5 + $0x708] sm:$0xff]
    %v611 = vld [vmem:[%s5 + $0x710] sm:$0xff]
    %v612 = vld [vmem:[%s5 + $0x718] sm:$0xff]
    %v613 = vld [vmem:[%s5 + $0x720] sm:$0xff]
    %v614 = vld [vmem:[%s5 + $0x728] sm:$0xff]
    %v615 = vld [vmem:[%s5 + $0x730] sm:$0xff]
    %v616 = vld [vmem:[%s5 + $0x738] sm:$0xff]
    %v617 = vld [vmem:[%s5 + $0x740] sm:$0xff]
    %v618 = vld [vmem:[%s5 + $0x748] sm:$0xff]
    %v619 = vld [vmem:[%s5 + $0x750] sm:$0xff]
    %v620 = vld [vmem:[%s5 + $0x758] sm:$0xff]
    %v621 = vld [vmem:[%s5 + $0x760] sm:$0xff]
    %v622 = vld [vmem:[%s5 + $0x768] sm:$0xff]
    %v623 = vld [vmem:[%s5 + $0x770] sm:$0xff]
    %v624 = vld [vmem:[%s5 + $0x778] sm:$0xff]
    %v625 = vld [vmem:[%s5 + $0x780] sm:$0xff]
    %v626 = vld [vmem:[%s5 + $0x788] sm:$0xff]
    %v627 = vld [vmem:[%s5 + $0x790] sm:$0xff]
    %v628 = vld [vmem:[%s5 + $0x798] sm:$0xff]
    %v629 = vld [vmem:[%s5 + $0x7a0] sm:$0xff]
    %v630 = vld [vmem:[%s5 + $0x7a8] sm:$0xff]
    %v631 = vld [vmem:[%s5 + $0x7b0] sm:$0xff]
    %v632 = vld [vmem:[%s5 + $0x7b8] sm:$0xff]
    %v633 = vld [vmem:[%s5 + $0x7c0] sm:$0xff]
    %v634 = vld [vmem:[%s5 + $0x7c8] sm:$0xff]
    %v635 = vld [vmem:[%s5 + $0x7d0] sm:$0xff]
    %v636 = vld [vmem:[%s5 + $0x7d8] sm:$0xff]
    %v637 = vld [vmem:[%s5 + $0x7e0] sm:$0xff]
    %v638 = vld [vmem:[%s5 + $0x7e8] sm:$0xff]
    %v639 = vld [vmem:[%s5 + $0x7f0] sm:$0xff]
    %v640 = vld [vmem:[%s5 + $0x7f8] sm:$0xff]
    %v641 = vld [vmem:[%s5 + $0x800] sm:$0xff]
    %v642 = vld [vmem:[%s5 + $0x808] sm:$0xff]
    %v643 = vld [vmem:[%s5 + $0x810] sm:$0xff]
    %v644 = vld [vmem:[%s5 + $0x818] sm:$0xff]
    %v645 = vld [vmem:[%s5 + $0x820] sm:$0xff]
    %v646 = vld [vmem:[%s5 + $0x828] sm:$0xff]
    %v647 = vld [vmem:[%s5 + $0x830] sm:$0xff]
    %v648 = vld [vmem:[%s5 + $0x838] sm:$0xff]
    %v649 = vld [vmem:[%s5 + $0x840] sm:$0xff]
    %v650 = vld [vmem:[%s5 + $0x848] sm:$0xff]
    %v651 = vld [vmem:[%s5 + $0x850] sm:$0xff]
    %v652 = vld [vmem:[%s5 + $0x858] sm:$0xff]
    %v653 = vld [vmem:[%s5 + $0x860] sm:$0xff]
    %v654 = vld [vmem:[%s5 + $0x868] sm:$0xff]
    %v655 = vld [vmem:[%s5 + $0x870] sm:$0xff]
    %v656 = vld [vmem:[%s5 + $0x878] sm:$0xff]
    %v657 = vld [vmem:[%s5 + $0x880] sm:$0xff]
    %v658 = vld [vmem:[%s5 + $0x888] sm:$0xff]
    %v659 = vld [vmem:[%s5 + $0x890] sm:$0xff]
    %v660 = vld [vmem:[%s5 + $0x898] sm:$0xff]
    %v661 = vld [vmem:[%s5 + $0x8a0] sm:$0xff]
    %v662 = vld [vmem:[%s5 + $0x8a8] sm:$0xff]
    %v663 = vld [vmem:[%s5 + $0x8b0] sm:$0xff]
    %v664 = vld [vmem:[%s5 + $0x8b8] sm:$0xff]
    %v665 = vld [vmem:[%s5 + $0x8c0] sm:$0xff]
    %v666 = vld [vmem:[%s5 + $0x8c8] sm:$0xff]
    %v667 = vld [vmem:[%s5 + $0x8d0] sm:$0xff]
    %v668 = vld [vmem:[%s5 + $0x8d8] sm:$0xff]
    %v669 = vld [vmem:[%s5 + $0x8e0] sm:$0xff]
    %v670 = vld [vmem:[%s5 + $0x8e8] sm:$0xff]
    %v671 = vld [vmem:[%s5 + $0x8f0] sm:$0xff]
    %v672 = vld [vmem:[%s5 + $0x8f8] sm:$0xff]
    %v673 = vld [vmem:[%s5 + $0x900] sm:$0xff]
    %v674 = vld [vmem:[%s5 + $0x908] sm:$0xff]
    %v675 = vld [vmem:[%s5 + $0x910] sm:$0xff]
    %v676 = vld [vmem:[%s5 + $0x918] sm:$0xff]
    %v677 = vld [vmem:[%s5 + $0x920] sm:$0xff]
    %v678 = vld [vmem:[%s5 + $0x928] sm:$0xff]
    %v679 = vld [vmem:[%s5 + $0x930] sm:$0xff]
    %v680 = vld [vmem:[%s5 + $0x938] sm:$0xff]
    %v681 = vld [vmem:[%s5 + $0x940] sm:$0xff]
    %v682 = vld [vmem:[%s5 + $0x948] sm:$0xff]
    %v683 = vld [vmem:[%s5 + $0x950] sm:$0xff]
    %v684 = vld [vmem:[%s5 + $0x958] sm:$0xff]
    %v685 = vld [vmem:[%s5 + $0x960] sm:$0xff]
    %v686 = vld [vmem:[%s5 + $0x968] sm:$0xff]
    %v687 = vld [vmem:[%s5 + $0x970] sm:$0xff]
    %v688 = vld [vmem:[%s5 + $0x978] sm:$0xff]
    %v689 = vld [vmem:[%s5 + $0x980] sm:$0xff]
    %v690 = vld [vmem:[%s5 + $0x988] sm:$0xff]
    %v691 = vld [vmem:[%s5 + $0x990] sm:$0xff]
    %v692 = vld [vmem:[%s5 + $0x998] sm:$0xff]
    %v693 = vld [vmem:[%s5 + $0x9a0] sm:$0xff]
    %v694 = vld [vmem:[%s5 + $0x9a8] sm:$0xff]
    %v695 = vld [vmem:[%s5 + $0x9b0] sm:$0xff]
    %v696 = vld [vmem:[%s5 + $0x9b8] sm:$0xff]
    %v697 = vld [vmem:[%s5 + $0x9c0] sm:$0xff]
    %v698 = vld [vmem:[%s5 + $0x9c8] sm:$0xff]
    %v699 = vld [vmem:[%s5 + $0x9d0] sm:$0xff]
    %v700 = vld [vmem:[%s5 + $0x9d8] sm:$0xff]
    %v701 = vld [vmem:[%s5 + $0x9e0] sm:$0xff]
    %v702 = vld [vmem:[%s5 + $0x9e8] sm:$0xff]
    %v703 = vld [vmem:[%s5 + $0x9f0] sm:$0xff]
    %v704 = vld [vmem:[%s5 + $0x9f8] sm:$0xff]
    %v705 = vld [vmem:[%s5 + $0xa00] sm:$0xff]
    %v706 = vld [vmem:[%s5 + $0xa08] sm:$0xff]
    %v707 = vld [vmem:[%s5 + $0xa10] sm:$0xff]
    %v708 = vld [vmem:[%s5 + $0xa18] sm:$0xff]
    %v709 = vld [vmem:[%s5 + $0xa20] sm:$0xff]
    %v710 = vld [vmem:[%s5 + $0xa28] sm:$0xff]
    %v711 = vld [vmem:[%s5 + $0xa30] sm:$0xff]
    %v712 = vld [vmem:[%s5 + $0xa38] sm:$0xff]
    %v713 = vld [vmem:[%s5 + $0xa40] sm:$0xff]
    %v714 = vld [vmem:[%s5 + $0xa48] sm:$0xff]
    %v715 = vld [vmem:[%s5 + $0xa50] sm:$0xff]
    %v716 = vld [vmem:[%s5 + $0xa58] sm:$0xff]
    %v717 = vld [vmem:[%s5 + $0xa60] sm:$0xff]
    %v718 = vld [vmem:[%s5 + $0xa68] sm:$0xff]
    %v719 = vld [vmem:[%s5 + $0xa70] sm:$0xff]
    %v720 = vld [vmem:[%s5 + $0xa78] sm:$0xff]
    %v721 = vld [vmem:[%s5 + $0xa80] sm:$0xff]
    %v722 = vld [vmem:[%s5 + $0xa88] sm:$0xff]
    %v723 = vld [vmem:[%s5 + $0xa90] sm:$0xff]
    %v724 = vld [vmem:[%s5 + $0xa98] sm:$0xff]
    %v725 = vld [vmem:[%s5 + $0xaa0] sm:$0xff]
    %v726 = vld [vmem:[%s5 + $0xaa8] sm:$0xff]
    %v727 = vld [vmem:[%s5 + $0xab0] sm:$0xff]
    %v728 = vld [vmem:[%s5 + $0xab8] sm:$0xff]
    %v729 = vld [vmem:[%s5 + $0xac0] sm:$0xff]
    %v730 = vld [vmem:[%s5 + $0xac8] sm:$0xff]
    %v731 = vld [vmem:[%s5 + $0xad0] sm:$0xff]
    %v732 = vld [vmem:[%s5 + $0xad8] sm:$0xff]
    %v733 = vld [vmem:[%s5 + $0xae0] sm:$0xff]
    %v734 = vld [vmem:[%s5 + $0xae8] sm:$0xff]
    %v735 = vld [vmem:[%s5 + $0xaf0] sm:$0xff]
    %v736 = vld [vmem:[%s5 + $0xaf8] sm:$0xff]
    %v737 = vld [vmem:[%s5 + $0xb00] sm:$0xff]
    %v738 = vld [vmem:[%s5 + $0xb08] sm:$0xff]
    %v739 = vld [vmem:[%s5 + $0xb10] sm:$0xff]
    %v740 = vld [vmem:[%s5 + $0xb18] sm:$0xff]
    %v741 = vld [vmem:[%s5 + $0xb20] sm:$0xff]
    %v742 = vld [vmem:[%s5 + $0xb28] sm:$0xff]
    %v743 = vld [vmem:[%s5 + $0xb30] sm:$0xff]
    %v744 = vld [vmem:[%s5 + $0xb38] sm:$0xff]
    %v745 = vld [vmem:[%s5 + $0xb40] sm:$0xff]
    %v746 = vld [vmem:[%s5 + $0xb48] sm:$0xff]
    %v747 = vld [vmem:[%s5 + $0xb50] sm:$0xff]
    %v748 = vld [vmem:[%s5 + $0xb58] sm:$0xff]
    %v749 = vld [vmem:[%s5 + $0xb60] sm:$0xff]
    %v750 = vld [vmem:[%s5 + $0xb68] sm:$0xff]
    %v751 = vld [vmem:[%s5 + $0xb70] sm:$0xff]
    %v752 = vld [vmem:[%s5 + $0xb78] sm:$0xff]
    %v753 = vld [vmem:[%s5 + $0xb80] sm:$0xff]
    %v754 = vld [vmem:[%s5 + $0xb88] sm:$0xff]
    %v755 = vld [vmem:[%s5 + $0xb90] sm:$0xff]
    %v756 = vld [vmem:[%s5 + $0xb98] sm:$0xff]
    %v757 = vld [vmem:[%s5 + $0xba0] sm:$0xff]
    %v758 = vld [vmem:[%s5 + $0xba8] sm:$0xff]
    %v759 = vld [vmem:[%s5 + $0xbb0] sm:$0xff]
    %v760 = vld [vmem:[%s5 + $0xbb8] sm:$0xff]
    %v761 = vld [vmem:[%s5 + $0xbc0] sm:$0xff]
    %v762 = vld [vmem:[%s5 + $0xbc8] sm:$0xff]
    %v763 = vld [vmem:[%s5 + $0xbd0] sm:$0xff]
    %v764 = vld [vmem:[%s5 + $0xbd8] sm:$0xff]
    %v765 = vld [vmem:[%s5 + $0xbe0] sm:$0xff]
    %v766 = vld [vmem:[%s5 + $0xbe8] sm:$0xff]
    %v767 = vld [vmem:[%s5 + $0xbf0] sm:$0xff]
    %v768 = vld [vmem:[%s5 + $0xbf8] sm:$0xff]
    %v769 = vld [vmem:[%s5 + $0xc00] sm:$0xff]
    %v770 = vld [vmem:[%s5 + $0xc08] sm:$0xff]
    %v771 = vld [vmem:[%s5 + $0xc10] sm:$0xff]
    %v772 = vld [vmem:[%s5 + $0xc18] sm:$0xff]
    %v773 = vld [vmem:[%s5 + $0xc20] sm:$0xff]
    %v774 = vld [vmem:[%s5 + $0xc28] sm:$0xff]
    %v775 = vld [vmem:[%s5 + $0xc30] sm:$0xff]
    %v776 = vld [vmem:[%s5 + $0xc38] sm:$0xff]
    %v777 = vld [vmem:[%s5 + $0xc40] sm:$0xff]
    %v778 = vld [vmem:[%s5 + $0xc48] sm:$0xff]
    %v779 = vld [vmem:[%s5 + $0xc50] sm:$0xff]
    %v780 = vld [vmem:[%s5 + $0xc58] sm:$0xff]
    %v781 = vld [vmem:[%s5 + $0xc60] sm:$0xff]
    %v782 = vld [vmem:[%s5 + $0xc68] sm:$0xff]
    %v783 = vld [vmem:[%s5 + $0xc70] sm:$0xff]
    %v784 = vld [vmem:[%s5 + $0xc78] sm:$0xff]
    %v785 = vld [vmem:[%s5 + $0xc80] sm:$0xff]
    %v786 = vld [vmem:[%s5 + $0xc88] sm:$0xff]
    %v787 = vld [vmem:[%s5 + $0xc90] sm:$0xff]
    %v788 = vld [vmem:[%s5 + $0xc98] sm:$0xff]
    %v789 = vld [vmem:[%s5 + $0xca0] sm:$0xff]
    %v790 = vld [vmem:[%s5 + $0xca8] sm:$0xff]
    %v791 = vld [vmem:[%s5 + $0xcb0] sm:$0xff]
    %v792 = vld [vmem:[%s5 + $0xcb8] sm:$0xff]
    %v793 = vld [vmem:[%s5 + $0xcc0] sm:$0xff]
    %v794 = vld [vmem:[%s5 + $0xcc8] sm:$0xff]
    %v795 = vld [vmem:[%s5 + $0xcd0] sm:$0xff]
    %v796 = vld [vmem:[%s5 + $0xcd8] sm:$0xff]
    %v797 = vld [vmem:[%s5 + $0xce0] sm:$0xff]
    %v798 = vld [vmem:[%s5 + $0xce8] sm:$0xff]
    %v799 = vld [vmem:[%s5 + $0xcf0] sm:$0xff]
    %v800 = vld [vmem:[%s5 + $0xcf8] sm:$0xff]
    %v801 = vld [vmem:[%s5 + $0xd00] sm:$0xff]
    %v802 = vld [vmem:[%s5 + $0xd08] sm:$0xff]
    %v803 = vld [vmem:[%s5 + $0xd10] sm:$0xff]
    %v804 = vld [vmem:[%s5 + $0xd18] sm:$0xff]
    %v805 = vld [vmem:[%s5 + $0xd20] sm:$0xff]
    %v806 = vld [vmem:[%s5 + $0xd28] sm:$0xff]
    %v807 = vld [vmem:[%s5 + $0xd30] sm:$0xff]
    %v808 = vld [vmem:[%s5 + $0xd38] sm:$0xff]
    %v809 = vld [vmem:[%s5 + $0xd40] sm:$0xff]
    %v810 = vld [vmem:[%s5 + $0xd48] sm:$0xff]
    %v811 = vld [vmem:[%s5 + $0xd50] sm:$0xff]
    %v812 = vld [vmem:[%s5 + $0xd58] sm:$0xff]
    %v813 = vld [vmem:[%s5 + $0xd60] sm:$0xff]
    %v814 = vld [vmem:[%s5 + $0xd68] sm:$0xff]
    %v815 = vld [vmem:[%s5 + $0xd70] sm:$0xff]
    %v816 = vld [vmem:[%s5 + $0xd78] sm:$0xff]
    %v817 = vld [vmem:[%s5 + $0xd80] sm:$0xff]
    %v818 = vld [vmem:[%s5 + $0xd88] sm:$0xff]
    %v819 = vld [vmem:[%s5 + $0xd90] sm:$0xff]
    %v820 = vld [vmem:[%s5 + $0xd98] sm:$0xff]
    %v821 = vld [vmem:[%s5 + $0xda0] sm:$0xff]
    %v822 = vld [vmem:[%s5 + $0xda8] sm:$0xff]
    %v823 = vld [vmem:[%s5 + $0xdb0] sm:$0xff]
    %v824 = vld [vmem:[%s5 + $0xdb8] sm:$0xff]
    %v825 = vld [vmem:[%s5 + $0xdc0] sm:$0xff]
    %v826 = vld [vmem:[%s5 + $0xdc8] sm:$0xff]
    %v827 = vld [vmem:[%s5 + $0xdd0] sm:$0xff]
    %v828 = vld [vmem:[%s5 + $0xdd8] sm:$0xff]
    %v829 = vld [vmem:[%s5 + $0xde0] sm:$0xff]
    %v830 = vld [vmem:[%s5 + $0xde8] sm:$0xff]
    %v831 = vld [vmem:[%s5 + $0xdf0] sm:$0xff]
    %v832 = vld [vmem:[%s5 + $0xdf8] sm:$0xff]
    %v833 = vld [vmem:[%s5 + $0xe00] sm:$0xff]
    %v834 = vld [vmem:[%s5 + $0xe08] sm:$0xff]
    %v835 = vld [vmem:[%s5 + $0xe10] sm:$0xff]
    %v836 = vld [vmem:[%s5 + $0xe18] sm:$0xff]
    %v837 = vld [vmem:[%s5 + $0xe20] sm:$0xff]
    %v838 = vld [vmem:[%s5 + $0xe28] sm:$0xff]
    %v839 = vld [vmem:[%s5 + $0xe30] sm:$0xff]
    %v840 = vld [vmem:[%s5 + $0xe38] sm:$0xff]
    %v841 = vld [vmem:[%s5 + $0xe40] sm:$0xff]
    %v842 = vld [vmem:[%s5 + $0xe48] sm:$0xff]
    %v843 = vld [vmem:[%s5 + $0xe50] sm:$0xff]
    %v844 = vld [vmem:[%s5 + $0xe58] sm:$0xff]
    %v845 = vld [vmem:[%s5 + $0xe60] sm:$0xff]
    %v846 = vld [vmem:[%s5 + $0xe68] sm:$0xff]
    %v847 = vld [vmem:[%s5 + $0xe70] sm:$0xff]
    %v848 = vld [vmem:[%s5 + $0xe78] sm:$0xff]
    %v849 = vld [vmem:[%s5 + $0xe80] sm:$0xff]
    %v850 = vld [vmem:[%s5 + $0xe88] sm:$0xff]
    %v851 = vld [vmem:[%s5 + $0xe90] sm:$0xff]
    %v852 = vld [vmem:[%s5 + $0xe98] sm:$0xff]
    %v853 = vld [vmem:[%s5 + $0xea0] sm:$0xff]
    %v854 = vld [vmem:[%s5 + $0xea8] sm:$0xff]
    %v855 = vld [vmem:[%s5 + $0xeb0] sm:$0xff]
    %v856 = vld [vmem:[%s5 + $0xeb8] sm:$0xff]
    %v857 = vld [vmem:[%s5 + $0xec0] sm:$0xff]
    %v858 = vld [vmem:[%s5 + $0xec8] sm:$0xff]
    %v859 = vld [vmem:[%s5 + $0xed0] sm:$0xff]
    %v860 = vld [vmem:[%s5 + $0xed8] sm:$0xff]
    %v861 = vld [vmem:[%s5 + $0xee0] sm:$0xff]
    %v862 = vld [vmem:[%s5 + $0xee8] sm:$0xff]
    %v863 = vld [vmem:[%s5 + $0xef0] sm:$0xff]
    %v864 = vld [vmem:[%s5 + $0xef8] sm:$0xff]
    %v865 = vld [vmem:[%s5 + $0xf00] sm:$0xff]
    %v866 = vld [vmem:[%s5 + $0xf08] sm:$0xff]
    %v867 = vld [vmem:[%s5 + $0xf10] sm:$0xff]
    %v868 = vld [vmem:[%s5 + $0xf18] sm:$0xff]
    %v869 = vld [vmem:[%s5 + $0xf20] sm:$0xff]
    %v870 = vld [vmem:[%s5 + $0xf28] sm:$0xff]
    %v871 = vld [vmem:[%s5 + $0xf30] sm:$0xff]
    %v872 = vld [vmem:[%s5 + $0xf38] sm:$0xff]
    %v873 = vld [vmem:[%s5 + $0xf40] sm:$0xff]
    %v874 = vld [vmem:[%s5 + $0xf48] sm:$0xff]
    %v875 = vld [vmem:[%s5 + $0xf50] sm:$0xff]
    %v876 = vld [vmem:[%s5 + $0xf58] sm:$0xff]
    %v877 = vld [vmem:[%s5 + $0xf60] sm:$0xff]
    %v878 = vld [vmem:[%s5 + $0xf68] sm:$0xff]
    %v879 = vld [vmem:[%s5 + $0xf70] sm:$0xff]
    %v880 = vld [vmem:[%s5 + $0xf78] sm:$0xff]
    %v881 = vld [vmem:[%s5 + $0xf80] sm:$0xff]
    %v882 = vld [vmem:[%s5 + $0xf88] sm:$0xff]
    %v883 = vld [vmem:[%s5 + $0xf90] sm:$0xff]
    %v884 = vld [vmem:[%s5 + $0xf98] sm:$0xff]
    %v885 = vld [vmem:[%s5 + $0xfa0] sm:$0xff]
    %v886 = vld [vmem:[%s5 + $0xfa8] sm:$0xff]
    %v887 = vld [vmem:[%s5 + $0xfb0] sm:$0xff]
    %v888 = vld [vmem:[%s5 + $0xfb8] sm:$0xff]
    %v889 = vld [vmem:[%s5 + $0xfc0] sm:$0xff]
    %v890 = vld [vmem:[%s5 + $0xfc8] sm:$0xff]
    %v891 = vld [vmem:[%s5 + $0xfd0] sm:$0xff]
    %v892 = vld [vmem:[%s5 + $0xfd8] sm:$0xff]
    %v893 = vld [vmem:[%s5 + $0xfe0] sm:$0xff]
    %v894 = vld [vmem:[%s5 + $0xfe8] sm:$0xff]
    %v895 = vld [vmem:[%s5 + $0xff0] sm:$0xff]
    %v896 = vld [vmem:[%s5 + $0xff8] sm:$0xff]
    %v897 = vld [vmem:[%s5 + $0x1000] sm:$0xff]
    %v898 = vld [vmem:[%s5 + $0x1008] sm:$0xff]
    %v899 = vld [vmem:[%s5 + $0x1010] sm:$0xff]
    %v900 = vld [vmem:[%s5 + $0x1018] sm:$0xff]
    %v901 = vld [vmem:[%s5 + $0x1020] sm:$0xff]
    %v902 = vld [vmem:[%s5 + $0x1028] sm:$0xff]
    %v903 = vld [vmem:[%s5 + $0x1030] sm:$0xff]
    %v904 = vld [vmem:[%s5 + $0x1038] sm:$0xff]
    %v905 = vld [vmem:[%s5 + $0x1040] sm:$0xff]
    %v906 = vld [vmem:[%s5 + $0x1048] sm:$0xff]
    %v907 = vld [vmem:[%s5 + $0x1050] sm:$0xff]
    %v908 = vld [vmem:[%s5 + $0x1058] sm:$0xff]
    %v909 = vld [vmem:[%s5 + $0x1060] sm:$0xff]
    %v910 = vld [vmem:[%s5 + $0x1068] sm:$0xff]
    %v911 = vld [vmem:[%s5 + $0x1070] sm:$0xff]
    %v912 = vld [vmem:[%s5 + $0x1078] sm:$0xff]
    %v913 = vld [vmem:[%s5 + $0x1080] sm:$0xff]
    %v914 = vld [vmem:[%s5 + $0x1088] sm:$0xff]
    %v915 = vld [vmem:[%s5 + $0x1090] sm:$0xff]
    %v916 = vld [vmem:[%s5 + $0x1098] sm:$0xff]
    %v917 = vld [vmem:[%s5 + $0x10a0] sm:$0xff]
    %v918 = vld [vmem:[%s5 + $0x10a8] sm:$0xff]
    %v919 = vld [vmem:[%s5 + $0x10b0] sm:$0xff]
    %v920 = vld [vmem:[%s5 + $0x10b8] sm:$0xff]
    %v921 = vld [vmem:[%s5 + $0x10c0] sm:$0xff]
    %v922 = vld [vmem:[%s5 + $0x10c8] sm:$0xff]
    %v923 = vld [vmem:[%s5 + $0x10d0] sm:$0xff]
    %v924 = vld [vmem:[%s5 + $0x10d8] sm:$0xff]
    %v925 = vld [vmem:[%s5 + $0x10e0] sm:$0xff]
    %v926 = vld [vmem:[%s5 + $0x10e8] sm:$0xff]
    %v927 = vld [vmem:[%s5 + $0x10f0] sm:$0xff]
    %v928 = vld [vmem:[%s5 + $0x10f8] sm:$0xff]
    %v929 = vld [vmem:[%s5 + $0x1100] sm:$0xff]
    %v930 = vld [vmem:[%s5 + $0x1108] sm:$0xff]
    %v931 = vld [vmem:[%s5 + $0x1110] sm:$0xff]
    %v932 = vld [vmem:[%s5 + $0x1118] sm:$0xff]
    %v933 = vld [vmem:[%s5 + $0x1120] sm:$0xff]
    %v934 = vld [vmem:[%s5 + $0x1128] sm:$0xff]
    %v935 = vld [vmem:[%s5 + $0x1130] sm:$0xff]
    %v936 = vld [vmem:[%s5 + $0x1138] sm:$0xff]
    %v937 = vld [vmem:[%s5 + $0x1140] sm:$0xff]
    %v938 = vld [vmem:[%s5 + $0x1148] sm:$0xff]
    %v939 = vld [vmem:[%s5 + $0x1150] sm:$0xff]
    %v940 = vld [vmem:[%s5 + $0x1158] sm:$0xff]
    %v941 = vld [vmem:[%s5 + $0x1160] sm:$0xff]
    %v942 = vld [vmem:[%s5 + $0x1168] sm:$0xff]
    %v943 = vld [vmem:[%s5 + $0x1170] sm:$0xff]
    %v944 = vld [vmem:[%s5 + $0x1178] sm:$0xff]
    %v945 = vld [vmem:[%s5 + $0x1180] sm:$0xff]
    %v946 = vld [vmem:[%s5 + $0x1188] sm:$0xff]
    %v947 = vld [vmem:[%s5 + $0x1190] sm:$0xff]
    %v948 = vld [vmem:[%s5 + $0x1198] sm:$0xff]
    %v949 = vld [vmem:[%s5 + $0x11a0] sm:$0xff]
    %v950 = vld [vmem:[%s5 + $0x11a8] sm:$0xff]
    %v951 = vld [vmem:[%s5 + $0x11b0] sm:$0xff]
    %v952 = vld [vmem:[%s5 + $0x11b8] sm:$0xff]
    %v953 = vld [vmem:[%s5 + $0x11c0] sm:$0xff]
    %v954 = vld [vmem:[%s5 + $0x11c8] sm:$0xff]
    %v955 = vld [vmem:[%s5 + $0x11d0] sm:$0xff]
    %v956 = vld [vmem:[%s5 + $0x11d8] sm:$0xff]
    %v957 = vld [vmem:[%s5 + $0x11e0] sm:$0xff]
    %v958 = vld [vmem:[%s5 + $0x11e8] sm:$0xff]
    %v959 = vld [vmem:[%s5 + $0x11f0] sm:$0xff]
    %v960 = vld [vmem:[%s5 + $0x11f8] sm:$0xff]
    %v961 = vld [vmem:[%s5 + $0x1200] sm:$0xff]
    %v962 = vld [vmem:[%s5 + $0x1208] sm:$0xff]
    %v963 = vld [vmem:[%s5 + $0x1210] sm:$0xff]
    %v964 = vld [vmem:[%s5 + $0x1218] sm:$0xff]
    %v965 = vld [vmem:[%s5 + $0x1220] sm:$0xff]
    %v966 = vld [vmem:[%s5 + $0x1228] sm:$0xff]
    %v967 = vld [vmem:[%s5 + $0x1230] sm:$0xff]
    %v968 = vld [vmem:[%s5 + $0x1238] sm:$0xff]
    %v969 = vld [vmem:[%s5 + $0x1240] sm:$0xff]
    %v970 = vld [vmem:[%s5 + $0x1248] sm:$0xff]
    %v971 = vld [vmem:[%s5 + $0x1250] sm:$0xff]
    %v972 = vld [vmem:[%s5 + $0x1258] sm:$0xff]
    %v973 = vld [vmem:[%s5 + $0x1260] sm:$0xff]
    %v974 = vld [vmem:[%s5 + $0x1268] sm:$0xff]
    %v975 = vld [vmem:[%s5 + $0x1270] sm:$0xff]
    %v976 = vld [vmem:[%s5 + $0x1278] sm:$0xff]
    %v977 = vld [vmem:[%s5 + $0x1280] sm:$0xff]
    %v978 = vld [vmem:[%s5 + $0x1288] sm:$0xff]
    %v979 = vld [vmem:[%s5 + $0x1290] sm:$0xff]
    %v980 = vld [vmem:[%s5 + $0x1298] sm:$0xff]
    %v981 = vld [vmem:[%s5 + $0x12a0] sm:$0xff]
    %v982 = vld [vmem:[%s5 + $0x12a8] sm:$0xff]
    %v983 = vld [vmem:[%s5 + $0x12b0] sm:$0xff]
    %v984 = vld [vmem:[%s5 + $0x12b8] sm:$0xff]
    %v985 = vld [vmem:[%s5 + $0x12c0] sm:$0xff]
    %v986 = vld [vmem:[%s5 + $0x12c8] sm:$0xff]
    %v987 = vld [vmem:[%s5 + $0x12d0] sm:$0xff]
    %v988 = vld [vmem:[%s5 + $0x12d8] sm:$0xff]
    %v989 = vld [vmem:[%s5 + $0x12e0] sm:$0xff]
    %v990 = vld [vmem:[%s5 + $0x12e8] sm:$0xff]
    %v991 = vld [vmem:[%s5 + $0x12f0] sm:$0xff]
    %v992 = vld [vmem:[%s5 + $0x12f8] sm:$0xff]
    %v993 = vld [vmem:[%s5 + $0x1300] sm:$0xff]
    %v994 = vld [vmem:[%s5 + $0x1308] sm:$0xff]
    %v995 = vld [vmem:[%s5 + $0x1310] sm:$0xff]
    %v996 = vld [vmem:[%s5 + $0x1318] sm:$0xff]
    %v997 = vld [vmem:[%s5 + $0x1320] sm:$0xff]
    %v998 = vld [vmem:[%s5 + $0x1328] sm:$0xff]
    %v999 = vld [vmem:[%s5 + $0x1330] sm:$0xff]
    %v1000 = vld [vmem:[%s5 + $0x1338] sm:$0xff]
    %v1001 = vld [vmem:[%s5 + $0x1340] sm:$0xff]
    %v1002 = vld [vmem:[%s5 + $0x1348] sm:$0xff]
    %v1003 = vld [vmem:[%s5 + $0x1350] sm:$0xff]
    %v1004 = vld [vmem:[%s5 + $0x1358] sm:$0xff]
    %v1005 = vld [vmem:[%s5 + $0x1360] sm:$0xff]
    %v1006 = vld [vmem:[%s5 + $0x1368] sm:$0xff]
    %v1007 = vld [vmem:[%s5 + $0x1370] sm:$0xff]
    %v1008 = vld [vmem:[%s5 + $0x1378] sm:$0xff]
    %v1009 = vld [vmem:[%s5 + $0x1380] sm:$0xff]
    %v1010 = vld [vmem:[%s5 + $0x1388] sm:$0xff]
    %v1011 = vld [vmem:[%s5 + $0x1390] sm:$0xff]
    %v1012 = vld [vmem:[%s5 + $0x1398] sm:$0xff]
    %v1013 = vld [vmem:[%s5 + $0x13a0] sm:$0xff]
    %v1014 = vld [vmem:[%s5 + $0x13a8] sm:$0xff]
    %v1015 = vld [vmem:[%s5 + $0x13b0] sm:$0xff]
    %v1016 = vld [vmem:[%s5 + $0x13b8] sm:$0xff]
    %v1017 = vld [vmem:[%s5 + $0x13c0] sm:$0xff]
    %v1018 = vld [vmem:[%s5 + $0x13c8] sm:$0xff]
    %v1019 = vld [vmem:[%s5 + $0x13d0] sm:$0xff]
    %v1020 = vld [vmem:[%s5 + $0x13d8] sm:$0xff]
    %v1021 = vld [vmem:[%s5 + $0x13e0] sm:$0xff]
    %v1022 = vld [vmem:[%s5 + $0x13e8] sm:$0xff]
    %v1023 = vld [vmem:[%s5 + $0x13f0] sm:$0xff]
    %v1024 = vld [vmem:[%s5 + $0x13f8] sm:$0xff]
    %v1025 = vld [vmem:[%s5 + $0x1400] sm:$0xff]
    %v1026 = vld [vmem:[%s5 + $0x1408] sm:$0xff]
    %v1027 = vld [vmem:[%s5 + $0x1410] sm:$0xff]
    %v1028 = vld [vmem:[%s5 + $0x1418] sm:$0xff]
    %v1029 = vld [vmem:[%s5 + $0x1420] sm:$0xff]
    %v1030 = vld [vmem:[%s5 + $0x1428] sm:$0xff]
    %v1031 = vld [vmem:[%s5 + $0x1430] sm:$0xff]
    %v1032 = vld [vmem:[%s5 + $0x1438] sm:$0xff]
    %v1033 = vld [vmem:[%s5 + $0x1440] sm:$0xff]
    %v1034 = vld [vmem:[%s5 + $0x1448] sm:$0xff]
    %v1035 = vld [vmem:[%s5 + $0x1450] sm:$0xff]
    %v1036 = vld [vmem:[%s5 + $0x1458] sm:$0xff]
    %v1037 = vld [vmem:[%s5 + $0x1460] sm:$0xff]
    %v1038 = vld [vmem:[%s5 + $0x1468] sm:$0xff]
    %v1039 = vld [vmem:[%s5 + $0x1470] sm:$0xff]
    %v1040 = vld [vmem:[%s5 + $0x1478] sm:$0xff]
    %v1041 = vld [vmem:[%s5 + $0x1480] sm:$0xff]
    %v1042 = vld [vmem:[%s5 + $0x1488] sm:$0xff]
    %v1043 = vld [vmem:[%s5 + $0x1490] sm:$0xff]
    %v1044 = vld [vmem:[%s5 + $0x1498] sm:$0xff]
    %v1045 = vld [vmem:[%s5 + $0x14a0] sm:$0xff]
    %v1046 = vld [vmem:[%s5 + $0x14a8] sm:$0xff]
    %v1047 = vld [vmem:[%s5 + $0x14b0] sm:$0xff]
    %v1048 = vld [vmem:[%s5 + $0x14b8] sm:$0xff]
    %v1049 = vld [vmem:[%s5 + $0x14c0] sm:$0xff]
    %v1050 = vld [vmem:[%s5 + $0x14c8] sm:$0xff]
    %v1051 = vld [vmem:[%s5 + $0x14d0] sm:$0xff]
    %v1052 = vld [vmem:[%s5 + $0x14d8] sm:$0xff]
    %v1053 = vld [vmem:[%s5 + $0x14e0] sm:$0xff]
    %v1054 = vld [vmem:[%s5 + $0x14e8] sm:$0xff]
    %v1055 = vld [vmem:[%s5 + $0x14f0] sm:$0xff]
    %v1056 = vld [vmem:[%s5 + $0x14f8] sm:$0xff]
    %v1057 = vld [vmem:[%s5 + $0x1500] sm:$0xff]
    %v1058 = vld [vmem:[%s5 + $0x1508] sm:$0xff]
    %v1059 = vld [vmem:[%s5 + $0x1510] sm:$0xff]
    %v1060 = vld [vmem:[%s5 + $0x1518] sm:$0xff]
    %v1061 = vld [vmem:[%s5 + $0x1520] sm:$0xff]
    %v1062 = vld [vmem:[%s5 + $0x1528] sm:$0xff]
    %v1063 = vld [vmem:[%s5 + $0x1530] sm:$0xff]
    %v1064 = vld [vmem:[%s5 + $0x1538] sm:$0xff]
    %v1065 = vld [vmem:[%s5 + $0x1540] sm:$0xff]
    %v1066 = vld [vmem:[%s5 + $0x1548] sm:$0xff]
    %v1067 = vld [vmem:[%s5 + $0x1550] sm:$0xff]
    %v1068 = vld [vmem:[%s5 + $0x1558] sm:$0xff]
    %v1069 = vld [vmem:[%s5 + $0x1560] sm:$0xff]
    %v1070 = vld [vmem:[%s5 + $0x1568] sm:$0xff]
    %v1071 = vld [vmem:[%s5 + $0x1570] sm:$0xff]
    %v1072 = vld [vmem:[%s5 + $0x1578] sm:$0xff]
    %v1073 = vld [vmem:[%s5 + $0x1580] sm:$0xff]
    %v1074 = vld [vmem:[%s5 + $0x1588] sm:$0xff]
    %v1075 = vld [vmem:[%s5 + $0x1590] sm:$0xff]
    %v1076 = vld [vmem:[%s5 + $0x1598] sm:$0xff]
    %v1077 = vld [vmem:[%s5 + $0x15a0] sm:$0xff]
    %v1078 = vld [vmem:[%s5 + $0x15a8] sm:$0xff]
    %v1079 = vld [vmem:[%s5 + $0x15b0] sm:$0xff]
    %v1080 = vld [vmem:[%s5 + $0x15b8] sm:$0xff]
    %v1081 = vld [vmem:[%s5 + $0x15c0] sm:$0xff]
    %v1082 = vld [vmem:[%s5 + $0x15c8] sm:$0xff]
    %v1083 = vld [vmem:[%s5 + $0x15d0] sm:$0xff]
    %v1084 = vld [vmem:[%s5 + $0x15d8] sm:$0xff]
    %v1085 = vld [vmem:[%s5 + $0x15e0] sm:$0xff]
    %v1086 = vld [vmem:[%s5 + $0x15e8] sm:$0xff]
    %v1087 = vld [vmem:[%s5 + $0x15f0] sm:$0xff]
    %v1088 = vld [vmem:[%s5 + $0x15f8] sm:$0xff]
    %v1089 = vld [vmem:[%s5 + $0x1600] sm:$0xff]
    %v1090 = vld [vmem:[%s5 + $0x1608] sm:$0xff]
    %v1091 = vld [vmem:[%s5 + $0x1610] sm:$0xff]
    %v1092 = vld [vmem:[%s5 + $0x1618] sm:$0xff]
    %v1093 = vld [vmem:[%s5 + $0x1620] sm:$0xff]
    %v1094 = vld [vmem:[%s5 + $0x1628] sm:$0xff]
    %v1095 = vld [vmem:[%s5 + $0x1630] sm:$0xff]
    %v1096 = vld [vmem:[%s5 + $0x1638] sm:$0xff]
    %v1097 = vld [vmem:[%s5 + $0x1640] sm:$0xff]
    %v1098 = vld [vmem:[%s5 + $0x1648] sm:$0xff]
    %v1099 = vld [vmem:[%s5 + $0x1650] sm:$0xff]
    %v1100 = vld [vmem:[%s5 + $0x1658] sm:$0xff]
    %v1101 = vld [vmem:[%s5 + $0x1660] sm:$0xff]
    %v1102 = vld [vmem:[%s5 + $0x1668] sm:$0xff]
    %v1103 = vld [vmem:[%s5 + $0x1670] sm:$0xff]
    %v1104 = vld [vmem:[%s5 + $0x1678] sm:$0xff]
    %v1105 = vld [vmem:[%s5 + $0x1680] sm:$0xff]
    %v1106 = vld [vmem:[%s5 + $0x1688] sm:$0xff]
    %v1107 = vld [vmem:[%s5 + $0x1690] sm:$0xff]
    %v1108 = vld [vmem:[%s5 + $0x1698] sm:$0xff]
    %v1109 = vld [vmem:[%s5 + $0x16a0] sm:$0xff]
    %v1110 = vld [vmem:[%s5 + $0x16a8] sm:$0xff]
    %v1111 = vld [vmem:[%s5 + $0x16b0] sm:$0xff]
    %v1112 = vld [vmem:[%s5 + $0x16b8] sm:$0xff]
    %v1113 = vld [vmem:[%s5 + $0x16c0] sm:$0xff]
    %v1114 = vld [vmem:[%s5 + $0x16c8] sm:$0xff]
    %v1115 = vld [vmem:[%s5 + $0x16d0] sm:$0xff]
    %v1116 = vld [vmem:[%s5 + $0x16d8] sm:$0xff]
    %v1117 = vld [vmem:[%s5 + $0x16e0] sm:$0xff]
    %v1118 = vld [vmem:[%s5 + $0x16e8] sm:$0xff]
    %v1119 = vld [vmem:[%s5 + $0x16f0] sm:$0xff]
    %v1120 = vld [vmem:[%s5 + $0x16f8] sm:$0xff]
    %v1121 = vld [vmem:[%s5 + $0x1700] sm:$0xff]
    %v1122 = vld [vmem:[%s5 + $0x1708] sm:$0xff]
    %v1123 = vld [vmem:[%s5 + $0x1710] sm:$0xff]
    %v1124 = vld [vmem:[%s5 + $0x1718] sm:$0xff]
    %v1125 = vld [vmem:[%s5 + $0x1720] sm:$0xff]
    %v1126 = vld [vmem:[%s5 + $0x1728] sm:$0xff]
    %v1127 = vld [vmem:[%s5 + $0x1730] sm:$0xff]
    %v1128 = vld [vmem:[%s5 + $0x1738] sm:$0xff]
    %v1129 = vld [vmem:[%s5 + $0x1740] sm:$0xff]
    %v1130 = vld [vmem:[%s5 + $0x1748] sm:$0xff]
    %v1131 = vld [vmem:[%s5 + $0x1750] sm:$0xff]
    %v1132 = vld [vmem:[%s5 + $0x1758] sm:$0xff]
    %v1133 = vld [vmem:[%s5 + $0x1760] sm:$0xff]
    %v1134 = vld [vmem:[%s5 + $0x1768] sm:$0xff]
    %v1135 = vld [vmem:[%s5 + $0x1770] sm:$0xff]
    %v1136 = vld [vmem:[%s5 + $0x1778] sm:$0xff]
    %v1137 = vld [vmem:[%s5 + $0x1780] sm:$0xff]
    %v1138 = vld [vmem:[%s5 + $0x1788] sm:$0xff]
    %v1139 = vld [vmem:[%s5 + $0x1790] sm:$0xff]
    %v1140 = vld [vmem:[%s5 + $0x1798] sm:$0xff]
    %v1141 = vld [vmem:[%s5 + $0x17a0] sm:$0xff]
    %v1142 = vld [vmem:[%s5 + $0x17a8] sm:$0xff]
    %v1143 = vld [vmem:[%s5 + $0x17b0] sm:$0xff]
    %v1144 = vld [vmem:[%s5 + $0x17b8] sm:$0xff]
    %v1145 = vld [vmem:[%s5 + $0x17c0] sm:$0xff]
    %v1146 = vld [vmem:[%s5 + $0x17c8] sm:$0xff]
    %v1147 = vld [vmem:[%s5 + $0x17d0] sm:$0xff]
    %v1148 = vld [vmem:[%s5 + $0x17d8] sm:$0xff]
    %v1149 = vld [vmem:[%s5 + $0x17e0] sm:$0xff]
    %v1150 = vld [vmem:[%s5 + $0x17e8] sm:$0xff]
    %v1151 = vld [vmem:[%s5 + $0x17f0] sm:$0xff]
    %v1152 = vld [vmem:[%s5 + $0x17f8] sm:$0xff]
    %v1153 = vld [vmem:[%s5 + $0x1800] sm:$0xff]
    %v1154 = vld [vmem:[%s5 + $0x1808] sm:$0xff]
    %v1155 = vld [vmem:[%s5 + $0x1810] sm:$0xff]
    %v1156 = vld [vmem:[%s5 + $0x1818] sm:$0xff]
    %v1157 = vld [vmem:[%s5 + $0x1820] sm:$0xff]
    %v1158 = vld [vmem:[%s5 + $0x1828] sm:$0xff]
    %v1159 = vld [vmem:[%s5 + $0x1830] sm:$0xff]
    %v1160 = vld [vmem:[%s5 + $0x1838] sm:$0xff]
    %v1161 = vld [vmem:[%s5 + $0x1840] sm:$0xff]
    %v1162 = vld [vmem:[%s5 + $0x1848] sm:$0xff]
    %v1163 = vld [vmem:[%s5 + $0x1850] sm:$0xff]
    %v1164 = vld [vmem:[%s5 + $0x1858] sm:$0xff]
    %v1165 = vld [vmem:[%s5 + $0x1860] sm:$0xff]
    %v1166 = vld [vmem:[%s5 + $0x1868] sm:$0xff]
    %v1167 = vld [vmem:[%s5 + $0x1870] sm:$0xff]
    %v1168 = vld [vmem:[%s5 + $0x1878] sm:$0xff]
    %v1169 = vld [vmem:[%s5 + $0x1880] sm:$0xff]
    %v1170 = vld [vmem:[%s5 + $0x1888] sm:$0xff]
    %v1171 = vld [vmem:[%s5 + $0x1890] sm:$0xff]
    %v1172 = vld [vmem:[%s5 + $0x1898] sm:$0xff]
    %v1173 = vld [vmem:[%s5 + $0x18a0] sm:$0xff]
    %v1174 = vld [vmem:[%s5 + $0x18a8] sm:$0xff]
    %v1175 = vld [vmem:[%s5 + $0x18b0] sm:$0xff]
    %v1176 = vld [vmem:[%s5 + $0x18b8] sm:$0xff]
    %v1177 = vld [vmem:[%s5 + $0x18c0] sm:$0xff]
    %v1178 = vld [vmem:[%s5 + $0x18c8] sm:$0xff]
    %v1179 = vld [vmem:[%s5 + $0x18d0] sm:$0xff]
    %v1180 = vld [vmem:[%s5 + $0x18d8] sm:$0xff]
    %v1181 = vld [vmem:[%s5 + $0x18e0] sm:$0xff]
    %v1182 = vld [vmem:[%s5 + $0x18e8] sm:$0xff]
    %v1183 = vld [vmem:[%s5 + $0x18f0] sm:$0xff]
    %v1184 = vld [vmem:[%s5 + $0x18f8] sm:$0xff]
    %v1185 = vld [vmem:[%s5 + $0x1900] sm:$0xff]
    %v1186 = vld [vmem:[%s5 + $0x1908] sm:$0xff]
    %v1187 = vld [vmem:[%s5 + $0x1910] sm:$0xff]
    %v1188 = vld [vmem:[%s5 + $0x1918] sm:$0xff]
    %v1189 = vld [vmem:[%s5 + $0x1920] sm:$0xff]
    %v1190 = vld [vmem:[%s5 + $0x1928] sm:$0xff]
    %v1191 = vld [vmem:[%s5 + $0x1930] sm:$0xff]
    %v1192 = vld [vmem:[%s5 + $0x1938] sm:$0xff]
    %v1193 = vld [vmem:[%s5 + $0x1940] sm:$0xff]
    %v1194 = vld [vmem:[%s5 + $0x1948] sm:$0xff]
    %v1195 = vld [vmem:[%s5 + $0x1950] sm:$0xff]
    %v1196 = vld [vmem:[%s5 + $0x1958] sm:$0xff]
    %v1197 = vld [vmem:[%s5 + $0x1960] sm:$0xff]
    %v1198 = vld [vmem:[%s5 + $0x1968] sm:$0xff]
    %v1199 = vld [vmem:[%s5 + $0x1970] sm:$0xff]
    %v1200 = vld [vmem:[%s5 + $0x1978] sm:$0xff]
    %v1201 = vld [vmem:[%s5 + $0x1980] sm:$0xff]
    %v1202 = vld [vmem:[%s5 + $0x1988] sm:$0xff]
    %v1203 = vld [vmem:[%s5 + $0x1990] sm:$0xff]
    %v1204 = vld [vmem:[%s5 + $0x1998] sm:$0xff]
    %v1205 = vld [vmem:[%s5 + $0x19a0] sm:$0xff]
    %v1206 = vld [vmem:[%s5 + $0x19a8] sm:$0xff]
    %v1207 = vld [vmem:[%s5 + $0x19b0] sm:$0xff]
    %v1208 = vld [vmem:[%s5 + $0x19b8] sm:$0xff]
    %v1209 = vld [vmem:[%s5 + $0x19c0] sm:$0xff]
    %v1210 = vld [vmem:[%s5 + $0x19c8] sm:$0xff]
    %v1211 = vld [vmem:[%s5 + $0x19d0] sm:$0xff]
    %v1212 = vld [vmem:[%s5 + $0x19d8] sm:$0xff]
    %v1213 = vld [vmem:[%s5 + $0x19e0] sm:$0xff]
    %v1214 = vld [vmem:[%s5 + $0x19e8] sm:$0xff]
    %v1215 = vld [vmem:[%s5 + $0x19f0] sm:$0xff]
    %v1216 = vld [vmem:[%s5 + $0x19f8] sm:$0xff]
    %v1217 = vld [vmem:[%s5 + $0x1a00] sm:$0xff]
    %v1218 = vld [vmem:[%s5 + $0x1a08] sm:$0xff]
    %v1219 = vld [vmem:[%s5 + $0x1a10] sm:$0xff]
    %v1220 = vld [vmem:[%s5 + $0x1a18] sm:$0xff]
    %v1221 = vld [vmem:[%s5 + $0x1a20] sm:$0xff]
    %v1222 = vld [vmem:[%s5 + $0x1a28] sm:$0xff]
    %v1223 = vld [vmem:[%s5 + $0x1a30] sm:$0xff]
    %v1224 = vld [vmem:[%s5 + $0x1a38] sm:$0xff]
    %v1225 = vld [vmem:[%s5 + $0x1a40] sm:$0xff]
    %v1226 = vld [vmem:[%s5 + $0x1a48] sm:$0xff]
    %v1227 = vld [vmem:[%s5 + $0x1a50] sm:$0xff]
    %v1228 = vld [vmem:[%s5 + $0x1a58] sm:$0xff]
    %v1229 = vld [vmem:[%s5 + $0x1a60] sm:$0xff]
    %v1230 = vld [vmem:[%s5 + $0x1a68] sm:$0xff]
    %v1231 = vld [vmem:[%s5 + $0x1a70] sm:$0xff]
    %v1232 = vld [vmem:[%s5 + $0x1a78] sm:$0xff]
    %v1233 = vld [vmem:[%s5 + $0x1a80] sm:$0xff]
    %v1234 = vld [vmem:[%s5 + $0x1a88] sm:$0xff]
    %v1235 = vld [vmem:[%s5 + $0x1a90] sm:$0xff]
    %v1236 = vld [vmem:[%s5 + $0x1a98] sm:$0xff]
    %v1237 = vld [vmem:[%s5 + $0x1aa0] sm:$0xff]
    %v1238 = vld [vmem:[%s5 + $0x1aa8] sm:$0xff]
    %v1239 = vld [vmem:[%s5 + $0x1ab0] sm:$0xff]
    %v1240 = vld [vmem:[%s5 + $0x1ab8] sm:$0xff]
    %v1241 = vld [vmem:[%s5 + $0x1ac0] sm:$0xff]
    %v1242 = vld [vmem:[%s5 + $0x1ac8] sm:$0xff]
    %v1243 = vld [vmem:[%s5 + $0x1ad0] sm:$0xff]
    %v1244 = vld [vmem:[%s5 + $0x1ad8] sm:$0xff]
    %v1245 = vld [vmem:[%s5 + $0x1ae0] sm:$0xff]
    %v1246 = vld [vmem:[%s5 + $0x1ae8] sm:$0xff]
    %v1247 = vld [vmem:[%s5 + $0x1af0] sm:$0xff]
    %v1248 = vld [vmem:[%s5 + $0x1af8] sm:$0xff]
    %v1249 = vld [vmem:[%s5 + $0x1b00] sm:$0xff]
    %v1250 = vld [vmem:[%s5 + $0x1b08] sm:$0xff]
    %v1251 = vld [vmem:[%s5 + $0x1b10] sm:$0xff]
    %v1252 = vld [vmem:[%s5 + $0x1b18] sm:$0xff]
    %v1253 = vld [vmem:[%s5 + $0x1b20] sm:$0xff]
    %v1254 = vld [vmem:[%s5 + $0x1b28] sm:$0xff]
    %v1255 = vld [vmem:[%s5 + $0x1b30] sm:$0xff]
    %v1256 = vld [vmem:[%s5 + $0x1b38] sm:$0xff]
    %v1257 = vld [vmem:[%s5 + $0x1b40] sm:$0xff]
    %v1258 = vld [vmem:[%s5 + $0x1b48] sm:$0xff]
    %v1259 = vld [vmem:[%s5 + $0x1b50] sm:$0xff]
    %v1260 = vld [vmem:[%s5 + $0x1b58] sm:$0xff]
    %v1261 = vld [vmem:[%s5 + $0x1b60] sm:$0xff]
    %v1262 = vld [vmem:[%s5 + $0x1b68] sm:$0xff]
    %v1263 = vld [vmem:[%s5 + $0x1b70] sm:$0xff]
    %v1264 = vld [vmem:[%s5 + $0x1b78] sm:$0xff]
    %v1265 = vld [vmem:[%s5 + $0x1b80] sm:$0xff]
    %v1266 = vld [vmem:[%s5 + $0x1b88] sm:$0xff]
    %v1267 = vld [vmem:[%s5 + $0x1b90] sm:$0xff]
    %v1268 = vld [vmem:[%s5 + $0x1b98] sm:$0xff]
    %v1269 = vld [vmem:[%s5 + $0x1ba0] sm:$0xff]
    %v1270 = vld [vmem:[%s5 + $0x1ba8] sm:$0xff]
    %v1271 = vld [vmem:[%s5 + $0x1bb0] sm:$0xff]
    %v1272 = vld [vmem:[%s5 + $0x1bb8] sm:$0xff]
    %v1273 = vld [vmem:[%s5 + $0x1bc0] sm:$0xff]
    %v1274 = vld [vmem:[%s5 + $0x1bc8] sm:$0xff]
    %v1275 = vld [vmem:[%s5 + $0x1bd0] sm:$0xff]
    %v1276 = vld [vmem:[%s5 + $0x1bd8] sm:$0xff]
    %v1277 = vld [vmem:[%s5 + $0x1be0] sm:$0xff]
    %v1278 = vld [vmem:[%s5 + $0x1be8] sm:$0xff]
    %v1279 = vld [vmem:[%s5 + $0x1bf0] sm:$0xff]
    %v1280 = vld [vmem:[%s5 + $0x1bf8] sm:$0xff]
    %v1281 = vld [vmem:[%s5 + $0x1c00] sm:$0xff]
    %v1282 = vld [vmem:[%s5 + $0x1c08] sm:$0xff]
    %v1283 = vld [vmem:[%s5 + $0x1c10] sm:$0xff]
    %v1284 = vld [vmem:[%s5 + $0x1c18] sm:$0xff]
    %v1285 = vld [vmem:[%s5 + $0x1c20] sm:$0xff]
    %v1286 = vld [vmem:[%s5 + $0x1c28] sm:$0xff]
    %v1287 = vld [vmem:[%s5 + $0x1c30] sm:$0xff]
    %v1288 = vld [vmem:[%s5 + $0x1c38] sm:$0xff]
    %v1289 = vld [vmem:[%s5 + $0x1c40] sm:$0xff]
    %v1290 = vld [vmem:[%s5 + $0x1c48] sm:$0xff]
    %v1291 = vld [vmem:[%s5 + $0x1c50] sm:$0xff]
    %v1292 = vld [vmem:[%s5 + $0x1c58] sm:$0xff]
    %v1293 = vld [vmem:[%s5 + $0x1c60] sm:$0xff]
    %v1294 = vld [vmem:[%s5 + $0x1c68] sm:$0xff]
    %v1295 = vld [vmem:[%s5 + $0x1c70] sm:$0xff]
    %v1296 = vld [vmem:[%s5 + $0x1c78] sm:$0xff]
    %v1297 = vld [vmem:[%s5 + $0x1c80] sm:$0xff]
    %v1298 = vld [vmem:[%s5 + $0x1c88] sm:$0xff]
    %v1299 = vld [vmem:[%s5 + $0x1c90] sm:$0xff]
    %v1300 = vld [vmem:[%s5 + $0x1c98] sm:$0xff]
    %v1301 = vld [vmem:[%s5 + $0x1ca0] sm:$0xff]
    %v1302 = vld [vmem:[%s5 + $0x1ca8] sm:$0xff]
    %v1303 = vld [vmem:[%s5 + $0x1cb0] sm:$0xff]
    %v1304 = vld [vmem:[%s5 + $0x1cb8] sm:$0xff]
    %v1305 = vld [vmem:[%s5 + $0x1cc0] sm:$0xff]
    %v1306 = vld [vmem:[%s5 + $0x1cc8] sm:$0xff]
    %v1307 = vld [vmem:[%s5 + $0x1cd0] sm:$0xff]
    %v1308 = vld [vmem:[%s5 + $0x1cd8] sm:$0xff]
    %v1309 = vld [vmem:[%s5 + $0x1ce0] sm:$0xff]
    %v1310 = vld [vmem:[%s5 + $0x1ce8] sm:$0xff]
    %v1311 = vld [vmem:[%s5 + $0x1cf0] sm:$0xff]
    %v1312 = vld [vmem:[%s5 + $0x1cf8] sm:$0xff]
    %v1313 = vld [vmem:[%s5 + $0x1d00] sm:$0xff]
    %v1314 = vld [vmem:[%s5 + $0x1d08] sm:$0xff]
    %v1315 = vld [vmem:[%s5 + $0x1d10] sm:$0xff]
    %v1316 = vld [vmem:[%s5 + $0x1d18] sm:$0xff]
    %v1317 = vld [vmem:[%s5 + $0x1d20] sm:$0xff]
    %v1318 = vld [vmem:[%s5 + $0x1d28] sm:$0xff]
    %v1319 = vld [vmem:[%s5 + $0x1d30] sm:$0xff]
    %v1320 = vld [vmem:[%s5 + $0x1d38] sm:$0xff]
    %v1321 = vld [vmem:[%s5 + $0x1d40] sm:$0xff]
    %v1322 = vld [vmem:[%s5 + $0x1d48] sm:$0xff]
    %v1323 = vld [vmem:[%s5 + $0x1d50] sm:$0xff]
    %v1324 = vld [vmem:[%s5 + $0x1d58] sm:$0xff]
    %v1325 = vld [vmem:[%s5 + $0x1d60] sm:$0xff]
    %v1326 = vld [vmem:[%s5 + $0x1d68] sm:$0xff]
    %v1327 = vld [vmem:[%s5 + $0x1d70] sm:$0xff]
    %v1328 = vld [vmem:[%s5 + $0x1d78] sm:$0xff]
    %v1329 = vld [vmem:[%s5 + $0x1d80] sm:$0xff]
    %v1330 = vld [vmem:[%s5 + $0x1d88] sm:$0xff]
    %v1331 = vld [vmem:[%s5 + $0x1d90] sm:$0xff]
    %v1332 = vld [vmem:[%s5 + $0x1d98] sm:$0xff]
    %v1333 = vld [vmem:[%s5 + $0x1da0] sm:$0xff]
    %v1334 = vld [vmem:[%s5 + $0x1da8] sm:$0xff]
    %v1335 = vld [vmem:[%s5 + $0x1db0] sm:$0xff]
    %v1336 = vld [vmem:[%s5 + $0x1db8] sm:$0xff]
    %v1337 = vld [vmem:[%s5 + $0x1dc0] sm:$0xff]
    %v1338 = vld [vmem:[%s5 + $0x1dc8] sm:$0xff]
    %v1339 = vld [vmem:[%s5 + $0x1dd0] sm:$0xff]
    %v1340 = vld [vmem:[%s5 + $0x1dd8] sm:$0xff]
    %v1341 = vld [vmem:[%s5 + $0x1de0] sm:$0xff]
    %v1342 = vld [vmem:[%s5 + $0x1de8] sm:$0xff]
    %v1343 = vld [vmem:[%s5 + $0x1df0] sm:$0xff]
    %v1344 = vld [vmem:[%s5 + $0x1df8] sm:$0xff]
    %v1345 = vld [vmem:[%s5 + $0x1e00] sm:$0xff]
    %v1346 = vld [vmem:[%s5 + $0x1e08] sm:$0xff]
    %v1347 = vld [vmem:[%s5 + $0x1e10] sm:$0xff]
    %v1348 = vld [vmem:[%s5 + $0x1e18] sm:$0xff]
    %v1349 = vld [vmem:[%s5 + $0x1e20] sm:$0xff]
    %v1350 = vld [vmem:[%s5 + $0x1e28] sm:$0xff]
    %v1351 = vld [vmem:[%s5 + $0x1e30] sm:$0xff]
    %v1352 = vld [vmem:[%s5 + $0x1e38] sm:$0xff]
    %v1353 = vld [vmem:[%s5 + $0x1e40] sm:$0xff]
    %v1354 = vld [vmem:[%s5 + $0x1e48] sm:$0xff]
    %v1355 = vld [vmem:[%s5 + $0x1e50] sm:$0xff]
    %v1356 = vld [vmem:[%s5 + $0x1e58] sm:$0xff]
    %v1357 = vld [vmem:[%s5 + $0x1e60] sm:$0xff]
    %v1358 = vld [vmem:[%s5 + $0x1e68] sm:$0xff]
    %v1359 = vld [vmem:[%s5 + $0x1e70] sm:$0xff]
    %v1360 = vld [vmem:[%s5 + $0x1e78] sm:$0xff]
    %v1361 = vld [vmem:[%s5 + $0x1e80] sm:$0xff]
    %v1362 = vld [vmem:[%s5 + $0x1e88] sm:$0xff]
    %v1363 = vld [vmem:[%s5 + $0x1e90] sm:$0xff]
    %v1364 = vld [vmem:[%s5 + $0x1e98] sm:$0xff]
    %v1365 = vld [vmem:[%s5 + $0x1ea0] sm:$0xff]
    %v1366 = vld [vmem:[%s5 + $0x1ea8] sm:$0xff]
    %v1367 = vld [vmem:[%s5 + $0x1eb0] sm:$0xff]
    %v1368 = vld [vmem:[%s5 + $0x1eb8] sm:$0xff]
    %v1369 = vld [vmem:[%s5 + $0x1ec0] sm:$0xff]
    %v1370 = vld [vmem:[%s5 + $0x1ec8] sm:$0xff]
    %v1371 = vld [vmem:[%s5 + $0x1ed0] sm:$0xff]
    %v1372 = vld [vmem:[%s5 + $0x1ed8] sm:$0xff]
    %v1373 = vld [vmem:[%s5 + $0x1ee0] sm:$0xff]
    %v1374 = vld [vmem:[%s5 + $0x1ee8] sm:$0xff]
    %v1375 = vld [vmem:[%s5 + $0x1ef0] sm:$0xff]
    %v1376 = vld [vmem:[%s5 + $0x1ef8] sm:$0xff]
    %v1377 = vld [vmem:[%s5 + $0x1f00] sm:$0xff]
    %v1378 = vld [vmem:[%s5 + $0x1f08] sm:$0xff]
    %v1379 = vld [vmem:[%s5 + $0x1f10] sm:$0xff]
    %v1380 = vld [vmem:[%s5 + $0x1f18] sm:$0xff]
    %v1381 = vld [vmem:[%s5 + $0x1f20] sm:$0xff]
    %v1382 = vld [vmem:[%s5 + $0x1f28] sm:$0xff]
    %v1383 = vld [vmem:[%s5 + $0x1f30] sm:$0xff]
    %v1384 = vld [vmem:[%s5 + $0x1f38] sm:$0xff]
    %v1385 = vld [vmem:[%s5 + $0x1f40] sm:$0xff]
    %v1386 = vld [vmem:[%s5 + $0x1f48] sm:$0xff]
    %v1387 = vld [vmem:[%s5 + $0x1f50] sm:$0xff]
    %v1388 = vld [vmem:[%s5 + $0x1f58] sm:$0xff]
    %v1389 = vld [vmem:[%s5 + $0x1f60] sm:$0xff]
    %v1390 = vld [vmem:[%s5 + $0x1f68] sm:$0xff]
    %v1391 = vld [vmem:[%s5 + $0x1f70] sm:$0xff]
    %v1392 = vld [vmem:[%s5 + $0x1f78] sm:$0xff]
    %v1393 = vld [vmem:[%s5 + $0x1f80] sm:$0xff]
    %v1394 = vld [vmem:[%s5 + $0x1f88] sm:$0xff]
    %v1395 = vld [vmem:[%s5 + $0x1f90] sm:$0xff]
    %v1396 = vld [vmem:[%s5 + $0x1f98] sm:$0xff]
    %v1397 = vld [vmem:[%s5 + $0x1fa0] sm:$0xff]
    %v1398 = vld [vmem:[%s5 + $0x1fa8] sm:$0xff]
    %v1399 = vld [vmem:[%s5 + $0x1fb0] sm:$0xff]
    %v1400 = vld [vmem:[%s5 + $0x1fb8] sm:$0xff]
    %v1401 = vld [vmem:[%s5 + $0x1fc0] sm:$0xff]
    %v1402 = vld [vmem:[%s5 + $0x1fc8] sm:$0xff]
    %v1403 = vld [vmem:[%s5 + $0x1fd0] sm:$0xff]
    %v1404 = vld [vmem:[%s5 + $0x1fd8] sm:$0xff]
    %v1405 = vld [vmem:[%s5 + $0x1fe0] sm:$0xff]
    %v1406 = vld [vmem:[%s5 + $0x1fe8] sm:$0xff]
    %v1407 = vld [vmem:[%s5 + $0x1ff0] sm:$0xff]
    %v1408 = vld [vmem:[%s5 + $0x1ff8] sm:$0xff]
    %v1409 = vld [vmem:[%s6] sm:$0xff]
    %v1411 = vperm.slane %v1409, 0
    %v1412 = vperm.slane %v1409, 1
    %v1413 = vperm.slane %v1409, 2
    %v1414 = vperm.slane %v1409, 3
    %v1415 = vperm.slane %v1409, 4
    %v1416 = vperm.slane %v1409, 5
    %v1417 = vperm.slane %v1409, 6
    %v1418 = vperm.slane %v1409, 7
    %1427 = vmatpush.msra.mxu0 %v505
    %1428 = vmatpush.msra.mxu0 %v497
    %1429 = vmatpush.msra.mxu0 %v489
    %1430 = vmatpush.msra.mxu0 %v481
    %1431 = vmatpush.msra.mxu0 %v473
    %1432 = vmatpush.msra.mxu0 %v465
    %1433 = vmatpush.msra.mxu0 %v457
    %1434 = vmatpush.msra.mxu0 %v449
    %1435 = vmatpush.msra.mxu0 %v441
    %1436 = vmatpush.msra.mxu0 %v433
    %1437 = vmatpush.msra.mxu0 %v425
    %1438 = vmatpush.msra.mxu0 %v417
    %1439 = vmatpush.msra.mxu0 %v409
    %1440 = vmatpush.msra.mxu0 %v401
    %1441 = vmatpush.msra.mxu0 %v393
    %1442 = vmatpush.msra.mxu0 %v385
    %1443 = vmatmul.f32.gmra.mxu0 %v377
    %v1444 = vpop.f32.mrf.mxu0
    %v1445 = vadd.f32 %v1411, %v1444
    %1446 = vdwg.mxu0
    %1447 = vmatpush.msra.mxu0 %v633
    %1448 = vmatpush.msra.mxu0 %v625
    %1449 = vmatpush.msra.mxu0 %v617
    %1450 = vmatpush.msra.mxu0 %v609
    %1451 = vmatpush.msra.mxu0 %v601
    %1452 = vmatpush.msra.mxu0 %v593
    %1453 = vmatpush.msra.mxu0 %v585
    %1454 = vmatpush.msra.mxu0 %v577
    %1455 = vmatpush.msra.mxu0 %v569
    %1456 = vmatpush.msra.mxu0 %v561
    %1457 = vmatpush.msra.mxu0 %v553
    %1458 = vmatpush.msra.mxu0 %v545
    %1459 = vmatpush.msra.mxu0 %v537
    %1460 = vmatpush.msra.mxu0 %v529
    %1461 = vmatpush.msra.mxu0 %v521
    %1462 = vmatpush.msra.mxu0 %v513
    %1463 = vmatmul.f32.gmra.mxu0 %v378
    %v1464 = vpop.f32.mrf.mxu0
    %v1465 = vadd.f32 %v1445, %v1464
    %1466 = vdwg.mxu0
    %1467 = vmatpush.msra.mxu0 %v761
    %1468 = vmatpush.msra.mxu0 %v753
    %1469 = vmatpush.msra.mxu0 %v745
    %1470 = vmatpush.msra.mxu0 %v737
    %1471 = vmatpush.msra.mxu0 %v729
    %1472 = vmatpush.msra.mxu0 %v721
    %1473 = vmatpush.msra.mxu0 %v713
    %1474 = vmatpush.msra.mxu0 %v705
    %1475 = vmatpush.msra.mxu0 %v697
    %1476 = vmatpush.msra.mxu0 %v689
    %1477 = vmatpush.msra.mxu0 %v681
    %1478 = vmatpush.msra.mxu0 %v673
    %1479 = vmatpush.msra.mxu0 %v665
    %1480 = vmatpush.msra.mxu0 %v657
    %1481 = vmatpush.msra.mxu0 %v649
    %1482 = vmatpush.msra.mxu0 %v641
    %1483 = vmatmul.f32.gmra.mxu0 %v379
    %v1484 = vpop.f32.mrf.mxu0
    %v1485 = vadd.f32 %v1465, %v1484
    %1486 = vdwg.mxu0
    %1487 = vmatpush.msra.mxu0 %v889
    %1488 = vmatpush.msra.mxu0 %v881
    %1489 = vmatpush.msra.mxu0 %v873
    %1490 = vmatpush.msra.mxu0 %v865
    %1491 = vmatpush.msra.mxu0 %v857
    %1492 = vmatpush.msra.mxu0 %v849
    %1493 = vmatpush.msra.mxu0 %v841
    %1494 = vmatpush.msra.mxu0 %v833
    %1495 = vmatpush.msra.mxu0 %v825
    %1496 = vmatpush.msra.mxu0 %v817
    %1497 = vmatpush.msra.mxu0 %v809
    %1498 = vmatpush.msra.mxu0 %v801
    %1499 = vmatpush.msra.mxu0 %v793
    %1500 = vmatpush.msra.mxu0 %v785
    %1501 = vmatpush.msra.mxu0 %v777
    %1502 = vmatpush.msra.mxu0 %v769
    %1503 = vmatmul.f32.gmra.mxu0 %v380
    %v1504 = vpop.f32.mrf.mxu0
    %v1505 = vadd.f32 %v1485, %v1504
    %1506 = vdwg.mxu0
    %1507 = vmatpush.msra.mxu0 %v1017
    %1508 = vmatpush.msra.mxu0 %v1009
    %1509 = vmatpush.msra.mxu0 %v1001
    %1510 = vmatpush.msra.mxu0 %v993
    %1511 = vmatpush.msra.mxu0 %v985
    %1512 = vmatpush.msra.mxu0 %v977
    %1513 = vmatpush.msra.mxu0 %v969
    %1514 = vmatpush.msra.mxu0 %v961
    %1515 = vmatpush.msra.mxu0 %v953
    %1516 = vmatpush.msra.mxu0 %v945
    %1517 = vmatpush.msra.mxu0 %v937
    %1518 = vmatpush.msra.mxu0 %v929
    %1519 = vmatpush.msra.mxu0 %v921
    %1520 = vmatpush.msra.mxu0 %v913
    %1521 = vmatpush.msra.mxu0 %v905
    %1522 = vmatpush.msra.mxu0 %v897
    %1523 = vmatmul.f32.gmra.mxu0 %v381
    %v1524 = vpop.f32.mrf.mxu0
    %v1525 = vadd.f32 %v1505, %v1524
    %1526 = vdwg.mxu0
    %1527 = vmatpush.msra.mxu0 %v1145
    %1528 = vmatpush.msra.mxu0 %v1137
    %1529 = vmatpush.msra.mxu0 %v1129
    %1530 = vmatpush.msra.mxu0 %v1121
    %1531 = vmatpush.msra.mxu0 %v1113
    %1532 = vmatpush.msra.mxu0 %v1105
    %1533 = vmatpush.msra.mxu0 %v1097
    %1534 = vmatpush.msra.mxu0 %v1089
    %1535 = vmatpush.msra.mxu0 %v1081
    %1536 = vmatpush.msra.mxu0 %v1073
    %1537 = vmatpush.msra.mxu0 %v1065
    %1538 = vmatpush.msra.mxu0 %v1057
    %1539 = vmatpush.msra.mxu0 %v1049
    %1540 = vmatpush.msra.mxu0 %v1041
    %1541 = vmatpush.msra.mxu0 %v1033
    %1542 = vmatpush.msra.mxu0 %v1025
    %1543 = vmatmul.f32.gmra.mxu0 %v382
    %v1544 = vpop.f32.mrf.mxu0
    %v1545 = vadd.f32 %v1525, %v1544
    %1546 = vdwg.mxu0
    %1547 = vmatpush.msra.mxu0 %v1273
    %1548 = vmatpush.msra.mxu0 %v1265
    %1549 = vmatpush.msra.mxu0 %v1257
    %1550 = vmatpush.msra.mxu0 %v1249
    %1551 = vmatpush.msra.mxu0 %v1241
    %1552 = vmatpush.msra.mxu0 %v1233
    %1553 = vmatpush.msra.mxu0 %v1225
    %1554 = vmatpush.msra.mxu0 %v1217
    %1555 = vmatpush.msra.mxu0 %v1209
    %1556 = vmatpush.msra.mxu0 %v1201
    %1557 = vmatpush.msra.mxu0 %v1193
    %1558 = vmatpush.msra.mxu0 %v1185
    %1559 = vmatpush.msra.mxu0 %v1177
    %1560 = vmatpush.msra.mxu0 %v1169
    %1561 = vmatpush.msra.mxu0 %v1161
    %1562 = vmatpush.msra.mxu0 %v1153
    %1563 = vmatmul.f32.gmra.mxu0 %v383
    %v1564 = vpop.f32.mrf.mxu0
    %v1565 = vadd.f32 %v1545, %v1564
    %1566 = vdwg.mxu0
    %1567 = vmatpush.msra.mxu0 %v1401
    %1568 = vmatpush.msra.mxu0 %v1393
    %1569 = vmatpush.msra.mxu0 %v1385
    %1570 = vmatpush.msra.mxu0 %v1377
    %1571 = vmatpush.msra.mxu0 %v1369
    %1572 = vmatpush.msra.mxu0 %v1361
    %1573 = vmatpush.msra.mxu0 %v1353
    %1574 = vmatpush.msra.mxu0 %v1345
    %1575 = vmatpush.msra.mxu0 %v1337
    %1576 = vmatpush.msra.mxu0 %v1329
    %1577 = vmatpush.msra.mxu0 %v1321
    %1578 = vmatpush.msra.mxu0 %v1313
    %1579 = vmatpush.msra.mxu0 %v1305
    %1580 = vmatpush.msra.mxu0 %v1297
    %1581 = vmatpush.msra.mxu0 %v1289
    %1582 = vmatpush.msra.mxu0 %v1281
    %1583 = vmatmul.f32.gmra.mxu0 %v384
    %v1584 = vpop.f32.mrf.mxu0
    %v1585 = vadd.f32 %v1565, %v1584
    %1586 = vdwg.mxu0
    %1587 = vmatpush.msra.mxu0 %v506
    %1588 = vmatpush.msra.mxu0 %v498
    %1589 = vmatpush.msra.mxu0 %v490
    %1590 = vmatpush.msra.mxu0 %v482
    %1591 = vmatpush.msra.mxu0 %v474
    %1592 = vmatpush.msra.mxu0 %v466
    %1593 = vmatpush.msra.mxu0 %v458
    %1594 = vmatpush.msra.mxu0 %v450
    %1595 = vmatpush.msra.mxu0 %v442
    %1596 = vmatpush.msra.mxu0 %v434
    %1597 = vmatpush.msra.mxu0 %v426
    %1598 = vmatpush.msra.mxu0 %v418
    %1599 = vmatpush.msra.mxu0 %v410
    %1600 = vmatpush.msra.mxu0 %v402
    %1601 = vmatpush.msra.mxu0 %v394
    %1602 = vmatpush.msra.mxu0 %v386
    %1603 = vmatmul.f32.gmra.mxu0 %v377
    %v1604 = vpop.f32.mrf.mxu0
    %v1605 = vadd.f32 %v1412, %v1604
    %1606 = vdwg.mxu0
    %1607 = vmatpush.msra.mxu0 %v634
    %1608 = vmatpush.msra.mxu0 %v626
    %1609 = vmatpush.msra.mxu0 %v618
    %1610 = vmatpush.msra.mxu0 %v610
    %1611 = vmatpush.msra.mxu0 %v602
    %1612 = vmatpush.msra.mxu0 %v594
    %1613 = vmatpush.msra.mxu0 %v586
    %1614 = vmatpush.msra.mxu0 %v578
    %1615 = vmatpush.msra.mxu0 %v570
    %1616 = vmatpush.msra.mxu0 %v562
    %1617 = vmatpush.msra.mxu0 %v554
    %1618 = vmatpush.msra.mxu0 %v546
    %1619 = vmatpush.msra.mxu0 %v538
    %1620 = vmatpush.msra.mxu0 %v530
    %1621 = vmatpush.msra.mxu0 %v522
    %1622 = vmatpush.msra.mxu0 %v514
    %1623 = vmatmul.f32.gmra.mxu0 %v378
    %v1624 = vpop.f32.mrf.mxu0
    %v1625 = vadd.f32 %v1605, %v1624
    %1626 = vdwg.mxu0
    %1627 = vmatpush.msra.mxu0 %v762
    %1628 = vmatpush.msra.mxu0 %v754
    %1629 = vmatpush.msra.mxu0 %v746
    %1630 = vmatpush.msra.mxu0 %v738
    %1631 = vmatpush.msra.mxu0 %v730
    %1632 = vmatpush.msra.mxu0 %v722
    %1633 = vmatpush.msra.mxu0 %v714
    %1634 = vmatpush.msra.mxu0 %v706
    %1635 = vmatpush.msra.mxu0 %v698
    %1636 = vmatpush.msra.mxu0 %v690
    %1637 = vmatpush.msra.mxu0 %v682
    %1638 = vmatpush.msra.mxu0 %v674
    %1639 = vmatpush.msra.mxu0 %v666
    %1640 = vmatpush.msra.mxu0 %v658
    %1641 = vmatpush.msra.mxu0 %v650
    %1642 = vmatpush.msra.mxu0 %v642
    %1643 = vmatmul.f32.gmra.mxu0 %v379
    %v1644 = vpop.f32.mrf.mxu0
    %v1645 = vadd.f32 %v1625, %v1644
    %1646 = vdwg.mxu0
    %1647 = vmatpush.msra.mxu0 %v890
    %1648 = vmatpush.msra.mxu0 %v882
    %1649 = vmatpush.msra.mxu0 %v874
    %1650 = vmatpush.msra.mxu0 %v866
    %1651 = vmatpush.msra.mxu0 %v858
    %1652 = vmatpush.msra.mxu0 %v850
    %1653 = vmatpush.msra.mxu0 %v842
    %1654 = vmatpush.msra.mxu0 %v834
    %1655 = vmatpush.msra.mxu0 %v826
    %1656 = vmatpush.msra.mxu0 %v818
    %1657 = vmatpush.msra.mxu0 %v810
    %1658 = vmatpush.msra.mxu0 %v802
    %1659 = vmatpush.msra.mxu0 %v794
    %1660 = vmatpush.msra.mxu0 %v786
    %1661 = vmatpush.msra.mxu0 %v778
    %1662 = vmatpush.msra.mxu0 %v770
    %1663 = vmatmul.f32.gmra.mxu0 %v380
    %v1664 = vpop.f32.mrf.mxu0
    %v1665 = vadd.f32 %v1645, %v1664
    %1666 = vdwg.mxu0
    %1667 = vmatpush.msra.mxu0 %v1018
    %1668 = vmatpush.msra.mxu0 %v1010
    %1669 = vmatpush.msra.mxu0 %v1002
    %1670 = vmatpush.msra.mxu0 %v994
    %1671 = vmatpush.msra.mxu0 %v986
    %1672 = vmatpush.msra.mxu0 %v978
    %1673 = vmatpush.msra.mxu0 %v970
    %1674 = vmatpush.msra.mxu0 %v962
    %1675 = vmatpush.msra.mxu0 %v954
    %1676 = vmatpush.msra.mxu0 %v946
    %1677 = vmatpush.msra.mxu0 %v938
    %1678 = vmatpush.msra.mxu0 %v930
    %1679 = vmatpush.msra.mxu0 %v922
    %1680 = vmatpush.msra.mxu0 %v914
    %1681 = vmatpush.msra.mxu0 %v906
    %1682 = vmatpush.msra.mxu0 %v898
    %1683 = vmatmul.f32.gmra.mxu0 %v381
    %v1684 = vpop.f32.mrf.mxu0
    %v1685 = vadd.f32 %v1665, %v1684
    %1686 = vdwg.mxu0
    %1687 = vmatpush.msra.mxu0 %v1146
    %1688 = vmatpush.msra.mxu0 %v1138
    %1689 = vmatpush.msra.mxu0 %v1130
    %1690 = vmatpush.msra.mxu0 %v1122
    %1691 = vmatpush.msra.mxu0 %v1114
    %1692 = vmatpush.msra.mxu0 %v1106
    %1693 = vmatpush.msra.mxu0 %v1098
    %1694 = vmatpush.msra.mxu0 %v1090
    %1695 = vmatpush.msra.mxu0 %v1082
    %1696 = vmatpush.msra.mxu0 %v1074
    %1697 = vmatpush.msra.mxu0 %v1066
    %1698 = vmatpush.msra.mxu0 %v1058
    %1699 = vmatpush.msra.mxu0 %v1050
    %1700 = vmatpush.msra.mxu0 %v1042
    %1701 = vmatpush.msra.mxu0 %v1034
    %1702 = vmatpush.msra.mxu0 %v1026
    %1703 = vmatmul.f32.gmra.mxu0 %v382
    %v1704 = vpop.f32.mrf.mxu0
    %v1705 = vadd.f32 %v1685, %v1704
    %1706 = vdwg.mxu0
    %1707 = vmatpush.msra.mxu0 %v1274
    %1708 = vmatpush.msra.mxu0 %v1266
    %1709 = vmatpush.msra.mxu0 %v1258
    %1710 = vmatpush.msra.mxu0 %v1250
    %1711 = vmatpush.msra.mxu0 %v1242
    %1712 = vmatpush.msra.mxu0 %v1234
    %1713 = vmatpush.msra.mxu0 %v1226
    %1714 = vmatpush.msra.mxu0 %v1218
    %1715 = vmatpush.msra.mxu0 %v1210
    %1716 = vmatpush.msra.mxu0 %v1202
    %1717 = vmatpush.msra.mxu0 %v1194
    %1718 = vmatpush.msra.mxu0 %v1186
    %1719 = vmatpush.msra.mxu0 %v1178
    %1720 = vmatpush.msra.mxu0 %v1170
    %1721 = vmatpush.msra.mxu0 %v1162
    %1722 = vmatpush.msra.mxu0 %v1154
    %1723 = vmatmul.f32.gmra.mxu0 %v383
    %v1724 = vpop.f32.mrf.mxu0
    %v1725 = vadd.f32 %v1705, %v1724
    %1726 = vdwg.mxu0
    %1727 = vmatpush.msra.mxu0 %v1402
    %1728 = vmatpush.msra.mxu0 %v1394
    %1729 = vmatpush.msra.mxu0 %v1386
    %1730 = vmatpush.msra.mxu0 %v1378
    %1731 = vmatpush.msra.mxu0 %v1370
    %1732 = vmatpush.msra.mxu0 %v1362
    %1733 = vmatpush.msra.mxu0 %v1354
    %1734 = vmatpush.msra.mxu0 %v1346
    %1735 = vmatpush.msra.mxu0 %v1338
    %1736 = vmatpush.msra.mxu0 %v1330
    %1737 = vmatpush.msra.mxu0 %v1322
    %1738 = vmatpush.msra.mxu0 %v1314
    %1739 = vmatpush.msra.mxu0 %v1306
    %1740 = vmatpush.msra.mxu0 %v1298
    %1741 = vmatpush.msra.mxu0 %v1290
    %1742 = vmatpush.msra.mxu0 %v1282
    %1743 = vmatmul.f32.gmra.mxu0 %v384
    %v1744 = vpop.f32.mrf.mxu0
    %v1745 = vadd.f32 %v1725, %v1744
    %1746 = vdwg.mxu0
    %1747 = vmatpush.msra.mxu0 %v507
    %1748 = vmatpush.msra.mxu0 %v499
    %1749 = vmatpush.msra.mxu0 %v491
    %1750 = vmatpush.msra.mxu0 %v483
    %1751 = vmatpush.msra.mxu0 %v475
    %1752 = vmatpush.msra.mxu0 %v467
    %1753 = vmatpush.msra.mxu0 %v459
    %1754 = vmatpush.msra.mxu0 %v451
    %1755 = vmatpush.msra.mxu0 %v443
    %1756 = vmatpush.msra.mxu0 %v435
    %1757 = vmatpush.msra.mxu0 %v427
    %1758 = vmatpush.msra.mxu0 %v419
    %1759 = vmatpush.msra.mxu0 %v411
    %1760 = vmatpush.msra.mxu0 %v403
    %1761 = vmatpush.msra.mxu0 %v395
    %1762 = vmatpush.msra.mxu0 %v387
    %1763 = vmatmul.f32.gmra.mxu0 %v377
    %v1764 = vpop.f32.mrf.mxu0
    %v1765 = vadd.f32 %v1413, %v1764
    %1766 = vdwg.mxu0
    %1767 = vmatpush.msra.mxu0 %v635
    %1768 = vmatpush.msra.mxu0 %v627
    %1769 = vmatpush.msra.mxu0 %v619
    %1770 = vmatpush.msra.mxu0 %v611
    %1771 = vmatpush.msra.mxu0 %v603
    %1772 = vmatpush.msra.mxu0 %v595
    %1773 = vmatpush.msra.mxu0 %v587
    %1774 = vmatpush.msra.mxu0 %v579
    %1775 = vmatpush.msra.mxu0 %v571
    %1776 = vmatpush.msra.mxu0 %v563
    %1777 = vmatpush.msra.mxu0 %v555
    %1778 = vmatpush.msra.mxu0 %v547
    %1779 = vmatpush.msra.mxu0 %v539
    %1780 = vmatpush.msra.mxu0 %v531
    %1781 = vmatpush.msra.mxu0 %v523
    %1782 = vmatpush.msra.mxu0 %v515
    %1783 = vmatmul.f32.gmra.mxu0 %v378
    %v1784 = vpop.f32.mrf.mxu0
    %v1785 = vadd.f32 %v1765, %v1784
    %1786 = vdwg.mxu0
    %1787 = vmatpush.msra.mxu0 %v763
    %1788 = vmatpush.msra.mxu0 %v755
    %1789 = vmatpush.msra.mxu0 %v747
    %1790 = vmatpush.msra.mxu0 %v739
    %1791 = vmatpush.msra.mxu0 %v731
    %1792 = vmatpush.msra.mxu0 %v723
    %1793 = vmatpush.msra.mxu0 %v715
    %1794 = vmatpush.msra.mxu0 %v707
    %1795 = vmatpush.msra.mxu0 %v699
    %1796 = vmatpush.msra.mxu0 %v691
    %1797 = vmatpush.msra.mxu0 %v683
    %1798 = vmatpush.msra.mxu0 %v675
    %1799 = vmatpush.msra.mxu0 %v667
    %1800 = vmatpush.msra.mxu0 %v659
    %1801 = vmatpush.msra.mxu0 %v651
    %1802 = vmatpush.msra.mxu0 %v643
    %1803 = vmatmul.f32.gmra.mxu0 %v379
    %v1804 = vpop.f32.mrf.mxu0
    %v1805 = vadd.f32 %v1785, %v1804
    %1806 = vdwg.mxu0
    %1807 = vmatpush.msra.mxu0 %v891
    %1808 = vmatpush.msra.mxu0 %v883
    %1809 = vmatpush.msra.mxu0 %v875
    %1810 = vmatpush.msra.mxu0 %v867
    %1811 = vmatpush.msra.mxu0 %v859
    %1812 = vmatpush.msra.mxu0 %v851
    %1813 = vmatpush.msra.mxu0 %v843
    %1814 = vmatpush.msra.mxu0 %v835
    %1815 = vmatpush.msra.mxu0 %v827
    %1816 = vmatpush.msra.mxu0 %v819
    %1817 = vmatpush.msra.mxu0 %v811
    %1818 = vmatpush.msra.mxu0 %v803
    %1819 = vmatpush.msra.mxu0 %v795
    %1820 = vmatpush.msra.mxu0 %v787
    %1821 = vmatpush.msra.mxu0 %v779
    %1822 = vmatpush.msra.mxu0 %v771
    %1823 = vmatmul.f32.gmra.mxu0 %v380
    %v1824 = vpop.f32.mrf.mxu0
    %v1825 = vadd.f32 %v1805, %v1824
    %1826 = vdwg.mxu0
    %1827 = vmatpush.msra.mxu0 %v1019
    %1828 = vmatpush.msra.mxu0 %v1011
    %1829 = vmatpush.msra.mxu0 %v1003
    %1830 = vmatpush.msra.mxu0 %v995
    %1831 = vmatpush.msra.mxu0 %v987
    %1832 = vmatpush.msra.mxu0 %v979
    %1833 = vmatpush.msra.mxu0 %v971
    %1834 = vmatpush.msra.mxu0 %v963
    %1835 = vmatpush.msra.mxu0 %v955
    %1836 = vmatpush.msra.mxu0 %v947
    %1837 = vmatpush.msra.mxu0 %v939
    %1838 = vmatpush.msra.mxu0 %v931
    %1839 = vmatpush.msra.mxu0 %v923
    %1840 = vmatpush.msra.mxu0 %v915
    %1841 = vmatpush.msra.mxu0 %v907
    %1842 = vmatpush.msra.mxu0 %v899
    %1843 = vmatmul.f32.gmra.mxu0 %v381
    %v1844 = vpop.f32.mrf.mxu0
    %v1845 = vadd.f32 %v1825, %v1844
    %1846 = vdwg.mxu0
    %1847 = vmatpush.msra.mxu0 %v1147
    %1848 = vmatpush.msra.mxu0 %v1139
    %1849 = vmatpush.msra.mxu0 %v1131
    %1850 = vmatpush.msra.mxu0 %v1123
    %1851 = vmatpush.msra.mxu0 %v1115
    %1852 = vmatpush.msra.mxu0 %v1107
    %1853 = vmatpush.msra.mxu0 %v1099
    %1854 = vmatpush.msra.mxu0 %v1091
    %1855 = vmatpush.msra.mxu0 %v1083
    %1856 = vmatpush.msra.mxu0 %v1075
    %1857 = vmatpush.msra.mxu0 %v1067
    %1858 = vmatpush.msra.mxu0 %v1059
    %1859 = vmatpush.msra.mxu0 %v1051
    %1860 = vmatpush.msra.mxu0 %v1043
    %1861 = vmatpush.msra.mxu0 %v1035
    %1862 = vmatpush.msra.mxu0 %v1027
    %1863 = vmatmul.f32.gmra.mxu0 %v382
    %v1864 = vpop.f32.mrf.mxu0
    %v1865 = vadd.f32 %v1845, %v1864
    %1866 = vdwg.mxu0
    %1867 = vmatpush.msra.mxu0 %v1275
    %1868 = vmatpush.msra.mxu0 %v1267
    %1869 = vmatpush.msra.mxu0 %v1259
    %1870 = vmatpush.msra.mxu0 %v1251
    %1871 = vmatpush.msra.mxu0 %v1243
    %1872 = vmatpush.msra.mxu0 %v1235
    %1873 = vmatpush.msra.mxu0 %v1227
    %1874 = vmatpush.msra.mxu0 %v1219
    %1875 = vmatpush.msra.mxu0 %v1211
    %1876 = vmatpush.msra.mxu0 %v1203
    %1877 = vmatpush.msra.mxu0 %v1195
    %1878 = vmatpush.msra.mxu0 %v1187
    %1879 = vmatpush.msra.mxu0 %v1179
    %1880 = vmatpush.msra.mxu0 %v1171
    %1881 = vmatpush.msra.mxu0 %v1163
    %1882 = vmatpush.msra.mxu0 %v1155
    %1883 = vmatmul.f32.gmra.mxu0 %v383
    %v1884 = vpop.f32.mrf.mxu0
    %v1885 = vadd.f32 %v1865, %v1884
    %1886 = vdwg.mxu0
    %1887 = vmatpush.msra.mxu0 %v1403
    %1888 = vmatpush.msra.mxu0 %v1395
    %1889 = vmatpush.msra.mxu0 %v1387
    %1890 = vmatpush.msra.mxu0 %v1379
    %1891 = vmatpush.msra.mxu0 %v1371
    %1892 = vmatpush.msra.mxu0 %v1363
    %1893 = vmatpush.msra.mxu0 %v1355
    %1894 = vmatpush.msra.mxu0 %v1347
    %1895 = vmatpush.msra.mxu0 %v1339
    %1896 = vmatpush.msra.mxu0 %v1331
    %1897 = vmatpush.msra.mxu0 %v1323
    %1898 = vmatpush.msra.mxu0 %v1315
    %1899 = vmatpush.msra.mxu0 %v1307
    %1900 = vmatpush.msra.mxu0 %v1299
    %1901 = vmatpush.msra.mxu0 %v1291
    %1902 = vmatpush.msra.mxu0 %v1283
    %1903 = vmatmul.f32.gmra.mxu0 %v384
    %v1904 = vpop.f32.mrf.mxu0
    %v1905 = vadd.f32 %v1885, %v1904
    %1906 = vdwg.mxu0
    %1907 = vmatpush.msra.mxu0 %v508
    %1908 = vmatpush.msra.mxu0 %v500
    %1909 = vmatpush.msra.mxu0 %v492
    %1910 = vmatpush.msra.mxu0 %v484
    %1911 = vmatpush.msra.mxu0 %v476
    %1912 = vmatpush.msra.mxu0 %v468
    %1913 = vmatpush.msra.mxu0 %v460
    %1914 = vmatpush.msra.mxu0 %v452
    %1915 = vmatpush.msra.mxu0 %v444
    %1916 = vmatpush.msra.mxu0 %v436
    %1917 = vmatpush.msra.mxu0 %v428
    %1918 = vmatpush.msra.mxu0 %v420
    %1919 = vmatpush.msra.mxu0 %v412
    %1920 = vmatpush.msra.mxu0 %v404
    %1921 = vmatpush.msra.mxu0 %v396
    %1922 = vmatpush.msra.mxu0 %v388
    %1923 = vmatmul.f32.gmra.mxu0 %v377
    %v1924 = vpop.f32.mrf.mxu0
    %v1925 = vadd.f32 %v1414, %v1924
    %1926 = vdwg.mxu0
    %1927 = vmatpush.msra.mxu0 %v636
    %1928 = vmatpush.msra.mxu0 %v628
    %1929 = vmatpush.msra.mxu0 %v620
    %1930 = vmatpush.msra.mxu0 %v612
    %1931 = vmatpush.msra.mxu0 %v604
    %1932 = vmatpush.msra.mxu0 %v596
    %1933 = vmatpush.msra.mxu0 %v588
    %1934 = vmatpush.msra.mxu0 %v580
    %1935 = vmatpush.msra.mxu0 %v572
    %1936 = vmatpush.msra.mxu0 %v564
    %1937 = vmatpush.msra.mxu0 %v556
    %1938 = vmatpush.msra.mxu0 %v548
    %1939 = vmatpush.msra.mxu0 %v540
    %1940 = vmatpush.msra.mxu0 %v532
    %1941 = vmatpush.msra.mxu0 %v524
    %1942 = vmatpush.msra.mxu0 %v516
    %1943 = vmatmul.f32.gmra.mxu0 %v378
    %v1944 = vpop.f32.mrf.mxu0
    %v1945 = vadd.f32 %v1925, %v1944
    %1946 = vdwg.mxu0
    %1947 = vmatpush.msra.mxu0 %v764
    %1948 = vmatpush.msra.mxu0 %v756
    %1949 = vmatpush.msra.mxu0 %v748
    %1950 = vmatpush.msra.mxu0 %v740
    %1951 = vmatpush.msra.mxu0 %v732
    %1952 = vmatpush.msra.mxu0 %v724
    %1953 = vmatpush.msra.mxu0 %v716
    %1954 = vmatpush.msra.mxu0 %v708
    %1955 = vmatpush.msra.mxu0 %v700
    %1956 = vmatpush.msra.mxu0 %v692
    %1957 = vmatpush.msra.mxu0 %v684
    %1958 = vmatpush.msra.mxu0 %v676
    %1959 = vmatpush.msra.mxu0 %v668
    %1960 = vmatpush.msra.mxu0 %v660
    %1961 = vmatpush.msra.mxu0 %v652
    %1962 = vmatpush.msra.mxu0 %v644
    %1963 = vmatmul.f32.gmra.mxu0 %v379
    %v1964 = vpop.f32.mrf.mxu0
    %v1965 = vadd.f32 %v1945, %v1964
    %1966 = vdwg.mxu0
    %1967 = vmatpush.msra.mxu0 %v892
    %1968 = vmatpush.msra.mxu0 %v884
    %1969 = vmatpush.msra.mxu0 %v876
    %1970 = vmatpush.msra.mxu0 %v868
    %1971 = vmatpush.msra.mxu0 %v860
    %1972 = vmatpush.msra.mxu0 %v852
    %1973 = vmatpush.msra.mxu0 %v844
    %1974 = vmatpush.msra.mxu0 %v836
    %1975 = vmatpush.msra.mxu0 %v828
    %1976 = vmatpush.msra.mxu0 %v820
    %1977 = vmatpush.msra.mxu0 %v812
    %1978 = vmatpush.msra.mxu0 %v804
    %1979 = vmatpush.msra.mxu0 %v796
    %1980 = vmatpush.msra.mxu0 %v788
    %1981 = vmatpush.msra.mxu0 %v780
    %1982 = vmatpush.msra.mxu0 %v772
    %1983 = vmatmul.f32.gmra.mxu0 %v380
    %v1984 = vpop.f32.mrf.mxu0
    %v1985 = vadd.f32 %v1965, %v1984
    %1986 = vdwg.mxu0
    %1987 = vmatpush.msra.mxu0 %v1020
    %1988 = vmatpush.msra.mxu0 %v1012
    %1989 = vmatpush.msra.mxu0 %v1004
    %1990 = vmatpush.msra.mxu0 %v996
    %1991 = vmatpush.msra.mxu0 %v988
    %1992 = vmatpush.msra.mxu0 %v980
    %1993 = vmatpush.msra.mxu0 %v972
    %1994 = vmatpush.msra.mxu0 %v964
    %1995 = vmatpush.msra.mxu0 %v956
    %1996 = vmatpush.msra.mxu0 %v948
    %1997 = vmatpush.msra.mxu0 %v940
    %1998 = vmatpush.msra.mxu0 %v932
    %1999 = vmatpush.msra.mxu0 %v924
    %2000 = vmatpush.msra.mxu0 %v916
    %2001 = vmatpush.msra.mxu0 %v908
    %2002 = vmatpush.msra.mxu0 %v900
    %2003 = vmatmul.f32.gmra.mxu0 %v381
    %v2004 = vpop.f32.mrf.mxu0
    %v2005 = vadd.f32 %v1985, %v2004
    %2006 = vdwg.mxu0
    %2007 = vmatpush.msra.mxu0 %v1148
    %2008 = vmatpush.msra.mxu0 %v1140
    %2009 = vmatpush.msra.mxu0 %v1132
    %2010 = vmatpush.msra.mxu0 %v1124
    %2011 = vmatpush.msra.mxu0 %v1116
    %2012 = vmatpush.msra.mxu0 %v1108
    %2013 = vmatpush.msra.mxu0 %v1100
    %2014 = vmatpush.msra.mxu0 %v1092
    %2015 = vmatpush.msra.mxu0 %v1084
    %2016 = vmatpush.msra.mxu0 %v1076
    %2017 = vmatpush.msra.mxu0 %v1068
    %2018 = vmatpush.msra.mxu0 %v1060
    %2019 = vmatpush.msra.mxu0 %v1052
    %2020 = vmatpush.msra.mxu0 %v1044
    %2021 = vmatpush.msra.mxu0 %v1036
    %2022 = vmatpush.msra.mxu0 %v1028
    %2023 = vmatmul.f32.gmra.mxu0 %v382
    %v2024 = vpop.f32.mrf.mxu0
    %v2025 = vadd.f32 %v2005, %v2024
    %2026 = vdwg.mxu0
    %2027 = vmatpush.msra.mxu0 %v1276
    %2028 = vmatpush.msra.mxu0 %v1268
    %2029 = vmatpush.msra.mxu0 %v1260
    %2030 = vmatpush.msra.mxu0 %v1252
    %2031 = vmatpush.msra.mxu0 %v1244
    %2032 = vmatpush.msra.mxu0 %v1236
    %2033 = vmatpush.msra.mxu0 %v1228
    %2034 = vmatpush.msra.mxu0 %v1220
    %2035 = vmatpush.msra.mxu0 %v1212
    %2036 = vmatpush.msra.mxu0 %v1204
    %2037 = vmatpush.msra.mxu0 %v1196
    %2038 = vmatpush.msra.mxu0 %v1188
    %2039 = vmatpush.msra.mxu0 %v1180
    %2040 = vmatpush.msra.mxu0 %v1172
    %2041 = vmatpush.msra.mxu0 %v1164
    %2042 = vmatpush.msra.mxu0 %v1156
    %2043 = vmatmul.f32.gmra.mxu0 %v383
    %v2044 = vpop.f32.mrf.mxu0
    %v2045 = vadd.f32 %v2025, %v2044
    %2046 = vdwg.mxu0
    %2047 = vmatpush.msra.mxu0 %v1404
    %2048 = vmatpush.msra.mxu0 %v1396
    %2049 = vmatpush.msra.mxu0 %v1388
    %2050 = vmatpush.msra.mxu0 %v1380
    %2051 = vmatpush.msra.mxu0 %v1372
    %2052 = vmatpush.msra.mxu0 %v1364
    %2053 = vmatpush.msra.mxu0 %v1356
    %2054 = vmatpush.msra.mxu0 %v1348
    %2055 = vmatpush.msra.mxu0 %v1340
    %2056 = vmatpush.msra.mxu0 %v1332
    %2057 = vmatpush.msra.mxu0 %v1324
    %2058 = vmatpush.msra.mxu0 %v1316
    %2059 = vmatpush.msra.mxu0 %v1308
    %2060 = vmatpush.msra.mxu0 %v1300
    %2061 = vmatpush.msra.mxu0 %v1292
    %2062 = vmatpush.msra.mxu0 %v1284
    %2063 = vmatmul.f32.gmra.mxu0 %v384
    %v2064 = vpop.f32.mrf.mxu0
    %v2065 = vadd.f32 %v2045, %v2064
    %2066 = vdwg.mxu0
    %2067 = vmatpush.msra.mxu0 %v509
    %2068 = vmatpush.msra.mxu0 %v501
    %2069 = vmatpush.msra.mxu0 %v493
    %2070 = vmatpush.msra.mxu0 %v485
    %2071 = vmatpush.msra.mxu0 %v477
    %2072 = vmatpush.msra.mxu0 %v469
    %2073 = vmatpush.msra.mxu0 %v461
    %2074 = vmatpush.msra.mxu0 %v453
    %2075 = vmatpush.msra.mxu0 %v445
    %2076 = vmatpush.msra.mxu0 %v437
    %2077 = vmatpush.msra.mxu0 %v429
    %2078 = vmatpush.msra.mxu0 %v421
    %2079 = vmatpush.msra.mxu0 %v413
    %2080 = vmatpush.msra.mxu0 %v405
    %2081 = vmatpush.msra.mxu0 %v397
    %2082 = vmatpush.msra.mxu0 %v389
    %2083 = vmatmul.f32.gmra.mxu0 %v377
    %v2084 = vpop.f32.mrf.mxu0
    %v2085 = vadd.f32 %v1415, %v2084
    %2086 = vdwg.mxu0
    %2087 = vmatpush.msra.mxu0 %v637
    %2088 = vmatpush.msra.mxu0 %v629
    %2089 = vmatpush.msra.mxu0 %v621
    %2090 = vmatpush.msra.mxu0 %v613
    %2091 = vmatpush.msra.mxu0 %v605
    %2092 = vmatpush.msra.mxu0 %v597
    %2093 = vmatpush.msra.mxu0 %v589
    %2094 = vmatpush.msra.mxu0 %v581
    %2095 = vmatpush.msra.mxu0 %v573
    %2096 = vmatpush.msra.mxu0 %v565
    %2097 = vmatpush.msra.mxu0 %v557
    %2098 = vmatpush.msra.mxu0 %v549
    %2099 = vmatpush.msra.mxu0 %v541
    %2100 = vmatpush.msra.mxu0 %v533
    %2101 = vmatpush.msra.mxu0 %v525
    %2102 = vmatpush.msra.mxu0 %v517
    %2103 = vmatmul.f32.gmra.mxu0 %v378
    %v2104 = vpop.f32.mrf.mxu0
    %v2105 = vadd.f32 %v2085, %v2104
    %2106 = vdwg.mxu0
    %2107 = vmatpush.msra.mxu0 %v765
    %2108 = vmatpush.msra.mxu0 %v757
    %2109 = vmatpush.msra.mxu0 %v749
    %2110 = vmatpush.msra.mxu0 %v741
    %2111 = vmatpush.msra.mxu0 %v733
    %2112 = vmatpush.msra.mxu0 %v725
    %2113 = vmatpush.msra.mxu0 %v717
    %2114 = vmatpush.msra.mxu0 %v709
    %2115 = vmatpush.msra.mxu0 %v701
    %2116 = vmatpush.msra.mxu0 %v693
    %2117 = vmatpush.msra.mxu0 %v685
    %2118 = vmatpush.msra.mxu0 %v677
    %2119 = vmatpush.msra.mxu0 %v669
    %2120 = vmatpush.msra.mxu0 %v661
    %2121 = vmatpush.msra.mxu0 %v653
    %2122 = vmatpush.msra.mxu0 %v645
    %2123 = vmatmul.f32.gmra.mxu0 %v379
    %v2124 = vpop.f32.mrf.mxu0
    %v2125 = vadd.f32 %v2105, %v2124
    %2126 = vdwg.mxu0
    %2127 = vmatpush.msra.mxu0 %v893
    %2128 = vmatpush.msra.mxu0 %v885
    %2129 = vmatpush.msra.mxu0 %v877
    %2130 = vmatpush.msra.mxu0 %v869
    %2131 = vmatpush.msra.mxu0 %v861
    %2132 = vmatpush.msra.mxu0 %v853
    %2133 = vmatpush.msra.mxu0 %v845
    %2134 = vmatpush.msra.mxu0 %v837
    %2135 = vmatpush.msra.mxu0 %v829
    %2136 = vmatpush.msra.mxu0 %v821
    %2137 = vmatpush.msra.mxu0 %v813
    %2138 = vmatpush.msra.mxu0 %v805
    %2139 = vmatpush.msra.mxu0 %v797
    %2140 = vmatpush.msra.mxu0 %v789
    %2141 = vmatpush.msra.mxu0 %v781
    %2142 = vmatpush.msra.mxu0 %v773
    %2143 = vmatmul.f32.gmra.mxu0 %v380
    %v2144 = vpop.f32.mrf.mxu0
    %v2145 = vadd.f32 %v2125, %v2144
    %2146 = vdwg.mxu0
    %2147 = vmatpush.msra.mxu0 %v1021
    %2148 = vmatpush.msra.mxu0 %v1013
    %2149 = vmatpush.msra.mxu0 %v1005
    %2150 = vmatpush.msra.mxu0 %v997
    %2151 = vmatpush.msra.mxu0 %v989
    %2152 = vmatpush.msra.mxu0 %v981
    %2153 = vmatpush.msra.mxu0 %v973
    %2154 = vmatpush.msra.mxu0 %v965
    %2155 = vmatpush.msra.mxu0 %v957
    %2156 = vmatpush.msra.mxu0 %v949
    %2157 = vmatpush.msra.mxu0 %v941
    %2158 = vmatpush.msra.mxu0 %v933
    %2159 = vmatpush.msra.mxu0 %v925
    %2160 = vmatpush.msra.mxu0 %v917
    %2161 = vmatpush.msra.mxu0 %v909
    %2162 = vmatpush.msra.mxu0 %v901
    %2163 = vmatmul.f32.gmra.mxu0 %v381
    %v2164 = vpop.f32.mrf.mxu0
    %v2165 = vadd.f32 %v2145, %v2164
    %2166 = vdwg.mxu0
    %2167 = vmatpush.msra.mxu0 %v1149
    %2168 = vmatpush.msra.mxu0 %v1141
    %2169 = vmatpush.msra.mxu0 %v1133
    %2170 = vmatpush.msra.mxu0 %v1125
    %2171 = vmatpush.msra.mxu0 %v1117
    %2172 = vmatpush.msra.mxu0 %v1109
    %2173 = vmatpush.msra.mxu0 %v1101
    %2174 = vmatpush.msra.mxu0 %v1093
    %2175 = vmatpush.msra.mxu0 %v1085
    %2176 = vmatpush.msra.mxu0 %v1077
    %2177 = vmatpush.msra.mxu0 %v1069
    %2178 = vmatpush.msra.mxu0 %v1061
    %2179 = vmatpush.msra.mxu0 %v1053
    %2180 = vmatpush.msra.mxu0 %v1045
    %2181 = vmatpush.msra.mxu0 %v1037
    %2182 = vmatpush.msra.mxu0 %v1029
    %2183 = vmatmul.f32.gmra.mxu0 %v382
    %v2184 = vpop.f32.mrf.mxu0
    %v2185 = vadd.f32 %v2165, %v2184
    %2186 = vdwg.mxu0
    %2187 = vmatpush.msra.mxu0 %v1277
    %2188 = vmatpush.msra.mxu0 %v1269
    %2189 = vmatpush.msra.mxu0 %v1261
    %2190 = vmatpush.msra.mxu0 %v1253
    %2191 = vmatpush.msra.mxu0 %v1245
    %2192 = vmatpush.msra.mxu0 %v1237
    %2193 = vmatpush.msra.mxu0 %v1229
    %2194 = vmatpush.msra.mxu0 %v1221
    %2195 = vmatpush.msra.mxu0 %v1213
    %2196 = vmatpush.msra.mxu0 %v1205
    %2197 = vmatpush.msra.mxu0 %v1197
    %2198 = vmatpush.msra.mxu0 %v1189
    %2199 = vmatpush.msra.mxu0 %v1181
    %2200 = vmatpush.msra.mxu0 %v1173
    %2201 = vmatpush.msra.mxu0 %v1165
    %2202 = vmatpush.msra.mxu0 %v1157
    %2203 = vmatmul.f32.gmra.mxu0 %v383
    %v2204 = vpop.f32.mrf.mxu0
    %v2205 = vadd.f32 %v2185, %v2204
    %2206 = vdwg.mxu0
    %2207 = vmatpush.msra.mxu0 %v1405
    %2208 = vmatpush.msra.mxu0 %v1397
    %2209 = vmatpush.msra.mxu0 %v1389
    %2210 = vmatpush.msra.mxu0 %v1381
    %2211 = vmatpush.msra.mxu0 %v1373
    %2212 = vmatpush.msra.mxu0 %v1365
    %2213 = vmatpush.msra.mxu0 %v1357
    %2214 = vmatpush.msra.mxu0 %v1349
    %2215 = vmatpush.msra.mxu0 %v1341
    %2216 = vmatpush.msra.mxu0 %v1333
    %2217 = vmatpush.msra.mxu0 %v1325
    %2218 = vmatpush.msra.mxu0 %v1317
    %2219 = vmatpush.msra.mxu0 %v1309
    %2220 = vmatpush.msra.mxu0 %v1301
    %2221 = vmatpush.msra.mxu0 %v1293
    %2222 = vmatpush.msra.mxu0 %v1285
    %2223 = vmatmul.f32.gmra.mxu0 %v384
    %v2224 = vpop.f32.mrf.mxu0
    %v2225 = vadd.f32 %v2205, %v2224
    %2226 = vdwg.mxu0
    %2227 = vmatpush.msra.mxu0 %v510
    %2228 = vmatpush.msra.mxu0 %v502
    %2229 = vmatpush.msra.mxu0 %v494
    %2230 = vmatpush.msra.mxu0 %v486
    %2231 = vmatpush.msra.mxu0 %v478
    %2232 = vmatpush.msra.mxu0 %v470
    %2233 = vmatpush.msra.mxu0 %v462
    %2234 = vmatpush.msra.mxu0 %v454
    %2235 = vmatpush.msra.mxu0 %v446
    %2236 = vmatpush.msra.mxu0 %v438
    %2237 = vmatpush.msra.mxu0 %v430
    %2238 = vmatpush.msra.mxu0 %v422
    %2239 = vmatpush.msra.mxu0 %v414
    %2240 = vmatpush.msra.mxu0 %v406
    %2241 = vmatpush.msra.mxu0 %v398
    %2242 = vmatpush.msra.mxu0 %v390
    %2243 = vmatmul.f32.gmra.mxu0 %v377
    %v2244 = vpop.f32.mrf.mxu0
    %v2245 = vadd.f32 %v1416, %v2244
    %2246 = vdwg.mxu0
    %2247 = vmatpush.msra.mxu0 %v638
    %2248 = vmatpush.msra.mxu0 %v630
    %2249 = vmatpush.msra.mxu0 %v622
    %2250 = vmatpush.msra.mxu0 %v614
    %2251 = vmatpush.msra.mxu0 %v606
    %2252 = vmatpush.msra.mxu0 %v598
    %2253 = vmatpush.msra.mxu0 %v590
    %2254 = vmatpush.msra.mxu0 %v582
    %2255 = vmatpush.msra.mxu0 %v574
    %2256 = vmatpush.msra.mxu0 %v566
    %2257 = vmatpush.msra.mxu0 %v558
    %2258 = vmatpush.msra.mxu0 %v550
    %2259 = vmatpush.msra.mxu0 %v542
    %2260 = vmatpush.msra.mxu0 %v534
    %2261 = vmatpush.msra.mxu0 %v526
    %2262 = vmatpush.msra.mxu0 %v518
    %2263 = vmatmul.f32.gmra.mxu0 %v378
    %v2264 = vpop.f32.mrf.mxu0
    %v2265 = vadd.f32 %v2245, %v2264
    %2266 = vdwg.mxu0
    %2267 = vmatpush.msra.mxu0 %v766
    %2268 = vmatpush.msra.mxu0 %v758
    %2269 = vmatpush.msra.mxu0 %v750
    %2270 = vmatpush.msra.mxu0 %v742
    %2271 = vmatpush.msra.mxu0 %v734
    %2272 = vmatpush.msra.mxu0 %v726
    %2273 = vmatpush.msra.mxu0 %v718
    %2274 = vmatpush.msra.mxu0 %v710
    %2275 = vmatpush.msra.mxu0 %v702
    %2276 = vmatpush.msra.mxu0 %v694
    %2277 = vmatpush.msra.mxu0 %v686
    %2278 = vmatpush.msra.mxu0 %v678
    %2279 = vmatpush.msra.mxu0 %v670
    %2280 = vmatpush.msra.mxu0 %v662
    %2281 = vmatpush.msra.mxu0 %v654
    %2282 = vmatpush.msra.mxu0 %v646
    %2283 = vmatmul.f32.gmra.mxu0 %v379
    %v2284 = vpop.f32.mrf.mxu0
    %v2285 = vadd.f32 %v2265, %v2284
    %2286 = vdwg.mxu0
    %2287 = vmatpush.msra.mxu0 %v894
    %2288 = vmatpush.msra.mxu0 %v886
    %2289 = vmatpush.msra.mxu0 %v878
    %2290 = vmatpush.msra.mxu0 %v870
    %2291 = vmatpush.msra.mxu0 %v862
    %2292 = vmatpush.msra.mxu0 %v854
    %2293 = vmatpush.msra.mxu0 %v846
    %2294 = vmatpush.msra.mxu0 %v838
    %2295 = vmatpush.msra.mxu0 %v830
    %2296 = vmatpush.msra.mxu0 %v822
    %2297 = vmatpush.msra.mxu0 %v814
    %2298 = vmatpush.msra.mxu0 %v806
    %2299 = vmatpush.msra.mxu0 %v798
    %2300 = vmatpush.msra.mxu0 %v790
    %2301 = vmatpush.msra.mxu0 %v782
    %2302 = vmatpush.msra.mxu0 %v774
    %2303 = vmatmul.f32.gmra.mxu0 %v380
    %v2304 = vpop.f32.mrf.mxu0
    %v2305 = vadd.f32 %v2285, %v2304
    %2306 = vdwg.mxu0
    %2307 = vmatpush.msra.mxu0 %v1022
    %2308 = vmatpush.msra.mxu0 %v1014
    %2309 = vmatpush.msra.mxu0 %v1006
    %2310 = vmatpush.msra.mxu0 %v998
    %2311 = vmatpush.msra.mxu0 %v990
    %2312 = vmatpush.msra.mxu0 %v982
    %2313 = vmatpush.msra.mxu0 %v974
    %2314 = vmatpush.msra.mxu0 %v966
    %2315 = vmatpush.msra.mxu0 %v958
    %2316 = vmatpush.msra.mxu0 %v950
    %2317 = vmatpush.msra.mxu0 %v942
    %2318 = vmatpush.msra.mxu0 %v934
    %2319 = vmatpush.msra.mxu0 %v926
    %2320 = vmatpush.msra.mxu0 %v918
    %2321 = vmatpush.msra.mxu0 %v910
    %2322 = vmatpush.msra.mxu0 %v902
    %2323 = vmatmul.f32.gmra.mxu0 %v381
    %v2324 = vpop.f32.mrf.mxu0
    %v2325 = vadd.f32 %v2305, %v2324
    %2326 = vdwg.mxu0
    %2327 = vmatpush.msra.mxu0 %v1150
    %2328 = vmatpush.msra.mxu0 %v1142
    %2329 = vmatpush.msra.mxu0 %v1134
    %2330 = vmatpush.msra.mxu0 %v1126
    %2331 = vmatpush.msra.mxu0 %v1118
    %2332 = vmatpush.msra.mxu0 %v1110
    %2333 = vmatpush.msra.mxu0 %v1102
    %2334 = vmatpush.msra.mxu0 %v1094
    %2335 = vmatpush.msra.mxu0 %v1086
    %2336 = vmatpush.msra.mxu0 %v1078
    %2337 = vmatpush.msra.mxu0 %v1070
    %2338 = vmatpush.msra.mxu0 %v1062
    %2339 = vmatpush.msra.mxu0 %v1054
    %2340 = vmatpush.msra.mxu0 %v1046
    %2341 = vmatpush.msra.mxu0 %v1038
    %2342 = vmatpush.msra.mxu0 %v1030
    %2343 = vmatmul.f32.gmra.mxu0 %v382
    %v2344 = vpop.f32.mrf.mxu0
    %v2345 = vadd.f32 %v2325, %v2344
    %2346 = vdwg.mxu0
    %2347 = vmatpush.msra.mxu0 %v1278
    %2348 = vmatpush.msra.mxu0 %v1270
    %2349 = vmatpush.msra.mxu0 %v1262
    %2350 = vmatpush.msra.mxu0 %v1254
    %2351 = vmatpush.msra.mxu0 %v1246
    %2352 = vmatpush.msra.mxu0 %v1238
    %2353 = vmatpush.msra.mxu0 %v1230
    %2354 = vmatpush.msra.mxu0 %v1222
    %2355 = vmatpush.msra.mxu0 %v1214
    %2356 = vmatpush.msra.mxu0 %v1206
    %2357 = vmatpush.msra.mxu0 %v1198
    %2358 = vmatpush.msra.mxu0 %v1190
    %2359 = vmatpush.msra.mxu0 %v1182
    %2360 = vmatpush.msra.mxu0 %v1174
    %2361 = vmatpush.msra.mxu0 %v1166
    %2362 = vmatpush.msra.mxu0 %v1158
    %2363 = vmatmul.f32.gmra.mxu0 %v383
    %v2364 = vpop.f32.mrf.mxu0
    %v2365 = vadd.f32 %v2345, %v2364
    %2366 = vdwg.mxu0
    %2367 = vmatpush.msra.mxu0 %v1406
    %2368 = vmatpush.msra.mxu0 %v1398
    %2369 = vmatpush.msra.mxu0 %v1390
    %2370 = vmatpush.msra.mxu0 %v1382
    %2371 = vmatpush.msra.mxu0 %v1374
    %2372 = vmatpush.msra.mxu0 %v1366
    %2373 = vmatpush.msra.mxu0 %v1358
    %2374 = vmatpush.msra.mxu0 %v1350
    %2375 = vmatpush.msra.mxu0 %v1342
    %2376 = vmatpush.msra.mxu0 %v1334
    %2377 = vmatpush.msra.mxu0 %v1326
    %2378 = vmatpush.msra.mxu0 %v1318
    %2379 = vmatpush.msra.mxu0 %v1310
    %2380 = vmatpush.msra.mxu0 %v1302
    %2381 = vmatpush.msra.mxu0 %v1294
    %2382 = vmatpush.msra.mxu0 %v1286
    %2383 = vmatmul.f32.gmra.mxu0 %v384
    %v2384 = vpop.f32.mrf.mxu0
    %v2385 = vadd.f32 %v2365, %v2384
    %2386 = vdwg.mxu0
    %2387 = vmatpush.msra.mxu0 %v511
    %2388 = vmatpush.msra.mxu0 %v503
    %2389 = vmatpush.msra.mxu0 %v495
    %2390 = vmatpush.msra.mxu0 %v487
    %2391 = vmatpush.msra.mxu0 %v479
    %2392 = vmatpush.msra.mxu0 %v471
    %2393 = vmatpush.msra.mxu0 %v463
    %2394 = vmatpush.msra.mxu0 %v455
    %2395 = vmatpush.msra.mxu0 %v447
    %2396 = vmatpush.msra.mxu0 %v439
    %2397 = vmatpush.msra.mxu0 %v431
    %2398 = vmatpush.msra.mxu0 %v423
    %2399 = vmatpush.msra.mxu0 %v415
    %2400 = vmatpush.msra.mxu0 %v407
    %2401 = vmatpush.msra.mxu0 %v399
    %2402 = vmatpush.msra.mxu0 %v391
    %2403 = vmatmul.f32.gmra.mxu0 %v377
    %v2404 = vpop.f32.mrf.mxu0
    %v2405 = vadd.f32 %v1417, %v2404
    %2406 = vdwg.mxu0
    %2407 = vmatpush.msra.mxu0 %v639
    %2408 = vmatpush.msra.mxu0 %v631
    %2409 = vmatpush.msra.mxu0 %v623
    %2410 = vmatpush.msra.mxu0 %v615
    %2411 = vmatpush.msra.mxu0 %v607
    %2412 = vmatpush.msra.mxu0 %v599
    %2413 = vmatpush.msra.mxu0 %v591
    %2414 = vmatpush.msra.mxu0 %v583
    %2415 = vmatpush.msra.mxu0 %v575
    %2416 = vmatpush.msra.mxu0 %v567
    %2417 = vmatpush.msra.mxu0 %v559
    %2418 = vmatpush.msra.mxu0 %v551
    %2419 = vmatpush.msra.mxu0 %v543
    %2420 = vmatpush.msra.mxu0 %v535
    %2421 = vmatpush.msra.mxu0 %v527
    %2422 = vmatpush.msra.mxu0 %v519
    %2423 = vmatmul.f32.gmra.mxu0 %v378
    %v2424 = vpop.f32.mrf.mxu0
    %v2425 = vadd.f32 %v2405, %v2424
    %2426 = vdwg.mxu0
    %2427 = vmatpush.msra.mxu0 %v767
    %2428 = vmatpush.msra.mxu0 %v759
    %2429 = vmatpush.msra.mxu0 %v751
    %2430 = vmatpush.msra.mxu0 %v743
    %2431 = vmatpush.msra.mxu0 %v735
    %2432 = vmatpush.msra.mxu0 %v727
    %2433 = vmatpush.msra.mxu0 %v719
    %2434 = vmatpush.msra.mxu0 %v711
    %2435 = vmatpush.msra.mxu0 %v703
    %2436 = vmatpush.msra.mxu0 %v695
    %2437 = vmatpush.msra.mxu0 %v687
    %2438 = vmatpush.msra.mxu0 %v679
    %2439 = vmatpush.msra.mxu0 %v671
    %2440 = vmatpush.msra.mxu0 %v663
    %2441 = vmatpush.msra.mxu0 %v655
    %2442 = vmatpush.msra.mxu0 %v647
    %2443 = vmatmul.f32.gmra.mxu0 %v379
    %v2444 = vpop.f32.mrf.mxu0
    %v2445 = vadd.f32 %v2425, %v2444
    %2446 = vdwg.mxu0
    %2447 = vmatpush.msra.mxu0 %v895
    %2448 = vmatpush.msra.mxu0 %v887
    %2449 = vmatpush.msra.mxu0 %v879
    %2450 = vmatpush.msra.mxu0 %v871
    %2451 = vmatpush.msra.mxu0 %v863
    %2452 = vmatpush.msra.mxu0 %v855
    %2453 = vmatpush.msra.mxu0 %v847
    %2454 = vmatpush.msra.mxu0 %v839
    %2455 = vmatpush.msra.mxu0 %v831
    %2456 = vmatpush.msra.mxu0 %v823
    %2457 = vmatpush.msra.mxu0 %v815
    %2458 = vmatpush.msra.mxu0 %v807
    %2459 = vmatpush.msra.mxu0 %v799
    %2460 = vmatpush.msra.mxu0 %v791
    %2461 = vmatpush.msra.mxu0 %v783
    %2462 = vmatpush.msra.mxu0 %v775
    %2463 = vmatmul.f32.gmra.mxu0 %v380
    %v2464 = vpop.f32.mrf.mxu0
    %v2465 = vadd.f32 %v2445, %v2464
    %2466 = vdwg.mxu0
    %2467 = vmatpush.msra.mxu0 %v1023
    %2468 = vmatpush.msra.mxu0 %v1015
    %2469 = vmatpush.msra.mxu0 %v1007
    %2470 = vmatpush.msra.mxu0 %v999
    %2471 = vmatpush.msra.mxu0 %v991
    %2472 = vmatpush.msra.mxu0 %v983
    %2473 = vmatpush.msra.mxu0 %v975
    %2474 = vmatpush.msra.mxu0 %v967
    %2475 = vmatpush.msra.mxu0 %v959
    %2476 = vmatpush.msra.mxu0 %v951
    %2477 = vmatpush.msra.mxu0 %v943
    %2478 = vmatpush.msra.mxu0 %v935
    %2479 = vmatpush.msra.mxu0 %v927
    %2480 = vmatpush.msra.mxu0 %v919
    %2481 = vmatpush.msra.mxu0 %v911
    %2482 = vmatpush.msra.mxu0 %v903
    %2483 = vmatmul.f32.gmra.mxu0 %v381
    %v2484 = vpop.f32.mrf.mxu0
    %v2485 = vadd.f32 %v2465, %v2484
    %2486 = vdwg.mxu0
    %2487 = vmatpush.msra.mxu0 %v1151
    %2488 = vmatpush.msra.mxu0 %v1143
    %2489 = vmatpush.msra.mxu0 %v1135
    %2490 = vmatpush.msra.mxu0 %v1127
    %2491 = vmatpush.msra.mxu0 %v1119
    %2492 = vmatpush.msra.mxu0 %v1111
    %2493 = vmatpush.msra.mxu0 %v1103
    %2494 = vmatpush.msra.mxu0 %v1095
    %2495 = vmatpush.msra.mxu0 %v1087
    %2496 = vmatpush.msra.mxu0 %v1079
    %2497 = vmatpush.msra.mxu0 %v1071
    %2498 = vmatpush.msra.mxu0 %v1063
    %2499 = vmatpush.msra.mxu0 %v1055
    %2500 = vmatpush.msra.mxu0 %v1047
    %2501 = vmatpush.msra.mxu0 %v1039
    %2502 = vmatpush.msra.mxu0 %v1031
    %2503 = vmatmul.f32.gmra.mxu0 %v382
    %v2504 = vpop.f32.mrf.mxu0
    %v2505 = vadd.f32 %v2485, %v2504
    %2506 = vdwg.mxu0
    %2507 = vmatpush.msra.mxu0 %v1279
    %2508 = vmatpush.msra.mxu0 %v1271
    %2509 = vmatpush.msra.mxu0 %v1263
    %2510 = vmatpush.msra.mxu0 %v1255
    %2511 = vmatpush.msra.mxu0 %v1247
    %2512 = vmatpush.msra.mxu0 %v1239
    %2513 = vmatpush.msra.mxu0 %v1231
    %2514 = vmatpush.msra.mxu0 %v1223
    %2515 = vmatpush.msra.mxu0 %v1215
    %2516 = vmatpush.msra.mxu0 %v1207
    %2517 = vmatpush.msra.mxu0 %v1199
    %2518 = vmatpush.msra.mxu0 %v1191
    %2519 = vmatpush.msra.mxu0 %v1183
    %2520 = vmatpush.msra.mxu0 %v1175
    %2521 = vmatpush.msra.mxu0 %v1167
    %2522 = vmatpush.msra.mxu0 %v1159
    %2523 = vmatmul.f32.gmra.mxu0 %v383
    %v2524 = vpop.f32.mrf.mxu0
    %v2525 = vadd.f32 %v2505, %v2524
    %2526 = vdwg.mxu0
    %2527 = vmatpush.msra.mxu0 %v1407
    %2528 = vmatpush.msra.mxu0 %v1399
    %2529 = vmatpush.msra.mxu0 %v1391
    %2530 = vmatpush.msra.mxu0 %v1383
    %2531 = vmatpush.msra.mxu0 %v1375
    %2532 = vmatpush.msra.mxu0 %v1367
    %2533 = vmatpush.msra.mxu0 %v1359
    %2534 = vmatpush.msra.mxu0 %v1351
    %2535 = vmatpush.msra.mxu0 %v1343
    %2536 = vmatpush.msra.mxu0 %v1335
    %2537 = vmatpush.msra.mxu0 %v1327
    %2538 = vmatpush.msra.mxu0 %v1319
    %2539 = vmatpush.msra.mxu0 %v1311
    %2540 = vmatpush.msra.mxu0 %v1303
    %2541 = vmatpush.msra.mxu0 %v1295
    %2542 = vmatpush.msra.mxu0 %v1287
    %2543 = vmatmul.f32.gmra.mxu0 %v384
    %v2544 = vpop.f32.mrf.mxu0
    %v2545 = vadd.f32 %v2525, %v2544
    %2546 = vdwg.mxu0
    %2547 = vmatpush.msra.mxu0 %v512
    %2548 = vmatpush.msra.mxu0 %v504
    %2549 = vmatpush.msra.mxu0 %v496
    %2550 = vmatpush.msra.mxu0 %v488
    %2551 = vmatpush.msra.mxu0 %v480
    %2552 = vmatpush.msra.mxu0 %v472
    %2553 = vmatpush.msra.mxu0 %v464
    %2554 = vmatpush.msra.mxu0 %v456
    %2555 = vmatpush.msra.mxu0 %v448
    %2556 = vmatpush.msra.mxu0 %v440
    %2557 = vmatpush.msra.mxu0 %v432
    %2558 = vmatpush.msra.mxu0 %v424
    %2559 = vmatpush.msra.mxu0 %v416
    %2560 = vmatpush.msra.mxu0 %v408
    %2561 = vmatpush.msra.mxu0 %v400
    %2562 = vmatpush.msra.mxu0 %v392
    %2563 = vmatmul.f32.gmra.mxu0 %v377
    %v2564 = vpop.f32.mrf.mxu0
    %v2565 = vadd.f32 %v1418, %v2564
    %2566 = vdwg.mxu0
    %2567 = vmatpush.msra.mxu0 %v640
    %2568 = vmatpush.msra.mxu0 %v632
    %2569 = vmatpush.msra.mxu0 %v624
    %2570 = vmatpush.msra.mxu0 %v616
    %2571 = vmatpush.msra.mxu0 %v608
    %2572 = vmatpush.msra.mxu0 %v600
    %2573 = vmatpush.msra.mxu0 %v592
    %2574 = vmatpush.msra.mxu0 %v584
    %2575 = vmatpush.msra.mxu0 %v576
    %2576 = vmatpush.msra.mxu0 %v568
    %2577 = vmatpush.msra.mxu0 %v560
    %2578 = vmatpush.msra.mxu0 %v552
    %2579 = vmatpush.msra.mxu0 %v544
    %2580 = vmatpush.msra.mxu0 %v536
    %2581 = vmatpush.msra.mxu0 %v528
    %2582 = vmatpush.msra.mxu0 %v520
    %2583 = vmatmul.f32.gmra.mxu0 %v378
    %v2584 = vpop.f32.mrf.mxu0
    %v2585 = vadd.f32 %v2565, %v2584
    %2586 = vdwg.mxu0
    %2587 = vmatpush.msra.mxu0 %v768
    %2588 = vmatpush.msra.mxu0 %v760
    %2589 = vmatpush.msra.mxu0 %v752
    %2590 = vmatpush.msra.mxu0 %v744
    %2591 = vmatpush.msra.mxu0 %v736
    %2592 = vmatpush.msra.mxu0 %v728
    %2593 = vmatpush.msra.mxu0 %v720
    %2594 = vmatpush.msra.mxu0 %v712
    %2595 = vmatpush.msra.mxu0 %v704
    %2596 = vmatpush.msra.mxu0 %v696
    %2597 = vmatpush.msra.mxu0 %v688
    %2598 = vmatpush.msra.mxu0 %v680
    %2599 = vmatpush.msra.mxu0 %v672
    %2600 = vmatpush.msra.mxu0 %v664
    %2601 = vmatpush.msra.mxu0 %v656
    %2602 = vmatpush.msra.mxu0 %v648
    %2603 = vmatmul.f32.gmra.mxu0 %v379
    %v2604 = vpop.f32.mrf.mxu0
    %v2605 = vadd.f32 %v2585, %v2604
    %2606 = vdwg.mxu0
    %2607 = vmatpush.msra.mxu0 %v896
    %2608 = vmatpush.msra.mxu0 %v888
    %2609 = vmatpush.msra.mxu0 %v880
    %2610 = vmatpush.msra.mxu0 %v872
    %2611 = vmatpush.msra.mxu0 %v864
    %2612 = vmatpush.msra.mxu0 %v856
    %2613 = vmatpush.msra.mxu0 %v848
    %2614 = vmatpush.msra.mxu0 %v840
    %2615 = vmatpush.msra.mxu0 %v832
    %2616 = vmatpush.msra.mxu0 %v824
    %2617 = vmatpush.msra.mxu0 %v816
    %2618 = vmatpush.msra.mxu0 %v808
    %2619 = vmatpush.msra.mxu0 %v800
    %2620 = vmatpush.msra.mxu0 %v792
    %2621 = vmatpush.msra.mxu0 %v784
    %2622 = vmatpush.msra.mxu0 %v776
    %2623 = vmatmul.f32.gmra.mxu0 %v380
    %v2624 = vpop.f32.mrf.mxu0
    %v2625 = vadd.f32 %v2605, %v2624
    %2626 = vdwg.mxu0
    %2627 = vmatpush.msra.mxu0 %v1024
    %2628 = vmatpush.msra.mxu0 %v1016
    %2629 = vmatpush.msra.mxu0 %v1008
    %2630 = vmatpush.msra.mxu0 %v1000
    %2631 = vmatpush.msra.mxu0 %v992
    %2632 = vmatpush.msra.mxu0 %v984
    %2633 = vmatpush.msra.mxu0 %v976
    %2634 = vmatpush.msra.mxu0 %v968
    %2635 = vmatpush.msra.mxu0 %v960
    %2636 = vmatpush.msra.mxu0 %v952
    %2637 = vmatpush.msra.mxu0 %v944
    %2638 = vmatpush.msra.mxu0 %v936
    %2639 = vmatpush.msra.mxu0 %v928
    %2640 = vmatpush.msra.mxu0 %v920
    %2641 = vmatpush.msra.mxu0 %v912
    %2642 = vmatpush.msra.mxu0 %v904
    %2643 = vmatmul.f32.gmra.mxu0 %v381
    %v2644 = vpop.f32.mrf.mxu0
    %v2645 = vadd.f32 %v2625, %v2644
    %2646 = vdwg.mxu0
    %2647 = vmatpush.msra.mxu0 %v1152
    %2648 = vmatpush.msra.mxu0 %v1144
    %2649 = vmatpush.msra.mxu0 %v1136
    %2650 = vmatpush.msra.mxu0 %v1128
    %2651 = vmatpush.msra.mxu0 %v1120
    %2652 = vmatpush.msra.mxu0 %v1112
    %2653 = vmatpush.msra.mxu0 %v1104
    %2654 = vmatpush.msra.mxu0 %v1096
    %2655 = vmatpush.msra.mxu0 %v1088
    %2656 = vmatpush.msra.mxu0 %v1080
    %2657 = vmatpush.msra.mxu0 %v1072
    %2658 = vmatpush.msra.mxu0 %v1064
    %2659 = vmatpush.msra.mxu0 %v1056
    %2660 = vmatpush.msra.mxu0 %v1048
    %2661 = vmatpush.msra.mxu0 %v1040
    %2662 = vmatpush.msra.mxu0 %v1032
    %2663 = vmatmul.f32.gmra.mxu0 %v382
    %v2664 = vpop.f32.mrf.mxu0
    %v2665 = vadd.f32 %v2645, %v2664
    %2666 = vdwg.mxu0
    %2667 = vmatpush.msra.mxu0 %v1280
    %2668 = vmatpush.msra.mxu0 %v1272
    %2669 = vmatpush.msra.mxu0 %v1264
    %2670 = vmatpush.msra.mxu0 %v1256
    %2671 = vmatpush.msra.mxu0 %v1248
    %2672 = vmatpush.msra.mxu0 %v1240
    %2673 = vmatpush.msra.mxu0 %v1232
    %2674 = vmatpush.msra.mxu0 %v1224
    %2675 = vmatpush.msra.mxu0 %v1216
    %2676 = vmatpush.msra.mxu0 %v1208
    %2677 = vmatpush.msra.mxu0 %v1200
    %2678 = vmatpush.msra.mxu0 %v1192
    %2679 = vmatpush.msra.mxu0 %v1184
    %2680 = vmatpush.msra.mxu0 %v1176
    %2681 = vmatpush.msra.mxu0 %v1168
    %2682 = vmatpush.msra.mxu0 %v1160
    %2683 = vmatmul.f32.gmra.mxu0 %v383
    %v2684 = vpop.f32.mrf.mxu0
    %v2685 = vadd.f32 %v2665, %v2684
    %2686 = vdwg.mxu0
    %2687 = vmatpush.msra.mxu0 %v1408
    %2688 = vmatpush.msra.mxu0 %v1400
    %2689 = vmatpush.msra.mxu0 %v1392
    %2690 = vmatpush.msra.mxu0 %v1384
    %2691 = vmatpush.msra.mxu0 %v1376
    %2692 = vmatpush.msra.mxu0 %v1368
    %2693 = vmatpush.msra.mxu0 %v1360
    %2694 = vmatpush.msra.mxu0 %v1352
    %2695 = vmatpush.msra.mxu0 %v1344
    %2696 = vmatpush.msra.mxu0 %v1336
    %2697 = vmatpush.msra.mxu0 %v1328
    %2698 = vmatpush.msra.mxu0 %v1320
    %2699 = vmatpush.msra.mxu0 %v1312
    %2700 = vmatpush.msra.mxu0 %v1304
    %2701 = vmatpush.msra.mxu0 %v1296
    %2702 = vmatpush.msra.mxu0 %v1288
    %2703 = vmatmul.f32.gmra.mxu0 %v384
    %v2704 = vpop.f32.mrf.mxu0
    %v2705 = vadd.f32 %v2685, %v2704
    %2706 = vdwg.mxu0
    %v2707 = vtanh.pop %v1585
    %v2708 = vtanh.pop %v1745
    %v2709 = vtanh.pop %v1905
    %v2710 = vtanh.pop %v2065
    %v2711 = vtanh.pop %v2225
    %v2712 = vtanh.pop %v2385
    %v2713 = vtanh.pop %v2545
    %v2714 = vtanh.pop %v2705
    %v2715 = vld [vmem:[%s7] sm:$0xff]
    %v2716 = vld [vmem:[%s7 + $0x8] sm:$0xff]
    %v2717 = vld [vmem:[%s7 + $0x10] sm:$0xff]
    %v2718 = vld [vmem:[%s7 + $0x18] sm:$0xff]
    %v2719 = vld [vmem:[%s7 + $0x20] sm:$0xff]
    %v2720 = vld [vmem:[%s7 + $0x28] sm:$0xff]
    %v2721 = vld [vmem:[%s7 + $0x30] sm:$0xff]
    %v2722 = vld [vmem:[%s7 + $0x38] sm:$0xff]
    %v2723 = vld [vmem:[%s7 + $0x40] sm:$0xff]
    %v2724 = vld [vmem:[%s7 + $0x48] sm:$0xff]
    %v2725 = vld [vmem:[%s7 + $0x50] sm:$0xff]
    %v2726 = vld [vmem:[%s7 + $0x58] sm:$0xff]
    %v2727 = vld [vmem:[%s7 + $0x60] sm:$0xff]
    %v2728 = vld [vmem:[%s7 + $0x68] sm:$0xff]
    %v2729 = vld [vmem:[%s7 + $0x70] sm:$0xff]
    %v2730 = vld [vmem:[%s7 + $0x78] sm:$0xff]
    %v2731 = vld [vmem:[%s7 + $0x80] sm:$0xff]
    %v2732 = vld [vmem:[%s7 + $0x88] sm:$0xff]
    %v2733 = vld [vmem:[%s7 + $0x90] sm:$0xff]
    %v2734 = vld [vmem:[%s7 + $0x98] sm:$0xff]
    %v2735 = vld [vmem:[%s7 + $0xa0] sm:$0xff]
    %v2736 = vld [vmem:[%s7 + $0xa8] sm:$0xff]
    %v2737 = vld [vmem:[%s7 + $0xb0] sm:$0xff]
    %v2738 = vld [vmem:[%s7 + $0xb8] sm:$0xff]
    %v2739 = vld [vmem:[%s7 + $0xc0] sm:$0xff]
    %v2740 = vld [vmem:[%s7 + $0xc8] sm:$0xff]
    %v2741 = vld [vmem:[%s7 + $0xd0] sm:$0xff]
    %v2742 = vld [vmem:[%s7 + $0xd8] sm:$0xff]
    %v2743 = vld [vmem:[%s7 + $0xe0] sm:$0xff]
    %v2744 = vld [vmem:[%s7 + $0xe8] sm:$0xff]
    %v2745 = vld [vmem:[%s7 + $0xf0] sm:$0xff]
    %v2746 = vld [vmem:[%s7 + $0xf8] sm:$0xff]
    %v2747 = vld [vmem:[%s7 + $0x100] sm:$0xff]
    %v2748 = vld [vmem:[%s7 + $0x108] sm:$0xff]
    %v2749 = vld [vmem:[%s7 + $0x110] sm:$0xff]
    %v2750 = vld [vmem:[%s7 + $0x118] sm:$0xff]
    %v2751 = vld [vmem:[%s7 + $0x120] sm:$0xff]
    %v2752 = vld [vmem:[%s7 + $0x128] sm:$0xff]
    %v2753 = vld [vmem:[%s7 + $0x130] sm:$0xff]
    %v2754 = vld [vmem:[%s7 + $0x138] sm:$0xff]
    %v2755 = vld [vmem:[%s7 + $0x140] sm:$0xff]
    %v2756 = vld [vmem:[%s7 + $0x148] sm:$0xff]
    %v2757 = vld [vmem:[%s7 + $0x150] sm:$0xff]
    %v2758 = vld [vmem:[%s7 + $0x158] sm:$0xff]
    %v2759 = vld [vmem:[%s7 + $0x160] sm:$0xff]
    %v2760 = vld [vmem:[%s7 + $0x168] sm:$0xff]
    %v2761 = vld [vmem:[%s7 + $0x170] sm:$0xff]
    %v2762 = vld [vmem:[%s7 + $0x178] sm:$0xff]
    %v2763 = vld [vmem:[%s7 + $0x180] sm:$0xff]
    %v2764 = vld [vmem:[%s7 + $0x188] sm:$0xff]
    %v2765 = vld [vmem:[%s7 + $0x190] sm:$0xff]
    %v2766 = vld [vmem:[%s7 + $0x198] sm:$0xff]
    %v2767 = vld [vmem:[%s7 + $0x1a0] sm:$0xff]
    %v2768 = vld [vmem:[%s7 + $0x1a8] sm:$0xff]
    %v2769 = vld [vmem:[%s7 + $0x1b0] sm:$0xff]
    %v2770 = vld [vmem:[%s7 + $0x1b8] sm:$0xff]
    %v2771 = vld [vmem:[%s7 + $0x1c0] sm:$0xff]
    %v2772 = vld [vmem:[%s7 + $0x1c8] sm:$0xff]
    %v2773 = vld [vmem:[%s7 + $0x1d0] sm:$0xff]
    %v2774 = vld [vmem:[%s7 + $0x1d8] sm:$0xff]
    %v2775 = vld [vmem:[%s7 + $0x1e0] sm:$0xff]
    %v2776 = vld [vmem:[%s7 + $0x1e8] sm:$0xff]
    %v2777 = vld [vmem:[%s7 + $0x1f0] sm:$0xff]
    %v2778 = vld [vmem:[%s7 + $0x1f8] sm:$0xff]
    %v2779 = vld [vmem:[%s7 + $0x200] sm:$0xff]
    %v2780 = vld [vmem:[%s7 + $0x208] sm:$0xff]
    %v2781 = vld [vmem:[%s7 + $0x210] sm:$0xff]
    %v2782 = vld [vmem:[%s7 + $0x218] sm:$0xff]
    %v2783 = vld [vmem:[%s7 + $0x220] sm:$0xff]
    %v2784 = vld [vmem:[%s7 + $0x228] sm:$0xff]
    %v2785 = vld [vmem:[%s7 + $0x230] sm:$0xff]
    %v2786 = vld [vmem:[%s7 + $0x238] sm:$0xff]
    %v2787 = vld [vmem:[%s7 + $0x240] sm:$0xff]
    %v2788 = vld [vmem:[%s7 + $0x248] sm:$0xff]
    %v2789 = vld [vmem:[%s7 + $0x250] sm:$0xff]
    %v2790 = vld [vmem:[%s7 + $0x258] sm:$0xff]
    %v2791 = vld [vmem:[%s7 + $0x260] sm:$0xff]
    %v2792 = vld [vmem:[%s7 + $0x268] sm:$0xff]
    %v2793 = vld [vmem:[%s7 + $0x270] sm:$0xff]
    %v2794 = vld [vmem:[%s7 + $0x278] sm:$0xff]
    %v2795 = vld [vmem:[%s7 + $0x280] sm:$0xff]
    %v2796 = vld [vmem:[%s7 + $0x288] sm:$0xff]
    %v2797 = vld [vmem:[%s7 + $0x290] sm:$0xff]
    %v2798 = vld [vmem:[%s7 + $0x298] sm:$0xff]
    %v2799 = vld [vmem:[%s7 + $0x2a0] sm:$0xff]
    %v2800 = vld [vmem:[%s7 + $0x2a8] sm:$0xff]
    %v2801 = vld [vmem:[%s7 + $0x2b0] sm:$0xff]
    %v2802 = vld [vmem:[%s7 + $0x2b8] sm:$0xff]
    %v2803 = vld [vmem:[%s7 + $0x2c0] sm:$0xff]
    %v2804 = vld [vmem:[%s7 + $0x2c8] sm:$0xff]
    %v2805 = vld [vmem:[%s7 + $0x2d0] sm:$0xff]
    %v2806 = vld [vmem:[%s7 + $0x2d8] sm:$0xff]
    %v2807 = vld [vmem:[%s7 + $0x2e0] sm:$0xff]
    %v2808 = vld [vmem:[%s7 + $0x2e8] sm:$0xff]
    %v2809 = vld [vmem:[%s7 + $0x2f0] sm:$0xff]
    %v2810 = vld [vmem:[%s7 + $0x2f8] sm:$0xff]
    %v2811 = vld [vmem:[%s7 + $0x300] sm:$0xff]
    %v2812 = vld [vmem:[%s7 + $0x308] sm:$0xff]
    %v2813 = vld [vmem:[%s7 + $0x310] sm:$0xff]
    %v2814 = vld [vmem:[%s7 + $0x318] sm:$0xff]
    %v2815 = vld [vmem:[%s7 + $0x320] sm:$0xff]
    %v2816 = vld [vmem:[%s7 + $0x328] sm:$0xff]
    %v2817 = vld [vmem:[%s7 + $0x330] sm:$0xff]
    %v2818 = vld [vmem:[%s7 + $0x338] sm:$0xff]
    %v2819 = vld [vmem:[%s7 + $0x340] sm:$0xff]
    %v2820 = vld [vmem:[%s7 + $0x348] sm:$0xff]
    %v2821 = vld [vmem:[%s7 + $0x350] sm:$0xff]
    %v2822 = vld [vmem:[%s7 + $0x358] sm:$0xff]
    %v2823 = vld [vmem:[%s7 + $0x360] sm:$0xff]
    %v2824 = vld [vmem:[%s7 + $0x368] sm:$0xff]
    %v2825 = vld [vmem:[%s7 + $0x370] sm:$0xff]
    %v2826 = vld [vmem:[%s7 + $0x378] sm:$0xff]
    %v2827 = vld [vmem:[%s7 + $0x380] sm:$0xff]
    %v2828 = vld [vmem:[%s7 + $0x388] sm:$0xff]
    %v2829 = vld [vmem:[%s7 + $0x390] sm:$0xff]
    %v2830 = vld [vmem:[%s7 + $0x398] sm:$0xff]
    %v2831 = vld [vmem:[%s7 + $0x3a0] sm:$0xff]
    %v2832 = vld [vmem:[%s7 + $0x3a8] sm:$0xff]
    %v2833 = vld [vmem:[%s7 + $0x3b0] sm:$0xff]
    %v2834 = vld [vmem:[%s7 + $0x3b8] sm:$0xff]
    %v2835 = vld [vmem:[%s7 + $0x3c0] sm:$0xff]
    %v2836 = vld [vmem:[%s7 + $0x3c8] sm:$0xff]
    %v2837 = vld [vmem:[%s7 + $0x3d0] sm:$0xff]
    %v2838 = vld [vmem:[%s7 + $0x3d8] sm:$0xff]
    %v2839 = vld [vmem:[%s7 + $0x3e0] sm:$0xff]
    %v2840 = vld [vmem:[%s7 + $0x3e8] sm:$0xff]
    %v2841 = vld [vmem:[%s7 + $0x3f0] sm:$0xff]
    %v2842 = vld [vmem:[%s7 + $0x3f8] sm:$0xff]
    %v2843 = vld [vmem:[%s7 + $0x400] sm:$0xff]
    %v2844 = vld [vmem:[%s7 + $0x408] sm:$0xff]
    %v2845 = vld [vmem:[%s7 + $0x410] sm:$0xff]
    %v2846 = vld [vmem:[%s7 + $0x418] sm:$0xff]
    %v2847 = vld [vmem:[%s7 + $0x420] sm:$0xff]
    %v2848 = vld [vmem:[%s7 + $0x428] sm:$0xff]
    %v2849 = vld [vmem:[%s7 + $0x430] sm:$0xff]
    %v2850 = vld [vmem:[%s7 + $0x438] sm:$0xff]
    %v2851 = vld [vmem:[%s7 + $0x440] sm:$0xff]
    %v2852 = vld [vmem:[%s7 + $0x448] sm:$0xff]
    %v2853 = vld [vmem:[%s7 + $0x450] sm:$0xff]
    %v2854 = vld [vmem:[%s7 + $0x458] sm:$0xff]
    %v2855 = vld [vmem:[%s7 + $0x460] sm:$0xff]
    %v2856 = vld [vmem:[%s7 + $0x468] sm:$0xff]
    %v2857 = vld [vmem:[%s7 + $0x470] sm:$0xff]
    %v2858 = vld [vmem:[%s7 + $0x478] sm:$0xff]
    %v2859 = vld [vmem:[%s7 + $0x480] sm:$0xff]
    %v2860 = vld [vmem:[%s7 + $0x488] sm:$0xff]
    %v2861 = vld [vmem:[%s7 + $0x490] sm:$0xff]
    %v2862 = vld [vmem:[%s7 + $0x498] sm:$0xff]
    %v2863 = vld [vmem:[%s7 + $0x4a0] sm:$0xff]
    %v2864 = vld [vmem:[%s7 + $0x4a8] sm:$0xff]
    %v2865 = vld [vmem:[%s7 + $0x4b0] sm:$0xff]
    %v2866 = vld [vmem:[%s7 + $0x4b8] sm:$0xff]
    %v2867 = vld [vmem:[%s7 + $0x4c0] sm:$0xff]
    %v2868 = vld [vmem:[%s7 + $0x4c8] sm:$0xff]
    %v2869 = vld [vmem:[%s7 + $0x4d0] sm:$0xff]
    %v2870 = vld [vmem:[%s7 + $0x4d8] sm:$0xff]
    %v2871 = vld [vmem:[%s7 + $0x4e0] sm:$0xff]
    %v2872 = vld [vmem:[%s7 + $0x4e8] sm:$0xff]
    %v2873 = vld [vmem:[%s7 + $0x4f0] sm:$0xff]
    %v2874 = vld [vmem:[%s7 + $0x4f8] sm:$0xff]
    %v2875 = vld [vmem:[%s7 + $0x500] sm:$0xff]
    %v2876 = vld [vmem:[%s7 + $0x508] sm:$0xff]
    %v2877 = vld [vmem:[%s7 + $0x510] sm:$0xff]
    %v2878 = vld [vmem:[%s7 + $0x518] sm:$0xff]
    %v2879 = vld [vmem:[%s7 + $0x520] sm:$0xff]
    %v2880 = vld [vmem:[%s7 + $0x528] sm:$0xff]
    %v2881 = vld [vmem:[%s7 + $0x530] sm:$0xff]
    %v2882 = vld [vmem:[%s7 + $0x538] sm:$0xff]
    %v2883 = vld [vmem:[%s7 + $0x540] sm:$0xff]
    %v2884 = vld [vmem:[%s7 + $0x548] sm:$0xff]
    %v2885 = vld [vmem:[%s7 + $0x550] sm:$0xff]
    %v2886 = vld [vmem:[%s7 + $0x558] sm:$0xff]
    %v2887 = vld [vmem:[%s7 + $0x560] sm:$0xff]
    %v2888 = vld [vmem:[%s7 + $0x568] sm:$0xff]
    %v2889 = vld [vmem:[%s7 + $0x570] sm:$0xff]
    %v2890 = vld [vmem:[%s7 + $0x578] sm:$0xff]
    %v2891 = vld [vmem:[%s7 + $0x580] sm:$0xff]
    %v2892 = vld [vmem:[%s7 + $0x588] sm:$0xff]
    %v2893 = vld [vmem:[%s7 + $0x590] sm:$0xff]
    %v2894 = vld [vmem:[%s7 + $0x598] sm:$0xff]
    %v2895 = vld [vmem:[%s7 + $0x5a0] sm:$0xff]
    %v2896 = vld [vmem:[%s7 + $0x5a8] sm:$0xff]
    %v2897 = vld [vmem:[%s7 + $0x5b0] sm:$0xff]
    %v2898 = vld [vmem:[%s7 + $0x5b8] sm:$0xff]
    %v2899 = vld [vmem:[%s7 + $0x5c0] sm:$0xff]
    %v2900 = vld [vmem:[%s7 + $0x5c8] sm:$0xff]
    %v2901 = vld [vmem:[%s7 + $0x5d0] sm:$0xff]
    %v2902 = vld [vmem:[%s7 + $0x5d8] sm:$0xff]
    %v2903 = vld [vmem:[%s7 + $0x5e0] sm:$0xff]
    %v2904 = vld [vmem:[%s7 + $0x5e8] sm:$0xff]
    %v2905 = vld [vmem:[%s7 + $0x5f0] sm:$0xff]
    %v2906 = vld [vmem:[%s7 + $0x5f8] sm:$0xff]
    %v2907 = vld [vmem:[%s7 + $0x600] sm:$0xff]
    %v2908 = vld [vmem:[%s7 + $0x608] sm:$0xff]
    %v2909 = vld [vmem:[%s7 + $0x610] sm:$0xff]
    %v2910 = vld [vmem:[%s7 + $0x618] sm:$0xff]
    %v2911 = vld [vmem:[%s7 + $0x620] sm:$0xff]
    %v2912 = vld [vmem:[%s7 + $0x628] sm:$0xff]
    %v2913 = vld [vmem:[%s7 + $0x630] sm:$0xff]
    %v2914 = vld [vmem:[%s7 + $0x638] sm:$0xff]
    %v2915 = vld [vmem:[%s7 + $0x640] sm:$0xff]
    %v2916 = vld [vmem:[%s7 + $0x648] sm:$0xff]
    %v2917 = vld [vmem:[%s7 + $0x650] sm:$0xff]
    %v2918 = vld [vmem:[%s7 + $0x658] sm:$0xff]
    %v2919 = vld [vmem:[%s7 + $0x660] sm:$0xff]
    %v2920 = vld [vmem:[%s7 + $0x668] sm:$0xff]
    %v2921 = vld [vmem:[%s7 + $0x670] sm:$0xff]
    %v2922 = vld [vmem:[%s7 + $0x678] sm:$0xff]
    %v2923 = vld [vmem:[%s7 + $0x680] sm:$0xff]
    %v2924 = vld [vmem:[%s7 + $0x688] sm:$0xff]
    %v2925 = vld [vmem:[%s7 + $0x690] sm:$0xff]
    %v2926 = vld [vmem:[%s7 + $0x698] sm:$0xff]
    %v2927 = vld [vmem:[%s7 + $0x6a0] sm:$0xff]
    %v2928 = vld [vmem:[%s7 + $0x6a8] sm:$0xff]
    %v2929 = vld [vmem:[%s7 + $0x6b0] sm:$0xff]
    %v2930 = vld [vmem:[%s7 + $0x6b8] sm:$0xff]
    %v2931 = vld [vmem:[%s7 + $0x6c0] sm:$0xff]
    %v2932 = vld [vmem:[%s7 + $0x6c8] sm:$0xff]
    %v2933 = vld [vmem:[%s7 + $0x6d0] sm:$0xff]
    %v2934 = vld [vmem:[%s7 + $0x6d8] sm:$0xff]
    %v2935 = vld [vmem:[%s7 + $0x6e0] sm:$0xff]
    %v2936 = vld [vmem:[%s7 + $0x6e8] sm:$0xff]
    %v2937 = vld [vmem:[%s7 + $0x6f0] sm:$0xff]
    %v2938 = vld [vmem:[%s7 + $0x6f8] sm:$0xff]
    %v2939 = vld [vmem:[%s7 + $0x700] sm:$0xff]
    %v2940 = vld [vmem:[%s7 + $0x708] sm:$0xff]
    %v2941 = vld [vmem:[%s7 + $0x710] sm:$0xff]
    %v2942 = vld [vmem:[%s7 + $0x718] sm:$0xff]
    %v2943 = vld [vmem:[%s7 + $0x720] sm:$0xff]
    %v2944 = vld [vmem:[%s7 + $0x728] sm:$0xff]
    %v2945 = vld [vmem:[%s7 + $0x730] sm:$0xff]
    %v2946 = vld [vmem:[%s7 + $0x738] sm:$0xff]
    %v2947 = vld [vmem:[%s7 + $0x740] sm:$0xff]
    %v2948 = vld [vmem:[%s7 + $0x748] sm:$0xff]
    %v2949 = vld [vmem:[%s7 + $0x750] sm:$0xff]
    %v2950 = vld [vmem:[%s7 + $0x758] sm:$0xff]
    %v2951 = vld [vmem:[%s7 + $0x760] sm:$0xff]
    %v2952 = vld [vmem:[%s7 + $0x768] sm:$0xff]
    %v2953 = vld [vmem:[%s7 + $0x770] sm:$0xff]
    %v2954 = vld [vmem:[%s7 + $0x778] sm:$0xff]
    %v2955 = vld [vmem:[%s7 + $0x780] sm:$0xff]
    %v2956 = vld [vmem:[%s7 + $0x788] sm:$0xff]
    %v2957 = vld [vmem:[%s7 + $0x790] sm:$0xff]
    %v2958 = vld [vmem:[%s7 + $0x798] sm:$0xff]
    %v2959 = vld [vmem:[%s7 + $0x7a0] sm:$0xff]
    %v2960 = vld [vmem:[%s7 + $0x7a8] sm:$0xff]
    %v2961 = vld [vmem:[%s7 + $0x7b0] sm:$0xff]
    %v2962 = vld [vmem:[%s7 + $0x7b8] sm:$0xff]
    %v2963 = vld [vmem:[%s7 + $0x7c0] sm:$0xff]
    %v2964 = vld [vmem:[%s7 + $0x7c8] sm:$0xff]
    %v2965 = vld [vmem:[%s7 + $0x7d0] sm:$0xff]
    %v2966 = vld [vmem:[%s7 + $0x7d8] sm:$0xff]
    %v2967 = vld [vmem:[%s7 + $0x7e0] sm:$0xff]
    %v2968 = vld [vmem:[%s7 + $0x7e8] sm:$0xff]
    %v2969 = vld [vmem:[%s7 + $0x7f0] sm:$0xff]
    %v2970 = vld [vmem:[%s7 + $0x7f8] sm:$0xff]
    %v2971 = vld [vmem:[%s7 + $0x800] sm:$0xff]
    %v2972 = vld [vmem:[%s7 + $0x808] sm:$0xff]
    %v2973 = vld [vmem:[%s7 + $0x810] sm:$0xff]
    %v2974 = vld [vmem:[%s7 + $0x818] sm:$0xff]
    %v2975 = vld [vmem:[%s7 + $0x820] sm:$0xff]
    %v2976 = vld [vmem:[%s7 + $0x828] sm:$0xff]
    %v2977 = vld [vmem:[%s7 + $0x830] sm:$0xff]
    %v2978 = vld [vmem:[%s7 + $0x838] sm:$0xff]
    %v2979 = vld [vmem:[%s7 + $0x840] sm:$0xff]
    %v2980 = vld [vmem:[%s7 + $0x848] sm:$0xff]
    %v2981 = vld [vmem:[%s7 + $0x850] sm:$0xff]
    %v2982 = vld [vmem:[%s7 + $0x858] sm:$0xff]
    %v2983 = vld [vmem:[%s7 + $0x860] sm:$0xff]
    %v2984 = vld [vmem:[%s7 + $0x868] sm:$0xff]
    %v2985 = vld [vmem:[%s7 + $0x870] sm:$0xff]
    %v2986 = vld [vmem:[%s7 + $0x878] sm:$0xff]
    %v2987 = vld [vmem:[%s7 + $0x880] sm:$0xff]
    %v2988 = vld [vmem:[%s7 + $0x888] sm:$0xff]
    %v2989 = vld [vmem:[%s7 + $0x890] sm:$0xff]
    %v2990 = vld [vmem:[%s7 + $0x898] sm:$0xff]
    %v2991 = vld [vmem:[%s7 + $0x8a0] sm:$0xff]
    %v2992 = vld [vmem:[%s7 + $0x8a8] sm:$0xff]
    %v2993 = vld [vmem:[%s7 + $0x8b0] sm:$0xff]
    %v2994 = vld [vmem:[%s7 + $0x8b8] sm:$0xff]
    %v2995 = vld [vmem:[%s7 + $0x8c0] sm:$0xff]
    %v2996 = vld [vmem:[%s7 + $0x8c8] sm:$0xff]
    %v2997 = vld [vmem:[%s7 + $0x8d0] sm:$0xff]
    %v2998 = vld [vmem:[%s7 + $0x8d8] sm:$0xff]
    %v2999 = vld [vmem:[%s7 + $0x8e0] sm:$0xff]
    %v3000 = vld [vmem:[%s7 + $0x8e8] sm:$0xff]
    %v3001 = vld [vmem:[%s7 + $0x8f0] sm:$0xff]
    %v3002 = vld [vmem:[%s7 + $0x8f8] sm:$0xff]
    %v3003 = vld [vmem:[%s7 + $0x900] sm:$0xff]
    %v3004 = vld [vmem:[%s7 + $0x908] sm:$0xff]
    %v3005 = vld [vmem:[%s7 + $0x910] sm:$0xff]
    %v3006 = vld [vmem:[%s7 + $0x918] sm:$0xff]
    %v3007 = vld [vmem:[%s7 + $0x920] sm:$0xff]
    %v3008 = vld [vmem:[%s7 + $0x928] sm:$0xff]
    %v3009 = vld [vmem:[%s7 + $0x930] sm:$0xff]
    %v3010 = vld [vmem:[%s7 + $0x938] sm:$0xff]
    %v3011 = vld [vmem:[%s7 + $0x940] sm:$0xff]
    %v3012 = vld [vmem:[%s7 + $0x948] sm:$0xff]
    %v3013 = vld [vmem:[%s7 + $0x950] sm:$0xff]
    %v3014 = vld [vmem:[%s7 + $0x958] sm:$0xff]
    %v3015 = vld [vmem:[%s7 + $0x960] sm:$0xff]
    %v3016 = vld [vmem:[%s7 + $0x968] sm:$0xff]
    %v3017 = vld [vmem:[%s7 + $0x970] sm:$0xff]
    %v3018 = vld [vmem:[%s7 + $0x978] sm:$0xff]
    %v3019 = vld [vmem:[%s7 + $0x980] sm:$0xff]
    %v3020 = vld [vmem:[%s7 + $0x988] sm:$0xff]
    %v3021 = vld [vmem:[%s7 + $0x990] sm:$0xff]
    %v3022 = vld [vmem:[%s7 + $0x998] sm:$0xff]
    %v3023 = vld [vmem:[%s7 + $0x9a0] sm:$0xff]
    %v3024 = vld [vmem:[%s7 + $0x9a8] sm:$0xff]
    %v3025 = vld [vmem:[%s7 + $0x9b0] sm:$0xff]
    %v3026 = vld [vmem:[%s7 + $0x9b8] sm:$0xff]
    %v3027 = vld [vmem:[%s7 + $0x9c0] sm:$0xff]
    %v3028 = vld [vmem:[%s7 + $0x9c8] sm:$0xff]
    %v3029 = vld [vmem:[%s7 + $0x9d0] sm:$0xff]
    %v3030 = vld [vmem:[%s7 + $0x9d8] sm:$0xff]
    %v3031 = vld [vmem:[%s7 + $0x9e0] sm:$0xff]
    %v3032 = vld [vmem:[%s7 + $0x9e8] sm:$0xff]
    %v3033 = vld [vmem:[%s7 + $0x9f0] sm:$0xff]
    %v3034 = vld [vmem:[%s7 + $0x9f8] sm:$0xff]
    %v3035 = vld [vmem:[%s7 + $0xa00] sm:$0xff]
    %v3036 = vld [vmem:[%s7 + $0xa08] sm:$0xff]
    %v3037 = vld [vmem:[%s7 + $0xa10] sm:$0xff]
    %v3038 = vld [vmem:[%s7 + $0xa18] sm:$0xff]
    %v3039 = vld [vmem:[%s7 + $0xa20] sm:$0xff]
    %v3040 = vld [vmem:[%s7 + $0xa28] sm:$0xff]
    %v3041 = vld [vmem:[%s7 + $0xa30] sm:$0xff]
    %v3042 = vld [vmem:[%s7 + $0xa38] sm:$0xff]
    %v3043 = vld [vmem:[%s7 + $0xa40] sm:$0xff]
    %v3044 = vld [vmem:[%s7 + $0xa48] sm:$0xff]
    %v3045 = vld [vmem:[%s7 + $0xa50] sm:$0xff]
    %v3046 = vld [vmem:[%s7 + $0xa58] sm:$0xff]
    %v3047 = vld [vmem:[%s7 + $0xa60] sm:$0xff]
    %v3048 = vld [vmem:[%s7 + $0xa68] sm:$0xff]
    %v3049 = vld [vmem:[%s7 + $0xa70] sm:$0xff]
    %v3050 = vld [vmem:[%s7 + $0xa78] sm:$0xff]
    %v3051 = vld [vmem:[%s7 + $0xa80] sm:$0xff]
    %v3052 = vld [vmem:[%s7 + $0xa88] sm:$0xff]
    %v3053 = vld [vmem:[%s7 + $0xa90] sm:$0xff]
    %v3054 = vld [vmem:[%s7 + $0xa98] sm:$0xff]
    %v3055 = vld [vmem:[%s7 + $0xaa0] sm:$0xff]
    %v3056 = vld [vmem:[%s7 + $0xaa8] sm:$0xff]
    %v3057 = vld [vmem:[%s7 + $0xab0] sm:$0xff]
    %v3058 = vld [vmem:[%s7 + $0xab8] sm:$0xff]
    %v3059 = vld [vmem:[%s7 + $0xac0] sm:$0xff]
    %v3060 = vld [vmem:[%s7 + $0xac8] sm:$0xff]
    %v3061 = vld [vmem:[%s7 + $0xad0] sm:$0xff]
    %v3062 = vld [vmem:[%s7 + $0xad8] sm:$0xff]
    %v3063 = vld [vmem:[%s7 + $0xae0] sm:$0xff]
    %v3064 = vld [vmem:[%s7 + $0xae8] sm:$0xff]
    %v3065 = vld [vmem:[%s7 + $0xaf0] sm:$0xff]
    %v3066 = vld [vmem:[%s7 + $0xaf8] sm:$0xff]
    %v3067 = vld [vmem:[%s7 + $0xb00] sm:$0xff]
    %v3068 = vld [vmem:[%s7 + $0xb08] sm:$0xff]
    %v3069 = vld [vmem:[%s7 + $0xb10] sm:$0xff]
    %v3070 = vld [vmem:[%s7 + $0xb18] sm:$0xff]
    %v3071 = vld [vmem:[%s7 + $0xb20] sm:$0xff]
    %v3072 = vld [vmem:[%s7 + $0xb28] sm:$0xff]
    %v3073 = vld [vmem:[%s7 + $0xb30] sm:$0xff]
    %v3074 = vld [vmem:[%s7 + $0xb38] sm:$0xff]
    %v3075 = vld [vmem:[%s7 + $0xb40] sm:$0xff]
    %v3076 = vld [vmem:[%s7 + $0xb48] sm:$0xff]
    %v3077 = vld [vmem:[%s7 + $0xb50] sm:$0xff]
    %v3078 = vld [vmem:[%s7 + $0xb58] sm:$0xff]
    %v3079 = vld [vmem:[%s7 + $0xb60] sm:$0xff]
    %v3080 = vld [vmem:[%s7 + $0xb68] sm:$0xff]
    %v3081 = vld [vmem:[%s7 + $0xb70] sm:$0xff]
    %v3082 = vld [vmem:[%s7 + $0xb78] sm:$0xff]
    %v3083 = vld [vmem:[%s7 + $0xb80] sm:$0xff]
    %v3084 = vld [vmem:[%s7 + $0xb88] sm:$0xff]
    %v3085 = vld [vmem:[%s7 + $0xb90] sm:$0xff]
    %v3086 = vld [vmem:[%s7 + $0xb98] sm:$0xff]
    %v3087 = vld [vmem:[%s7 + $0xba0] sm:$0xff]
    %v3088 = vld [vmem:[%s7 + $0xba8] sm:$0xff]
    %v3089 = vld [vmem:[%s7 + $0xbb0] sm:$0xff]
    %v3090 = vld [vmem:[%s7 + $0xbb8] sm:$0xff]
    %v3091 = vld [vmem:[%s7 + $0xbc0] sm:$0xff]
    %v3092 = vld [vmem:[%s7 + $0xbc8] sm:$0xff]
    %v3093 = vld [vmem:[%s7 + $0xbd0] sm:$0xff]
    %v3094 = vld [vmem:[%s7 + $0xbd8] sm:$0xff]
    %v3095 = vld [vmem:[%s7 + $0xbe0] sm:$0xff]
    %v3096 = vld [vmem:[%s7 + $0xbe8] sm:$0xff]
    %v3097 = vld [vmem:[%s7 + $0xbf0] sm:$0xff]
    %v3098 = vld [vmem:[%s7 + $0xbf8] sm:$0xff]
    %v3099 = vld [vmem:[%s7 + $0xc00] sm:$0xff]
    %v3100 = vld [vmem:[%s7 + $0xc08] sm:$0xff]
    %v3101 = vld [vmem:[%s7 + $0xc10] sm:$0xff]
    %v3102 = vld [vmem:[%s7 + $0xc18] sm:$0xff]
    %v3103 = vld [vmem:[%s7 + $0xc20] sm:$0xff]
    %v3104 = vld [vmem:[%s7 + $0xc28] sm:$0xff]
    %v3105 = vld [vmem:[%s7 + $0xc30] sm:$0xff]
    %v3106 = vld [vmem:[%s7 + $0xc38] sm:$0xff]
    %v3107 = vld [vmem:[%s7 + $0xc40] sm:$0xff]
    %v3108 = vld [vmem:[%s7 + $0xc48] sm:$0xff]
    %v3109 = vld [vmem:[%s7 + $0xc50] sm:$0xff]
    %v3110 = vld [vmem:[%s7 + $0xc58] sm:$0xff]
    %v3111 = vld [vmem:[%s7 + $0xc60] sm:$0xff]
    %v3112 = vld [vmem:[%s7 + $0xc68] sm:$0xff]
    %v3113 = vld [vmem:[%s7 + $0xc70] sm:$0xff]
    %v3114 = vld [vmem:[%s7 + $0xc78] sm:$0xff]
    %v3115 = vld [vmem:[%s7 + $0xc80] sm:$0xff]
    %v3116 = vld [vmem:[%s7 + $0xc88] sm:$0xff]
    %v3117 = vld [vmem:[%s7 + $0xc90] sm:$0xff]
    %v3118 = vld [vmem:[%s7 + $0xc98] sm:$0xff]
    %v3119 = vld [vmem:[%s7 + $0xca0] sm:$0xff]
    %v3120 = vld [vmem:[%s7 + $0xca8] sm:$0xff]
    %v3121 = vld [vmem:[%s7 + $0xcb0] sm:$0xff]
    %v3122 = vld [vmem:[%s7 + $0xcb8] sm:$0xff]
    %v3123 = vld [vmem:[%s7 + $0xcc0] sm:$0xff]
    %v3124 = vld [vmem:[%s7 + $0xcc8] sm:$0xff]
    %v3125 = vld [vmem:[%s7 + $0xcd0] sm:$0xff]
    %v3126 = vld [vmem:[%s7 + $0xcd8] sm:$0xff]
    %v3127 = vld [vmem:[%s7 + $0xce0] sm:$0xff]
    %v3128 = vld [vmem:[%s7 + $0xce8] sm:$0xff]
    %v3129 = vld [vmem:[%s7 + $0xcf0] sm:$0xff]
    %v3130 = vld [vmem:[%s7 + $0xcf8] sm:$0xff]
    %v3131 = vld [vmem:[%s7 + $0xd00] sm:$0xff]
    %v3132 = vld [vmem:[%s7 + $0xd08] sm:$0xff]
    %v3133 = vld [vmem:[%s7 + $0xd10] sm:$0xff]
    %v3134 = vld [vmem:[%s7 + $0xd18] sm:$0xff]
    %v3135 = vld [vmem:[%s7 + $0xd20] sm:$0xff]
    %v3136 = vld [vmem:[%s7 + $0xd28] sm:$0xff]
    %v3137 = vld [vmem:[%s7 + $0xd30] sm:$0xff]
    %v3138 = vld [vmem:[%s7 + $0xd38] sm:$0xff]
    %v3139 = vld [vmem:[%s7 + $0xd40] sm:$0xff]
    %v3140 = vld [vmem:[%s7 + $0xd48] sm:$0xff]
    %v3141 = vld [vmem:[%s7 + $0xd50] sm:$0xff]
    %v3142 = vld [vmem:[%s7 + $0xd58] sm:$0xff]
    %v3143 = vld [vmem:[%s7 + $0xd60] sm:$0xff]
    %v3144 = vld [vmem:[%s7 + $0xd68] sm:$0xff]
    %v3145 = vld [vmem:[%s7 + $0xd70] sm:$0xff]
    %v3146 = vld [vmem:[%s7 + $0xd78] sm:$0xff]
    %v3147 = vld [vmem:[%s7 + $0xd80] sm:$0xff]
    %v3148 = vld [vmem:[%s7 + $0xd88] sm:$0xff]
    %v3149 = vld [vmem:[%s7 + $0xd90] sm:$0xff]
    %v3150 = vld [vmem:[%s7 + $0xd98] sm:$0xff]
    %v3151 = vld [vmem:[%s7 + $0xda0] sm:$0xff]
    %v3152 = vld [vmem:[%s7 + $0xda8] sm:$0xff]
    %v3153 = vld [vmem:[%s7 + $0xdb0] sm:$0xff]
    %v3154 = vld [vmem:[%s7 + $0xdb8] sm:$0xff]
    %v3155 = vld [vmem:[%s7 + $0xdc0] sm:$0xff]
    %v3156 = vld [vmem:[%s7 + $0xdc8] sm:$0xff]
    %v3157 = vld [vmem:[%s7 + $0xdd0] sm:$0xff]
    %v3158 = vld [vmem:[%s7 + $0xdd8] sm:$0xff]
    %v3159 = vld [vmem:[%s7 + $0xde0] sm:$0xff]
    %v3160 = vld [vmem:[%s7 + $0xde8] sm:$0xff]
    %v3161 = vld [vmem:[%s7 + $0xdf0] sm:$0xff]
    %v3162 = vld [vmem:[%s7 + $0xdf8] sm:$0xff]
    %v3163 = vld [vmem:[%s7 + $0xe00] sm:$0xff]
    %v3164 = vld [vmem:[%s7 + $0xe08] sm:$0xff]
    %v3165 = vld [vmem:[%s7 + $0xe10] sm:$0xff]
    %v3166 = vld [vmem:[%s7 + $0xe18] sm:$0xff]
    %v3167 = vld [vmem:[%s7 + $0xe20] sm:$0xff]
    %v3168 = vld [vmem:[%s7 + $0xe28] sm:$0xff]
    %v3169 = vld [vmem:[%s7 + $0xe30] sm:$0xff]
    %v3170 = vld [vmem:[%s7 + $0xe38] sm:$0xff]
    %v3171 = vld [vmem:[%s7 + $0xe40] sm:$0xff]
    %v3172 = vld [vmem:[%s7 + $0xe48] sm:$0xff]
    %v3173 = vld [vmem:[%s7 + $0xe50] sm:$0xff]
    %v3174 = vld [vmem:[%s7 + $0xe58] sm:$0xff]
    %v3175 = vld [vmem:[%s7 + $0xe60] sm:$0xff]
    %v3176 = vld [vmem:[%s7 + $0xe68] sm:$0xff]
    %v3177 = vld [vmem:[%s7 + $0xe70] sm:$0xff]
    %v3178 = vld [vmem:[%s7 + $0xe78] sm:$0xff]
    %v3179 = vld [vmem:[%s7 + $0xe80] sm:$0xff]
    %v3180 = vld [vmem:[%s7 + $0xe88] sm:$0xff]
    %v3181 = vld [vmem:[%s7 + $0xe90] sm:$0xff]
    %v3182 = vld [vmem:[%s7 + $0xe98] sm:$0xff]
    %v3183 = vld [vmem:[%s7 + $0xea0] sm:$0xff]
    %v3184 = vld [vmem:[%s7 + $0xea8] sm:$0xff]
    %v3185 = vld [vmem:[%s7 + $0xeb0] sm:$0xff]
    %v3186 = vld [vmem:[%s7 + $0xeb8] sm:$0xff]
    %v3187 = vld [vmem:[%s7 + $0xec0] sm:$0xff]
    %v3188 = vld [vmem:[%s7 + $0xec8] sm:$0xff]
    %v3189 = vld [vmem:[%s7 + $0xed0] sm:$0xff]
    %v3190 = vld [vmem:[%s7 + $0xed8] sm:$0xff]
    %v3191 = vld [vmem:[%s7 + $0xee0] sm:$0xff]
    %v3192 = vld [vmem:[%s7 + $0xee8] sm:$0xff]
    %v3193 = vld [vmem:[%s7 + $0xef0] sm:$0xff]
    %v3194 = vld [vmem:[%s7 + $0xef8] sm:$0xff]
    %v3195 = vld [vmem:[%s7 + $0xf00] sm:$0xff]
    %v3196 = vld [vmem:[%s7 + $0xf08] sm:$0xff]
    %v3197 = vld [vmem:[%s7 + $0xf10] sm:$0xff]
    %v3198 = vld [vmem:[%s7 + $0xf18] sm:$0xff]
    %v3199 = vld [vmem:[%s7 + $0xf20] sm:$0xff]
    %v3200 = vld [vmem:[%s7 + $0xf28] sm:$0xff]
    %v3201 = vld [vmem:[%s7 + $0xf30] sm:$0xff]
    %v3202 = vld [vmem:[%s7 + $0xf38] sm:$0xff]
    %v3203 = vld [vmem:[%s7 + $0xf40] sm:$0xff]
    %v3204 = vld [vmem:[%s7 + $0xf48] sm:$0xff]
    %v3205 = vld [vmem:[%s7 + $0xf50] sm:$0xff]
    %v3206 = vld [vmem:[%s7 + $0xf58] sm:$0xff]
    %v3207 = vld [vmem:[%s7 + $0xf60] sm:$0xff]
    %v3208 = vld [vmem:[%s7 + $0xf68] sm:$0xff]
    %v3209 = vld [vmem:[%s7 + $0xf70] sm:$0xff]
    %v3210 = vld [vmem:[%s7 + $0xf78] sm:$0xff]
    %v3211 = vld [vmem:[%s7 + $0xf80] sm:$0xff]
    %v3212 = vld [vmem:[%s7 + $0xf88] sm:$0xff]
    %v3213 = vld [vmem:[%s7 + $0xf90] sm:$0xff]
    %v3214 = vld [vmem:[%s7 + $0xf98] sm:$0xff]
    %v3215 = vld [vmem:[%s7 + $0xfa0] sm:$0xff]
    %v3216 = vld [vmem:[%s7 + $0xfa8] sm:$0xff]
    %v3217 = vld [vmem:[%s7 + $0xfb0] sm:$0xff]
    %v3218 = vld [vmem:[%s7 + $0xfb8] sm:$0xff]
    %v3219 = vld [vmem:[%s7 + $0xfc0] sm:$0xff]
    %v3220 = vld [vmem:[%s7 + $0xfc8] sm:$0xff]
    %v3221 = vld [vmem:[%s7 + $0xfd0] sm:$0xff]
    %v3222 = vld [vmem:[%s7 + $0xfd8] sm:$0xff]
    %v3223 = vld [vmem:[%s7 + $0xfe0] sm:$0xff]
    %v3224 = vld [vmem:[%s7 + $0xfe8] sm:$0xff]
    %v3225 = vld [vmem:[%s7 + $0xff0] sm:$0xff]
    %v3226 = vld [vmem:[%s7 + $0xff8] sm:$0xff]
    %v3227 = vld [vmem:[%s7 + $0x1000] sm:$0xff]
    %v3228 = vld [vmem:[%s7 + $0x1008] sm:$0xff]
    %v3229 = vld [vmem:[%s7 + $0x1010] sm:$0xff]
    %v3230 = vld [vmem:[%s7 + $0x1018] sm:$0xff]
    %v3231 = vld [vmem:[%s7 + $0x1020] sm:$0xff]
    %v3232 = vld [vmem:[%s7 + $0x1028] sm:$0xff]
    %v3233 = vld [vmem:[%s7 + $0x1030] sm:$0xff]
    %v3234 = vld [vmem:[%s7 + $0x1038] sm:$0xff]
    %v3235 = vld [vmem:[%s7 + $0x1040] sm:$0xff]
    %v3236 = vld [vmem:[%s7 + $0x1048] sm:$0xff]
    %v3237 = vld [vmem:[%s7 + $0x1050] sm:$0xff]
    %v3238 = vld [vmem:[%s7 + $0x1058] sm:$0xff]
    %v3239 = vld [vmem:[%s7 + $0x1060] sm:$0xff]
    %v3240 = vld [vmem:[%s7 + $0x1068] sm:$0xff]
    %v3241 = vld [vmem:[%s7 + $0x1070] sm:$0xff]
    %v3242 = vld [vmem:[%s7 + $0x1078] sm:$0xff]
    %v3243 = vld [vmem:[%s7 + $0x1080] sm:$0xff]
    %v3244 = vld [vmem:[%s7 + $0x1088] sm:$0xff]
    %v3245 = vld [vmem:[%s7 + $0x1090] sm:$0xff]
    %v3246 = vld [vmem:[%s7 + $0x1098] sm:$0xff]
    %v3247 = vld [vmem:[%s7 + $0x10a0] sm:$0xff]
    %v3248 = vld [vmem:[%s7 + $0x10a8] sm:$0xff]
    %v3249 = vld [vmem:[%s7 + $0x10b0] sm:$0xff]
    %v3250 = vld [vmem:[%s7 + $0x10b8] sm:$0xff]
    %v3251 = vld [vmem:[%s7 + $0x10c0] sm:$0xff]
    %v3252 = vld [vmem:[%s7 + $0x10c8] sm:$0xff]
    %v3253 = vld [vmem:[%s7 + $0x10d0] sm:$0xff]
    %v3254 = vld [vmem:[%s7 + $0x10d8] sm:$0xff]
    %v3255 = vld [vmem:[%s7 + $0x10e0] sm:$0xff]
    %v3256 = vld [vmem:[%s7 + $0x10e8] sm:$0xff]
    %v3257 = vld [vmem:[%s7 + $0x10f0] sm:$0xff]
    %v3258 = vld [vmem:[%s7 + $0x10f8] sm:$0xff]
    %v3259 = vld [vmem:[%s7 + $0x1100] sm:$0xff]
    %v3260 = vld [vmem:[%s7 + $0x1108] sm:$0xff]
    %v3261 = vld [vmem:[%s7 + $0x1110] sm:$0xff]
    %v3262 = vld [vmem:[%s7 + $0x1118] sm:$0xff]
    %v3263 = vld [vmem:[%s7 + $0x1120] sm:$0xff]
    %v3264 = vld [vmem:[%s7 + $0x1128] sm:$0xff]
    %v3265 = vld [vmem:[%s7 + $0x1130] sm:$0xff]
    %v3266 = vld [vmem:[%s7 + $0x1138] sm:$0xff]
    %v3267 = vld [vmem:[%s7 + $0x1140] sm:$0xff]
    %v3268 = vld [vmem:[%s7 + $0x1148] sm:$0xff]
    %v3269 = vld [vmem:[%s7 + $0x1150] sm:$0xff]
    %v3270 = vld [vmem:[%s7 + $0x1158] sm:$0xff]
    %v3271 = vld [vmem:[%s7 + $0x1160] sm:$0xff]
    %v3272 = vld [vmem:[%s7 + $0x1168] sm:$0xff]
    %v3273 = vld [vmem:[%s7 + $0x1170] sm:$0xff]
    %v3274 = vld [vmem:[%s7 + $0x1178] sm:$0xff]
    %v3275 = vld [vmem:[%s7 + $0x1180] sm:$0xff]
    %v3276 = vld [vmem:[%s7 + $0x1188] sm:$0xff]
    %v3277 = vld [vmem:[%s7 + $0x1190] sm:$0xff]
    %v3278 = vld [vmem:[%s7 + $0x1198] sm:$0xff]
    %v3279 = vld [vmem:[%s7 + $0x11a0] sm:$0xff]
    %v3280 = vld [vmem:[%s7 + $0x11a8] sm:$0xff]
    %v3281 = vld [vmem:[%s7 + $0x11b0] sm:$0xff]
    %v3282 = vld [vmem:[%s7 + $0x11b8] sm:$0xff]
    %v3283 = vld [vmem:[%s7 + $0x11c0] sm:$0xff]
    %v3284 = vld [vmem:[%s7 + $0x11c8] sm:$0xff]
    %v3285 = vld [vmem:[%s7 + $0x11d0] sm:$0xff]
    %v3286 = vld [vmem:[%s7 + $0x11d8] sm:$0xff]
    %v3287 = vld [vmem:[%s7 + $0x11e0] sm:$0xff]
    %v3288 = vld [vmem:[%s7 + $0x11e8] sm:$0xff]
    %v3289 = vld [vmem:[%s7 + $0x11f0] sm:$0xff]
    %v3290 = vld [vmem:[%s7 + $0x11f8] sm:$0xff]
    %v3291 = vld [vmem:[%s7 + $0x1200] sm:$0xff]
    %v3292 = vld [vmem:[%s7 + $0x1208] sm:$0xff]
    %v3293 = vld [vmem:[%s7 + $0x1210] sm:$0xff]
    %v3294 = vld [vmem:[%s7 + $0x1218] sm:$0xff]
    %v3295 = vld [vmem:[%s7 + $0x1220] sm:$0xff]
    %v3296 = vld [vmem:[%s7 + $0x1228] sm:$0xff]
    %v3297 = vld [vmem:[%s7 + $0x1230] sm:$0xff]
    %v3298 = vld [vmem:[%s7 + $0x1238] sm:$0xff]
    %v3299 = vld [vmem:[%s7 + $0x1240] sm:$0xff]
    %v3300 = vld [vmem:[%s7 + $0x1248] sm:$0xff]
    %v3301 = vld [vmem:[%s7 + $0x1250] sm:$0xff]
    %v3302 = vld [vmem:[%s7 + $0x1258] sm:$0xff]
    %v3303 = vld [vmem:[%s7 + $0x1260] sm:$0xff]
    %v3304 = vld [vmem:[%s7 + $0x1268] sm:$0xff]
    %v3305 = vld [vmem:[%s7 + $0x1270] sm:$0xff]
    %v3306 = vld [vmem:[%s7 + $0x1278] sm:$0xff]
    %v3307 = vld [vmem:[%s7 + $0x1280] sm:$0xff]
    %v3308 = vld [vmem:[%s7 + $0x1288] sm:$0xff]
    %v3309 = vld [vmem:[%s7 + $0x1290] sm:$0xff]
    %v3310 = vld [vmem:[%s7 + $0x1298] sm:$0xff]
    %v3311 = vld [vmem:[%s7 + $0x12a0] sm:$0xff]
    %v3312 = vld [vmem:[%s7 + $0x12a8] sm:$0xff]
    %v3313 = vld [vmem:[%s7 + $0x12b0] sm:$0xff]
    %v3314 = vld [vmem:[%s7 + $0x12b8] sm:$0xff]
    %v3315 = vld [vmem:[%s7 + $0x12c0] sm:$0xff]
    %v3316 = vld [vmem:[%s7 + $0x12c8] sm:$0xff]
    %v3317 = vld [vmem:[%s7 + $0x12d0] sm:$0xff]
    %v3318 = vld [vmem:[%s7 + $0x12d8] sm:$0xff]
    %v3319 = vld [vmem:[%s7 + $0x12e0] sm:$0xff]
    %v3320 = vld [vmem:[%s7 + $0x12e8] sm:$0xff]
    %v3321 = vld [vmem:[%s7 + $0x12f0] sm:$0xff]
    %v3322 = vld [vmem:[%s7 + $0x12f8] sm:$0xff]
    %v3323 = vld [vmem:[%s7 + $0x1300] sm:$0xff]
    %v3324 = vld [vmem:[%s7 + $0x1308] sm:$0xff]
    %v3325 = vld [vmem:[%s7 + $0x1310] sm:$0xff]
    %v3326 = vld [vmem:[%s7 + $0x1318] sm:$0xff]
    %v3327 = vld [vmem:[%s7 + $0x1320] sm:$0xff]
    %v3328 = vld [vmem:[%s7 + $0x1328] sm:$0xff]
    %v3329 = vld [vmem:[%s7 + $0x1330] sm:$0xff]
    %v3330 = vld [vmem:[%s7 + $0x1338] sm:$0xff]
    %v3331 = vld [vmem:[%s7 + $0x1340] sm:$0xff]
    %v3332 = vld [vmem:[%s7 + $0x1348] sm:$0xff]
    %v3333 = vld [vmem:[%s7 + $0x1350] sm:$0xff]
    %v3334 = vld [vmem:[%s7 + $0x1358] sm:$0xff]
    %v3335 = vld [vmem:[%s7 + $0x1360] sm:$0xff]
    %v3336 = vld [vmem:[%s7 + $0x1368] sm:$0xff]
    %v3337 = vld [vmem:[%s7 + $0x1370] sm:$0xff]
    %v3338 = vld [vmem:[%s7 + $0x1378] sm:$0xff]
    %v3339 = vld [vmem:[%s7 + $0x1380] sm:$0xff]
    %v3340 = vld [vmem:[%s7 + $0x1388] sm:$0xff]
    %v3341 = vld [vmem:[%s7 + $0x1390] sm:$0xff]
    %v3342 = vld [vmem:[%s7 + $0x1398] sm:$0xff]
    %v3343 = vld [vmem:[%s7 + $0x13a0] sm:$0xff]
    %v3344 = vld [vmem:[%s7 + $0x13a8] sm:$0xff]
    %v3345 = vld [vmem:[%s7 + $0x13b0] sm:$0xff]
    %v3346 = vld [vmem:[%s7 + $0x13b8] sm:$0xff]
    %v3347 = vld [vmem:[%s7 + $0x13c0] sm:$0xff]
    %v3348 = vld [vmem:[%s7 + $0x13c8] sm:$0xff]
    %v3349 = vld [vmem:[%s7 + $0x13d0] sm:$0xff]
    %v3350 = vld [vmem:[%s7 + $0x13d8] sm:$0xff]
    %v3351 = vld [vmem:[%s7 + $0x13e0] sm:$0xff]
    %v3352 = vld [vmem:[%s7 + $0x13e8] sm:$0xff]
    %v3353 = vld [vmem:[%s7 + $0x13f0] sm:$0xff]
    %v3354 = vld [vmem:[%s7 + $0x13f8] sm:$0xff]
    %v3355 = vld [vmem:[%s7 + $0x1400] sm:$0xff]
    %v3356 = vld [vmem:[%s7 + $0x1408] sm:$0xff]
    %v3357 = vld [vmem:[%s7 + $0x1410] sm:$0xff]
    %v3358 = vld [vmem:[%s7 + $0x1418] sm:$0xff]
    %v3359 = vld [vmem:[%s7 + $0x1420] sm:$0xff]
    %v3360 = vld [vmem:[%s7 + $0x1428] sm:$0xff]
    %v3361 = vld [vmem:[%s7 + $0x1430] sm:$0xff]
    %v3362 = vld [vmem:[%s7 + $0x1438] sm:$0xff]
    %v3363 = vld [vmem:[%s7 + $0x1440] sm:$0xff]
    %v3364 = vld [vmem:[%s7 + $0x1448] sm:$0xff]
    %v3365 = vld [vmem:[%s7 + $0x1450] sm:$0xff]
    %v3366 = vld [vmem:[%s7 + $0x1458] sm:$0xff]
    %v3367 = vld [vmem:[%s7 + $0x1460] sm:$0xff]
    %v3368 = vld [vmem:[%s7 + $0x1468] sm:$0xff]
    %v3369 = vld [vmem:[%s7 + $0x1470] sm:$0xff]
    %v3370 = vld [vmem:[%s7 + $0x1478] sm:$0xff]
    %v3371 = vld [vmem:[%s7 + $0x1480] sm:$0xff]
    %v3372 = vld [vmem:[%s7 + $0x1488] sm:$0xff]
    %v3373 = vld [vmem:[%s7 + $0x1490] sm:$0xff]
    %v3374 = vld [vmem:[%s7 + $0x1498] sm:$0xff]
    %v3375 = vld [vmem:[%s7 + $0x14a0] sm:$0xff]
    %v3376 = vld [vmem:[%s7 + $0x14a8] sm:$0xff]
    %v3377 = vld [vmem:[%s7 + $0x14b0] sm:$0xff]
    %v3378 = vld [vmem:[%s7 + $0x14b8] sm:$0xff]
    %v3379 = vld [vmem:[%s7 + $0x14c0] sm:$0xff]
    %v3380 = vld [vmem:[%s7 + $0x14c8] sm:$0xff]
    %v3381 = vld [vmem:[%s7 + $0x14d0] sm:$0xff]
    %v3382 = vld [vmem:[%s7 + $0x14d8] sm:$0xff]
    %v3383 = vld [vmem:[%s7 + $0x14e0] sm:$0xff]
    %v3384 = vld [vmem:[%s7 + $0x14e8] sm:$0xff]
    %v3385 = vld [vmem:[%s7 + $0x14f0] sm:$0xff]
    %v3386 = vld [vmem:[%s7 + $0x14f8] sm:$0xff]
    %v3387 = vld [vmem:[%s7 + $0x1500] sm:$0xff]
    %v3388 = vld [vmem:[%s7 + $0x1508] sm:$0xff]
    %v3389 = vld [vmem:[%s7 + $0x1510] sm:$0xff]
    %v3390 = vld [vmem:[%s7 + $0x1518] sm:$0xff]
    %v3391 = vld [vmem:[%s7 + $0x1520] sm:$0xff]
    %v3392 = vld [vmem:[%s7 + $0x1528] sm:$0xff]
    %v3393 = vld [vmem:[%s7 + $0x1530] sm:$0xff]
    %v3394 = vld [vmem:[%s7 + $0x1538] sm:$0xff]
    %v3395 = vld [vmem:[%s7 + $0x1540] sm:$0xff]
    %v3396 = vld [vmem:[%s7 + $0x1548] sm:$0xff]
    %v3397 = vld [vmem:[%s7 + $0x1550] sm:$0xff]
    %v3398 = vld [vmem:[%s7 + $0x1558] sm:$0xff]
    %v3399 = vld [vmem:[%s7 + $0x1560] sm:$0xff]
    %v3400 = vld [vmem:[%s7 + $0x1568] sm:$0xff]
    %v3401 = vld [vmem:[%s7 + $0x1570] sm:$0xff]
    %v3402 = vld [vmem:[%s7 + $0x1578] sm:$0xff]
    %v3403 = vld [vmem:[%s7 + $0x1580] sm:$0xff]
    %v3404 = vld [vmem:[%s7 + $0x1588] sm:$0xff]
    %v3405 = vld [vmem:[%s7 + $0x1590] sm:$0xff]
    %v3406 = vld [vmem:[%s7 + $0x1598] sm:$0xff]
    %v3407 = vld [vmem:[%s7 + $0x15a0] sm:$0xff]
    %v3408 = vld [vmem:[%s7 + $0x15a8] sm:$0xff]
    %v3409 = vld [vmem:[%s7 + $0x15b0] sm:$0xff]
    %v3410 = vld [vmem:[%s7 + $0x15b8] sm:$0xff]
    %v3411 = vld [vmem:[%s7 + $0x15c0] sm:$0xff]
    %v3412 = vld [vmem:[%s7 + $0x15c8] sm:$0xff]
    %v3413 = vld [vmem:[%s7 + $0x15d0] sm:$0xff]
    %v3414 = vld [vmem:[%s7 + $0x15d8] sm:$0xff]
    %v3415 = vld [vmem:[%s7 + $0x15e0] sm:$0xff]
    %v3416 = vld [vmem:[%s7 + $0x15e8] sm:$0xff]
    %v3417 = vld [vmem:[%s7 + $0x15f0] sm:$0xff]
    %v3418 = vld [vmem:[%s7 + $0x15f8] sm:$0xff]
    %v3419 = vld [vmem:[%s7 + $0x1600] sm:$0xff]
    %v3420 = vld [vmem:[%s7 + $0x1608] sm:$0xff]
    %v3421 = vld [vmem:[%s7 + $0x1610] sm:$0xff]
    %v3422 = vld [vmem:[%s7 + $0x1618] sm:$0xff]
    %v3423 = vld [vmem:[%s7 + $0x1620] sm:$0xff]
    %v3424 = vld [vmem:[%s7 + $0x1628] sm:$0xff]
    %v3425 = vld [vmem:[%s7 + $0x1630] sm:$0xff]
    %v3426 = vld [vmem:[%s7 + $0x1638] sm:$0xff]
    %v3427 = vld [vmem:[%s7 + $0x1640] sm:$0xff]
    %v3428 = vld [vmem:[%s7 + $0x1648] sm:$0xff]
    %v3429 = vld [vmem:[%s7 + $0x1650] sm:$0xff]
    %v3430 = vld [vmem:[%s7 + $0x1658] sm:$0xff]
    %v3431 = vld [vmem:[%s7 + $0x1660] sm:$0xff]
    %v3432 = vld [vmem:[%s7 + $0x1668] sm:$0xff]
    %v3433 = vld [vmem:[%s7 + $0x1670] sm:$0xff]
    %v3434 = vld [vmem:[%s7 + $0x1678] sm:$0xff]
    %v3435 = vld [vmem:[%s7 + $0x1680] sm:$0xff]
    %v3436 = vld [vmem:[%s7 + $0x1688] sm:$0xff]
    %v3437 = vld [vmem:[%s7 + $0x1690] sm:$0xff]
    %v3438 = vld [vmem:[%s7 + $0x1698] sm:$0xff]
    %v3439 = vld [vmem:[%s7 + $0x16a0] sm:$0xff]
    %v3440 = vld [vmem:[%s7 + $0x16a8] sm:$0xff]
    %v3441 = vld [vmem:[%s7 + $0x16b0] sm:$0xff]
    %v3442 = vld [vmem:[%s7 + $0x16b8] sm:$0xff]
    %v3443 = vld [vmem:[%s7 + $0x16c0] sm:$0xff]
    %v3444 = vld [vmem:[%s7 + $0x16c8] sm:$0xff]
    %v3445 = vld [vmem:[%s7 + $0x16d0] sm:$0xff]
    %v3446 = vld [vmem:[%s7 + $0x16d8] sm:$0xff]
    %v3447 = vld [vmem:[%s7 + $0x16e0] sm:$0xff]
    %v3448 = vld [vmem:[%s7 + $0x16e8] sm:$0xff]
    %v3449 = vld [vmem:[%s7 + $0x16f0] sm:$0xff]
    %v3450 = vld [vmem:[%s7 + $0x16f8] sm:$0xff]
    %v3451 = vld [vmem:[%s7 + $0x1700] sm:$0xff]
    %v3452 = vld [vmem:[%s7 + $0x1708] sm:$0xff]
    %v3453 = vld [vmem:[%s7 + $0x1710] sm:$0xff]
    %v3454 = vld [vmem:[%s7 + $0x1718] sm:$0xff]
    %v3455 = vld [vmem:[%s7 + $0x1720] sm:$0xff]
    %v3456 = vld [vmem:[%s7 + $0x1728] sm:$0xff]
    %v3457 = vld [vmem:[%s7 + $0x1730] sm:$0xff]
    %v3458 = vld [vmem:[%s7 + $0x1738] sm:$0xff]
    %v3459 = vld [vmem:[%s7 + $0x1740] sm:$0xff]
    %v3460 = vld [vmem:[%s7 + $0x1748] sm:$0xff]
    %v3461 = vld [vmem:[%s7 + $0x1750] sm:$0xff]
    %v3462 = vld [vmem:[%s7 + $0x1758] sm:$0xff]
    %v3463 = vld [vmem:[%s7 + $0x1760] sm:$0xff]
    %v3464 = vld [vmem:[%s7 + $0x1768] sm:$0xff]
    %v3465 = vld [vmem:[%s7 + $0x1770] sm:$0xff]
    %v3466 = vld [vmem:[%s7 + $0x1778] sm:$0xff]
    %v3467 = vld [vmem:[%s7 + $0x1780] sm:$0xff]
    %v3468 = vld [vmem:[%s7 + $0x1788] sm:$0xff]
    %v3469 = vld [vmem:[%s7 + $0x1790] sm:$0xff]
    %v3470 = vld [vmem:[%s7 + $0x1798] sm:$0xff]
    %v3471 = vld [vmem:[%s7 + $0x17a0] sm:$0xff]
    %v3472 = vld [vmem:[%s7 + $0x17a8] sm:$0xff]
    %v3473 = vld [vmem:[%s7 + $0x17b0] sm:$0xff]
    %v3474 = vld [vmem:[%s7 + $0x17b8] sm:$0xff]
    %v3475 = vld [vmem:[%s7 + $0x17c0] sm:$0xff]
    %v3476 = vld [vmem:[%s7 + $0x17c8] sm:$0xff]
    %v3477 = vld [vmem:[%s7 + $0x17d0] sm:$0xff]
    %v3478 = vld [vmem:[%s7 + $0x17d8] sm:$0xff]
    %v3479 = vld [vmem:[%s7 + $0x17e0] sm:$0xff]
    %v3480 = vld [vmem:[%s7 + $0x17e8] sm:$0xff]
    %v3481 = vld [vmem:[%s7 + $0x17f0] sm:$0xff]
    %v3482 = vld [vmem:[%s7 + $0x17f8] sm:$0xff]
    %v3483 = vld [vmem:[%s7 + $0x1800] sm:$0xff]
    %v3484 = vld [vmem:[%s7 + $0x1808] sm:$0xff]
    %v3485 = vld [vmem:[%s7 + $0x1810] sm:$0xff]
    %v3486 = vld [vmem:[%s7 + $0x1818] sm:$0xff]
    %v3487 = vld [vmem:[%s7 + $0x1820] sm:$0xff]
    %v3488 = vld [vmem:[%s7 + $0x1828] sm:$0xff]
    %v3489 = vld [vmem:[%s7 + $0x1830] sm:$0xff]
    %v3490 = vld [vmem:[%s7 + $0x1838] sm:$0xff]
    %v3491 = vld [vmem:[%s7 + $0x1840] sm:$0xff]
    %v3492 = vld [vmem:[%s7 + $0x1848] sm:$0xff]
    %v3493 = vld [vmem:[%s7 + $0x1850] sm:$0xff]
    %v3494 = vld [vmem:[%s7 + $0x1858] sm:$0xff]
    %v3495 = vld [vmem:[%s7 + $0x1860] sm:$0xff]
    %v3496 = vld [vmem:[%s7 + $0x1868] sm:$0xff]
    %v3497 = vld [vmem:[%s7 + $0x1870] sm:$0xff]
    %v3498 = vld [vmem:[%s7 + $0x1878] sm:$0xff]
    %v3499 = vld [vmem:[%s7 + $0x1880] sm:$0xff]
    %v3500 = vld [vmem:[%s7 + $0x1888] sm:$0xff]
    %v3501 = vld [vmem:[%s7 + $0x1890] sm:$0xff]
    %v3502 = vld [vmem:[%s7 + $0x1898] sm:$0xff]
    %v3503 = vld [vmem:[%s7 + $0x18a0] sm:$0xff]
    %v3504 = vld [vmem:[%s7 + $0x18a8] sm:$0xff]
    %v3505 = vld [vmem:[%s7 + $0x18b0] sm:$0xff]
    %v3506 = vld [vmem:[%s7 + $0x18b8] sm:$0xff]
    %v3507 = vld [vmem:[%s7 + $0x18c0] sm:$0xff]
    %v3508 = vld [vmem:[%s7 + $0x18c8] sm:$0xff]
    %v3509 = vld [vmem:[%s7 + $0x18d0] sm:$0xff]
    %v3510 = vld [vmem:[%s7 + $0x18d8] sm:$0xff]
    %v3511 = vld [vmem:[%s7 + $0x18e0] sm:$0xff]
    %v3512 = vld [vmem:[%s7 + $0x18e8] sm:$0xff]
    %v3513 = vld [vmem:[%s7 + $0x18f0] sm:$0xff]
    %v3514 = vld [vmem:[%s7 + $0x18f8] sm:$0xff]
    %v3515 = vld [vmem:[%s7 + $0x1900] sm:$0xff]
    %v3516 = vld [vmem:[%s7 + $0x1908] sm:$0xff]
    %v3517 = vld [vmem:[%s7 + $0x1910] sm:$0xff]
    %v3518 = vld [vmem:[%s7 + $0x1918] sm:$0xff]
    %v3519 = vld [vmem:[%s7 + $0x1920] sm:$0xff]
    %v3520 = vld [vmem:[%s7 + $0x1928] sm:$0xff]
    %v3521 = vld [vmem:[%s7 + $0x1930] sm:$0xff]
    %v3522 = vld [vmem:[%s7 + $0x1938] sm:$0xff]
    %v3523 = vld [vmem:[%s7 + $0x1940] sm:$0xff]
    %v3524 = vld [vmem:[%s7 + $0x1948] sm:$0xff]
    %v3525 = vld [vmem:[%s7 + $0x1950] sm:$0xff]
    %v3526 = vld [vmem:[%s7 + $0x1958] sm:$0xff]
    %v3527 = vld [vmem:[%s7 + $0x1960] sm:$0xff]
    %v3528 = vld [vmem:[%s7 + $0x1968] sm:$0xff]
    %v3529 = vld [vmem:[%s7 + $0x1970] sm:$0xff]
    %v3530 = vld [vmem:[%s7 + $0x1978] sm:$0xff]
    %v3531 = vld [vmem:[%s7 + $0x1980] sm:$0xff]
    %v3532 = vld [vmem:[%s7 + $0x1988] sm:$0xff]
    %v3533 = vld [vmem:[%s7 + $0x1990] sm:$0xff]
    %v3534 = vld [vmem:[%s7 + $0x1998] sm:$0xff]
    %v3535 = vld [vmem:[%s7 + $0x19a0] sm:$0xff]
    %v3536 = vld [vmem:[%s7 + $0x19a8] sm:$0xff]
    %v3537 = vld [vmem:[%s7 + $0x19b0] sm:$0xff]
    %v3538 = vld [vmem:[%s7 + $0x19b8] sm:$0xff]
    %v3539 = vld [vmem:[%s7 + $0x19c0] sm:$0xff]
    %v3540 = vld [vmem:[%s7 + $0x19c8] sm:$0xff]
    %v3541 = vld [vmem:[%s7 + $0x19d0] sm:$0xff]
    %v3542 = vld [vmem:[%s7 + $0x19d8] sm:$0xff]
    %v3543 = vld [vmem:[%s7 + $0x19e0] sm:$0xff]
    %v3544 = vld [vmem:[%s7 + $0x19e8] sm:$0xff]
    %v3545 = vld [vmem:[%s7 + $0x19f0] sm:$0xff]
    %v3546 = vld [vmem:[%s7 + $0x19f8] sm:$0xff]
    %v3547 = vld [vmem:[%s7 + $0x1a00] sm:$0xff]
    %v3548 = vld [vmem:[%s7 + $0x1a08] sm:$0xff]
    %v3549 = vld [vmem:[%s7 + $0x1a10] sm:$0xff]
    %v3550 = vld [vmem:[%s7 + $0x1a18] sm:$0xff]
    %v3551 = vld [vmem:[%s7 + $0x1a20] sm:$0xff]
    %v3552 = vld [vmem:[%s7 + $0x1a28] sm:$0xff]
    %v3553 = vld [vmem:[%s7 + $0x1a30] sm:$0xff]
    %v3554 = vld [vmem:[%s7 + $0x1a38] sm:$0xff]
    %v3555 = vld [vmem:[%s7 + $0x1a40] sm:$0xff]
    %v3556 = vld [vmem:[%s7 + $0x1a48] sm:$0xff]
    %v3557 = vld [vmem:[%s7 + $0x1a50] sm:$0xff]
    %v3558 = vld [vmem:[%s7 + $0x1a58] sm:$0xff]
    %v3559 = vld [vmem:[%s7 + $0x1a60] sm:$0xff]
    %v3560 = vld [vmem:[%s7 + $0x1a68] sm:$0xff]
    %v3561 = vld [vmem:[%s7 + $0x1a70] sm:$0xff]
    %v3562 = vld [vmem:[%s7 + $0x1a78] sm:$0xff]
    %v3563 = vld [vmem:[%s7 + $0x1a80] sm:$0xff]
    %v3564 = vld [vmem:[%s7 + $0x1a88] sm:$0xff]
    %v3565 = vld [vmem:[%s7 + $0x1a90] sm:$0xff]
    %v3566 = vld [vmem:[%s7 + $0x1a98] sm:$0xff]
    %v3567 = vld [vmem:[%s7 + $0x1aa0] sm:$0xff]
    %v3568 = vld [vmem:[%s7 + $0x1aa8] sm:$0xff]
    %v3569 = vld [vmem:[%s7 + $0x1ab0] sm:$0xff]
    %v3570 = vld [vmem:[%s7 + $0x1ab8] sm:$0xff]
    %v3571 = vld [vmem:[%s7 + $0x1ac0] sm:$0xff]
    %v3572 = vld [vmem:[%s7 + $0x1ac8] sm:$0xff]
    %v3573 = vld [vmem:[%s7 + $0x1ad0] sm:$0xff]
    %v3574 = vld [vmem:[%s7 + $0x1ad8] sm:$0xff]
    %v3575 = vld [vmem:[%s7 + $0x1ae0] sm:$0xff]
    %v3576 = vld [vmem:[%s7 + $0x1ae8] sm:$0xff]
    %v3577 = vld [vmem:[%s7 + $0x1af0] sm:$0xff]
    %v3578 = vld [vmem:[%s7 + $0x1af8] sm:$0xff]
    %v3579 = vld [vmem:[%s7 + $0x1b00] sm:$0xff]
    %v3580 = vld [vmem:[%s7 + $0x1b08] sm:$0xff]
    %v3581 = vld [vmem:[%s7 + $0x1b10] sm:$0xff]
    %v3582 = vld [vmem:[%s7 + $0x1b18] sm:$0xff]
    %v3583 = vld [vmem:[%s7 + $0x1b20] sm:$0xff]
    %v3584 = vld [vmem:[%s7 + $0x1b28] sm:$0xff]
    %v3585 = vld [vmem:[%s7 + $0x1b30] sm:$0xff]
    %v3586 = vld [vmem:[%s7 + $0x1b38] sm:$0xff]
    %v3587 = vld [vmem:[%s7 + $0x1b40] sm:$0xff]
    %v3588 = vld [vmem:[%s7 + $0x1b48] sm:$0xff]
    %v3589 = vld [vmem:[%s7 + $0x1b50] sm:$0xff]
    %v3590 = vld [vmem:[%s7 + $0x1b58] sm:$0xff]
    %v3591 = vld [vmem:[%s7 + $0x1b60] sm:$0xff]
    %v3592 = vld [vmem:[%s7 + $0x1b68] sm:$0xff]
    %v3593 = vld [vmem:[%s7 + $0x1b70] sm:$0xff]
    %v3594 = vld [vmem:[%s7 + $0x1b78] sm:$0xff]
    %v3595 = vld [vmem:[%s7 + $0x1b80] sm:$0xff]
    %v3596 = vld [vmem:[%s7 + $0x1b88] sm:$0xff]
    %v3597 = vld [vmem:[%s7 + $0x1b90] sm:$0xff]
    %v3598 = vld [vmem:[%s7 + $0x1b98] sm:$0xff]
    %v3599 = vld [vmem:[%s7 + $0x1ba0] sm:$0xff]
    %v3600 = vld [vmem:[%s7 + $0x1ba8] sm:$0xff]
    %v3601 = vld [vmem:[%s7 + $0x1bb0] sm:$0xff]
    %v3602 = vld [vmem:[%s7 + $0x1bb8] sm:$0xff]
    %v3603 = vld [vmem:[%s7 + $0x1bc0] sm:$0xff]
    %v3604 = vld [vmem:[%s7 + $0x1bc8] sm:$0xff]
    %v3605 = vld [vmem:[%s7 + $0x1bd0] sm:$0xff]
    %v3606 = vld [vmem:[%s7 + $0x1bd8] sm:$0xff]
    %v3607 = vld [vmem:[%s7 + $0x1be0] sm:$0xff]
    %v3608 = vld [vmem:[%s7 + $0x1be8] sm:$0xff]
    %v3609 = vld [vmem:[%s7 + $0x1bf0] sm:$0xff]
    %v3610 = vld [vmem:[%s7 + $0x1bf8] sm:$0xff]
    %v3611 = vld [vmem:[%s7 + $0x1c00] sm:$0xff]
    %v3612 = vld [vmem:[%s7 + $0x1c08] sm:$0xff]
    %v3613 = vld [vmem:[%s7 + $0x1c10] sm:$0xff]
    %v3614 = vld [vmem:[%s7 + $0x1c18] sm:$0xff]
    %v3615 = vld [vmem:[%s7 + $0x1c20] sm:$0xff]
    %v3616 = vld [vmem:[%s7 + $0x1c28] sm:$0xff]
    %v3617 = vld [vmem:[%s7 + $0x1c30] sm:$0xff]
    %v3618 = vld [vmem:[%s7 + $0x1c38] sm:$0xff]
    %v3619 = vld [vmem:[%s7 + $0x1c40] sm:$0xff]
    %v3620 = vld [vmem:[%s7 + $0x1c48] sm:$0xff]
    %v3621 = vld [vmem:[%s7 + $0x1c50] sm:$0xff]
    %v3622 = vld [vmem:[%s7 + $0x1c58] sm:$0xff]
    %v3623 = vld [vmem:[%s7 + $0x1c60] sm:$0xff]
    %v3624 = vld [vmem:[%s7 + $0x1c68] sm:$0xff]
    %v3625 = vld [vmem:[%s7 + $0x1c70] sm:$0xff]
    %v3626 = vld [vmem:[%s7 + $0x1c78] sm:$0xff]
    %v3627 = vld [vmem:[%s7 + $0x1c80] sm:$0xff]
    %v3628 = vld [vmem:[%s7 + $0x1c88] sm:$0xff]
    %v3629 = vld [vmem:[%s7 + $0x1c90] sm:$0xff]
    %v3630 = vld [vmem:[%s7 + $0x1c98] sm:$0xff]
    %v3631 = vld [vmem:[%s7 + $0x1ca0] sm:$0xff]
    %v3632 = vld [vmem:[%s7 + $0x1ca8] sm:$0xff]
    %v3633 = vld [vmem:[%s7 + $0x1cb0] sm:$0xff]
    %v3634 = vld [vmem:[%s7 + $0x1cb8] sm:$0xff]
    %v3635 = vld [vmem:[%s7 + $0x1cc0] sm:$0xff]
    %v3636 = vld [vmem:[%s7 + $0x1cc8] sm:$0xff]
    %v3637 = vld [vmem:[%s7 + $0x1cd0] sm:$0xff]
    %v3638 = vld [vmem:[%s7 + $0x1cd8] sm:$0xff]
    %v3639 = vld [vmem:[%s7 + $0x1ce0] sm:$0xff]
    %v3640 = vld [vmem:[%s7 + $0x1ce8] sm:$0xff]
    %v3641 = vld [vmem:[%s7 + $0x1cf0] sm:$0xff]
    %v3642 = vld [vmem:[%s7 + $0x1cf8] sm:$0xff]
    %v3643 = vld [vmem:[%s7 + $0x1d00] sm:$0xff]
    %v3644 = vld [vmem:[%s7 + $0x1d08] sm:$0xff]
    %v3645 = vld [vmem:[%s7 + $0x1d10] sm:$0xff]
    %v3646 = vld [vmem:[%s7 + $0x1d18] sm:$0xff]
    %v3647 = vld [vmem:[%s7 + $0x1d20] sm:$0xff]
    %v3648 = vld [vmem:[%s7 + $0x1d28] sm:$0xff]
    %v3649 = vld [vmem:[%s7 + $0x1d30] sm:$0xff]
    %v3650 = vld [vmem:[%s7 + $0x1d38] sm:$0xff]
    %v3651 = vld [vmem:[%s7 + $0x1d40] sm:$0xff]
    %v3652 = vld [vmem:[%s7 + $0x1d48] sm:$0xff]
    %v3653 = vld [vmem:[%s7 + $0x1d50] sm:$0xff]
    %v3654 = vld [vmem:[%s7 + $0x1d58] sm:$0xff]
    %v3655 = vld [vmem:[%s7 + $0x1d60] sm:$0xff]
    %v3656 = vld [vmem:[%s7 + $0x1d68] sm:$0xff]
    %v3657 = vld [vmem:[%s7 + $0x1d70] sm:$0xff]
    %v3658 = vld [vmem:[%s7 + $0x1d78] sm:$0xff]
    %v3659 = vld [vmem:[%s7 + $0x1d80] sm:$0xff]
    %v3660 = vld [vmem:[%s7 + $0x1d88] sm:$0xff]
    %v3661 = vld [vmem:[%s7 + $0x1d90] sm:$0xff]
    %v3662 = vld [vmem:[%s7 + $0x1d98] sm:$0xff]
    %v3663 = vld [vmem:[%s7 + $0x1da0] sm:$0xff]
    %v3664 = vld [vmem:[%s7 + $0x1da8] sm:$0xff]
    %v3665 = vld [vmem:[%s7 + $0x1db0] sm:$0xff]
    %v3666 = vld [vmem:[%s7 + $0x1db8] sm:$0xff]
    %v3667 = vld [vmem:[%s7 + $0x1dc0] sm:$0xff]
    %v3668 = vld [vmem:[%s7 + $0x1dc8] sm:$0xff]
    %v3669 = vld [vmem:[%s7 + $0x1dd0] sm:$0xff]
    %v3670 = vld [vmem:[%s7 + $0x1dd8] sm:$0xff]
    %v3671 = vld [vmem:[%s7 + $0x1de0] sm:$0xff]
    %v3672 = vld [vmem:[%s7 + $0x1de8] sm:$0xff]
    %v3673 = vld [vmem:[%s7 + $0x1df0] sm:$0xff]
    %v3674 = vld [vmem:[%s7 + $0x1df8] sm:$0xff]
    %v3675 = vld [vmem:[%s7 + $0x1e00] sm:$0xff]
    %v3676 = vld [vmem:[%s7 + $0x1e08] sm:$0xff]
    %v3677 = vld [vmem:[%s7 + $0x1e10] sm:$0xff]
    %v3678 = vld [vmem:[%s7 + $0x1e18] sm:$0xff]
    %v3679 = vld [vmem:[%s7 + $0x1e20] sm:$0xff]
    %v3680 = vld [vmem:[%s7 + $0x1e28] sm:$0xff]
    %v3681 = vld [vmem:[%s7 + $0x1e30] sm:$0xff]
    %v3682 = vld [vmem:[%s7 + $0x1e38] sm:$0xff]
    %v3683 = vld [vmem:[%s7 + $0x1e40] sm:$0xff]
    %v3684 = vld [vmem:[%s7 + $0x1e48] sm:$0xff]
    %v3685 = vld [vmem:[%s7 + $0x1e50] sm:$0xff]
    %v3686 = vld [vmem:[%s7 + $0x1e58] sm:$0xff]
    %v3687 = vld [vmem:[%s7 + $0x1e60] sm:$0xff]
    %v3688 = vld [vmem:[%s7 + $0x1e68] sm:$0xff]
    %v3689 = vld [vmem:[%s7 + $0x1e70] sm:$0xff]
    %v3690 = vld [vmem:[%s7 + $0x1e78] sm:$0xff]
    %v3691 = vld [vmem:[%s7 + $0x1e80] sm:$0xff]
    %v3692 = vld [vmem:[%s7 + $0x1e88] sm:$0xff]
    %v3693 = vld [vmem:[%s7 + $0x1e90] sm:$0xff]
    %v3694 = vld [vmem:[%s7 + $0x1e98] sm:$0xff]
    %v3695 = vld [vmem:[%s7 + $0x1ea0] sm:$0xff]
    %v3696 = vld [vmem:[%s7 + $0x1ea8] sm:$0xff]
    %v3697 = vld [vmem:[%s7 + $0x1eb0] sm:$0xff]
    %v3698 = vld [vmem:[%s7 + $0x1eb8] sm:$0xff]
    %v3699 = vld [vmem:[%s7 + $0x1ec0] sm:$0xff]
    %v3700 = vld [vmem:[%s7 + $0x1ec8] sm:$0xff]
    %v3701 = vld [vmem:[%s7 + $0x1ed0] sm:$0xff]
    %v3702 = vld [vmem:[%s7 + $0x1ed8] sm:$0xff]
    %v3703 = vld [vmem:[%s7 + $0x1ee0] sm:$0xff]
    %v3704 = vld [vmem:[%s7 + $0x1ee8] sm:$0xff]
    %v3705 = vld [vmem:[%s7 + $0x1ef0] sm:$0xff]
    %v3706 = vld [vmem:[%s7 + $0x1ef8] sm:$0xff]
    %v3707 = vld [vmem:[%s7 + $0x1f00] sm:$0xff]
    %v3708 = vld [vmem:[%s7 + $0x1f08] sm:$0xff]
    %v3709 = vld [vmem:[%s7 + $0x1f10] sm:$0xff]
    %v3710 = vld [vmem:[%s7 + $0x1f18] sm:$0xff]
    %v3711 = vld [vmem:[%s7 + $0x1f20] sm:$0xff]
    %v3712 = vld [vmem:[%s7 + $0x1f28] sm:$0xff]
    %v3713 = vld [vmem:[%s7 + $0x1f30] sm:$0xff]
    %v3714 = vld [vmem:[%s7 + $0x1f38] sm:$0xff]
    %v3715 = vld [vmem:[%s7 + $0x1f40] sm:$0xff]
    %v3716 = vld [vmem:[%s7 + $0x1f48] sm:$0xff]
    %v3717 = vld [vmem:[%s7 + $0x1f50] sm:$0xff]
    %v3718 = vld [vmem:[%s7 + $0x1f58] sm:$0xff]
    %v3719 = vld [vmem:[%s7 + $0x1f60] sm:$0xff]
    %v3720 = vld [vmem:[%s7 + $0x1f68] sm:$0xff]
    %v3721 = vld [vmem:[%s7 + $0x1f70] sm:$0xff]
    %v3722 = vld [vmem:[%s7 + $0x1f78] sm:$0xff]
    %v3723 = vld [vmem:[%s7 + $0x1f80] sm:$0xff]
    %v3724 = vld [vmem:[%s7 + $0x1f88] sm:$0xff]
    %v3725 = vld [vmem:[%s7 + $0x1f90] sm:$0xff]
    %v3726 = vld [vmem:[%s7 + $0x1f98] sm:$0xff]
    %v3727 = vld [vmem:[%s7 + $0x1fa0] sm:$0xff]
    %v3728 = vld [vmem:[%s7 + $0x1fa8] sm:$0xff]
    %v3729 = vld [vmem:[%s7 + $0x1fb0] sm:$0xff]
    %v3730 = vld [vmem:[%s7 + $0x1fb8] sm:$0xff]
    %v3731 = vld [vmem:[%s7 + $0x1fc0] sm:$0xff]
    %v3732 = vld [vmem:[%s7 + $0x1fc8] sm:$0xff]
    %v3733 = vld [vmem:[%s7 + $0x1fd0] sm:$0xff]
    %v3734 = vld [vmem:[%s7 + $0x1fd8] sm:$0xff]
    %v3735 = vld [vmem:[%s7 + $0x1fe0] sm:$0xff]
    %v3736 = vld [vmem:[%s7 + $0x1fe8] sm:$0xff]
    %v3737 = vld [vmem:[%s7 + $0x1ff0] sm:$0xff]
    %v3738 = vld [vmem:[%s7 + $0x1ff8] sm:$0xff]
    %v3739 = vld [vmem:[%s8] sm:$0xff]
    %v3741 = vperm.slane %v3739, 0
    %v3742 = vperm.slane %v3739, 1
    %v3743 = vperm.slane %v3739, 2
    %v3744 = vperm.slane %v3739, 3
    %v3745 = vperm.slane %v3739, 4
    %v3746 = vperm.slane %v3739, 5
    %v3747 = vperm.slane %v3739, 6
    %v3748 = vperm.slane %v3739, 7
    %3757 = vmatpush.msra.mxu0 %v2835
    %3758 = vmatpush.msra.mxu0 %v2827
    %3759 = vmatpush.msra.mxu0 %v2819
    %3760 = vmatpush.msra.mxu0 %v2811
    %3761 = vmatpush.msra.mxu0 %v2803
    %3762 = vmatpush.msra.mxu0 %v2795
    %3763 = vmatpush.msra.mxu0 %v2787
    %3764 = vmatpush.msra.mxu0 %v2779
    %3765 = vmatpush.msra.mxu0 %v2771
    %3766 = vmatpush.msra.mxu0 %v2763
    %3767 = vmatpush.msra.mxu0 %v2755
    %3768 = vmatpush.msra.mxu0 %v2747
    %3769 = vmatpush.msra.mxu0 %v2739
    %3770 = vmatpush.msra.mxu0 %v2731
    %3771 = vmatpush.msra.mxu0 %v2723
    %3772 = vmatpush.msra.mxu0 %v2715
    %3773 = vmatmul.f32.gmra.mxu0 %v2707
    %v3774 = vpop.f32.mrf.mxu0
    %v3775 = vadd.f32 %v3741, %v3774
    %3776 = vdwg.mxu0
    %3777 = vmatpush.msra.mxu0 %v2963
    %3778 = vmatpush.msra.mxu0 %v2955
    %3779 = vmatpush.msra.mxu0 %v2947
    %3780 = vmatpush.msra.mxu0 %v2939
    %3781 = vmatpush.msra.mxu0 %v2931
    %3782 = vmatpush.msra.mxu0 %v2923
    %3783 = vmatpush.msra.mxu0 %v2915
    %3784 = vmatpush.msra.mxu0 %v2907
    %3785 = vmatpush.msra.mxu0 %v2899
    %3786 = vmatpush.msra.mxu0 %v2891
    %3787 = vmatpush.msra.mxu0 %v2883
    %3788 = vmatpush.msra.mxu0 %v2875
    %3789 = vmatpush.msra.mxu0 %v2867
    %3790 = vmatpush.msra.mxu0 %v2859
    %3791 = vmatpush.msra.mxu0 %v2851
    %3792 = vmatpush.msra.mxu0 %v2843
    %3793 = vmatmul.f32.gmra.mxu0 %v2708
    %v3794 = vpop.f32.mrf.mxu0
    %v3795 = vadd.f32 %v3775, %v3794
    %3796 = vdwg.mxu0
    %3797 = vmatpush.msra.mxu0 %v3091
    %3798 = vmatpush.msra.mxu0 %v3083
    %3799 = vmatpush.msra.mxu0 %v3075
    %3800 = vmatpush.msra.mxu0 %v3067
    %3801 = vmatpush.msra.mxu0 %v3059
    %3802 = vmatpush.msra.mxu0 %v3051
    %3803 = vmatpush.msra.mxu0 %v3043
    %3804 = vmatpush.msra.mxu0 %v3035
    %3805 = vmatpush.msra.mxu0 %v3027
    %3806 = vmatpush.msra.mxu0 %v3019
    %3807 = vmatpush.msra.mxu0 %v3011
    %3808 = vmatpush.msra.mxu0 %v3003
    %3809 = vmatpush.msra.mxu0 %v2995
    %3810 = vmatpush.msra.mxu0 %v2987
    %3811 = vmatpush.msra.mxu0 %v2979
    %3812 = vmatpush.msra.mxu0 %v2971
    %3813 = vmatmul.f32.gmra.mxu0 %v2709
    %v3814 = vpop.f32.mrf.mxu0
    %v3815 = vadd.f32 %v3795, %v3814
    %3816 = vdwg.mxu0
    %3817 = vmatpush.msra.mxu0 %v3219
    %3818 = vmatpush.msra.mxu0 %v3211
    %3819 = vmatpush.msra.mxu0 %v3203
    %3820 = vmatpush.msra.mxu0 %v3195
    %3821 = vmatpush.msra.mxu0 %v3187
    %3822 = vmatpush.msra.mxu0 %v3179
    %3823 = vmatpush.msra.mxu0 %v3171
    %3824 = vmatpush.msra.mxu0 %v3163
    %3825 = vmatpush.msra.mxu0 %v3155
    %3826 = vmatpush.msra.mxu0 %v3147
    %3827 = vmatpush.msra.mxu0 %v3139
    %3828 = vmatpush.msra.mxu0 %v3131
    %3829 = vmatpush.msra.mxu0 %v3123
    %3830 = vmatpush.msra.mxu0 %v3115
    %3831 = vmatpush.msra.mxu0 %v3107
    %3832 = vmatpush.msra.mxu0 %v3099
    %3833 = vmatmul.f32.gmra.mxu0 %v2710
    %v3834 = vpop.f32.mrf.mxu0
    %v3835 = vadd.f32 %v3815, %v3834
    %3836 = vdwg.mxu0
    %3837 = vmatpush.msra.mxu0 %v3347
    %3838 = vmatpush.msra.mxu0 %v3339
    %3839 = vmatpush.msra.mxu0 %v3331
    %3840 = vmatpush.msra.mxu0 %v3323
    %3841 = vmatpush.msra.mxu0 %v3315
    %3842 = vmatpush.msra.mxu0 %v3307
    %3843 = vmatpush.msra.mxu0 %v3299
    %3844 = vmatpush.msra.mxu0 %v3291
    %3845 = vmatpush.msra.mxu0 %v3283
    %3846 = vmatpush.msra.mxu0 %v3275
    %3847 = vmatpush.msra.mxu0 %v3267
    %3848 = vmatpush.msra.mxu0 %v3259
    %3849 = vmatpush.msra.mxu0 %v3251
    %3850 = vmatpush.msra.mxu0 %v3243
    %3851 = vmatpush.msra.mxu0 %v3235
    %3852 = vmatpush.msra.mxu0 %v3227
    %3853 = vmatmul.f32.gmra.mxu0 %v2711
    %v3854 = vpop.f32.mrf.mxu0
    %v3855 = vadd.f32 %v3835, %v3854
    %3856 = vdwg.mxu0
    %3857 = vmatpush.msra.mxu0 %v3475
    %3858 = vmatpush.msra.mxu0 %v3467
    %3859 = vmatpush.msra.mxu0 %v3459
    %3860 = vmatpush.msra.mxu0 %v3451
    %3861 = vmatpush.msra.mxu0 %v3443
    %3862 = vmatpush.msra.mxu0 %v3435
    %3863 = vmatpush.msra.mxu0 %v3427
    %3864 = vmatpush.msra.mxu0 %v3419
    %3865 = vmatpush.msra.mxu0 %v3411
    %3866 = vmatpush.msra.mxu0 %v3403
    %3867 = vmatpush.msra.mxu0 %v3395
    %3868 = vmatpush.msra.mxu0 %v3387
    %3869 = vmatpush.msra.mxu0 %v3379
    %3870 = vmatpush.msra.mxu0 %v3371
    %3871 = vmatpush.msra.mxu0 %v3363
    %3872 = vmatpush.msra.mxu0 %v3355
    %3873 = vmatmul.f32.gmra.mxu0 %v2712
    %v3874 = vpop.f32.mrf.mxu0
    %v3875 = vadd.f32 %v3855, %v3874
    %3876 = vdwg.mxu0
    %3877 = vmatpush.msra.mxu0 %v3603
    %3878 = vmatpush.msra.mxu0 %v3595
    %3879 = vmatpush.msra.mxu0 %v3587
    %3880 = vmatpush.msra.mxu0 %v3579
    %3881 = vmatpush.msra.mxu0 %v3571
    %3882 = vmatpush.msra.mxu0 %v3563
    %3883 = vmatpush.msra.mxu0 %v3555
    %3884 = vmatpush.msra.mxu0 %v3547
    %3885 = vmatpush.msra.mxu0 %v3539
    %3886 = vmatpush.msra.mxu0 %v3531
    %3887 = vmatpush.msra.mxu0 %v3523
    %3888 = vmatpush.msra.mxu0 %v3515
    %3889 = vmatpush.msra.mxu0 %v3507
    %3890 = vmatpush.msra.mxu0 %v3499
    %3891 = vmatpush.msra.mxu0 %v3491
    %3892 = vmatpush.msra.mxu0 %v3483
    %3893 = vmatmul.f32.gmra.mxu0 %v2713
    %v3894 = vpop.f32.mrf.mxu0
    %v3895 = vadd.f32 %v3875, %v3894
    %3896 = vdwg.mxu0
    %3897 = vmatpush.msra.mxu0 %v3731
    %3898 = vmatpush.msra.mxu0 %v3723
    %3899 = vmatpush.msra.mxu0 %v3715
    %3900 = vmatpush.msra.mxu0 %v3707
    %3901 = vmatpush.msra.mxu0 %v3699
    %3902 = vmatpush.msra.mxu0 %v3691
    %3903 = vmatpush.msra.mxu0 %v3683
    %3904 = vmatpush.msra.mxu0 %v3675
    %3905 = vmatpush.msra.mxu0 %v3667
    %3906 = vmatpush.msra.mxu0 %v3659
    %3907 = vmatpush.msra.mxu0 %v3651
    %3908 = vmatpush.msra.mxu0 %v3643
    %3909 = vmatpush.msra.mxu0 %v3635
    %3910 = vmatpush.msra.mxu0 %v3627
    %3911 = vmatpush.msra.mxu0 %v3619
    %3912 = vmatpush.msra.mxu0 %v3611
    %3913 = vmatmul.f32.gmra.mxu0 %v2714
    %v3914 = vpop.f32.mrf.mxu0
    %v3915 = vadd.f32 %v3895, %v3914
    %3916 = vdwg.mxu0
    %3917 = vmatpush.msra.mxu0 %v2836
    %3918 = vmatpush.msra.mxu0 %v2828
    %3919 = vmatpush.msra.mxu0 %v2820
    %3920 = vmatpush.msra.mxu0 %v2812
    %3921 = vmatpush.msra.mxu0 %v2804
    %3922 = vmatpush.msra.mxu0 %v2796
    %3923 = vmatpush.msra.mxu0 %v2788
    %3924 = vmatpush.msra.mxu0 %v2780
    %3925 = vmatpush.msra.mxu0 %v2772
    %3926 = vmatpush.msra.mxu0 %v2764
    %3927 = vmatpush.msra.mxu0 %v2756
    %3928 = vmatpush.msra.mxu0 %v2748
    %3929 = vmatpush.msra.mxu0 %v2740
    %3930 = vmatpush.msra.mxu0 %v2732
    %3931 = vmatpush.msra.mxu0 %v2724
    %3932 = vmatpush.msra.mxu0 %v2716
    %3933 = vmatmul.f32.gmra.mxu0 %v2707
    %v3934 = vpop.f32.mrf.mxu0
    %v3935 = vadd.f32 %v3742, %v3934
    %3936 = vdwg.mxu0
    %3937 = vmatpush.msra.mxu0 %v2964
    %3938 = vmatpush.msra.mxu0 %v2956
    %3939 = vmatpush.msra.mxu0 %v2948
    %3940 = vmatpush.msra.mxu0 %v2940
    %3941 = vmatpush.msra.mxu0 %v2932
    %3942 = vmatpush.msra.mxu0 %v2924
    %3943 = vmatpush.msra.mxu0 %v2916
    %3944 = vmatpush.msra.mxu0 %v2908
    %3945 = vmatpush.msra.mxu0 %v2900
    %3946 = vmatpush.msra.mxu0 %v2892
    %3947 = vmatpush.msra.mxu0 %v2884
    %3948 = vmatpush.msra.mxu0 %v2876
    %3949 = vmatpush.msra.mxu0 %v2868
    %3950 = vmatpush.msra.mxu0 %v2860
    %3951 = vmatpush.msra.mxu0 %v2852
    %3952 = vmatpush.msra.mxu0 %v2844
    %3953 = vmatmul.f32.gmra.mxu0 %v2708
    %v3954 = vpop.f32.mrf.mxu0
    %v3955 = vadd.f32 %v3935, %v3954
    %3956 = vdwg.mxu0
    %3957 = vmatpush.msra.mxu0 %v3092
    %3958 = vmatpush.msra.mxu0 %v3084
    %3959 = vmatpush.msra.mxu0 %v3076
    %3960 = vmatpush.msra.mxu0 %v3068
    %3961 = vmatpush.msra.mxu0 %v3060
    %3962 = vmatpush.msra.mxu0 %v3052
    %3963 = vmatpush.msra.mxu0 %v3044
    %3964 = vmatpush.msra.mxu0 %v3036
    %3965 = vmatpush.msra.mxu0 %v3028
    %3966 = vmatpush.msra.mxu0 %v3020
    %3967 = vmatpush.msra.mxu0 %v3012
    %3968 = vmatpush.msra.mxu0 %v3004
    %3969 = vmatpush.msra.mxu0 %v2996
    %3970 = vmatpush.msra.mxu0 %v2988
    %3971 = vmatpush.msra.mxu0 %v2980
    %3972 = vmatpush.msra.mxu0 %v2972
    %3973 = vmatmul.f32.gmra.mxu0 %v2709
    %v3974 = vpop.f32.mrf.mxu0
    %v3975 = vadd.f32 %v3955, %v3974
    %3976 = vdwg.mxu0
    %3977 = vmatpush.msra.mxu0 %v3220
    %3978 = vmatpush.msra.mxu0 %v3212
    %3979 = vmatpush.msra.mxu0 %v3204
    %3980 = vmatpush.msra.mxu0 %v3196
    %3981 = vmatpush.msra.mxu0 %v3188
    %3982 = vmatpush.msra.mxu0 %v3180
    %3983 = vmatpush.msra.mxu0 %v3172
    %3984 = vmatpush.msra.mxu0 %v3164
    %3985 = vmatpush.msra.mxu0 %v3156
    %3986 = vmatpush.msra.mxu0 %v3148
    %3987 = vmatpush.msra.mxu0 %v3140
    %3988 = vmatpush.msra.mxu0 %v3132
    %3989 = vmatpush.msra.mxu0 %v3124
    %3990 = vmatpush.msra.mxu0 %v3116
    %3991 = vmatpush.msra.mxu0 %v3108
    %3992 = vmatpush.msra.mxu0 %v3100
    %3993 = vmatmul.f32.gmra.mxu0 %v2710
    %v3994 = vpop.f32.mrf.mxu0
    %v3995 = vadd.f32 %v3975, %v3994
    %3996 = vdwg.mxu0
    %3997 = vmatpush.msra.mxu0 %v3348
    %3998 = vmatpush.msra.mxu0 %v3340
    %3999 = vmatpush.msra.mxu0 %v3332
    %4000 = vmatpush.msra.mxu0 %v3324
    %4001 = vmatpush.msra.mxu0 %v3316
    %4002 = vmatpush.msra.mxu0 %v3308
    %4003 = vmatpush.msra.mxu0 %v3300
    %4004 = vmatpush.msra.mxu0 %v3292
    %4005 = vmatpush.msra.mxu0 %v3284
    %4006 = vmatpush.msra.mxu0 %v3276
    %4007 = vmatpush.msra.mxu0 %v3268
    %4008 = vmatpush.msra.mxu0 %v3260
    %4009 = vmatpush.msra.mxu0 %v3252
    %4010 = vmatpush.msra.mxu0 %v3244
    %4011 = vmatpush.msra.mxu0 %v3236
    %4012 = vmatpush.msra.mxu0 %v3228
    %4013 = vmatmul.f32.gmra.mxu0 %v2711
    %v4014 = vpop.f32.mrf.mxu0
    %v4015 = vadd.f32 %v3995, %v4014
    %4016 = vdwg.mxu0
    %4017 = vmatpush.msra.mxu0 %v3476
    %4018 = vmatpush.msra.mxu0 %v3468
    %4019 = vmatpush.msra.mxu0 %v3460
    %4020 = vmatpush.msra.mxu0 %v3452
    %4021 = vmatpush.msra.mxu0 %v3444
    %4022 = vmatpush.msra.mxu0 %v3436
    %4023 = vmatpush.msra.mxu0 %v3428
    %4024 = vmatpush.msra.mxu0 %v3420
    %4025 = vmatpush.msra.mxu0 %v3412
    %4026 = vmatpush.msra.mxu0 %v3404
    %4027 = vmatpush.msra.mxu0 %v3396
    %4028 = vmatpush.msra.mxu0 %v3388
    %4029 = vmatpush.msra.mxu0 %v3380
    %4030 = vmatpush.msra.mxu0 %v3372
    %4031 = vmatpush.msra.mxu0 %v3364
    %4032 = vmatpush.msra.mxu0 %v3356
    %4033 = vmatmul.f32.gmra.mxu0 %v2712
    %v4034 = vpop.f32.mrf.mxu0
    %v4035 = vadd.f32 %v4015, %v4034
    %4036 = vdwg.mxu0
    %4037 = vmatpush.msra.mxu0 %v3604
    %4038 = vmatpush.msra.mxu0 %v3596
    %4039 = vmatpush.msra.mxu0 %v3588
    %4040 = vmatpush.msra.mxu0 %v3580
    %4041 = vmatpush.msra.mxu0 %v3572
    %4042 = vmatpush.msra.mxu0 %v3564
    %4043 = vmatpush.msra.mxu0 %v3556
    %4044 = vmatpush.msra.mxu0 %v3548
    %4045 = vmatpush.msra.mxu0 %v3540
    %4046 = vmatpush.msra.mxu0 %v3532
    %4047 = vmatpush.msra.mxu0 %v3524
    %4048 = vmatpush.msra.mxu0 %v3516
    %4049 = vmatpush.msra.mxu0 %v3508
    %4050 = vmatpush.msra.mxu0 %v3500
    %4051 = vmatpush.msra.mxu0 %v3492
    %4052 = vmatpush.msra.mxu0 %v3484
    %4053 = vmatmul.f32.gmra.mxu0 %v2713
    %v4054 = vpop.f32.mrf.mxu0
    %v4055 = vadd.f32 %v4035, %v4054
    %4056 = vdwg.mxu0
    %4057 = vmatpush.msra.mxu0 %v3732
    %4058 = vmatpush.msra.mxu0 %v3724
    %4059 = vmatpush.msra.mxu0 %v3716
    %4060 = vmatpush.msra.mxu0 %v3708
    %4061 = vmatpush.msra.mxu0 %v3700
    %4062 = vmatpush.msra.mxu0 %v3692
    %4063 = vmatpush.msra.mxu0 %v3684
    %4064 = vmatpush.msra.mxu0 %v3676
    %4065 = vmatpush.msra.mxu0 %v3668
    %4066 = vmatpush.msra.mxu0 %v3660
    %4067 = vmatpush.msra.mxu0 %v3652
    %4068 = vmatpush.msra.mxu0 %v3644
    %4069 = vmatpush.msra.mxu0 %v3636
    %4070 = vmatpush.msra.mxu0 %v3628
    %4071 = vmatpush.msra.mxu0 %v3620
    %4072 = vmatpush.msra.mxu0 %v3612
    %4073 = vmatmul.f32.gmra.mxu0 %v2714
    %v4074 = vpop.f32.mrf.mxu0
    %v4075 = vadd.f32 %v4055, %v4074
    %4076 = vdwg.mxu0
    %4077 = vmatpush.msra.mxu0 %v2837
    %4078 = vmatpush.msra.mxu0 %v2829
    %4079 = vmatpush.msra.mxu0 %v2821
    %4080 = vmatpush.msra.mxu0 %v2813
    %4081 = vmatpush.msra.mxu0 %v2805
    %4082 = vmatpush.msra.mxu0 %v2797
    %4083 = vmatpush.msra.mxu0 %v2789
    %4084 = vmatpush.msra.mxu0 %v2781
    %4085 = vmatpush.msra.mxu0 %v2773
    %4086 = vmatpush.msra.mxu0 %v2765
    %4087 = vmatpush.msra.mxu0 %v2757
    %4088 = vmatpush.msra.mxu0 %v2749
    %4089 = vmatpush.msra.mxu0 %v2741
    %4090 = vmatpush.msra.mxu0 %v2733
    %4091 = vmatpush.msra.mxu0 %v2725
    %4092 = vmatpush.msra.mxu0 %v2717
    %4093 = vmatmul.f32.gmra.mxu0 %v2707
    %v4094 = vpop.f32.mrf.mxu0
    %v4095 = vadd.f32 %v3743, %v4094
    %4096 = vdwg.mxu0
    %4097 = vmatpush.msra.mxu0 %v2965
    %4098 = vmatpush.msra.mxu0 %v2957
    %4099 = vmatpush.msra.mxu0 %v2949
    %4100 = vmatpush.msra.mxu0 %v2941
    %4101 = vmatpush.msra.mxu0 %v2933
    %4102 = vmatpush.msra.mxu0 %v2925
    %4103 = vmatpush.msra.mxu0 %v2917
    %4104 = vmatpush.msra.mxu0 %v2909
    %4105 = vmatpush.msra.mxu0 %v2901
    %4106 = vmatpush.msra.mxu0 %v2893
    %4107 = vmatpush.msra.mxu0 %v2885
    %4108 = vmatpush.msra.mxu0 %v2877
    %4109 = vmatpush.msra.mxu0 %v2869
    %4110 = vmatpush.msra.mxu0 %v2861
    %4111 = vmatpush.msra.mxu0 %v2853
    %4112 = vmatpush.msra.mxu0 %v2845
    %4113 = vmatmul.f32.gmra.mxu0 %v2708
    %v4114 = vpop.f32.mrf.mxu0
    %v4115 = vadd.f32 %v4095, %v4114
    %4116 = vdwg.mxu0
    %4117 = vmatpush.msra.mxu0 %v3093
    %4118 = vmatpush.msra.mxu0 %v3085
    %4119 = vmatpush.msra.mxu0 %v3077
    %4120 = vmatpush.msra.mxu0 %v3069
    %4121 = vmatpush.msra.mxu0 %v3061
    %4122 = vmatpush.msra.mxu0 %v3053
    %4123 = vmatpush.msra.mxu0 %v3045
    %4124 = vmatpush.msra.mxu0 %v3037
    %4125 = vmatpush.msra.mxu0 %v3029
    %4126 = vmatpush.msra.mxu0 %v3021
    %4127 = vmatpush.msra.mxu0 %v3013
    %4128 = vmatpush.msra.mxu0 %v3005
    %4129 = vmatpush.msra.mxu0 %v2997
    %4130 = vmatpush.msra.mxu0 %v2989
    %4131 = vmatpush.msra.mxu0 %v2981
    %4132 = vmatpush.msra.mxu0 %v2973
    %4133 = vmatmul.f32.gmra.mxu0 %v2709
    %v4134 = vpop.f32.mrf.mxu0
    %v4135 = vadd.f32 %v4115, %v4134
    %4136 = vdwg.mxu0
    %4137 = vmatpush.msra.mxu0 %v3221
    %4138 = vmatpush.msra.mxu0 %v3213
    %4139 = vmatpush.msra.mxu0 %v3205
    %4140 = vmatpush.msra.mxu0 %v3197
    %4141 = vmatpush.msra.mxu0 %v3189
    %4142 = vmatpush.msra.mxu0 %v3181
    %4143 = vmatpush.msra.mxu0 %v3173
    %4144 = vmatpush.msra.mxu0 %v3165
    %4145 = vmatpush.msra.mxu0 %v3157
    %4146 = vmatpush.msra.mxu0 %v3149
    %4147 = vmatpush.msra.mxu0 %v3141
    %4148 = vmatpush.msra.mxu0 %v3133
    %4149 = vmatpush.msra.mxu0 %v3125
    %4150 = vmatpush.msra.mxu0 %v3117
    %4151 = vmatpush.msra.mxu0 %v3109
    %4152 = vmatpush.msra.mxu0 %v3101
    %4153 = vmatmul.f32.gmra.mxu0 %v2710
    %v4154 = vpop.f32.mrf.mxu0
    %v4155 = vadd.f32 %v4135, %v4154
    %4156 = vdwg.mxu0
    %4157 = vmatpush.msra.mxu0 %v3349
    %4158 = vmatpush.msra.mxu0 %v3341
    %4159 = vmatpush.msra.mxu0 %v3333
    %4160 = vmatpush.msra.mxu0 %v3325
    %4161 = vmatpush.msra.mxu0 %v3317
    %4162 = vmatpush.msra.mxu0 %v3309
    %4163 = vmatpush.msra.mxu0 %v3301
    %4164 = vmatpush.msra.mxu0 %v3293
    %4165 = vmatpush.msra.mxu0 %v3285
    %4166 = vmatpush.msra.mxu0 %v3277
    %4167 = vmatpush.msra.mxu0 %v3269
    %4168 = vmatpush.msra.mxu0 %v3261
    %4169 = vmatpush.msra.mxu0 %v3253
    %4170 = vmatpush.msra.mxu0 %v3245
    %4171 = vmatpush.msra.mxu0 %v3237
    %4172 = vmatpush.msra.mxu0 %v3229
    %4173 = vmatmul.f32.gmra.mxu0 %v2711
    %v4174 = vpop.f32.mrf.mxu0
    %v4175 = vadd.f32 %v4155, %v4174
    %4176 = vdwg.mxu0
    %4177 = vmatpush.msra.mxu0 %v3477
    %4178 = vmatpush.msra.mxu0 %v3469
    %4179 = vmatpush.msra.mxu0 %v3461
    %4180 = vmatpush.msra.mxu0 %v3453
    %4181 = vmatpush.msra.mxu0 %v3445
    %4182 = vmatpush.msra.mxu0 %v3437
    %4183 = vmatpush.msra.mxu0 %v3429
    %4184 = vmatpush.msra.mxu0 %v3421
    %4185 = vmatpush.msra.mxu0 %v3413
    %4186 = vmatpush.msra.mxu0 %v3405
    %4187 = vmatpush.msra.mxu0 %v3397
    %4188 = vmatpush.msra.mxu0 %v3389
    %4189 = vmatpush.msra.mxu0 %v3381
    %4190 = vmatpush.msra.mxu0 %v3373
    %4191 = vmatpush.msra.mxu0 %v3365
    %4192 = vmatpush.msra.mxu0 %v3357
    %4193 = vmatmul.f32.gmra.mxu0 %v2712
    %v4194 = vpop.f32.mrf.mxu0
    %v4195 = vadd.f32 %v4175, %v4194
    %4196 = vdwg.mxu0
    %4197 = vmatpush.msra.mxu0 %v3605
    %4198 = vmatpush.msra.mxu0 %v3597
    %4199 = vmatpush.msra.mxu0 %v3589
    %4200 = vmatpush.msra.mxu0 %v3581
    %4201 = vmatpush.msra.mxu0 %v3573
    %4202 = vmatpush.msra.mxu0 %v3565
    %4203 = vmatpush.msra.mxu0 %v3557
    %4204 = vmatpush.msra.mxu0 %v3549
    %4205 = vmatpush.msra.mxu0 %v3541
    %4206 = vmatpush.msra.mxu0 %v3533
    %4207 = vmatpush.msra.mxu0 %v3525
    %4208 = vmatpush.msra.mxu0 %v3517
    %4209 = vmatpush.msra.mxu0 %v3509
    %4210 = vmatpush.msra.mxu0 %v3501
    %4211 = vmatpush.msra.mxu0 %v3493
    %4212 = vmatpush.msra.mxu0 %v3485
    %4213 = vmatmul.f32.gmra.mxu0 %v2713
    %v4214 = vpop.f32.mrf.mxu0
    %v4215 = vadd.f32 %v4195, %v4214
    %4216 = vdwg.mxu0
    %4217 = vmatpush.msra.mxu0 %v3733
    %4218 = vmatpush.msra.mxu0 %v3725
    %4219 = vmatpush.msra.mxu0 %v3717
    %4220 = vmatpush.msra.mxu0 %v3709
    %4221 = vmatpush.msra.mxu0 %v3701
    %4222 = vmatpush.msra.mxu0 %v3693
    %4223 = vmatpush.msra.mxu0 %v3685
    %4224 = vmatpush.msra.mxu0 %v3677
    %4225 = vmatpush.msra.mxu0 %v3669
    %4226 = vmatpush.msra.mxu0 %v3661
    %4227 = vmatpush.msra.mxu0 %v3653
    %4228 = vmatpush.msra.mxu0 %v3645
    %4229 = vmatpush.msra.mxu0 %v3637
    %4230 = vmatpush.msra.mxu0 %v3629
    %4231 = vmatpush.msra.mxu0 %v3621
    %4232 = vmatpush.msra.mxu0 %v3613
    %4233 = vmatmul.f32.gmra.mxu0 %v2714
    %v4234 = vpop.f32.mrf.mxu0
    %v4235 = vadd.f32 %v4215, %v4234
    %4236 = vdwg.mxu0
    %4237 = vmatpush.msra.mxu0 %v2838
    %4238 = vmatpush.msra.mxu0 %v2830
    %4239 = vmatpush.msra.mxu0 %v2822
    %4240 = vmatpush.msra.mxu0 %v2814
    %4241 = vmatpush.msra.mxu0 %v2806
    %4242 = vmatpush.msra.mxu0 %v2798
    %4243 = vmatpush.msra.mxu0 %v2790
    %4244 = vmatpush.msra.mxu0 %v2782
    %4245 = vmatpush.msra.mxu0 %v2774
    %4246 = vmatpush.msra.mxu0 %v2766
    %4247 = vmatpush.msra.mxu0 %v2758
    %4248 = vmatpush.msra.mxu0 %v2750
    %4249 = vmatpush.msra.mxu0 %v2742
    %4250 = vmatpush.msra.mxu0 %v2734
    %4251 = vmatpush.msra.mxu0 %v2726
    %4252 = vmatpush.msra.mxu0 %v2718
    %4253 = vmatmul.f32.gmra.mxu0 %v2707
    %v4254 = vpop.f32.mrf.mxu0
    %v4255 = vadd.f32 %v3744, %v4254
    %4256 = vdwg.mxu0
    %4257 = vmatpush.msra.mxu0 %v2966
    %4258 = vmatpush.msra.mxu0 %v2958
    %4259 = vmatpush.msra.mxu0 %v2950
    %4260 = vmatpush.msra.mxu0 %v2942
    %4261 = vmatpush.msra.mxu0 %v2934
    %4262 = vmatpush.msra.mxu0 %v2926
    %4263 = vmatpush.msra.mxu0 %v2918
    %4264 = vmatpush.msra.mxu0 %v2910
    %4265 = vmatpush.msra.mxu0 %v2902
    %4266 = vmatpush.msra.mxu0 %v2894
    %4267 = vmatpush.msra.mxu0 %v2886
    %4268 = vmatpush.msra.mxu0 %v2878
    %4269 = vmatpush.msra.mxu0 %v2870
    %4270 = vmatpush.msra.mxu0 %v2862
    %4271 = vmatpush.msra.mxu0 %v2854
    %4272 = vmatpush.msra.mxu0 %v2846
    %4273 = vmatmul.f32.gmra.mxu0 %v2708
    %v4274 = vpop.f32.mrf.mxu0
    %v4275 = vadd.f32 %v4255, %v4274
    %4276 = vdwg.mxu0
    %4277 = vmatpush.msra.mxu0 %v3094
    %4278 = vmatpush.msra.mxu0 %v3086
    %4279 = vmatpush.msra.mxu0 %v3078
    %4280 = vmatpush.msra.mxu0 %v3070
    %4281 = vmatpush.msra.mxu0 %v3062
    %4282 = vmatpush.msra.mxu0 %v3054
    %4283 = vmatpush.msra.mxu0 %v3046
    %4284 = vmatpush.msra.mxu0 %v3038
    %4285 = vmatpush.msra.mxu0 %v3030
    %4286 = vmatpush.msra.mxu0 %v3022
    %4287 = vmatpush.msra.mxu0 %v3014
    %4288 = vmatpush.msra.mxu0 %v3006
    %4289 = vmatpush.msra.mxu0 %v2998
    %4290 = vmatpush.msra.mxu0 %v2990
    %4291 = vmatpush.msra.mxu0 %v2982
    %4292 = vmatpush.msra.mxu0 %v2974
    %4293 = vmatmul.f32.gmra.mxu0 %v2709
    %v4294 = vpop.f32.mrf.mxu0
    %v4295 = vadd.f32 %v4275, %v4294
    %4296 = vdwg.mxu0
    %4297 = vmatpush.msra.mxu0 %v3222
    %4298 = vmatpush.msra.mxu0 %v3214
    %4299 = vmatpush.msra.mxu0 %v3206
    %4300 = vmatpush.msra.mxu0 %v3198
    %4301 = vmatpush.msra.mxu0 %v3190
    %4302 = vmatpush.msra.mxu0 %v3182
    %4303 = vmatpush.msra.mxu0 %v3174
    %4304 = vmatpush.msra.mxu0 %v3166
    %4305 = vmatpush.msra.mxu0 %v3158
    %4306 = vmatpush.msra.mxu0 %v3150
    %4307 = vmatpush.msra.mxu0 %v3142
    %4308 = vmatpush.msra.mxu0 %v3134
    %4309 = vmatpush.msra.mxu0 %v3126
    %4310 = vmatpush.msra.mxu0 %v3118
    %4311 = vmatpush.msra.mxu0 %v3110
    %4312 = vmatpush.msra.mxu0 %v3102
    %4313 = vmatmul.f32.gmra.mxu0 %v2710
    %v4314 = vpop.f32.mrf.mxu0
    %v4315 = vadd.f32 %v4295, %v4314
    %4316 = vdwg.mxu0
    %4317 = vmatpush.msra.mxu0 %v3350
    %4318 = vmatpush.msra.mxu0 %v3342
    %4319 = vmatpush.msra.mxu0 %v3334
    %4320 = vmatpush.msra.mxu0 %v3326
    %4321 = vmatpush.msra.mxu0 %v3318
    %4322 = vmatpush.msra.mxu0 %v3310
    %4323 = vmatpush.msra.mxu0 %v3302
    %4324 = vmatpush.msra.mxu0 %v3294
    %4325 = vmatpush.msra.mxu0 %v3286
    %4326 = vmatpush.msra.mxu0 %v3278
    %4327 = vmatpush.msra.mxu0 %v3270
    %4328 = vmatpush.msra.mxu0 %v3262
    %4329 = vmatpush.msra.mxu0 %v3254
    %4330 = vmatpush.msra.mxu0 %v3246
    %4331 = vmatpush.msra.mxu0 %v3238
    %4332 = vmatpush.msra.mxu0 %v3230
    %4333 = vmatmul.f32.gmra.mxu0 %v2711
    %v4334 = vpop.f32.mrf.mxu0
    %v4335 = vadd.f32 %v4315, %v4334
    %4336 = vdwg.mxu0
    %4337 = vmatpush.msra.mxu0 %v3478
    %4338 = vmatpush.msra.mxu0 %v3470
    %4339 = vmatpush.msra.mxu0 %v3462
    %4340 = vmatpush.msra.mxu0 %v3454
    %4341 = vmatpush.msra.mxu0 %v3446
    %4342 = vmatpush.msra.mxu0 %v3438
    %4343 = vmatpush.msra.mxu0 %v3430
    %4344 = vmatpush.msra.mxu0 %v3422
    %4345 = vmatpush.msra.mxu0 %v3414
    %4346 = vmatpush.msra.mxu0 %v3406
    %4347 = vmatpush.msra.mxu0 %v3398
    %4348 = vmatpush.msra.mxu0 %v3390
    %4349 = vmatpush.msra.mxu0 %v3382
    %4350 = vmatpush.msra.mxu0 %v3374
    %4351 = vmatpush.msra.mxu0 %v3366
    %4352 = vmatpush.msra.mxu0 %v3358
    %4353 = vmatmul.f32.gmra.mxu0 %v2712
    %v4354 = vpop.f32.mrf.mxu0
    %v4355 = vadd.f32 %v4335, %v4354
    %4356 = vdwg.mxu0
    %4357 = vmatpush.msra.mxu0 %v3606
    %4358 = vmatpush.msra.mxu0 %v3598
    %4359 = vmatpush.msra.mxu0 %v3590
    %4360 = vmatpush.msra.mxu0 %v3582
    %4361 = vmatpush.msra.mxu0 %v3574
    %4362 = vmatpush.msra.mxu0 %v3566
    %4363 = vmatpush.msra.mxu0 %v3558
    %4364 = vmatpush.msra.mxu0 %v3550
    %4365 = vmatpush.msra.mxu0 %v3542
    %4366 = vmatpush.msra.mxu0 %v3534
    %4367 = vmatpush.msra.mxu0 %v3526
    %4368 = vmatpush.msra.mxu0 %v3518
    %4369 = vmatpush.msra.mxu0 %v3510
    %4370 = vmatpush.msra.mxu0 %v3502
    %4371 = vmatpush.msra.mxu0 %v3494
    %4372 = vmatpush.msra.mxu0 %v3486
    %4373 = vmatmul.f32.gmra.mxu0 %v2713
    %v4374 = vpop.f32.mrf.mxu0
    %v4375 = vadd.f32 %v4355, %v4374
    %4376 = vdwg.mxu0
    %4377 = vmatpush.msra.mxu0 %v3734
    %4378 = vmatpush.msra.mxu0 %v3726
    %4379 = vmatpush.msra.mxu0 %v3718
    %4380 = vmatpush.msra.mxu0 %v3710
    %4381 = vmatpush.msra.mxu0 %v3702
    %4382 = vmatpush.msra.mxu0 %v3694
    %4383 = vmatpush.msra.mxu0 %v3686
    %4384 = vmatpush.msra.mxu0 %v3678
    %4385 = vmatpush.msra.mxu0 %v3670
    %4386 = vmatpush.msra.mxu0 %v3662
    %4387 = vmatpush.msra.mxu0 %v3654
    %4388 = vmatpush.msra.mxu0 %v3646
    %4389 = vmatpush.msra.mxu0 %v3638
    %4390 = vmatpush.msra.mxu0 %v3630
    %4391 = vmatpush.msra.mxu0 %v3622
    %4392 = vmatpush.msra.mxu0 %v3614
    %4393 = vmatmul.f32.gmra.mxu0 %v2714
    %v4394 = vpop.f32.mrf.mxu0
    %v4395 = vadd.f32 %v4375, %v4394
    %4396 = vdwg.mxu0
    %4397 = vmatpush.msra.mxu0 %v2839
    %4398 = vmatpush.msra.mxu0 %v2831
    %4399 = vmatpush.msra.mxu0 %v2823
    %4400 = vmatpush.msra.mxu0 %v2815
    %4401 = vmatpush.msra.mxu0 %v2807
    %4402 = vmatpush.msra.mxu0 %v2799
    %4403 = vmatpush.msra.mxu0 %v2791
    %4404 = vmatpush.msra.mxu0 %v2783
    %4405 = vmatpush.msra.mxu0 %v2775
    %4406 = vmatpush.msra.mxu0 %v2767
    %4407 = vmatpush.msra.mxu0 %v2759
    %4408 = vmatpush.msra.mxu0 %v2751
    %4409 = vmatpush.msra.mxu0 %v2743
    %4410 = vmatpush.msra.mxu0 %v2735
    %4411 = vmatpush.msra.mxu0 %v2727
    %4412 = vmatpush.msra.mxu0 %v2719
    %4413 = vmatmul.f32.gmra.mxu0 %v2707
    %v4414 = vpop.f32.mrf.mxu0
    %v4415 = vadd.f32 %v3745, %v4414
    %4416 = vdwg.mxu0
    %4417 = vmatpush.msra.mxu0 %v2967
    %4418 = vmatpush.msra.mxu0 %v2959
    %4419 = vmatpush.msra.mxu0 %v2951
    %4420 = vmatpush.msra.mxu0 %v2943
    %4421 = vmatpush.msra.mxu0 %v2935
    %4422 = vmatpush.msra.mxu0 %v2927
    %4423 = vmatpush.msra.mxu0 %v2919
    %4424 = vmatpush.msra.mxu0 %v2911
    %4425 = vmatpush.msra.mxu0 %v2903
    %4426 = vmatpush.msra.mxu0 %v2895
    %4427 = vmatpush.msra.mxu0 %v2887
    %4428 = vmatpush.msra.mxu0 %v2879
    %4429 = vmatpush.msra.mxu0 %v2871
    %4430 = vmatpush.msra.mxu0 %v2863
    %4431 = vmatpush.msra.mxu0 %v2855
    %4432 = vmatpush.msra.mxu0 %v2847
    %4433 = vmatmul.f32.gmra.mxu0 %v2708
    %v4434 = vpop.f32.mrf.mxu0
    %v4435 = vadd.f32 %v4415, %v4434
    %4436 = vdwg.mxu0
    %4437 = vmatpush.msra.mxu0 %v3095
    %4438 = vmatpush.msra.mxu0 %v3087
    %4439 = vmatpush.msra.mxu0 %v3079
    %4440 = vmatpush.msra.mxu0 %v3071
    %4441 = vmatpush.msra.mxu0 %v3063
    %4442 = vmatpush.msra.mxu0 %v3055
    %4443 = vmatpush.msra.mxu0 %v3047
    %4444 = vmatpush.msra.mxu0 %v3039
    %4445 = vmatpush.msra.mxu0 %v3031
    %4446 = vmatpush.msra.mxu0 %v3023
    %4447 = vmatpush.msra.mxu0 %v3015
    %4448 = vmatpush.msra.mxu0 %v3007
    %4449 = vmatpush.msra.mxu0 %v2999
    %4450 = vmatpush.msra.mxu0 %v2991
    %4451 = vmatpush.msra.mxu0 %v2983
    %4452 = vmatpush.msra.mxu0 %v2975
    %4453 = vmatmul.f32.gmra.mxu0 %v2709
    %v4454 = vpop.f32.mrf.mxu0
    %v4455 = vadd.f32 %v4435, %v4454
    %4456 = vdwg.mxu0
    %4457 = vmatpush.msra.mxu0 %v3223
    %4458 = vmatpush.msra.mxu0 %v3215
    %4459 = vmatpush.msra.mxu0 %v3207
    %4460 = vmatpush.msra.mxu0 %v3199
    %4461 = vmatpush.msra.mxu0 %v3191
    %4462 = vmatpush.msra.mxu0 %v3183
    %4463 = vmatpush.msra.mxu0 %v3175
    %4464 = vmatpush.msra.mxu0 %v3167
    %4465 = vmatpush.msra.mxu0 %v3159
    %4466 = vmatpush.msra.mxu0 %v3151
    %4467 = vmatpush.msra.mxu0 %v3143
    %4468 = vmatpush.msra.mxu0 %v3135
    %4469 = vmatpush.msra.mxu0 %v3127
    %4470 = vmatpush.msra.mxu0 %v3119
    %4471 = vmatpush.msra.mxu0 %v3111
    %4472 = vmatpush.msra.mxu0 %v3103
    %4473 = vmatmul.f32.gmra.mxu0 %v2710
    %v4474 = vpop.f32.mrf.mxu0
    %v4475 = vadd.f32 %v4455, %v4474
    %4476 = vdwg.mxu0
    %4477 = vmatpush.msra.mxu0 %v3351
    %4478 = vmatpush.msra.mxu0 %v3343
    %4479 = vmatpush.msra.mxu0 %v3335
    %4480 = vmatpush.msra.mxu0 %v3327
    %4481 = vmatpush.msra.mxu0 %v3319
    %4482 = vmatpush.msra.mxu0 %v3311
    %4483 = vmatpush.msra.mxu0 %v3303
    %4484 = vmatpush.msra.mxu0 %v3295
    %4485 = vmatpush.msra.mxu0 %v3287
    %4486 = vmatpush.msra.mxu0 %v3279
    %4487 = vmatpush.msra.mxu0 %v3271
    %4488 = vmatpush.msra.mxu0 %v3263
    %4489 = vmatpush.msra.mxu0 %v3255
    %4490 = vmatpush.msra.mxu0 %v3247
    %4491 = vmatpush.msra.mxu0 %v3239
    %4492 = vmatpush.msra.mxu0 %v3231
    %4493 = vmatmul.f32.gmra.mxu0 %v2711
    %v4494 = vpop.f32.mrf.mxu0
    %v4495 = vadd.f32 %v4475, %v4494
    %4496 = vdwg.mxu0
    %4497 = vmatpush.msra.mxu0 %v3479
    %4498 = vmatpush.msra.mxu0 %v3471
    %4499 = vmatpush.msra.mxu0 %v3463
    %4500 = vmatpush.msra.mxu0 %v3455
    %4501 = vmatpush.msra.mxu0 %v3447
    %4502 = vmatpush.msra.mxu0 %v3439
    %4503 = vmatpush.msra.mxu0 %v3431
    %4504 = vmatpush.msra.mxu0 %v3423
    %4505 = vmatpush.msra.mxu0 %v3415
    %4506 = vmatpush.msra.mxu0 %v3407
    %4507 = vmatpush.msra.mxu0 %v3399
    %4508 = vmatpush.msra.mxu0 %v3391
    %4509 = vmatpush.msra.mxu0 %v3383
    %4510 = vmatpush.msra.mxu0 %v3375
    %4511 = vmatpush.msra.mxu0 %v3367
    %4512 = vmatpush.msra.mxu0 %v3359
    %4513 = vmatmul.f32.gmra.mxu0 %v2712
    %v4514 = vpop.f32.mrf.mxu0
    %v4515 = vadd.f32 %v4495, %v4514
    %4516 = vdwg.mxu0
    %4517 = vmatpush.msra.mxu0 %v3607
    %4518 = vmatpush.msra.mxu0 %v3599
    %4519 = vmatpush.msra.mxu0 %v3591
    %4520 = vmatpush.msra.mxu0 %v3583
    %4521 = vmatpush.msra.mxu0 %v3575
    %4522 = vmatpush.msra.mxu0 %v3567
    %4523 = vmatpush.msra.mxu0 %v3559
    %4524 = vmatpush.msra.mxu0 %v3551
    %4525 = vmatpush.msra.mxu0 %v3543
    %4526 = vmatpush.msra.mxu0 %v3535
    %4527 = vmatpush.msra.mxu0 %v3527
    %4528 = vmatpush.msra.mxu0 %v3519
    %4529 = vmatpush.msra.mxu0 %v3511
    %4530 = vmatpush.msra.mxu0 %v3503
    %4531 = vmatpush.msra.mxu0 %v3495
    %4532 = vmatpush.msra.mxu0 %v3487
    %4533 = vmatmul.f32.gmra.mxu0 %v2713
    %v4534 = vpop.f32.mrf.mxu0
    %v4535 = vadd.f32 %v4515, %v4534
    %4536 = vdwg.mxu0
    %4537 = vmatpush.msra.mxu0 %v3735
    %4538 = vmatpush.msra.mxu0 %v3727
    %4539 = vmatpush.msra.mxu0 %v3719
    %4540 = vmatpush.msra.mxu0 %v3711
    %4541 = vmatpush.msra.mxu0 %v3703
    %4542 = vmatpush.msra.mxu0 %v3695
    %4543 = vmatpush.msra.mxu0 %v3687
    %4544 = vmatpush.msra.mxu0 %v3679
    %4545 = vmatpush.msra.mxu0 %v3671
    %4546 = vmatpush.msra.mxu0 %v3663
    %4547 = vmatpush.msra.mxu0 %v3655
    %4548 = vmatpush.msra.mxu0 %v3647
    %4549 = vmatpush.msra.mxu0 %v3639
    %4550 = vmatpush.msra.mxu0 %v3631
    %4551 = vmatpush.msra.mxu0 %v3623
    %4552 = vmatpush.msra.mxu0 %v3615
    %4553 = vmatmul.f32.gmra.mxu0 %v2714
    %v4554 = vpop.f32.mrf.mxu0
    %v4555 = vadd.f32 %v4535, %v4554
    %4556 = vdwg.mxu0
    %4557 = vmatpush.msra.mxu0 %v2840
    %4558 = vmatpush.msra.mxu0 %v2832
    %4559 = vmatpush.msra.mxu0 %v2824
    %4560 = vmatpush.msra.mxu0 %v2816
    %4561 = vmatpush.msra.mxu0 %v2808
    %4562 = vmatpush.msra.mxu0 %v2800
    %4563 = vmatpush.msra.mxu0 %v2792
    %4564 = vmatpush.msra.mxu0 %v2784
    %4565 = vmatpush.msra.mxu0 %v2776
    %4566 = vmatpush.msra.mxu0 %v2768
    %4567 = vmatpush.msra.mxu0 %v2760
    %4568 = vmatpush.msra.mxu0 %v2752
    %4569 = vmatpush.msra.mxu0 %v2744
    %4570 = vmatpush.msra.mxu0 %v2736
    %4571 = vmatpush.msra.mxu0 %v2728
    %4572 = vmatpush.msra.mxu0 %v2720
    %4573 = vmatmul.f32.gmra.mxu0 %v2707
    %v4574 = vpop.f32.mrf.mxu0
    %v4575 = vadd.f32 %v3746, %v4574
    %4576 = vdwg.mxu0
    %4577 = vmatpush.msra.mxu0 %v2968
    %4578 = vmatpush.msra.mxu0 %v2960
    %4579 = vmatpush.msra.mxu0 %v2952
    %4580 = vmatpush.msra.mxu0 %v2944
    %4581 = vmatpush.msra.mxu0 %v2936
    %4582 = vmatpush.msra.mxu0 %v2928
    %4583 = vmatpush.msra.mxu0 %v2920
    %4584 = vmatpush.msra.mxu0 %v2912
    %4585 = vmatpush.msra.mxu0 %v2904
    %4586 = vmatpush.msra.mxu0 %v2896
    %4587 = vmatpush.msra.mxu0 %v2888
    %4588 = vmatpush.msra.mxu0 %v2880
    %4589 = vmatpush.msra.mxu0 %v2872
    %4590 = vmatpush.msra.mxu0 %v2864
    %4591 = vmatpush.msra.mxu0 %v2856
    %4592 = vmatpush.msra.mxu0 %v2848
    %4593 = vmatmul.f32.gmra.mxu0 %v2708
    %v4594 = vpop.f32.mrf.mxu0
    %v4595 = vadd.f32 %v4575, %v4594
    %4596 = vdwg.mxu0
    %4597 = vmatpush.msra.mxu0 %v3096
    %4598 = vmatpush.msra.mxu0 %v3088
    %4599 = vmatpush.msra.mxu0 %v3080
    %4600 = vmatpush.msra.mxu0 %v3072
    %4601 = vmatpush.msra.mxu0 %v3064
    %4602 = vmatpush.msra.mxu0 %v3056
    %4603 = vmatpush.msra.mxu0 %v3048
    %4604 = vmatpush.msra.mxu0 %v3040
    %4605 = vmatpush.msra.mxu0 %v3032
    %4606 = vmatpush.msra.mxu0 %v3024
    %4607 = vmatpush.msra.mxu0 %v3016
    %4608 = vmatpush.msra.mxu0 %v3008
    %4609 = vmatpush.msra.mxu0 %v3000
    %4610 = vmatpush.msra.mxu0 %v2992
    %4611 = vmatpush.msra.mxu0 %v2984
    %4612 = vmatpush.msra.mxu0 %v2976
    %4613 = vmatmul.f32.gmra.mxu0 %v2709
    %v4614 = vpop.f32.mrf.mxu0
    %v4615 = vadd.f32 %v4595, %v4614
    %4616 = vdwg.mxu0
    %4617 = vmatpush.msra.mxu0 %v3224
    %4618 = vmatpush.msra.mxu0 %v3216
    %4619 = vmatpush.msra.mxu0 %v3208
    %4620 = vmatpush.msra.mxu0 %v3200
    %4621 = vmatpush.msra.mxu0 %v3192
    %4622 = vmatpush.msra.mxu0 %v3184
    %4623 = vmatpush.msra.mxu0 %v3176
    %4624 = vmatpush.msra.mxu0 %v3168
    %4625 = vmatpush.msra.mxu0 %v3160
    %4626 = vmatpush.msra.mxu0 %v3152
    %4627 = vmatpush.msra.mxu0 %v3144
    %4628 = vmatpush.msra.mxu0 %v3136
    %4629 = vmatpush.msra.mxu0 %v3128
    %4630 = vmatpush.msra.mxu0 %v3120
    %4631 = vmatpush.msra.mxu0 %v3112
    %4632 = vmatpush.msra.mxu0 %v3104
    %4633 = vmatmul.f32.gmra.mxu0 %v2710
    %v4634 = vpop.f32.mrf.mxu0
    %v4635 = vadd.f32 %v4615, %v4634
    %4636 = vdwg.mxu0
    %4637 = vmatpush.msra.mxu0 %v3352
    %4638 = vmatpush.msra.mxu0 %v3344
    %4639 = vmatpush.msra.mxu0 %v3336
    %4640 = vmatpush.msra.mxu0 %v3328
    %4641 = vmatpush.msra.mxu0 %v3320
    %4642 = vmatpush.msra.mxu0 %v3312
    %4643 = vmatpush.msra.mxu0 %v3304
    %4644 = vmatpush.msra.mxu0 %v3296
    %4645 = vmatpush.msra.mxu0 %v3288
    %4646 = vmatpush.msra.mxu0 %v3280
    %4647 = vmatpush.msra.mxu0 %v3272
    %4648 = vmatpush.msra.mxu0 %v3264
    %4649 = vmatpush.msra.mxu0 %v3256
    %4650 = vmatpush.msra.mxu0 %v3248
    %4651 = vmatpush.msra.mxu0 %v3240
    %4652 = vmatpush.msra.mxu0 %v3232
    %4653 = vmatmul.f32.gmra.mxu0 %v2711
    %v4654 = vpop.f32.mrf.mxu0
    %v4655 = vadd.f32 %v4635, %v4654
    %4656 = vdwg.mxu0
    %4657 = vmatpush.msra.mxu0 %v3480
    %4658 = vmatpush.msra.mxu0 %v3472
    %4659 = vmatpush.msra.mxu0 %v3464
    %4660 = vmatpush.msra.mxu0 %v3456
    %4661 = vmatpush.msra.mxu0 %v3448
    %4662 = vmatpush.msra.mxu0 %v3440
    %4663 = vmatpush.msra.mxu0 %v3432
    %4664 = vmatpush.msra.mxu0 %v3424
    %4665 = vmatpush.msra.mxu0 %v3416
    %4666 = vmatpush.msra.mxu0 %v3408
    %4667 = vmatpush.msra.mxu0 %v3400
    %4668 = vmatpush.msra.mxu0 %v3392
    %4669 = vmatpush.msra.mxu0 %v3384
    %4670 = vmatpush.msra.mxu0 %v3376
    %4671 = vmatpush.msra.mxu0 %v3368
    %4672 = vmatpush.msra.mxu0 %v3360
    %4673 = vmatmul.f32.gmra.mxu0 %v2712
    %v4674 = vpop.f32.mrf.mxu0
    %v4675 = vadd.f32 %v4655, %v4674
    %4676 = vdwg.mxu0
    %4677 = vmatpush.msra.mxu0 %v3608
    %4678 = vmatpush.msra.mxu0 %v3600
    %4679 = vmatpush.msra.mxu0 %v3592
    %4680 = vmatpush.msra.mxu0 %v3584
    %4681 = vmatpush.msra.mxu0 %v3576
    %4682 = vmatpush.msra.mxu0 %v3568
    %4683 = vmatpush.msra.mxu0 %v3560
    %4684 = vmatpush.msra.mxu0 %v3552
    %4685 = vmatpush.msra.mxu0 %v3544
    %4686 = vmatpush.msra.mxu0 %v3536
    %4687 = vmatpush.msra.mxu0 %v3528
    %4688 = vmatpush.msra.mxu0 %v3520
    %4689 = vmatpush.msra.mxu0 %v3512
    %4690 = vmatpush.msra.mxu0 %v3504
    %4691 = vmatpush.msra.mxu0 %v3496
    %4692 = vmatpush.msra.mxu0 %v3488
    %4693 = vmatmul.f32.gmra.mxu0 %v2713
    %v4694 = vpop.f32.mrf.mxu0
    %v4695 = vadd.f32 %v4675, %v4694
    %4696 = vdwg.mxu0
    %4697 = vmatpush.msra.mxu0 %v3736
    %4698 = vmatpush.msra.mxu0 %v3728
    %4699 = vmatpush.msra.mxu0 %v3720
    %4700 = vmatpush.msra.mxu0 %v3712
    %4701 = vmatpush.msra.mxu0 %v3704
    %4702 = vmatpush.msra.mxu0 %v3696
    %4703 = vmatpush.msra.mxu0 %v3688
    %4704 = vmatpush.msra.mxu0 %v3680
    %4705 = vmatpush.msra.mxu0 %v3672
    %4706 = vmatpush.msra.mxu0 %v3664
    %4707 = vmatpush.msra.mxu0 %v3656
    %4708 = vmatpush.msra.mxu0 %v3648
    %4709 = vmatpush.msra.mxu0 %v3640
    %4710 = vmatpush.msra.mxu0 %v3632
    %4711 = vmatpush.msra.mxu0 %v3624
    %4712 = vmatpush.msra.mxu0 %v3616
    %4713 = vmatmul.f32.gmra.mxu0 %v2714
    %v4714 = vpop.f32.mrf.mxu0
    %v4715 = vadd.f32 %v4695, %v4714
    %4716 = vdwg.mxu0
    %4717 = vmatpush.msra.mxu0 %v2841
    %4718 = vmatpush.msra.mxu0 %v2833
    %4719 = vmatpush.msra.mxu0 %v2825
    %4720 = vmatpush.msra.mxu0 %v2817
    %4721 = vmatpush.msra.mxu0 %v2809
    %4722 = vmatpush.msra.mxu0 %v2801
    %4723 = vmatpush.msra.mxu0 %v2793
    %4724 = vmatpush.msra.mxu0 %v2785
    %4725 = vmatpush.msra.mxu0 %v2777
    %4726 = vmatpush.msra.mxu0 %v2769
    %4727 = vmatpush.msra.mxu0 %v2761
    %4728 = vmatpush.msra.mxu0 %v2753
    %4729 = vmatpush.msra.mxu0 %v2745
    %4730 = vmatpush.msra.mxu0 %v2737
    %4731 = vmatpush.msra.mxu0 %v2729
    %4732 = vmatpush.msra.mxu0 %v2721
    %4733 = vmatmul.f32.gmra.mxu0 %v2707
    %v4734 = vpop.f32.mrf.mxu0
    %v4735 = vadd.f32 %v3747, %v4734
    %4736 = vdwg.mxu0
    %4737 = vmatpush.msra.mxu0 %v2969
    %4738 = vmatpush.msra.mxu0 %v2961
    %4739 = vmatpush.msra.mxu0 %v2953
    %4740 = vmatpush.msra.mxu0 %v2945
    %4741 = vmatpush.msra.mxu0 %v2937
    %4742 = vmatpush.msra.mxu0 %v2929
    %4743 = vmatpush.msra.mxu0 %v2921
    %4744 = vmatpush.msra.mxu0 %v2913
    %4745 = vmatpush.msra.mxu0 %v2905
    %4746 = vmatpush.msra.mxu0 %v2897
    %4747 = vmatpush.msra.mxu0 %v2889
    %4748 = vmatpush.msra.mxu0 %v2881
    %4749 = vmatpush.msra.mxu0 %v2873
    %4750 = vmatpush.msra.mxu0 %v2865
    %4751 = vmatpush.msra.mxu0 %v2857
    %4752 = vmatpush.msra.mxu0 %v2849
    %4753 = vmatmul.f32.gmra.mxu0 %v2708
    %v4754 = vpop.f32.mrf.mxu0
    %v4755 = vadd.f32 %v4735, %v4754
    %4756 = vdwg.mxu0
    %4757 = vmatpush.msra.mxu0 %v3097
    %4758 = vmatpush.msra.mxu0 %v3089
    %4759 = vmatpush.msra.mxu0 %v3081
    %4760 = vmatpush.msra.mxu0 %v3073
    %4761 = vmatpush.msra.mxu0 %v3065
    %4762 = vmatpush.msra.mxu0 %v3057
    %4763 = vmatpush.msra.mxu0 %v3049
    %4764 = vmatpush.msra.mxu0 %v3041
    %4765 = vmatpush.msra.mxu0 %v3033
    %4766 = vmatpush.msra.mxu0 %v3025
    %4767 = vmatpush.msra.mxu0 %v3017
    %4768 = vmatpush.msra.mxu0 %v3009
    %4769 = vmatpush.msra.mxu0 %v3001
    %4770 = vmatpush.msra.mxu0 %v2993
    %4771 = vmatpush.msra.mxu0 %v2985
    %4772 = vmatpush.msra.mxu0 %v2977
    %4773 = vmatmul.f32.gmra.mxu0 %v2709
    %v4774 = vpop.f32.mrf.mxu0
    %v4775 = vadd.f32 %v4755, %v4774
    %4776 = vdwg.mxu0
    %4777 = vmatpush.msra.mxu0 %v3225
    %4778 = vmatpush.msra.mxu0 %v3217
    %4779 = vmatpush.msra.mxu0 %v3209
    %4780 = vmatpush.msra.mxu0 %v3201
    %4781 = vmatpush.msra.mxu0 %v3193
    %4782 = vmatpush.msra.mxu0 %v3185
    %4783 = vmatpush.msra.mxu0 %v3177
    %4784 = vmatpush.msra.mxu0 %v3169
    %4785 = vmatpush.msra.mxu0 %v3161
    %4786 = vmatpush.msra.mxu0 %v3153
    %4787 = vmatpush.msra.mxu0 %v3145
    %4788 = vmatpush.msra.mxu0 %v3137
    %4789 = vmatpush.msra.mxu0 %v3129
    %4790 = vmatpush.msra.mxu0 %v3121
    %4791 = vmatpush.msra.mxu0 %v3113
    %4792 = vmatpush.msra.mxu0 %v3105
    %4793 = vmatmul.f32.gmra.mxu0 %v2710
    %v4794 = vpop.f32.mrf.mxu0
    %v4795 = vadd.f32 %v4775, %v4794
    %4796 = vdwg.mxu0
    %4797 = vmatpush.msra.mxu0 %v3353
    %4798 = vmatpush.msra.mxu0 %v3345
    %4799 = vmatpush.msra.mxu0 %v3337
    %4800 = vmatpush.msra.mxu0 %v3329
    %4801 = vmatpush.msra.mxu0 %v3321
    %4802 = vmatpush.msra.mxu0 %v3313
    %4803 = vmatpush.msra.mxu0 %v3305
    %4804 = vmatpush.msra.mxu0 %v3297
    %4805 = vmatpush.msra.mxu0 %v3289
    %4806 = vmatpush.msra.mxu0 %v3281
    %4807 = vmatpush.msra.mxu0 %v3273
    %4808 = vmatpush.msra.mxu0 %v3265
    %4809 = vmatpush.msra.mxu0 %v3257
    %4810 = vmatpush.msra.mxu0 %v3249
    %4811 = vmatpush.msra.mxu0 %v3241
    %4812 = vmatpush.msra.mxu0 %v3233
    %4813 = vmatmul.f32.gmra.mxu0 %v2711
    %v4814 = vpop.f32.mrf.mxu0
    %v4815 = vadd.f32 %v4795, %v4814
    %4816 = vdwg.mxu0
    %4817 = vmatpush.msra.mxu0 %v3481
    %4818 = vmatpush.msra.mxu0 %v3473
    %4819 = vmatpush.msra.mxu0 %v3465
    %4820 = vmatpush.msra.mxu0 %v3457
    %4821 = vmatpush.msra.mxu0 %v3449
    %4822 = vmatpush.msra.mxu0 %v3441
    %4823 = vmatpush.msra.mxu0 %v3433
    %4824 = vmatpush.msra.mxu0 %v3425
    %4825 = vmatpush.msra.mxu0 %v3417
    %4826 = vmatpush.msra.mxu0 %v3409
    %4827 = vmatpush.msra.mxu0 %v3401
    %4828 = vmatpush.msra.mxu0 %v3393
    %4829 = vmatpush.msra.mxu0 %v3385
    %4830 = vmatpush.msra.mxu0 %v3377
    %4831 = vmatpush.msra.mxu0 %v3369
    %4832 = vmatpush.msra.mxu0 %v3361
    %4833 = vmatmul.f32.gmra.mxu0 %v2712
    %v4834 = vpop.f32.mrf.mxu0
    %v4835 = vadd.f32 %v4815, %v4834
    %4836 = vdwg.mxu0
    %4837 = vmatpush.msra.mxu0 %v3609
    %4838 = vmatpush.msra.mxu0 %v3601
    %4839 = vmatpush.msra.mxu0 %v3593
    %4840 = vmatpush.msra.mxu0 %v3585
    %4841 = vmatpush.msra.mxu0 %v3577
    %4842 = vmatpush.msra.mxu0 %v3569
    %4843 = vmatpush.msra.mxu0 %v3561
    %4844 = vmatpush.msra.mxu0 %v3553
    %4845 = vmatpush.msra.mxu0 %v3545
    %4846 = vmatpush.msra.mxu0 %v3537
    %4847 = vmatpush.msra.mxu0 %v3529
    %4848 = vmatpush.msra.mxu0 %v3521
    %4849 = vmatpush.msra.mxu0 %v3513
    %4850 = vmatpush.msra.mxu0 %v3505
    %4851 = vmatpush.msra.mxu0 %v3497
    %4852 = vmatpush.msra.mxu0 %v3489
    %4853 = vmatmul.f32.gmra.mxu0 %v2713
    %v4854 = vpop.f32.mrf.mxu0
    %v4855 = vadd.f32 %v4835, %v4854
    %4856 = vdwg.mxu0
    %4857 = vmatpush.msra.mxu0 %v3737
    %4858 = vmatpush.msra.mxu0 %v3729
    %4859 = vmatpush.msra.mxu0 %v3721
    %4860 = vmatpush.msra.mxu0 %v3713
    %4861 = vmatpush.msra.mxu0 %v3705
    %4862 = vmatpush.msra.mxu0 %v3697
    %4863 = vmatpush.msra.mxu0 %v3689
    %4864 = vmatpush.msra.mxu0 %v3681
    %4865 = vmatpush.msra.mxu0 %v3673
    %4866 = vmatpush.msra.mxu0 %v3665
    %4867 = vmatpush.msra.mxu0 %v3657
    %4868 = vmatpush.msra.mxu0 %v3649
    %4869 = vmatpush.msra.mxu0 %v3641
    %4870 = vmatpush.msra.mxu0 %v3633
    %4871 = vmatpush.msra.mxu0 %v3625
    %4872 = vmatpush.msra.mxu0 %v3617
    %4873 = vmatmul.f32.gmra.mxu0 %v2714
    %v4874 = vpop.f32.mrf.mxu0
    %v4875 = vadd.f32 %v4855, %v4874
    %4876 = vdwg.mxu0
    %4877 = vmatpush.msra.mxu0 %v2842
    %4878 = vmatpush.msra.mxu0 %v2834
    %4879 = vmatpush.msra.mxu0 %v2826
    %4880 = vmatpush.msra.mxu0 %v2818
    %4881 = vmatpush.msra.mxu0 %v2810
    %4882 = vmatpush.msra.mxu0 %v2802
    %4883 = vmatpush.msra.mxu0 %v2794
    %4884 = vmatpush.msra.mxu0 %v2786
    %4885 = vmatpush.msra.mxu0 %v2778
    %4886 = vmatpush.msra.mxu0 %v2770
    %4887 = vmatpush.msra.mxu0 %v2762
    %4888 = vmatpush.msra.mxu0 %v2754
    %4889 = vmatpush.msra.mxu0 %v2746
    %4890 = vmatpush.msra.mxu0 %v2738
    %4891 = vmatpush.msra.mxu0 %v2730
    %4892 = vmatpush.msra.mxu0 %v2722
    %4893 = vmatmul.f32.gmra.mxu0 %v2707
    %v4894 = vpop.f32.mrf.mxu0
    %v4895 = vadd.f32 %v3748, %v4894
    %4896 = vdwg.mxu0
    %4897 = vmatpush.msra.mxu0 %v2970
    %4898 = vmatpush.msra.mxu0 %v2962
    %4899 = vmatpush.msra.mxu0 %v2954
    %4900 = vmatpush.msra.mxu0 %v2946
    %4901 = vmatpush.msra.mxu0 %v2938
    %4902 = vmatpush.msra.mxu0 %v2930
    %4903 = vmatpush.msra.mxu0 %v2922
    %4904 = vmatpush.msra.mxu0 %v2914
    %4905 = vmatpush.msra.mxu0 %v2906
    %4906 = vmatpush.msra.mxu0 %v2898
    %4907 = vmatpush.msra.mxu0 %v2890
    %4908 = vmatpush.msra.mxu0 %v2882
    %4909 = vmatpush.msra.mxu0 %v2874
    %4910 = vmatpush.msra.mxu0 %v2866
    %4911 = vmatpush.msra.mxu0 %v2858
    %4912 = vmatpush.msra.mxu0 %v2850
    %4913 = vmatmul.f32.gmra.mxu0 %v2708
    %v4914 = vpop.f32.mrf.mxu0
    %v4915 = vadd.f32 %v4895, %v4914
    %4916 = vdwg.mxu0
    %4917 = vmatpush.msra.mxu0 %v3098
    %4918 = vmatpush.msra.mxu0 %v3090
    %4919 = vmatpush.msra.mxu0 %v3082
    %4920 = vmatpush.msra.mxu0 %v3074
    %4921 = vmatpush.msra.mxu0 %v3066
    %4922 = vmatpush.msra.mxu0 %v3058
    %4923 = vmatpush.msra.mxu0 %v3050
    %4924 = vmatpush.msra.mxu0 %v3042
    %4925 = vmatpush.msra.mxu0 %v3034
    %4926 = vmatpush.msra.mxu0 %v3026
    %4927 = vmatpush.msra.mxu0 %v3018
    %4928 = vmatpush.msra.mxu0 %v3010
    %4929 = vmatpush.msra.mxu0 %v3002
    %4930 = vmatpush.msra.mxu0 %v2994
    %4931 = vmatpush.msra.mxu0 %v2986
    %4932 = vmatpush.msra.mxu0 %v2978
    %4933 = vmatmul.f32.gmra.mxu0 %v2709
    %v4934 = vpop.f32.mrf.mxu0
    %v4935 = vadd.f32 %v4915, %v4934
    %4936 = vdwg.mxu0
    %4937 = vmatpush.msra.mxu0 %v3226
    %4938 = vmatpush.msra.mxu0 %v3218
    %4939 = vmatpush.msra.mxu0 %v3210
    %4940 = vmatpush.msra.mxu0 %v3202
    %4941 = vmatpush.msra.mxu0 %v3194
    %4942 = vmatpush.msra.mxu0 %v3186
    %4943 = vmatpush.msra.mxu0 %v3178
    %4944 = vmatpush.msra.mxu0 %v3170
    %4945 = vmatpush.msra.mxu0 %v3162
    %4946 = vmatpush.msra.mxu0 %v3154
    %4947 = vmatpush.msra.mxu0 %v3146
    %4948 = vmatpush.msra.mxu0 %v3138
    %4949 = vmatpush.msra.mxu0 %v3130
    %4950 = vmatpush.msra.mxu0 %v3122
    %4951 = vmatpush.msra.mxu0 %v3114
    %4952 = vmatpush.msra.mxu0 %v3106
    %4953 = vmatmul.f32.gmra.mxu0 %v2710
    %v4954 = vpop.f32.mrf.mxu0
    %v4955 = vadd.f32 %v4935, %v4954
    %4956 = vdwg.mxu0
    %4957 = vmatpush.msra.mxu0 %v3354
    %4958 = vmatpush.msra.mxu0 %v3346
    %4959 = vmatpush.msra.mxu0 %v3338
    %4960 = vmatpush.msra.mxu0 %v3330
    %4961 = vmatpush.msra.mxu0 %v3322
    %4962 = vmatpush.msra.mxu0 %v3314
    %4963 = vmatpush.msra.mxu0 %v3306
    %4964 = vmatpush.msra.mxu0 %v3298
    %4965 = vmatpush.msra.mxu0 %v3290
    %4966 = vmatpush.msra.mxu0 %v3282
    %4967 = vmatpush.msra.mxu0 %v3274
    %4968 = vmatpush.msra.mxu0 %v3266
    %4969 = vmatpush.msra.mxu0 %v3258
    %4970 = vmatpush.msra.mxu0 %v3250
    %4971 = vmatpush.msra.mxu0 %v3242
    %4972 = vmatpush.msra.mxu0 %v3234
    %4973 = vmatmul.f32.gmra.mxu0 %v2711
    %v4974 = vpop.f32.mrf.mxu0
    %v4975 = vadd.f32 %v4955, %v4974
    %4976 = vdwg.mxu0
    %4977 = vmatpush.msra.mxu0 %v3482
    %4978 = vmatpush.msra.mxu0 %v3474
    %4979 = vmatpush.msra.mxu0 %v3466
    %4980 = vmatpush.msra.mxu0 %v3458
    %4981 = vmatpush.msra.mxu0 %v3450
    %4982 = vmatpush.msra.mxu0 %v3442
    %4983 = vmatpush.msra.mxu0 %v3434
    %4984 = vmatpush.msra.mxu0 %v3426
    %4985 = vmatpush.msra.mxu0 %v3418
    %4986 = vmatpush.msra.mxu0 %v3410
    %4987 = vmatpush.msra.mxu0 %v3402
    %4988 = vmatpush.msra.mxu0 %v3394
    %4989 = vmatpush.msra.mxu0 %v3386
    %4990 = vmatpush.msra.mxu0 %v3378
    %4991 = vmatpush.msra.mxu0 %v3370
    %4992 = vmatpush.msra.mxu0 %v3362
    %4993 = vmatmul.f32.gmra.mxu0 %v2712
    %v4994 = vpop.f32.mrf.mxu0
    %v4995 = vadd.f32 %v4975, %v4994
    %4996 = vdwg.mxu0
    %4997 = vmatpush.msra.mxu0 %v3610
    %4998 = vmatpush.msra.mxu0 %v3602
    %4999 = vmatpush.msra.mxu0 %v3594
    %5000 = vmatpush.msra.mxu0 %v3586
    %5001 = vmatpush.msra.mxu0 %v3578
    %5002 = vmatpush.msra.mxu0 %v3570
    %5003 = vmatpush.msra.mxu0 %v3562
    %5004 = vmatpush.msra.mxu0 %v3554
    %5005 = vmatpush.msra.mxu0 %v3546
    %5006 = vmatpush.msra.mxu0 %v3538
    %5007 = vmatpush.msra.mxu0 %v3530
    %5008 = vmatpush.msra.mxu0 %v3522
    %5009 = vmatpush.msra.mxu0 %v3514
    %5010 = vmatpush.msra.mxu0 %v3506
    %5011 = vmatpush.msra.mxu0 %v3498
    %5012 = vmatpush.msra.mxu0 %v3490
    %5013 = vmatmul.f32.gmra.mxu0 %v2713
    %v5014 = vpop.f32.mrf.mxu0
    %v5015 = vadd.f32 %v4995, %v5014
    %5016 = vdwg.mxu0
    %5017 = vmatpush.msra.mxu0 %v3738
    %5018 = vmatpush.msra.mxu0 %v3730
    %5019 = vmatpush.msra.mxu0 %v3722
    %5020 = vmatpush.msra.mxu0 %v3714
    %5021 = vmatpush.msra.mxu0 %v3706
    %5022 = vmatpush.msra.mxu0 %v3698
    %5023 = vmatpush.msra.mxu0 %v3690
    %5024 = vmatpush.msra.mxu0 %v3682
    %5025 = vmatpush.msra.mxu0 %v3674
    %5026 = vmatpush.msra.mxu0 %v3666
    %5027 = vmatpush.msra.mxu0 %v3658
    %5028 = vmatpush.msra.mxu0 %v3650
    %5029 = vmatpush.msra.mxu0 %v3642
    %5030 = vmatpush.msra.mxu0 %v3634
    %5031 = vmatpush.msra.mxu0 %v3626
    %5032 = vmatpush.msra.mxu0 %v3618
    %5033 = vmatmul.f32.gmra.mxu0 %v2714
    %v5034 = vpop.f32.mrf.mxu0
    %v5035 = vadd.f32 %v5015, %v5034
    %5036 = vdwg.mxu0
    %v5037 = vadd.f32 %v3915, %v1585
    %v5038 = vadd.f32 %v4075, %v1745
    %v5039 = vadd.f32 %v4235, %v1905
    %v5040 = vadd.f32 %v4395, %v2065
    %v5041 = vadd.f32 %v4555, %v2225
    %v5042 = vadd.f32 %v4715, %v2385
    %v5043 = vadd.f32 %v4875, %v2545
    %v5044 = vadd.f32 %v5035, %v2705
    %v5045 = vld [vmem:[%s9] sm:$0xff]
    %v5046 = vld [vmem:[%s9 + $0x8] sm:$0xff]
    %v5047 = vld [vmem:[%s9 + $0x10] sm:$0xff]
    %v5048 = vld [vmem:[%s9 + $0x18] sm:$0xff]
    %v5049 = vld [vmem:[%s9 + $0x20] sm:$0xff]
    %v5050 = vld [vmem:[%s9 + $0x28] sm:$0xff]
    %v5051 = vld [vmem:[%s9 + $0x30] sm:$0xff]
    %v5052 = vld [vmem:[%s9 + $0x38] sm:$0xff]
    %v5053 = vld [vmem:[%s9 + $0x40] sm:$0xff]
    %v5054 = vld [vmem:[%s9 + $0x48] sm:$0xff]
    %v5055 = vld [vmem:[%s9 + $0x50] sm:$0xff]
    %v5056 = vld [vmem:[%s9 + $0x58] sm:$0xff]
    %v5057 = vld [vmem:[%s9 + $0x60] sm:$0xff]
    %v5058 = vld [vmem:[%s9 + $0x68] sm:$0xff]
    %v5059 = vld [vmem:[%s9 + $0x70] sm:$0xff]
    %v5060 = vld [vmem:[%s9 + $0x78] sm:$0xff]
    %v5061 = vld [vmem:[%s9 + $0x80] sm:$0xff]
    %v5062 = vld [vmem:[%s9 + $0x88] sm:$0xff]
    %v5063 = vld [vmem:[%s9 + $0x90] sm:$0xff]
    %v5064 = vld [vmem:[%s9 + $0x98] sm:$0xff]
    %v5065 = vld [vmem:[%s9 + $0xa0] sm:$0xff]
    %v5066 = vld [vmem:[%s9 + $0xa8] sm:$0xff]
    %v5067 = vld [vmem:[%s9 + $0xb0] sm:$0xff]
    %v5068 = vld [vmem:[%s9 + $0xb8] sm:$0xff]
    %v5069 = vld [vmem:[%s9 + $0xc0] sm:$0xff]
    %v5070 = vld [vmem:[%s9 + $0xc8] sm:$0xff]
    %v5071 = vld [vmem:[%s9 + $0xd0] sm:$0xff]
    %v5072 = vld [vmem:[%s9 + $0xd8] sm:$0xff]
    %v5073 = vld [vmem:[%s9 + $0xe0] sm:$0xff]
    %v5074 = vld [vmem:[%s9 + $0xe8] sm:$0xff]
    %v5075 = vld [vmem:[%s9 + $0xf0] sm:$0xff]
    %v5076 = vld [vmem:[%s9 + $0xf8] sm:$0xff]
    %v5077 = vld [vmem:[%s9 + $0x100] sm:$0xff]
    %v5078 = vld [vmem:[%s9 + $0x108] sm:$0xff]
    %v5079 = vld [vmem:[%s9 + $0x110] sm:$0xff]
    %v5080 = vld [vmem:[%s9 + $0x118] sm:$0xff]
    %v5081 = vld [vmem:[%s9 + $0x120] sm:$0xff]
    %v5082 = vld [vmem:[%s9 + $0x128] sm:$0xff]
    %v5083 = vld [vmem:[%s9 + $0x130] sm:$0xff]
    %v5084 = vld [vmem:[%s9 + $0x138] sm:$0xff]
    %v5085 = vld [vmem:[%s9 + $0x140] sm:$0xff]
    %v5086 = vld [vmem:[%s9 + $0x148] sm:$0xff]
    %v5087 = vld [vmem:[%s9 + $0x150] sm:$0xff]
    %v5088 = vld [vmem:[%s9 + $0x158] sm:$0xff]
    %v5089 = vld [vmem:[%s9 + $0x160] sm:$0xff]
    %v5090 = vld [vmem:[%s9 + $0x168] sm:$0xff]
    %v5091 = vld [vmem:[%s9 + $0x170] sm:$0xff]
    %v5092 = vld [vmem:[%s9 + $0x178] sm:$0xff]
    %v5093 = vld [vmem:[%s9 + $0x180] sm:$0xff]
    %v5094 = vld [vmem:[%s9 + $0x188] sm:$0xff]
    %v5095 = vld [vmem:[%s9 + $0x190] sm:$0xff]
    %v5096 = vld [vmem:[%s9 + $0x198] sm:$0xff]
    %v5097 = vld [vmem:[%s9 + $0x1a0] sm:$0xff]
    %v5098 = vld [vmem:[%s9 + $0x1a8] sm:$0xff]
    %v5099 = vld [vmem:[%s9 + $0x1b0] sm:$0xff]
    %v5100 = vld [vmem:[%s9 + $0x1b8] sm:$0xff]
    %v5101 = vld [vmem:[%s9 + $0x1c0] sm:$0xff]
    %v5102 = vld [vmem:[%s9 + $0x1c8] sm:$0xff]
    %v5103 = vld [vmem:[%s9 + $0x1d0] sm:$0xff]
    %v5104 = vld [vmem:[%s9 + $0x1d8] sm:$0xff]
    %v5105 = vld [vmem:[%s9 + $0x1e0] sm:$0xff]
    %v5106 = vld [vmem:[%s9 + $0x1e8] sm:$0xff]
    %v5107 = vld [vmem:[%s9 + $0x1f0] sm:$0xff]
    %v5108 = vld [vmem:[%s9 + $0x1f8] sm:$0xff]
    %v5109 = vld [vmem:[%s9 + $0x200] sm:$0xff]
    %v5110 = vld [vmem:[%s9 + $0x208] sm:$0xff]
    %v5111 = vld [vmem:[%s9 + $0x210] sm:$0xff]
    %v5112 = vld [vmem:[%s9 + $0x218] sm:$0xff]
    %v5113 = vld [vmem:[%s9 + $0x220] sm:$0xff]
    %v5114 = vld [vmem:[%s9 + $0x228] sm:$0xff]
    %v5115 = vld [vmem:[%s9 + $0x230] sm:$0xff]
    %v5116 = vld [vmem:[%s9 + $0x238] sm:$0xff]
    %v5117 = vld [vmem:[%s9 + $0x240] sm:$0xff]
    %v5118 = vld [vmem:[%s9 + $0x248] sm:$0xff]
    %v5119 = vld [vmem:[%s9 + $0x250] sm:$0xff]
    %v5120 = vld [vmem:[%s9 + $0x258] sm:$0xff]
    %v5121 = vld [vmem:[%s9 + $0x260] sm:$0xff]
    %v5122 = vld [vmem:[%s9 + $0x268] sm:$0xff]
    %v5123 = vld [vmem:[%s9 + $0x270] sm:$0xff]
    %v5124 = vld [vmem:[%s9 + $0x278] sm:$0xff]
    %v5125 = vld [vmem:[%s9 + $0x280] sm:$0xff]
    %v5126 = vld [vmem:[%s9 + $0x288] sm:$0xff]
    %v5127 = vld [vmem:[%s9 + $0x290] sm:$0xff]
    %v5128 = vld [vmem:[%s9 + $0x298] sm:$0xff]
    %v5129 = vld [vmem:[%s9 + $0x2a0] sm:$0xff]
    %v5130 = vld [vmem:[%s9 + $0x2a8] sm:$0xff]
    %v5131 = vld [vmem:[%s9 + $0x2b0] sm:$0xff]
    %v5132 = vld [vmem:[%s9 + $0x2b8] sm:$0xff]
    %v5133 = vld [vmem:[%s9 + $0x2c0] sm:$0xff]
    %v5134 = vld [vmem:[%s9 + $0x2c8] sm:$0xff]
    %v5135 = vld [vmem:[%s9 + $0x2d0] sm:$0xff]
    %v5136 = vld [vmem:[%s9 + $0x2d8] sm:$0xff]
    %v5137 = vld [vmem:[%s9 + $0x2e0] sm:$0xff]
    %v5138 = vld [vmem:[%s9 + $0x2e8] sm:$0xff]
    %v5139 = vld [vmem:[%s9 + $0x2f0] sm:$0xff]
    %v5140 = vld [vmem:[%s9 + $0x2f8] sm:$0xff]
    %v5141 = vld [vmem:[%s9 + $0x300] sm:$0xff]
    %v5142 = vld [vmem:[%s9 + $0x308] sm:$0xff]
    %v5143 = vld [vmem:[%s9 + $0x310] sm:$0xff]
    %v5144 = vld [vmem:[%s9 + $0x318] sm:$0xff]
    %v5145 = vld [vmem:[%s9 + $0x320] sm:$0xff]
    %v5146 = vld [vmem:[%s9 + $0x328] sm:$0xff]
    %v5147 = vld [vmem:[%s9 + $0x330] sm:$0xff]
    %v5148 = vld [vmem:[%s9 + $0x338] sm:$0xff]
    %v5149 = vld [vmem:[%s9 + $0x340] sm:$0xff]
    %v5150 = vld [vmem:[%s9 + $0x348] sm:$0xff]
    %v5151 = vld [vmem:[%s9 + $0x350] sm:$0xff]
    %v5152 = vld [vmem:[%s9 + $0x358] sm:$0xff]
    %v5153 = vld [vmem:[%s9 + $0x360] sm:$0xff]
    %v5154 = vld [vmem:[%s9 + $0x368] sm:$0xff]
    %v5155 = vld [vmem:[%s9 + $0x370] sm:$0xff]
    %v5156 = vld [vmem:[%s9 + $0x378] sm:$0xff]
    %v5157 = vld [vmem:[%s9 + $0x380] sm:$0xff]
    %v5158 = vld [vmem:[%s9 + $0x388] sm:$0xff]
    %v5159 = vld [vmem:[%s9 + $0x390] sm:$0xff]
    %v5160 = vld [vmem:[%s9 + $0x398] sm:$0xff]
    %v5161 = vld [vmem:[%s9 + $0x3a0] sm:$0xff]
    %v5162 = vld [vmem:[%s9 + $0x3a8] sm:$0xff]
    %v5163 = vld [vmem:[%s9 + $0x3b0] sm:$0xff]
    %v5164 = vld [vmem:[%s9 + $0x3b8] sm:$0xff]
    %v5165 = vld [vmem:[%s9 + $0x3c0] sm:$0xff]
    %v5166 = vld [vmem:[%s9 + $0x3c8] sm:$0xff]
    %v5167 = vld [vmem:[%s9 + $0x3d0] sm:$0xff]
    %v5168 = vld [vmem:[%s9 + $0x3d8] sm:$0xff]
    %v5169 = vld [vmem:[%s9 + $0x3e0] sm:$0xff]
    %v5170 = vld [vmem:[%s9 + $0x3e8] sm:$0xff]
    %v5171 = vld [vmem:[%s9 + $0x3f0] sm:$0xff]
    %v5172 = vld [vmem:[%s9 + $0x3f8] sm:$0xff]
    %v5173 = vstv %s49
    %5174 = vmatpush.msra.mxu0 %v5060
    %5175 = vmatpush.msra.mxu0 %v5059
    %5176 = vmatpush.msra.mxu0 %v5058
    %5177 = vmatpush.msra.mxu0 %v5057
    %5178 = vmatpush.msra.mxu0 %v5056
    %5179 = vmatpush.msra.mxu0 %v5055
    %5180 = vmatpush.msra.mxu0 %v5054
    %5181 = vmatpush.msra.mxu0 %v5053
    %5182 = vmatpush.msra.mxu0 %v5052
    %5183 = vmatpush.msra.mxu0 %v5051
    %5184 = vmatpush.msra.mxu0 %v5050
    %5185 = vmatpush.msra.mxu0 %v5049
    %5186 = vmatpush.msra.mxu0 %v5048
    %5187 = vmatpush.msra.mxu0 %v5047
    %5188 = vmatpush.msra.mxu0 %v5046
    %5189 = vmatpush.msra.mxu0 %v5045
    %5190 = vmatmul.f32.gmra.mxu0 %v5037
    %v5191 = vpop.f32.mrf.mxu0
    %v5192 = vadd.f32 %v5173, %v5191
    %5193 = vdwg.mxu0
    %5194 = vmatpush.msra.mxu0 %v5076
    %5195 = vmatpush.msra.mxu0 %v5075
    %5196 = vmatpush.msra.mxu0 %v5074
    %5197 = vmatpush.msra.mxu0 %v5073
    %5198 = vmatpush.msra.mxu0 %v5072
    %5199 = vmatpush.msra.mxu0 %v5071
    %5200 = vmatpush.msra.mxu0 %v5070
    %5201 = vmatpush.msra.mxu0 %v5069
    %5202 = vmatpush.msra.mxu0 %v5068
    %5203 = vmatpush.msra.mxu0 %v5067
    %5204 = vmatpush.msra.mxu0 %v5066
    %5205 = vmatpush.msra.mxu0 %v5065
    %5206 = vmatpush.msra.mxu0 %v5064
    %5207 = vmatpush.msra.mxu0 %v5063
    %5208 = vmatpush.msra.mxu0 %v5062
    %5209 = vmatpush.msra.mxu0 %v5061
    %5210 = vmatmul.f32.gmra.mxu0 %v5038
    %v5211 = vpop.f32.mrf.mxu0
    %v5212 = vadd.f32 %v5192, %v5211
    %5213 = vdwg.mxu0
    %5214 = vmatpush.msra.mxu0 %v5092
    %5215 = vmatpush.msra.mxu0 %v5091
    %5216 = vmatpush.msra.mxu0 %v5090
    %5217 = vmatpush.msra.mxu0 %v5089
    %5218 = vmatpush.msra.mxu0 %v5088
    %5219 = vmatpush.msra.mxu0 %v5087
    %5220 = vmatpush.msra.mxu0 %v5086
    %5221 = vmatpush.msra.mxu0 %v5085
    %5222 = vmatpush.msra.mxu0 %v5084
    %5223 = vmatpush.msra.mxu0 %v5083
    %5224 = vmatpush.msra.mxu0 %v5082
    %5225 = vmatpush.msra.mxu0 %v5081
    %5226 = vmatpush.msra.mxu0 %v5080
    %5227 = vmatpush.msra.mxu0 %v5079
    %5228 = vmatpush.msra.mxu0 %v5078
    %5229 = vmatpush.msra.mxu0 %v5077
    %5230 = vmatmul.f32.gmra.mxu0 %v5039
    %v5231 = vpop.f32.mrf.mxu0
    %v5232 = vadd.f32 %v5212, %v5231
    %5233 = vdwg.mxu0
    %5234 = vmatpush.msra.mxu0 %v5108
    %5235 = vmatpush.msra.mxu0 %v5107
    %5236 = vmatpush.msra.mxu0 %v5106
    %5237 = vmatpush.msra.mxu0 %v5105
    %5238 = vmatpush.msra.mxu0 %v5104
    %5239 = vmatpush.msra.mxu0 %v5103
    %5240 = vmatpush.msra.mxu0 %v5102
    %5241 = vmatpush.msra.mxu0 %v5101
    %5242 = vmatpush.msra.mxu0 %v5100
    %5243 = vmatpush.msra.mxu0 %v5099
    %5244 = vmatpush.msra.mxu0 %v5098
    %5245 = vmatpush.msra.mxu0 %v5097
    %5246 = vmatpush.msra.mxu0 %v5096
    %5247 = vmatpush.msra.mxu0 %v5095
    %5248 = vmatpush.msra.mxu0 %v5094
    %5249 = vmatpush.msra.mxu0 %v5093
    %5250 = vmatmul.f32.gmra.mxu0 %v5040
    %v5251 = vpop.f32.mrf.mxu0
    %v5252 = vadd.f32 %v5232, %v5251
    %5253 = vdwg.mxu0
    %5254 = vmatpush.msra.mxu0 %v5124
    %5255 = vmatpush.msra.mxu0 %v5123
    %5256 = vmatpush.msra.mxu0 %v5122
    %5257 = vmatpush.msra.mxu0 %v5121
    %5258 = vmatpush.msra.mxu0 %v5120
    %5259 = vmatpush.msra.mxu0 %v5119
    %5260 = vmatpush.msra.mxu0 %v5118
    %5261 = vmatpush.msra.mxu0 %v5117
    %5262 = vmatpush.msra.mxu0 %v5116
    %5263 = vmatpush.msra.mxu0 %v5115
    %5264 = vmatpush.msra.mxu0 %v5114
    %5265 = vmatpush.msra.mxu0 %v5113
    %5266 = vmatpush.msra.mxu0 %v5112
    %5267 = vmatpush.msra.mxu0 %v5111
    %5268 = vmatpush.msra.mxu0 %v5110
    %5269 = vmatpush.msra.mxu0 %v5109
    %5270 = vmatmul.f32.gmra.mxu0 %v5041
    %v5271 = vpop.f32.mrf.mxu0
    %v5272 = vadd.f32 %v5252, %v5271
    %5273 = vdwg.mxu0
    %5274 = vmatpush.msra.mxu0 %v5140
    %5275 = vmatpush.msra.mxu0 %v5139
    %5276 = vmatpush.msra.mxu0 %v5138
    %5277 = vmatpush.msra.mxu0 %v5137
    %5278 = vmatpush.msra.mxu0 %v5136
    %5279 = vmatpush.msra.mxu0 %v5135
    %5280 = vmatpush.msra.mxu0 %v5134
    %5281 = vmatpush.msra.mxu0 %v5133
    %5282 = vmatpush.msra.mxu0 %v5132
    %5283 = vmatpush.msra.mxu0 %v5131
    %5284 = vmatpush.msra.mxu0 %v5130
    %5285 = vmatpush.msra.mxu0 %v5129
    %5286 = vmatpush.msra.mxu0 %v5128
    %5287 = vmatpush.msra.mxu0 %v5127
    %5288 = vmatpush.msra.mxu0 %v5126
    %5289 = vmatpush.msra.mxu0 %v5125
    %5290 = vmatmul.f32.gmra.mxu0 %v5042
    %v5291 = vpop.f32.mrf.mxu0
    %v5292 = vadd.f32 %v5272, %v5291
    %5293 = vdwg.mxu0
    %5294 = vmatpush.msra.mxu0 %v5156
    %5295 = vmatpush.msra.mxu0 %v5155
    %5296 = vmatpush.msra.mxu0 %v5154
    %5297 = vmatpush.msra.mxu0 %v5153
    %5298 = vmatpush.msra.mxu0 %v5152
    %5299 = vmatpush.msra.mxu0 %v5151
    %5300 = vmatpush.msra.mxu0 %v5150
    %5301 = vmatpush.msra.mxu0 %v5149
    %5302 = vmatpush.msra.mxu0 %v5148
    %5303 = vmatpush.msra.mxu0 %v5147
    %5304 = vmatpush.msra.mxu0 %v5146
    %5305 = vmatpush.msra.mxu0 %v5145
    %5306 = vmatpush.msra.mxu0 %v5144
    %5307 = vmatpush.msra.mxu0 %v5143
    %5308 = vmatpush.msra.mxu0 %v5142
    %5309 = vmatpush.msra.mxu0 %v5141
    %5310 = vmatmul.f32.gmra.mxu0 %v5043
    %v5311 = vpop.f32.mrf.mxu0
    %v5312 = vadd.f32 %v5292, %v5311
    %5313 = vdwg.mxu0
    %5314 = vmatpush.msra.mxu0 %v5172
    %5315 = vmatpush.msra.mxu0 %v5171
    %5316 = vmatpush.msra.mxu0 %v5170
    %5317 = vmatpush.msra.mxu0 %v5169
    %5318 = vmatpush.msra.mxu0 %v5168
    %5319 = vmatpush.msra.mxu0 %v5167
    %5320 = vmatpush.msra.mxu0 %v5166
    %5321 = vmatpush.msra.mxu0 %v5165
    %5322 = vmatpush.msra.mxu0 %v5164
    %5323 = vmatpush.msra.mxu0 %v5163
    %5324 = vmatpush.msra.mxu0 %v5162
    %5325 = vmatpush.msra.mxu0 %v5161
    %5326 = vmatpush.msra.mxu0 %v5160
    %5327 = vmatpush.msra.mxu0 %v5159
    %5328 = vmatpush.msra.mxu0 %v5158
    %5329 = vmatpush.msra.mxu0 %v5157
    %5330 = vmatmul.f32.gmra.mxu0 %v5044
    %v5331 = vpop.f32.mrf.mxu0
    %v5332 = vadd.f32 %v5312, %v5331
    %5333 = vdwg.mxu0
    %v5334 = vadd.f32 %v5332, %v129
    %v5335 = vstv %s50
    %v5336 = vmul.f32 %v5334, %v5335
    %vm5337 = vcmask 517120
    %5338 = vst.msk [vmem:[%s10] sm:$0x3] %vm5337, %v5336
    // Predicated region
    $region46: #{variant_c_forward.1} parent=1 // pred_check
      _
    $region47: #{variant_c_forward.1} parent=1 // pred_check_branch
      %5340 = sbr.rel (0) target = $region49
    $region48: #{variant_c_forward.1} parent=1 // pred_region
      _
    $region49: #{variant_c_forward.1} parent=1 // pred_fallthru
      _
    // Predicated region
    $region50: #{variant_c_forward.1} parent=1 // pred_check
      _
    $region51: #{variant_c_forward.1} parent=1 // pred_check_branch
      %5342 = sbr.rel (0) target = $region53
    $region52: #{variant_c_forward.1} parent=1 // pred_region
      _
    $region53: #{variant_c_forward.1} parent=1 // pred_fallthru
      _
    %5343 = vsyncpa [#allocation3], 1

</llo_original>
